<compile_context>
chip_gen: v7x
topology: tpu7x:2x2x1
jax: 0.10.0
libtpu: 0.0.40
codegen_flags: <defaults>
</compile_context>

<pallas_src>
import functools
import math

import jax
import jax.numpy as jnp
from jax.experimental import pallas as pl
from jax.experimental.pallas import tpu as pltpu

EPS = 1e-5


# --------------------------- in-kernel helpers ---------------------------

def _bn(y, gb):
    """Train-mode BatchNorm (batch stats, biased var). gb: (C, 2) = [gamma | beta]."""
    mean = jnp.mean(y, axis=1, keepdims=True)
    var = jnp.mean(jnp.square(y - mean), axis=1, keepdims=True)
    return (y - mean) * jax.lax.rsqrt(var + EPS) * gb[:, 0:1] + gb[:, 1:2]


def _dot(w, x):
    return jnp.dot(w, x, preferred_element_type=jnp.float32)


def _rowcol_ids(H, W, M):
    """(1, M) int32 column / row indices of the flattened (N, H, W) lane axis,
    generated in-kernel (no rc input, no full-size mask materialization)."""
    m = jax.lax.broadcasted_iota(jnp.int32, (1, M), 1)
    if (W & (W - 1)) == 0 and (H & (H - 1)) == 0:      # pow-2 fast path: bit ops only
        col = m & (W - 1)
        row = (m >> (W.bit_length() - 1)) & (H - 1)
    else:                                              # general path
        hw = jax.lax.rem(m, H * W)
        col = jax.lax.rem(hw, W)
        row = jax.lax.div(hw, W)
    return col, row


def _make_taps(x, col, row, H, W):
    """The 9 shifted source tensors of a depthwise 3x3 (stride 1, reflect pad 1) on
    the channel-major (C, N*H*W) layout: lane rolls + edge fixups.  Built once per
    input tensor and SHARED by every depthwise conv that consumes it."""
    M = x.shape[-1]
    colb = jnp.broadcast_to(col, x.shape)
    rowb = jnp.broadcast_to(row, x.shape)
    col_first, col_last = colb == 0, colb == W - 1
    row_first, row_last = rowb == 0, rowb == H - 1

    def rot(v, s):                       # out[m] = v[(m - s) % M]
        return pltpu.roll(v, s % M, 1)

    xm, xp = rot(x, W), rot(x, -W)
    rows = (jnp.where(row_first, xp, xm),          # source row h-1 (reflect)
            x,                                     # source row h
            jnp.where(row_last, xm, xp))           # source row h+1 (reflect)
    taps = []
    for r in rows:
        rm, rp = rot(r, 1), rot(r, -1)
        taps += [jnp.where(col_first, rp, rm),     # source col w-1 (reflect)
                 r,
                 jnp.where(col_last, rm, rp)]      # source col w+1 (reflect)
    return taps                                    # k = ky*3 + kx


def _dw_acc(taps, dw, off):
    """Per-channel 3x3 MAC over pre-built taps; weights in dw columns off..off+8."""
    acc = taps[0] * dw[:, off:off + 1]
    for k in range(1, 9):
        acc = acc + taps[k] * dw[:, off + k:off + k + 1]
    return acc


def _pre_section(xlg, w_in, gb_in, dwp, w_mid, w_s1, gb_s1, col, row, H, W):
    """Packed-stream NoFusionLFFC front half (everything before the FFT):
    stacked l_in/g_in 1x1+BN+ReLU, shared-tap depthwise 3x3s, stacked pointwise
    (the l2l+g2l add folded into the weights) and the spectral conv1+BN+ReLU."""
    r = jnp.maximum(_bn(_dot(w_in, xlg), gb_in), 0.0)        # (2cr, M) = [xl_r; xg_r]
    taps = _make_taps(r, col, row, H, W)                     # shared by 3 dw convs
    k = r.shape[0]
    dA = _dw_acc(taps, dwp, 0)                               # [dw_l2l(xl); dw_g2l(xg)]
    dB = _dw_acc(taps, dwp, 9)                               # [dw_l2g(xl); 0]
    olg = _dot(w_mid[:, 0:k], dA) + _dot(w_mid[:, k:], dB)   # [ol; ogl]
    s1 = jnp.maximum(_bn(_dot(w_s1, r), gb_s1), 0.0)         # spectral conv1+BN+ReLU
    return olg, s1


def _post_section(olg, sfu, w_out, gb_out, relu_out):
    """Packed-stream NoFusionLFFC back half (after the FFT): spectral conv2 and the
    `og` add folded into the out_G columns, stacked out_L/out_G 1x1 + BN (+ ReLU)."""
    k = olg.shape[0]
    y = _bn(_dot(w_out[:, 0:k], olg) + _dot(w_out[:, k:], sfu), gb_out)
    return jnp.maximum(y, 0.0) if relu_out else y


# ------------------------------ Pallas kernels ------------------------------

def _k1_kernel(H, W,
               x_ref, w_lin, gb_lin, dw1, w_po1, gb_po1,
               w_in2, gb_in2, dwp2, w_mid2, w_s12, gb_s12,
               xlg_ref, olg_ref, s1_ref):
    """conv1 (NoFusionLFFC ratio_g_in=0, nc_reduce=2) fused with the front half of
    conv2.conv1 (first tuple LFFC)."""
    M = x_ref.shape[1]
    col, row = _rowcol_ids(H, W, M)
    # --- lffc_first ---
    a = jnp.maximum(_bn(_dot(w_lin[...], x_ref[...]), gb_lin[...]), 0.0)     # (8, M)
    taps = _make_taps(a, col, row, H, W)              # shared by convl2l / convl2g
    dwv = dw1[...]
    dL = _dw_acc(taps, dwv, 0)
    dG = _dw_acc(taps, dwv, 9)
    wp = w_po1[...]
    h = a.shape[0]
    xlg = jnp.maximum(
        _bn(_dot(wp[:, 0:h], dL) + _dot(wp[:, h:], dG), gb_po1[...]), 0.0)   # (16, M)
    xlg_ref[...] = xlg                                # conv2's residual identity
    # --- conv2.conv1 front half ---
    olg, s1 = _pre_section(xlg, w_in2[...], gb_in2[...], dwp2[...], w_mid2[...],
                           w_s12[...], gb_s12[...], col, row, H, W)
    olg_ref[...] = olg
    s1_ref[...] = s1


def _post_pre_kernel(H, W, relu_post, add_id, *refs):
    """Back half of one tuple LFFC fused with the front half of the next one.
    add_id also folds in the TwoStream residual and emits the new identity."""
    if add_id:
        (olg_in, s1_in, fu_in, id_in,
         w_out, gb_out, w_in, gb_in, dwp, w_mid, w_s1, gb_s1,
         xlg_ref, olg_ref, s1_ref) = refs
    else:
        (olg_in, s1_in, fu_in,
         w_out, gb_out, w_in, gb_in, dwp, w_mid, w_s1, gb_s1,
         olg_ref, s1_ref) = refs
    M = olg_in.shape[1]
    col, row = _rowcol_ids(H, W, M)
    xlg = _post_section(olg_in[...], s1_in[...] + fu_in[...],
                        w_out[...], gb_out[...], relu_post)
    if add_id:
        xlg = xlg + id_in[...]
        xlg_ref[...] = xlg
    olg, s1 = _pre_section(xlg, w_in[...], gb_in[...], dwp[...], w_mid[...],
                           w_s1[...], gb_s1[...], col, row, H, W)
    olg_ref[...] = olg
    s1_ref[...] = s1


def _final_kernel(olg_in, s1_in, fu_in, id_in, res_in, w_out, gb_out, out_ref):
    """Back half of the last tuple LFFC + TwoStream residual + block concat (packed
    channel order is already [local; global]) + block residual."""
    y = _post_section(olg_in[...], s1_in[...] + fu_in[...],
                      w_out[...], gb_out[...], False)
    out_ref[...] = y + id_in[...] + res_in[...]


# ------------------------------ wrappers ------------------------------

def _call_k1(x_cm, pk, H, W):
    dim, M = x_cm.shape
    cr, cs = dim // 8, dim // 16
    return pl.pallas_call(
        functools.partial(_k1_kernel, H, W),
        out_shape=(jax.ShapeDtypeStruct((dim, M), jnp.float32),
                   jax.ShapeDtypeStruct((2 * cr, M), jnp.float32),
                   jax.ShapeDtypeStruct((cs, M), jnp.float32)),
    )(x_cm, pk['w_lin'], pk['gb_lin'], pk['dw1'], pk['w_po1'], pk['gb_po1'],
      pk['w_in'], pk['gb_in'], pk['dwp'], pk['w_mid'], pk['w_s1'], pk['gb_s1'])


def _call_post_pre(olg, s1, fu, pk, H, W, dim, relu_post, xlg_id=None):
    M = olg.shape[1]
    cr, cs = dim // 8, dim // 16
    add_id = xlg_id is not None
    outs = ((jax.ShapeDtypeStruct((dim, M), jnp.float32),) if add_id else ()) + (
        jax.ShapeDtypeStruct((2 * cr, M), jnp.float32),
        jax.ShapeDtypeStruct((cs, M), jnp.float32))
    args = (olg, s1, fu) + ((xlg_id,) if add_id else ()) + (
        pk['w_out'], pk['gb_out'], pk['w_in'], pk['gb_in'],
        pk['dwp'], pk['w_mid'], pk['w_s1'], pk['gb_s1'])
    return pl.pallas_call(
        functools.partial(_post_pre_kernel, H, W, relu_post, add_id),
        out_shape=outs,
    )(*args)


def _call_final(olg, s1, fu, xlg_id, res_cm, pk):
    dim, M = res_cm.shape
    return pl.pallas_call(
        _final_kernel,
        out_shape=jax.ShapeDtypeStruct((dim, M), jnp.float32),
    )(olg, s1, fu, xlg_id, res_cm, pk['w_out'], pk['gb_out'])


def _fourier_unit(s1_cm, fu, N, H, W):
    """rfft2(ortho) -> 1x1 conv (no bias) + BN + ReLU -> irfft2(ortho), in XLA.
    TODO(synk): FFT has no Pallas primitive; the conv+BN stays next to it in XLA
    because N*H*(W//2+1) lanes is not a multiple of 128 (masked partial stores)."""
    C, M = s1_cm.shape
    Wf = W // 2 + 1
    ff = jnp.fft.rfft2(s1_cm.reshape(C, N, H, W), s=(H, W), axes=(2, 3), norm='ortho')
    ffr = jnp.concatenate([ff.real, ff.imag], axis=0).astype(jnp.float32)
    y = jnp.dot(fu['w'], ffr.reshape(2 * C, N * H * Wf))
    mean = jnp.mean(y, axis=1, keepdims=True)
    var = jnp.mean(jnp.square(y - mean), axis=1, keepdims=True)
    y = (y - mean) * jax.lax.rsqrt(var + EPS) * fu['g'][:, None] + fu['b'][:, None]
    y = jnp.maximum(y, 0.0).reshape(2 * C, N, H, Wf)
    out = jnp.fft.irfft2(jax.lax.complex(y[:C], y[C:]), s=(H, W), axes=(2, 3), norm='ortho')
    return out.reshape(C, M).astype(jnp.float32)


def fused_lffc_resnet_block(x, params):
    """FusedLFFCResNetBlock forward: 5 fused pallas_calls + 4 XLA FFT/FU segments.
    Single channel-major layout (C, N*H*W): one transpose at entry, one at exit."""
    N, C, H, W = x.shape
    M = N * H * W
    x_cm = jnp.transpose(x, (1, 0, 2, 3)).reshape(C, M)

    # conv1 + conv2.conv1 front
    xlg1, olg, s1 = _call_k1(x_cm, params['k1'], H, W)
    fu = _fourier_unit(s1, params['fu_a'], N, H, W)
    # conv2.conv1 back + conv2.conv2 front
    olg, s1 = _call_post_pre(olg, s1, fu, params['k2'], H, W, C, relu_post=True)
    fu = _fourier_unit(s1, params['fu_b'], N, H, W)
    # conv2.conv2 back + stream residual + conv3.conv1 front
    xlg2, olg, s1 = _call_post_pre(olg, s1, fu, params['k3'], H, W, C,
                                   relu_post=False, xlg_id=xlg1)
    fu = _fourier_unit(s1, params['fu_c'], N, H, W)
    # conv3.conv1 back + conv3.conv2 front
    olg, s1 = _call_post_pre(olg, s1, fu, params['k4'], H, W, C, relu_post=True)
    fu = _fourier_unit(s1, params['fu_d'], N, H, W)
    # conv3.conv2 back + stream residual + concat + block residual
    out_cm = _call_final(olg, s1, fu, xlg2, x_cm, params['k5'])
    return jnp.transpose(out_cm.reshape(C, N, H, W), (1, 0, 2, 3))


# ----------------------------- parameter init & packing -----------------------------
# Conv biases are omitted throughout: every conv bias in the module reaches a
# train-mode BatchNorm through a purely linear path, so it cancels exactly.

class PGen:
    def __init__(self, seed):
        self._key = jax.random.PRNGKey(seed)

    def _next(self):
        self._key, sub = jax.random.split(self._key)
        return sub

    def kaiming(self, shape, fan_in):
        std = math.sqrt(2.0 / fan_in)
        return (std * jax.random.normal(self._next(), shape)).astype(jnp.float32)


def _ones(c):
    return jnp.ones((c,), jnp.float32)


def _zeros(c):
    return jnp.zeros((c,), jnp.float32)


def lffc_first_raw(pg, dim):
    # NoFusionLFFC(in=dim, out=dim, ratio_g_in=0, ratio_g_out=0.5, nc_reduce=2)
    h, q = dim // 2, dim // 4
    return {'lin_w': pg.kaiming((h, dim), dim), 'lin_g': _ones(h), 'lin_b': _zeros(h),
            'l2l_dw': pg.kaiming((h, 9), 9), 'l2l_pw': pg.kaiming((q, h), h),
            'l2g_dw': pg.kaiming((h, 9), 9), 'l2g_pw': pg.kaiming((q, h), h),
            'outL_w': pg.kaiming((h, q), q), 'outL_g': _ones(h), 'outL_b': _zeros(h),
            'outG_w': pg.kaiming((h, q), q), 'outG_g': _ones(h), 'outG_b': _zeros(h)}


def lffc_tuple_raw(pg, dim):
    # NoFusionLFFC(in=dim, out=dim, ratio 0.5/0.5, nc_reduce=4) incl. SpectralTransform
    ch, cr, cs = dim // 2, dim // 8, dim // 16
    return {'lin_w': pg.kaiming((cr, ch), ch), 'lin_g': _ones(cr), 'lin_b': _zeros(cr),
            'gin_w': pg.kaiming((cr, ch), ch), 'gin_g': _ones(cr), 'gin_b': _zeros(cr),
            'l2l_dw': pg.kaiming((cr, 9), 9), 'l2l_pw': pg.kaiming((cr, cr), cr),
            'l2g_dw': pg.kaiming((cr, 9), 9), 'l2g_pw': pg.kaiming((cr, cr), cr),
            'g2l_dw': pg.kaiming((cr, 9), 9), 'g2l_pw': pg.kaiming((cr, cr), cr),
            'sp1_w': pg.kaiming((cs, cr), cr), 'sp1_g': _ones(cs), 'sp1_b': _zeros(cs),
            'fu_w': pg.kaiming((2 * cs, 2 * cs), 2 * cs),
            'fu_g': _ones(2 * cs), 'fu_b': _zeros(2 * cs),
            'sp2_w': pg.kaiming((cr, cs), cs),
            'outL_w': pg.kaiming((ch, cr), cr), 'outL_g': _ones(ch), 'outL_b': _zeros(ch),
            'outG_w': pg.kaiming((ch, cr), cr), 'outG_g': _ones(ch), 'outG_b': _zeros(ch)}


def _gb(g, b):
    return jnp.stack([g, b], axis=1)                       # (C, 2) = [gamma | beta]


def _pack_pre(q, dim):
    """Front-half params of a tuple LFFC, stacked for the packed [xl; xg] layout."""
    ch, cr, cs = dim // 2, dim // 8, dim // 16
    w_in = jnp.zeros((2 * cr, 2 * ch), jnp.float32)
    w_in = w_in.at[0:cr, 0:ch].set(q['lin_w']).at[cr:, ch:].set(q['gin_w'])
    dwp = jnp.concatenate(
        [jnp.concatenate([q['l2l_dw'], q['g2l_dw']], axis=0),
         jnp.concatenate([q['l2g_dw'], jnp.zeros((cr, 9), jnp.float32)], axis=0)],
        axis=1)                                            # (2cr, 18)
    w_mid = jnp.zeros((2 * cr, 4 * cr), jnp.float32)
    w_mid = (w_mid.at[0:cr, 0:cr].set(q['l2l_pw'])
                  .at[0:cr, cr:2 * cr].set(q['g2l_pw'])    # folds the l2l + g2l add
                  .at[cr:, 2 * cr:3 * cr].set(q['l2g_pw']))
    w_s1 = jnp.zeros((cs, 2 * cr), jnp.float32).at[:, cr:].set(q['sp1_w'])
    return {'w_in': w_in,
            'gb_in': _gb(jnp.concatenate([q['lin_g'], q['gin_g']]),
                         jnp.concatenate([q['lin_b'], q['gin_b']])),
            'dwp': dwp, 'w_mid': w_mid, 'w_s1': w_s1,
            'gb_s1': _gb(q['sp1_g'], q['sp1_b'])}


def _pack_post(q, dim):
    """Back-half params: out_L/out_G stacked; spectral conv2 and the `og` add
    folded into the out_G columns (outG_w @ sp2_w)."""
    ch, cr, cs = dim // 2, dim // 8, dim // 16
    w_out = jnp.zeros((2 * ch, 2 * cr + cs), jnp.float32)
    w_out = (w_out.at[0:ch, 0:cr].set(q['outL_w'])
                  .at[ch:, cr:2 * cr].set(q['outG_w'])
                  .at[ch:, 2 * cr:].set(q['outG_w'] @ q['sp2_w']))
    gb_out = _gb(jnp.concatenate([q['outL_g'], q['outG_g']]),
                 jnp.concatenate([q['outL_b'], q['outG_b']]))
    return {'w_out': w_out, 'gb_out': gb_out}


def _pack_k1(p1, q_pre, dim):
    h = dim // 2
    w_po1 = jnp.zeros((dim, dim), jnp.float32)
    w_po1 = (w_po1.at[0:h, 0:h].set(p1['outL_w'] @ p1['l2l_pw'])   # pointConv folded in
                  .at[h:, h:].set(p1['outG_w'] @ p1['l2g_pw']))
    pk = {'w_lin': p1['lin_w'], 'gb_lin': _gb(p1['lin_g'], p1['lin_b']),
          'dw1': jnp.concatenate([p1['l2l_dw'], p1['l2g_dw']], axis=1),
          'w_po1': w_po1,
          'gb_po1': _gb(jnp.concatenate([p1['outL_g'], p1['outG_g']]),
                        jnp.concatenate([p1['outL_b'], p1['outG_b']]))}
    pk.update(_pack_pre(q_pre, dim))
    return pk


def _pack_stage(q_post, q_pre, dim):
    pk = dict(_pack_post(q_post, dim))
    pk.update(_pack_pre(q_pre, dim))
    return pk


def _fu_params(q):
    return {'w': q['fu_w'], 'g': q['fu_g'], 'b': q['fu_b']}


def build_params(seed, dim):
    assert dim % 16 == 0, "dim must be divisible by 16 (nc_reduce=4 + SpectralTransform)"
    pg = PGen(seed)
    p1 = lffc_first_raw(pg, dim)
    c2a, c2b = lffc_tuple_raw(pg, dim), lffc_tuple_raw(pg, dim)
    c3a, c3b = lffc_tuple_raw(pg, dim), lffc_tuple_raw(pg, dim)
    return {'k1': _pack_k1(p1, c2a, dim),
            'k2': _pack_stage(c2a, c2b, dim),
            'k3': _pack_stage(c2b, c3a, dim),
            'k4': _pack_stage(c3a, c3b, dim),
            'k5': _pack_post(c3b, dim),
            'fu_a': _fu_params(c2a), 'fu_b': _fu_params(c2b),
            'fu_c': _fu_params(c3a), 'fu_d': _fu_params(c3b)}


# ----------------------------------- main ----------------------------------

if __name__ == "__main__":
    dim = 16            # must be divisible by 16
    N, H, W = 2, 16, 16

    params = build_params(42, dim)
    x = jax.random.normal(jax.random.PRNGKey(0), (N, dim, H, W), jnp.float32)

    fwd = jax.jit(fused_lffc_resnet_block)
    out = jax.block_until_ready(fwd(x, params))

    assert out.shape == (N, dim, H, W), out.shape
    assert out.dtype == jnp.float32
    assert bool(jnp.all(jnp.isfinite(out)))
    print("KERNEL_OK")
</pallas_src>

<mosaic_0001>
module attributes {stable_mosaic.version = 11 : i64} {
  func.func @_k1_kernel(%arg0: memref<16x512xf32, #tpu.memory_space<vmem>>, %arg1: memref<8x16xf32, #tpu.memory_space<vmem>>, %arg2: memref<8x2xf32, #tpu.memory_space<vmem>>, %arg3: memref<8x18xf32, #tpu.memory_space<vmem>>, %arg4: memref<16x16xf32, #tpu.memory_space<vmem>>, %arg5: memref<16x2xf32, #tpu.memory_space<vmem>>, %arg6: memref<4x16xf32, #tpu.memory_space<vmem>>, %arg7: memref<4x2xf32, #tpu.memory_space<vmem>>, %arg8: memref<4x18xf32, #tpu.memory_space<vmem>>, %arg9: memref<4x8xf32, #tpu.memory_space<vmem>>, %arg10: memref<1x4xf32, #tpu.memory_space<vmem>>, %arg11: memref<1x2xf32, #tpu.memory_space<vmem>>, %arg12: memref<16x512xf32, #tpu.memory_space<vmem>>, %arg13: memref<4x512xf32, #tpu.memory_space<vmem>>, %arg14: memref<1x512xf32, #tpu.memory_space<vmem>>) attributes {dimension_semantics = [], scalar_prefetch = 0 : i64, scratch_operands = 0 : i64, tpu.core_type = #tpu.core_type<tc>} {
    %0 = tpu.iota {dimensions = array<i32: 1>} : vector<1x512xi32>
    %c15_i32 = arith.constant 15 : i32
    %1 = vector.broadcast %c15_i32 : i32 to vector<1x512xi32>
    %2 = arith.andi %0, %1 : vector<1x512xi32>
    %c4_i32 = arith.constant 4 : i32
    %3 = vector.broadcast %c4_i32 : i32 to vector<1x512xi32>
    %4 = arith.shrsi %0, %3 : vector<1x512xi32>
    %c15_i32_0 = arith.constant 15 : i32
    %5 = vector.broadcast %c15_i32_0 : i32 to vector<1x512xi32>
    %6 = arith.andi %4, %5 : vector<1x512xi32>
    %c0 = arith.constant 0 : index
    %c0_1 = arith.constant 0 : index
    %7 = vector.load %arg1[%c0, %c0_1] : memref<8x16xf32, #tpu.memory_space<vmem>>, vector<8x16xf32>
    %c0_2 = arith.constant 0 : index
    %c0_3 = arith.constant 0 : index
    %8 = vector.load %arg0[%c0_2, %c0_3] : memref<16x512xf32, #tpu.memory_space<vmem>>, vector<16x512xf32>
    %cst = arith.constant dense<0.000000e+00> : vector<8x512xf32>
    %9 = tpu.matmul %7, %8, %cst {dimension_numbers = #tpu.dot_dimension_numbers<[1], [0], [0], [1], [0, 0, 1, 1], [], []>} : vector<8x16xf32>, vector<16x512xf32>, vector<8x512xf32> -> vector<8x512xf32>
    %c0_4 = arith.constant 0 : index
    %c0_5 = arith.constant 0 : index
    %10 = vector.load %arg2[%c0_4, %c0_5] : memref<8x2xf32, #tpu.memory_space<vmem>>, vector<8x2xf32>
    %cst_6 = arith.constant dense<0.000000e+00> : vector<8xf32>
    %11 = vector.multi_reduction <add>, %9, %cst_6 [1] : vector<8x512xf32> to vector<8xf32>
    %12 = vector.shape_cast %11 : vector<8xf32> to vector<8x1xf32>
    %cst_7 = arith.constant 5.120000e+02 : f32
    %13 = vector.broadcast %cst_7 : f32 to vector<8x1xf32>
    %14 = arith.divf %12, %13 : vector<8x1xf32>
    %15 = vector.broadcast %14 : vector<8x1xf32> to vector<8x512xf32>
    %16 = arith.subf %9, %15 : vector<8x512xf32>
    %17 = arith.mulf %16, %16 : vector<8x512xf32>
    %cst_8 = arith.constant dense<0.000000e+00> : vector<8xf32>
    %18 = vector.multi_reduction <add>, %17, %cst_8 [1] : vector<8x512xf32> to vector<8xf32>
    %19 = vector.shape_cast %18 : vector<8xf32> to vector<8x1xf32>
    %cst_9 = arith.constant 5.120000e+02 : f32
    %20 = vector.broadcast %cst_9 : f32 to vector<8x1xf32>
    %21 = arith.divf %19, %20 : vector<8x1xf32>
    %22 = vector.broadcast %14 : vector<8x1xf32> to vector<8x512xf32>
    %23 = arith.subf %9, %22 : vector<8x512xf32>
    %cst_10 = arith.constant 9.99999974E-6 : f32
    %24 = vector.broadcast %cst_10 : f32 to vector<8x1xf32>
    %25 = arith.addf %21, %24 : vector<8x1xf32>
    %26 = math.rsqrt %25 : vector<8x1xf32>
    %27 = vector.broadcast %26 : vector<8x1xf32> to vector<8x512xf32>
    %28 = arith.mulf %23, %27 : vector<8x512xf32>
    %29 = vector.extract_strided_slice %10 {offsets = [0, 0], sizes = [8, 1], strides = [1, 1]} : vector<8x2xf32> to vector<8x1xf32>
    %30 = vector.broadcast %29 : vector<8x1xf32> to vector<8x512xf32>
    %31 = arith.mulf %28, %30 : vector<8x512xf32>
    %32 = vector.extract_strided_slice %10 {offsets = [0, 1], sizes = [8, 1], strides = [1, 1]} : vector<8x2xf32> to vector<8x1xf32>
    %33 = vector.broadcast %32 : vector<8x1xf32> to vector<8x512xf32>
    %34 = arith.addf %31, %33 : vector<8x512xf32>
    %cst_11 = arith.constant 0.000000e+00 : f32
    %35 = vector.broadcast %cst_11 : f32 to vector<8x512xf32>
    %36 = arith.maximumf %34, %35 : vector<8x512xf32>
    %37 = vector.shape_cast %2 : vector<1x512xi32> to vector<1x512xi32>
    %38 = vector.broadcast %37 : vector<1x512xi32> to vector<8x512xi32>
    %39 = vector.shape_cast %6 : vector<1x512xi32> to vector<1x512xi32>
    %40 = vector.broadcast %39 : vector<1x512xi32> to vector<8x512xi32>
    %c0_i32 = arith.constant 0 : i32
    %41 = vector.broadcast %c0_i32 : i32 to vector<8x512xi32>
    %42 = arith.cmpi eq, %38, %41 : vector<8x512xi32>
    %c15_i32_12 = arith.constant 15 : i32
    %43 = vector.broadcast %c15_i32_12 : i32 to vector<8x512xi32>
    %44 = arith.cmpi eq, %38, %43 : vector<8x512xi32>
    %c0_i32_13 = arith.constant 0 : i32
    %45 = vector.broadcast %c0_i32_13 : i32 to vector<8x512xi32>
    %46 = arith.cmpi eq, %40, %45 : vector<8x512xi32>
    %c15_i32_14 = arith.constant 15 : i32
    %47 = vector.broadcast %c15_i32_14 : i32 to vector<8x512xi32>
    %48 = arith.cmpi eq, %40, %47 : vector<8x512xi32>
    %c16_i32 = arith.constant 16 : i32
    %49 = tpu.dynamic_rotate %36 by %c16_i32 dim 1 : vector<8x512xf32>, i32 -> vector<8x512xf32>
    %c496_i32 = arith.constant 496 : i32
    %50 = tpu.dynamic_rotate %36 by %c496_i32 dim 1 : vector<8x512xf32>, i32 -> vector<8x512xf32>
    %51 = arith.select %46, %50, %49 : vector<8x512xi1>, vector<8x512xf32>
    %52 = arith.select %48, %49, %50 : vector<8x512xi1>, vector<8x512xf32>
    %c1_i32 = arith.constant 1 : i32
    %53 = tpu.dynamic_rotate %51 by %c1_i32 dim 1 : vector<8x512xf32>, i32 -> vector<8x512xf32>
    %c511_i32 = arith.constant 511 : i32
    %54 = tpu.dynamic_rotate %51 by %c511_i32 dim 1 : vector<8x512xf32>, i32 -> vector<8x512xf32>
    %55 = arith.select %42, %54, %53 : vector<8x512xi1>, vector<8x512xf32>
    %56 = arith.select %44, %53, %54 : vector<8x512xi1>, vector<8x512xf32>
    %c1_i32_15 = arith.constant 1 : i32
    %57 = tpu.dynamic_rotate %36 by %c1_i32_15 dim 1 : vector<8x512xf32>, i32 -> vector<8x512xf32>
    %c511_i32_16 = arith.constant 511 : i32
    %58 = tpu.dynamic_rotate %36 by %c511_i32_16 dim 1 : vector<8x512xf32>, i32 -> vector<8x512xf32>
    %59 = arith.select %42, %58, %57 : vector<8x512xi1>, vector<8x512xf32>
    %60 = arith.select %44, %57, %58 : vector<8x512xi1>, vector<8x512xf32>
    %c1_i32_17 = arith.constant 1 : i32
    %61 = tpu.dynamic_rotate %52 by %c1_i32_17 dim 1 : vector<8x512xf32>, i32 -> vector<8x512xf32>
    %c511_i32_18 = arith.constant 511 : i32
    %62 = tpu.dynamic_rotate %52 by %c511_i32_18 dim 1 : vector<8x512xf32>, i32 -> vector<8x512xf32>
    %63 = arith.select %42, %62, %61 : vector<8x512xi1>, vector<8x512xf32>
    %64 = arith.select %44, %61, %62 : vector<8x512xi1>, vector<8x512xf32>
    %c0_19 = arith.constant 0 : index
    %c0_20 = arith.constant 0 : index
    %65 = vector.load %arg3[%c0_19, %c0_20] : memref<8x18xf32, #tpu.memory_space<vmem>>, vector<8x18xf32>
    %66 = vector.extract_strided_slice %65 {offsets = [0, 0], sizes = [8, 1], strides = [1, 1]} : vector<8x18xf32> to vector<8x1xf32>
    %67 = vector.broadcast %66 : vector<8x1xf32> to vector<8x512xf32>
    %68 = arith.mulf %55, %67 : vector<8x512xf32>
    %69 = vector.extract_strided_slice %65 {offsets = [0, 1], sizes = [8, 1], strides = [1, 1]} : vector<8x18xf32> to vector<8x1xf32>
    %70 = vector.broadcast %69 : vector<8x1xf32> to vector<8x512xf32>
    %71 = arith.mulf %51, %70 : vector<8x512xf32>
    %72 = arith.addf %68, %71 : vector<8x512xf32>
    %73 = vector.extract_strided_slice %65 {offsets = [0, 2], sizes = [8, 1], strides = [1, 1]} : vector<8x18xf32> to vector<8x1xf32>
    %74 = vector.broadcast %73 : vector<8x1xf32> to vector<8x512xf32>
    %75 = arith.mulf %56, %74 : vector<8x512xf32>
    %76 = arith.addf %72, %75 : vector<8x512xf32>
    %77 = vector.extract_strided_slice %65 {offsets = [0, 3], sizes = [8, 1], strides = [1, 1]} : vector<8x18xf32> to vector<8x1xf32>
    %78 = vector.broadcast %77 : vector<8x1xf32> to vector<8x512xf32>
    %79 = arith.mulf %59, %78 : vector<8x512xf32>
    %80 = arith.addf %76, %79 : vector<8x512xf32>
    %81 = vector.extract_strided_slice %65 {offsets = [0, 4], sizes = [8, 1], strides = [1, 1]} : vector<8x18xf32> to vector<8x1xf32>
    %82 = vector.broadcast %81 : vector<8x1xf32> to vector<8x512xf32>
    %83 = arith.mulf %36, %82 : vector<8x512xf32>
    %84 = arith.addf %80, %83 : vector<8x512xf32>
    %85 = vector.extract_strided_slice %65 {offsets = [0, 5], sizes = [8, 1], strides = [1, 1]} : vector<8x18xf32> to vector<8x1xf32>
    %86 = vector.broadcast %85 : vector<8x1xf32> to vector<8x512xf32>
    %87 = arith.mulf %60, %86 : vector<8x512xf32>
    %88 = arith.addf %84, %87 : vector<8x512xf32>
    %89 = vector.extract_strided_slice %65 {offsets = [0, 6], sizes = [8, 1], strides = [1, 1]} : vector<8x18xf32> to vector<8x1xf32>
    %90 = vector.broadcast %89 : vector<8x1xf32> to vector<8x512xf32>
    %91 = arith.mulf %63, %90 : vector<8x512xf32>
    %92 = arith.addf %88, %91 : vector<8x512xf32>
    %93 = vector.extract_strided_slice %65 {offsets = [0, 7], sizes = [8, 1], strides = [1, 1]} : vector<8x18xf32> to vector<8x1xf32>
    %94 = vector.broadcast %93 : vector<8x1xf32> to vector<8x512xf32>
    %95 = arith.mulf %52, %94 : vector<8x512xf32>
    %96 = arith.addf %92, %95 : vector<8x512xf32>
    %97 = vector.extract_strided_slice %65 {offsets = [0, 8], sizes = [8, 1], strides = [1, 1]} : vector<8x18xf32> to vector<8x1xf32>
    %98 = vector.broadcast %97 : vector<8x1xf32> to vector<8x512xf32>
    %99 = arith.mulf %64, %98 : vector<8x512xf32>
    %100 = arith.addf %96, %99 : vector<8x512xf32>
    %101 = vector.extract_strided_slice %65 {offsets = [0, 9], sizes = [8, 1], strides = [1, 1]} : vector<8x18xf32> to vector<8x1xf32>
    %102 = vector.broadcast %101 : vector<8x1xf32> to vector<8x512xf32>
    %103 = arith.mulf %55, %102 : vector<8x512xf32>
    %104 = vector.extract_strided_slice %65 {offsets = [0, 10], sizes = [8, 1], strides = [1, 1]} : vector<8x18xf32> to vector<8x1xf32>
    %105 = vector.broadcast %104 : vector<8x1xf32> to vector<8x512xf32>
    %106 = arith.mulf %51, %105 : vector<8x512xf32>
    %107 = arith.addf %103, %106 : vector<8x512xf32>
    %108 = vector.extract_strided_slice %65 {offsets = [0, 11], sizes = [8, 1], strides = [1, 1]} : vector<8x18xf32> to vector<8x1xf32>
    %109 = vector.broadcast %108 : vector<8x1xf32> to vector<8x512xf32>
    %110 = arith.mulf %56, %109 : vector<8x512xf32>
    %111 = arith.addf %107, %110 : vector<8x512xf32>
    %112 = vector.extract_strided_slice %65 {offsets = [0, 12], sizes = [8, 1], strides = [1, 1]} : vector<8x18xf32> to vector<8x1xf32>
    %113 = vector.broadcast %112 : vector<8x1xf32> to vector<8x512xf32>
    %114 = arith.mulf %59, %113 : vector<8x512xf32>
    %115 = arith.addf %111, %114 : vector<8x512xf32>
    %116 = vector.extract_strided_slice %65 {offsets = [0, 13], sizes = [8, 1], strides = [1, 1]} : vector<8x18xf32> to vector<8x1xf32>
    %117 = vector.broadcast %116 : vector<8x1xf32> to vector<8x512xf32>
    %118 = arith.mulf %36, %117 : vector<8x512xf32>
    %119 = arith.addf %115, %118 : vector<8x512xf32>
    %120 = vector.extract_strided_slice %65 {offsets = [0, 14], sizes = [8, 1], strides = [1, 1]} : vector<8x18xf32> to vector<8x1xf32>
    %121 = vector.broadcast %120 : vector<8x1xf32> to vector<8x512xf32>
    %122 = arith.mulf %60, %121 : vector<8x512xf32>
    %123 = arith.addf %119, %122 : vector<8x512xf32>
    %124 = vector.extract_strided_slice %65 {offsets = [0, 15], sizes = [8, 1], strides = [1, 1]} : vector<8x18xf32> to vector<8x1xf32>
    %125 = vector.broadcast %124 : vector<8x1xf32> to vector<8x512xf32>
    %126 = arith.mulf %63, %125 : vector<8x512xf32>
    %127 = arith.addf %123, %126 : vector<8x512xf32>
    %128 = vector.extract_strided_slice %65 {offsets = [0, 16], sizes = [8, 1], strides = [1, 1]} : vector<8x18xf32> to vector<8x1xf32>
    %129 = vector.broadcast %128 : vector<8x1xf32> to vector<8x512xf32>
    %130 = arith.mulf %52, %129 : vector<8x512xf32>
    %131 = arith.addf %127, %130 : vector<8x512xf32>
    %132 = vector.extract_strided_slice %65 {offsets = [0, 17], sizes = [8, 1], strides = [1, 1]} : vector<8x18xf32> to vector<8x1xf32>
    %133 = vector.broadcast %132 : vector<8x1xf32> to vector<8x512xf32>
    %134 = arith.mulf %64, %133 : vector<8x512xf32>
    %135 = arith.addf %131, %134 : vector<8x512xf32>
    %c0_21 = arith.constant 0 : index
    %c0_22 = arith.constant 0 : index
    %136 = vector.load %arg4[%c0_21, %c0_22] : memref<16x16xf32, #tpu.memory_space<vmem>>, vector<16x16xf32>
    %137 = vector.extract_strided_slice %136 {offsets = [0, 0], sizes = [16, 8], strides = [1, 1]} : vector<16x16xf32> to vector<16x8xf32>
    %cst_23 = arith.constant dense<0.000000e+00> : vector<16x512xf32>
    %138 = tpu.matmul %137, %100, %cst_23 {dimension_numbers = #tpu.dot_dimension_numbers<[1], [0], [0], [1], [0, 0, 1, 1], [], []>} : vector<16x8xf32>, vector<8x512xf32>, vector<16x512xf32> -> vector<16x512xf32>
    %139 = vector.extract_strided_slice %136 {offsets = [0, 8], sizes = [16, 8], strides = [1, 1]} : vector<16x16xf32> to vector<16x8xf32>
    %cst_24 = arith.constant dense<0.000000e+00> : vector<16x512xf32>
    %140 = tpu.matmul %139, %135, %cst_24 {dimension_numbers = #tpu.dot_dimension_numbers<[1], [0], [0], [1], [0, 0, 1, 1], [], []>} : vector<16x8xf32>, vector<8x512xf32>, vector<16x512xf32> -> vector<16x512xf32>
    %141 = arith.addf %138, %140 : vector<16x512xf32>
    %c0_25 = arith.constant 0 : index
    %c0_26 = arith.constant 0 : index
    %142 = vector.load %arg5[%c0_25, %c0_26] : memref<16x2xf32, #tpu.memory_space<vmem>>, vector<16x2xf32>
    %cst_27 = arith.constant dense<0.000000e+00> : vector<16xf32>
    %143 = vector.multi_reduction <add>, %141, %cst_27 [1] : vector<16x512xf32> to vector<16xf32>
    %144 = vector.shape_cast %143 : vector<16xf32> to vector<16x1xf32>
    %cst_28 = arith.constant 5.120000e+02 : f32
    %145 = vector.broadcast %cst_28 : f32 to vector<16x1xf32>
    %146 = arith.divf %144, %145 : vector<16x1xf32>
    %147 = vector.broadcast %146 : vector<16x1xf32> to vector<16x512xf32>
    %148 = arith.subf %141, %147 : vector<16x512xf32>
    %149 = arith.mulf %148, %148 : vector<16x512xf32>
    %cst_29 = arith.constant dense<0.000000e+00> : vector<16xf32>
    %150 = vector.multi_reduction <add>, %149, %cst_29 [1] : vector<16x512xf32> to vector<16xf32>
    %151 = vector.shape_cast %150 : vector<16xf32> to vector<16x1xf32>
    %cst_30 = arith.constant 5.120000e+02 : f32
    %152 = vector.broadcast %cst_30 : f32 to vector<16x1xf32>
    %153 = arith.divf %151, %152 : vector<16x1xf32>
    %154 = vector.broadcast %146 : vector<16x1xf32> to vector<16x512xf32>
    %155 = arith.subf %141, %154 : vector<16x512xf32>
    %cst_31 = arith.constant 9.99999974E-6 : f32
    %156 = vector.broadcast %cst_31 : f32 to vector<16x1xf32>
    %157 = arith.addf %153, %156 : vector<16x1xf32>
    %158 = math.rsqrt %157 : vector<16x1xf32>
    %159 = vector.broadcast %158 : vector<16x1xf32> to vector<16x512xf32>
    %160 = arith.mulf %155, %159 : vector<16x512xf32>
    %161 = vector.extract_strided_slice %142 {offsets = [0, 0], sizes = [16, 1], strides = [1, 1]} : vector<16x2xf32> to vector<16x1xf32>
    %162 = vector.broadcast %161 : vector<16x1xf32> to vector<16x512xf32>
    %163 = arith.mulf %160, %162 : vector<16x512xf32>
    %164 = vector.extract_strided_slice %142 {offsets = [0, 1], sizes = [16, 1], strides = [1, 1]} : vector<16x2xf32> to vector<16x1xf32>
    %165 = vector.broadcast %164 : vector<16x1xf32> to vector<16x512xf32>
    %166 = arith.addf %163, %165 : vector<16x512xf32>
    %cst_32 = arith.constant 0.000000e+00 : f32
    %167 = vector.broadcast %cst_32 : f32 to vector<16x512xf32>
    %168 = arith.maximumf %166, %167 : vector<16x512xf32>
    %c0_33 = arith.constant 0 : index
    %c0_34 = arith.constant 0 : index
    %169 = vector.load %arg12[%c0_33, %c0_34] : memref<16x512xf32, #tpu.memory_space<vmem>>, vector<16x512xf32>
    tpu.vector_store %arg12[%c0_33, %c0_34], %168 {strides = array<i32>} : memref<16x512xf32, #tpu.memory_space<vmem>>, vector<16x512xf32>,
    %c0_35 = arith.constant 0 : index
    %c0_36 = arith.constant 0 : index
    %170 = vector.load %arg6[%c0_35, %c0_36] : memref<4x16xf32, #tpu.memory_space<vmem>>, vector<4x16xf32>
    %c0_37 = arith.constant 0 : index
    %c0_38 = arith.constant 0 : index
    %171 = vector.load %arg7[%c0_37, %c0_38] : memref<4x2xf32, #tpu.memory_space<vmem>>, vector<4x2xf32>
    %c0_39 = arith.constant 0 : index
    %c0_40 = arith.constant 0 : index
    %172 = vector.load %arg8[%c0_39, %c0_40] : memref<4x18xf32, #tpu.memory_space<vmem>>, vector<4x18xf32>
    %c0_41 = arith.constant 0 : index
    %c0_42 = arith.constant 0 : index
    %173 = vector.load %arg9[%c0_41, %c0_42] : memref<4x8xf32, #tpu.memory_space<vmem>>, vector<4x8xf32>
    %c0_43 = arith.constant 0 : index
    %c0_44 = arith.constant 0 : index
    %174 = vector.load %arg10[%c0_43, %c0_44] : memref<1x4xf32, #tpu.memory_space<vmem>>, vector<1x4xf32>
    %c0_45 = arith.constant 0 : index
    %c0_46 = arith.constant 0 : index
    %175 = vector.load %arg11[%c0_45, %c0_46] : memref<1x2xf32, #tpu.memory_space<vmem>>, vector<1x2xf32>
    %cst_47 = arith.constant dense<0.000000e+00> : vector<4x512xf32>
    %176 = tpu.matmul %170, %168, %cst_47 {dimension_numbers = #tpu.dot_dimension_numbers<[1], [0], [0], [1], [0, 0, 1, 1], [], []>} : vector<4x16xf32>, vector<16x512xf32>, vector<4x512xf32> -> vector<4x512xf32>
    %cst_48 = arith.constant dense<0.000000e+00> : vector<4xf32>
    %177 = vector.multi_reduction <add>, %176, %cst_48 [1] : vector<4x512xf32> to vector<4xf32>
    %178 = vector.shape_cast %177 : vector<4xf32> to vector<4x1xf32>
    %cst_49 = arith.constant 5.120000e+02 : f32
    %179 = vector.broadcast %cst_49 : f32 to vector<4x1xf32>
    %180 = arith.divf %178, %179 : vector<4x1xf32>
    %181 = vector.broadcast %180 : vector<4x1xf32> to vector<4x512xf32>
    %182 = arith.subf %176, %181 : vector<4x512xf32>
    %183 = arith.mulf %182, %182 : vector<4x512xf32>
    %cst_50 = arith.constant dense<0.000000e+00> : vector<4xf32>
    %184 = vector.multi_reduction <add>, %183, %cst_50 [1] : vector<4x512xf32> to vector<4xf32>
    %185 = vector.shape_cast %184 : vector<4xf32> to vector<4x1xf32>
    %cst_51 = arith.constant 5.120000e+02 : f32
    %186 = vector.broadcast %cst_51 : f32 to vector<4x1xf32>
    %187 = arith.divf %185, %186 : vector<4x1xf32>
    %188 = vector.broadcast %180 : vector<4x1xf32> to vector<4x512xf32>
    %189 = arith.subf %176, %188 : vector<4x512xf32>
    %cst_52 = arith.constant 9.99999974E-6 : f32
    %190 = vector.broadcast %cst_52 : f32 to vector<4x1xf32>
    %191 = arith.addf %187, %190 : vector<4x1xf32>
    %192 = math.rsqrt %191 : vector<4x1xf32>
    %193 = vector.broadcast %192 : vector<4x1xf32> to vector<4x512xf32>
    %194 = arith.mulf %189, %193 : vector<4x512xf32>
    %195 = vector.extract_strided_slice %171 {offsets = [0, 0], sizes = [4, 1], strides = [1, 1]} : vector<4x2xf32> to vector<4x1xf32>
    %196 = vector.broadcast %195 : vector<4x1xf32> to vector<4x512xf32>
    %197 = arith.mulf %194, %196 : vector<4x512xf32>
    %198 = vector.extract_strided_slice %171 {offsets = [0, 1], sizes = [4, 1], strides = [1, 1]} : vector<4x2xf32> to vector<4x1xf32>
    %199 = vector.broadcast %198 : vector<4x1xf32> to vector<4x512xf32>
    %200 = arith.addf %197, %199 : vector<4x512xf32>
    %cst_53 = arith.constant 0.000000e+00 : f32
    %201 = vector.broadcast %cst_53 : f32 to vector<4x512xf32>
    %202 = arith.maximumf %200, %201 : vector<4x512xf32>
    %203 = vector.shape_cast %2 : vector<1x512xi32> to vector<1x512xi32>
    %204 = vector.broadcast %203 : vector<1x512xi32> to vector<4x512xi32>
    %205 = vector.shape_cast %6 : vector<1x512xi32> to vector<1x512xi32>
    %206 = vector.broadcast %205 : vector<1x512xi32> to vector<4x512xi32>
    %c0_i32_54 = arith.constant 0 : i32
    %207 = vector.broadcast %c0_i32_54 : i32 to vector<4x512xi32>
    %208 = arith.cmpi eq, %204, %207 : vector<4x512xi32>
    %c15_i32_55 = arith.constant 15 : i32
    %209 = vector.broadcast %c15_i32_55 : i32 to vector<4x512xi32>
    %210 = arith.cmpi eq, %204, %209 : vector<4x512xi32>
    %c0_i32_56 = arith.constant 0 : i32
    %211 = vector.broadcast %c0_i32_56 : i32 to vector<4x512xi32>
    %212 = arith.cmpi eq, %206, %211 : vector<4x512xi32>
    %c15_i32_57 = arith.constant 15 : i32
    %213 = vector.broadcast %c15_i32_57 : i32 to vector<4x512xi32>
    %214 = arith.cmpi eq, %206, %213 : vector<4x512xi32>
    %c16_i32_58 = arith.constant 16 : i32
    %215 = tpu.dynamic_rotate %202 by %c16_i32_58 dim 1 : vector<4x512xf32>, i32 -> vector<4x512xf32>
    %c496_i32_59 = arith.constant 496 : i32
    %216 = tpu.dynamic_rotate %202 by %c496_i32_59 dim 1 : vector<4x512xf32>, i32 -> vector<4x512xf32>
    %217 = arith.select %212, %216, %215 : vector<4x512xi1>, vector<4x512xf32>
    %218 = arith.select %214, %215, %216 : vector<4x512xi1>, vector<4x512xf32>
    %c1_i32_60 = arith.constant 1 : i32
    %219 = tpu.dynamic_rotate %217 by %c1_i32_60 dim 1 : vector<4x512xf32>, i32 -> vector<4x512xf32>
    %c511_i32_61 = arith.constant 511 : i32
    %220 = tpu.dynamic_rotate %217 by %c511_i32_61 dim 1 : vector<4x512xf32>, i32 -> vector<4x512xf32>
    %221 = arith.select %208, %220, %219 : vector<4x512xi1>, vector<4x512xf32>
    %222 = arith.select %210, %219, %220 : vector<4x512xi1>, vector<4x512xf32>
    %c1_i32_62 = arith.constant 1 : i32
    %223 = tpu.dynamic_rotate %202 by %c1_i32_62 dim 1 : vector<4x512xf32>, i32 -> vector<4x512xf32>
    %c511_i32_63 = arith.constant 511 : i32
    %224 = tpu.dynamic_rotate %202 by %c511_i32_63 dim 1 : vector<4x512xf32>, i32 -> vector<4x512xf32>
    %225 = arith.select %208, %224, %223 : vector<4x512xi1>, vector<4x512xf32>
    %226 = arith.select %210, %223, %224 : vector<4x512xi1>, vector<4x512xf32>
    %c1_i32_64 = arith.constant 1 : i32
    %227 = tpu.dynamic_rotate %218 by %c1_i32_64 dim 1 : vector<4x512xf32>, i32 -> vector<4x512xf32>
    %c511_i32_65 = arith.constant 511 : i32
    %228 = tpu.dynamic_rotate %218 by %c511_i32_65 dim 1 : vector<4x512xf32>, i32 -> vector<4x512xf32>
    %229 = arith.select %208, %228, %227 : vector<4x512xi1>, vector<4x512xf32>
    %230 = arith.select %210, %227, %228 : vector<4x512xi1>, vector<4x512xf32>
    %231 = vector.extract_strided_slice %172 {offsets = [0, 0], sizes = [4, 1], strides = [1, 1]} : vector<4x18xf32> to vector<4x1xf32>
    %232 = vector.broadcast %231 : vector<4x1xf32> to vector<4x512xf32>
    %233 = arith.mulf %221, %232 : vector<4x512xf32>
    %234 = vector.extract_strided_slice %172 {offsets = [0, 1], sizes = [4, 1], strides = [1, 1]} : vector<4x18xf32> to vector<4x1xf32>
    %235 = vector.broadcast %234 : vector<4x1xf32> to vector<4x512xf32>
    %236 = arith.mulf %217, %235 : vector<4x512xf32>
    %237 = arith.addf %233, %236 : vector<4x512xf32>
    %238 = vector.extract_strided_slice %172 {offsets = [0, 2], sizes = [4, 1], strides = [1, 1]} : vector<4x18xf32> to vector<4x1xf32>
    %239 = vector.broadcast %238 : vector<4x1xf32> to vector<4x512xf32>
    %240 = arith.mulf %222, %239 : vector<4x512xf32>
    %241 = arith.addf %237, %240 : vector<4x512xf32>
    %242 = vector.extract_strided_slice %172 {offsets = [0, 3], sizes = [4, 1], strides = [1, 1]} : vector<4x18xf32> to vector<4x1xf32>
    %243 = vector.broadcast %242 : vector<4x1xf32> to vector<4x512xf32>
    %244 = arith.mulf %225, %243 : vector<4x512xf32>
    %245 = arith.addf %241, %244 : vector<4x512xf32>
    %246 = vector.extract_strided_slice %172 {offsets = [0, 4], sizes = [4, 1], strides = [1, 1]} : vector<4x18xf32> to vector<4x1xf32>
    %247 = vector.broadcast %246 : vector<4x1xf32> to vector<4x512xf32>
    %248 = arith.mulf %202, %247 : vector<4x512xf32>
    %249 = arith.addf %245, %248 : vector<4x512xf32>
    %250 = vector.extract_strided_slice %172 {offsets = [0, 5], sizes = [4, 1], strides = [1, 1]} : vector<4x18xf32> to vector<4x1xf32>
    %251 = vector.broadcast %250 : vector<4x1xf32> to vector<4x512xf32>
    %252 = arith.mulf %226, %251 : vector<4x512xf32>
    %253 = arith.addf %249, %252 : vector<4x512xf32>
    %254 = vector.extract_strided_slice %172 {offsets = [0, 6], sizes = [4, 1], strides = [1, 1]} : vector<4x18xf32> to vector<4x1xf32>
    %255 = vector.broadcast %254 : vector<4x1xf32> to vector<4x512xf32>
    %256 = arith.mulf %229, %255 : vector<4x512xf32>
    %257 = arith.addf %253, %256 : vector<4x512xf32>
    %258 = vector.extract_strided_slice %172 {offsets = [0, 7], sizes = [4, 1], strides = [1, 1]} : vector<4x18xf32> to vector<4x1xf32>
    %259 = vector.broadcast %258 : vector<4x1xf32> to vector<4x512xf32>
    %260 = arith.mulf %218, %259 : vector<4x512xf32>
    %261 = arith.addf %257, %260 : vector<4x512xf32>
    %262 = vector.extract_strided_slice %172 {offsets = [0, 8], sizes = [4, 1], strides = [1, 1]} : vector<4x18xf32> to vector<4x1xf32>
    %263 = vector.broadcast %262 : vector<4x1xf32> to vector<4x512xf32>
    %264 = arith.mulf %230, %263 : vector<4x512xf32>
    %265 = arith.addf %261, %264 : vector<4x512xf32>
    %266 = vector.extract_strided_slice %172 {offsets = [0, 9], sizes = [4, 1], strides = [1, 1]} : vector<4x18xf32> to vector<4x1xf32>
    %267 = vector.broadcast %266 : vector<4x1xf32> to vector<4x512xf32>
    %268 = arith.mulf %221, %267 : vector<4x512xf32>
    %269 = vector.extract_strided_slice %172 {offsets = [0, 10], sizes = [4, 1], strides = [1, 1]} : vector<4x18xf32> to vector<4x1xf32>
    %270 = vector.broadcast %269 : vector<4x1xf32> to vector<4x512xf32>
    %271 = arith.mulf %217, %270 : vector<4x512xf32>
    %272 = arith.addf %268, %271 : vector<4x512xf32>
    %273 = vector.extract_strided_slice %172 {offsets = [0, 11], sizes = [4, 1], strides = [1, 1]} : vector<4x18xf32> to vector<4x1xf32>
    %274 = vector.broadcast %273 : vector<4x1xf32> to vector<4x512xf32>
    %275 = arith.mulf %222, %274 : vector<4x512xf32>
    %276 = arith.addf %272, %275 : vector<4x512xf32>
    %277 = vector.extract_strided_slice %172 {offsets = [0, 12], sizes = [4, 1], strides = [1, 1]} : vector<4x18xf32> to vector<4x1xf32>
    %278 = vector.broadcast %277 : vector<4x1xf32> to vector<4x512xf32>
    %279 = arith.mulf %225, %278 : vector<4x512xf32>
    %280 = arith.addf %276, %279 : vector<4x512xf32>
    %281 = vector.extract_strided_slice %172 {offsets = [0, 13], sizes = [4, 1], strides = [1, 1]} : vector<4x18xf32> to vector<4x1xf32>
    %282 = vector.broadcast %281 : vector<4x1xf32> to vector<4x512xf32>
    %283 = arith.mulf %202, %282 : vector<4x512xf32>
    %284 = arith.addf %280, %283 : vector<4x512xf32>
    %285 = vector.extract_strided_slice %172 {offsets = [0, 14], sizes = [4, 1], strides = [1, 1]} : vector<4x18xf32> to vector<4x1xf32>
    %286 = vector.broadcast %285 : vector<4x1xf32> to vector<4x512xf32>
    %287 = arith.mulf %226, %286 : vector<4x512xf32>
    %288 = arith.addf %284, %287 : vector<4x512xf32>
    %289 = vector.extract_strided_slice %172 {offsets = [0, 15], sizes = [4, 1], strides = [1, 1]} : vector<4x18xf32> to vector<4x1xf32>
    %290 = vector.broadcast %289 : vector<4x1xf32> to vector<4x512xf32>
    %291 = arith.mulf %229, %290 : vector<4x512xf32>
    %292 = arith.addf %288, %291 : vector<4x512xf32>
    %293 = vector.extract_strided_slice %172 {offsets = [0, 16], sizes = [4, 1], strides = [1, 1]} : vector<4x18xf32> to vector<4x1xf32>
    %294 = vector.broadcast %293 : vector<4x1xf32> to vector<4x512xf32>
    %295 = arith.mulf %218, %294 : vector<4x512xf32>
    %296 = arith.addf %292, %295 : vector<4x512xf32>
    %297 = vector.extract_strided_slice %172 {offsets = [0, 17], sizes = [4, 1], strides = [1, 1]} : vector<4x18xf32> to vector<4x1xf32>
    %298 = vector.broadcast %297 : vector<4x1xf32> to vector<4x512xf32>
    %299 = arith.mulf %230, %298 : vector<4x512xf32>
    %300 = arith.addf %296, %299 : vector<4x512xf32>
    %301 = vector.extract_strided_slice %173 {offsets = [0, 0], sizes = [4, 4], strides = [1, 1]} : vector<4x8xf32> to vector<4x4xf32>
    %cst_66 = arith.constant dense<0.000000e+00> : vector<4x512xf32>
    %302 = tpu.matmul %301, %265, %cst_66 {dimension_numbers = #tpu.dot_dimension_numbers<[1], [0], [0], [1], [0, 0, 1, 1], [], []>} : vector<4x4xf32>, vector<4x512xf32>, vector<4x512xf32> -> vector<4x512xf32>
    %303 = vector.extract_strided_slice %173 {offsets = [0, 4], sizes = [4, 4], strides = [1, 1]} : vector<4x8xf32> to vector<4x4xf32>
    %cst_67 = arith.constant dense<0.000000e+00> : vector<4x512xf32>
    %304 = tpu.matmul %303, %300, %cst_67 {dimension_numbers = #tpu.dot_dimension_numbers<[1], [0], [0], [1], [0, 0, 1, 1], [], []>} : vector<4x4xf32>, vector<4x512xf32>, vector<4x512xf32> -> vector<4x512xf32>
    %305 = arith.addf %302, %304 : vector<4x512xf32>
    %cst_68 = arith.constant dense<0.000000e+00> : vector<1x512xf32>
    %306 = tpu.matmul %174, %202, %cst_68 {dimension_numbers = #tpu.dot_dimension_numbers<[1], [0], [0], [1], [0, 0, 1, 1], [], []>} : vector<1x4xf32>, vector<4x512xf32>, vector<1x512xf32> -> vector<1x512xf32>
    %cst_69 = arith.constant dense<0.000000e+00> : vector<1xf32>
    %307 = vector.multi_reduction <add>, %306, %cst_69 [1] : vector<1x512xf32> to vector<1xf32>
    %308 = vector.shape_cast %307 : vector<1xf32> to vector<1x1xf32>
    %cst_70 = arith.constant 5.120000e+02 : f32
    %309 = vector.broadcast %cst_70 : f32 to vector<1x1xf32>
    %310 = arith.divf %308, %309 : vector<1x1xf32>
    %311 = vector.broadcast %310 : vector<1x1xf32> to vector<1x512xf32>
    %312 = arith.subf %306, %311 : vector<1x512xf32>
    %313 = arith.mulf %312, %312 : vector<1x512xf32>
    %cst_71 = arith.constant dense<0.000000e+00> : vector<1xf32>
    %314 = vector.multi_reduction <add>, %313, %cst_71 [1] : vector<1x512xf32> to vector<1xf32>
    %315 = vector.shape_cast %314 : vector<1xf32> to vector<1x1xf32>
    %cst_72 = arith.constant 5.120000e+02 : f32
    %316 = vector.broadcast %cst_72 : f32 to vector<1x1xf32>
    %317 = arith.divf %315, %316 : vector<1x1xf32>
    %318 = vector.broadcast %310 : vector<1x1xf32> to vector<1x512xf32>
    %319 = arith.subf %306, %318 : vector<1x512xf32>
    %cst_73 = arith.constant 9.99999974E-6 : f32
    %320 = vector.broadcast %cst_73 : f32 to vector<1x1xf32>
    %321 = arith.addf %317, %320 : vector<1x1xf32>
    %322 = math.rsqrt %321 : vector<1x1xf32>
    %323 = vector.broadcast %322 : vector<1x1xf32> to vector<1x512xf32>
    %324 = arith.mulf %319, %323 : vector<1x512xf32>
    %325 = vector.extract_strided_slice %175 {offsets = [0, 0], sizes = [1, 1], strides = [1, 1]} : vector<1x2xf32> to vector<1x1xf32>
    %326 = vector.broadcast %325 : vector<1x1xf32> to vector<1x512xf32>
    %327 = arith.mulf %324, %326 : vector<1x512xf32>
    %328 = vector.extract_strided_slice %175 {offsets = [0, 1], sizes = [1, 1], strides = [1, 1]} : vector<1x2xf32> to vector<1x1xf32>
    %329 = vector.broadcast %328 : vector<1x1xf32> to vector<1x512xf32>
    %330 = arith.addf %327, %329 : vector<1x512xf32>
    %cst_74 = arith.constant 0.000000e+00 : f32
    %331 = vector.broadcast %cst_74 : f32 to vector<1x512xf32>
    %332 = arith.maximumf %330, %331 : vector<1x512xf32>
    %c0_75 = arith.constant 0 : index
    %c0_76 = arith.constant 0 : index
    %333 = vector.load %arg13[%c0_75, %c0_76] : memref<4x512xf32, #tpu.memory_space<vmem>>, vector<4x512xf32>
    tpu.vector_store %arg13[%c0_75, %c0_76], %305 {strides = array<i32>} : memref<4x512xf32, #tpu.memory_space<vmem>>, vector<4x512xf32>,
    %c0_77 = arith.constant 0 : index
    %c0_78 = arith.constant 0 : index
    %334 = vector.load %arg14[%c0_77, %c0_78] : memref<1x512xf32, #tpu.memory_space<vmem>>, vector<1x512xf32>
    tpu.vector_store %arg14[%c0_77, %c0_78], %332 {strides = array<i32>} : memref<1x512xf32, #tpu.memory_space<vmem>>, vector<1x512xf32>,
    return
  }
}

module attributes {stable_mosaic.version = 11 : i64} {
  func.func @_post_pre_kernel(%arg0: memref<4x512xf32, #tpu.memory_space<vmem>>, %arg1: memref<1x512xf32, #tpu.memory_space<vmem>>, %arg2: memref<1x512xf32, #tpu.memory_space<vmem>>, %arg3: memref<16x5xf32, #tpu.memory_space<vmem>>, %arg4: memref<16x2xf32, #tpu.memory_space<vmem>>, %arg5: memref<4x16xf32, #tpu.memory_space<vmem>>, %arg6: memref<4x2xf32, #tpu.memory_space<vmem>>, %arg7: memref<4x18xf32, #tpu.memory_space<vmem>>, %arg8: memref<4x8xf32, #tpu.memory_space<vmem>>, %arg9: memref<1x4xf32, #tpu.memory_space<vmem>>, %arg10: memref<1x2xf32, #tpu.memory_space<vmem>>, %arg11: memref<4x512xf32, #tpu.memory_space<vmem>>, %arg12: memref<1x512xf32, #tpu.memory_space<vmem>>) attributes {dimension_semantics = [], scalar_prefetch = 0 : i64, scratch_operands = 0 : i64, tpu.core_type = #tpu.core_type<tc>} {
    %0 = tpu.iota {dimensions = array<i32: 1>} : vector<1x512xi32>
    %c15_i32 = arith.constant 15 : i32
    %1 = vector.broadcast %c15_i32 : i32 to vector<1x512xi32>
    %2 = arith.andi %0, %1 : vector<1x512xi32>
    %c4_i32 = arith.constant 4 : i32
    %3 = vector.broadcast %c4_i32 : i32 to vector<1x512xi32>
    %4 = arith.shrsi %0, %3 : vector<1x512xi32>
    %c15_i32_0 = arith.constant 15 : i32
    %5 = vector.broadcast %c15_i32_0 : i32 to vector<1x512xi32>
    %6 = arith.andi %4, %5 : vector<1x512xi32>
    %c0 = arith.constant 0 : index
    %c0_1 = arith.constant 0 : index
    %7 = vector.load %arg0[%c0, %c0_1] : memref<4x512xf32, #tpu.memory_space<vmem>>, vector<4x512xf32>
    %c0_2 = arith.constant 0 : index
    %c0_3 = arith.constant 0 : index
    %8 = vector.load %arg1[%c0_2, %c0_3] : memref<1x512xf32, #tpu.memory_space<vmem>>, vector<1x512xf32>
    %c0_4 = arith.constant 0 : index
    %c0_5 = arith.constant 0 : index
    %9 = vector.load %arg2[%c0_4, %c0_5] : memref<1x512xf32, #tpu.memory_space<vmem>>, vector<1x512xf32>
    %10 = arith.addf %8, %9 : vector<1x512xf32>
    %c0_6 = arith.constant 0 : index
    %c0_7 = arith.constant 0 : index
    %11 = vector.load %arg3[%c0_6, %c0_7] : memref<16x5xf32, #tpu.memory_space<vmem>>, vector<16x5xf32>
    %c0_8 = arith.constant 0 : index
    %c0_9 = arith.constant 0 : index
    %12 = vector.load %arg4[%c0_8, %c0_9] : memref<16x2xf32, #tpu.memory_space<vmem>>, vector<16x2xf32>
    %13 = vector.extract_strided_slice %11 {offsets = [0, 0], sizes = [16, 4], strides = [1, 1]} : vector<16x5xf32> to vector<16x4xf32>
    %cst = arith.constant dense<0.000000e+00> : vector<16x512xf32>
    %14 = tpu.matmul %13, %7, %cst {dimension_numbers = #tpu.dot_dimension_numbers<[1], [0], [0], [1], [0, 0, 1, 1], [], []>} : vector<16x4xf32>, vector<4x512xf32>, vector<16x512xf32> -> vector<16x512xf32>
    %15 = vector.extract_strided_slice %11 {offsets = [0, 4], sizes = [16, 1], strides = [1, 1]} : vector<16x5xf32> to vector<16x1xf32>
    %cst_10 = arith.constant dense<0.000000e+00> : vector<16x512xf32>
    %16 = tpu.matmul %15, %10, %cst_10 {dimension_numbers = #tpu.dot_dimension_numbers<[1], [0], [0], [1], [0, 0, 1, 1], [], []>} : vector<16x1xf32>, vector<1x512xf32>, vector<16x512xf32> -> vector<16x512xf32>
    %17 = arith.addf %14, %16 : vector<16x512xf32>
    %cst_11 = arith.constant dense<0.000000e+00> : vector<16xf32>
    %18 = vector.multi_reduction <add>, %17, %cst_11 [1] : vector<16x512xf32> to vector<16xf32>
    %19 = vector.shape_cast %18 : vector<16xf32> to vector<16x1xf32>
    %cst_12 = arith.constant 5.120000e+02 : f32
    %20 = vector.broadcast %cst_12 : f32 to vector<16x1xf32>
    %21 = arith.divf %19, %20 : vector<16x1xf32>
    %22 = vector.broadcast %21 : vector<16x1xf32> to vector<16x512xf32>
    %23 = arith.subf %17, %22 : vector<16x512xf32>
    %24 = arith.mulf %23, %23 : vector<16x512xf32>
    %cst_13 = arith.constant dense<0.000000e+00> : vector<16xf32>
    %25 = vector.multi_reduction <add>, %24, %cst_13 [1] : vector<16x512xf32> to vector<16xf32>
    %26 = vector.shape_cast %25 : vector<16xf32> to vector<16x1xf32>
    %cst_14 = arith.constant 5.120000e+02 : f32
    %27 = vector.broadcast %cst_14 : f32 to vector<16x1xf32>
    %28 = arith.divf %26, %27 : vector<16x1xf32>
    %29 = vector.broadcast %21 : vector<16x1xf32> to vector<16x512xf32>
    %30 = arith.subf %17, %29 : vector<16x512xf32>
    %cst_15 = arith.constant 9.99999974E-6 : f32
    %31 = vector.broadcast %cst_15 : f32 to vector<16x1xf32>
    %32 = arith.addf %28, %31 : vector<16x1xf32>
    %33 = math.rsqrt %32 : vector<16x1xf32>
    %34 = vector.broadcast %33 : vector<16x1xf32> to vector<16x512xf32>
    %35 = arith.mulf %30, %34 : vector<16x512xf32>
    %36 = vector.extract_strided_slice %12 {offsets = [0, 0], sizes = [16, 1], strides = [1, 1]} : vector<16x2xf32> to vector<16x1xf32>
    %37 = vector.broadcast %36 : vector<16x1xf32> to vector<16x512xf32>
    %38 = arith.mulf %35, %37 : vector<16x512xf32>
    %39 = vector.extract_strided_slice %12 {offsets = [0, 1], sizes = [16, 1], strides = [1, 1]} : vector<16x2xf32> to vector<16x1xf32>
    %40 = vector.broadcast %39 : vector<16x1xf32> to vector<16x512xf32>
    %41 = arith.addf %38, %40 : vector<16x512xf32>
    %cst_16 = arith.constant 0.000000e+00 : f32
    %42 = vector.broadcast %cst_16 : f32 to vector<16x512xf32>
    %43 = arith.maximumf %41, %42 : vector<16x512xf32>
    %c0_17 = arith.constant 0 : index
    %c0_18 = arith.constant 0 : index
    %44 = vector.load %arg5[%c0_17, %c0_18] : memref<4x16xf32, #tpu.memory_space<vmem>>, vector<4x16xf32>
    %c0_19 = arith.constant 0 : index
    %c0_20 = arith.constant 0 : index
    %45 = vector.load %arg6[%c0_19, %c0_20] : memref<4x2xf32, #tpu.memory_space<vmem>>, vector<4x2xf32>
    %c0_21 = arith.constant 0 : index
    %c0_22 = arith.constant 0 : index
    %46 = vector.load %arg7[%c0_21, %c0_22] : memref<4x18xf32, #tpu.memory_space<vmem>>, vector<4x18xf32>
    %c0_23 = arith.constant 0 : index
    %c0_24 = arith.constant 0 : index
    %47 = vector.load %arg8[%c0_23, %c0_24] : memref<4x8xf32, #tpu.memory_space<vmem>>, vector<4x8xf32>
    %c0_25 = arith.constant 0 : index
    %c0_26 = arith.constant 0 : index
    %48 = vector.load %arg9[%c0_25, %c0_26] : memref<1x4xf32, #tpu.memory_space<vmem>>, vector<1x4xf32>
    %c0_27 = arith.constant 0 : index
    %c0_28 = arith.constant 0 : index
    %49 = vector.load %arg10[%c0_27, %c0_28] : memref<1x2xf32, #tpu.memory_space<vmem>>, vector<1x2xf32>
    %cst_29 = arith.constant dense<0.000000e+00> : vector<4x512xf32>
    %50 = tpu.matmul %44, %43, %cst_29 {dimension_numbers = #tpu.dot_dimension_numbers<[1], [0], [0], [1], [0, 0, 1, 1], [], []>} : vector<4x16xf32>, vector<16x512xf32>, vector<4x512xf32> -> vector<4x512xf32>
    %cst_30 = arith.constant dense<0.000000e+00> : vector<4xf32>
    %51 = vector.multi_reduction <add>, %50, %cst_30 [1] : vector<4x512xf32> to vector<4xf32>
    %52 = vector.shape_cast %51 : vector<4xf32> to vector<4x1xf32>
    %cst_31 = arith.constant 5.120000e+02 : f32
    %53 = vector.broadcast %cst_31 : f32 to vector<4x1xf32>
    %54 = arith.divf %52, %53 : vector<4x1xf32>
    %55 = vector.broadcast %54 : vector<4x1xf32> to vector<4x512xf32>
    %56 = arith.subf %50, %55 : vector<4x512xf32>
    %57 = arith.mulf %56, %56 : vector<4x512xf32>
    %cst_32 = arith.constant dense<0.000000e+00> : vector<4xf32>
    %58 = vector.multi_reduction <add>, %57, %cst_32 [1] : vector<4x512xf32> to vector<4xf32>
    %59 = vector.shape_cast %58 : vector<4xf32> to vector<4x1xf32>
    %cst_33 = arith.constant 5.120000e+02 : f32
    %60 = vector.broadcast %cst_33 : f32 to vector<4x1xf32>
    %61 = arith.divf %59, %60 : vector<4x1xf32>
    %62 = vector.broadcast %54 : vector<4x1xf32> to vector<4x512xf32>
    %63 = arith.subf %50, %62 : vector<4x512xf32>
    %cst_34 = arith.constant 9.99999974E-6 : f32
    %64 = vector.broadcast %cst_34 : f32 to vector<4x1xf32>
    %65 = arith.addf %61, %64 : vector<4x1xf32>
    %66 = math.rsqrt %65 : vector<4x1xf32>
    %67 = vector.broadcast %66 : vector<4x1xf32> to vector<4x512xf32>
    %68 = arith.mulf %63, %67 : vector<4x512xf32>
    %69 = vector.extract_strided_slice %45 {offsets = [0, 0], sizes = [4, 1], strides = [1, 1]} : vector<4x2xf32> to vector<4x1xf32>
    %70 = vector.broadcast %69 : vector<4x1xf32> to vector<4x512xf32>
    %71 = arith.mulf %68, %70 : vector<4x512xf32>
    %72 = vector.extract_strided_slice %45 {offsets = [0, 1], sizes = [4, 1], strides = [1, 1]} : vector<4x2xf32> to vector<4x1xf32>
    %73 = vector.broadcast %72 : vector<4x1xf32> to vector<4x512xf32>
    %74 = arith.addf %71, %73 : vector<4x512xf32>
    %cst_35 = arith.constant 0.000000e+00 : f32
    %75 = vector.broadcast %cst_35 : f32 to vector<4x512xf32>
    %76 = arith.maximumf %74, %75 : vector<4x512xf32>
    %77 = vector.shape_cast %2 : vector<1x512xi32> to vector<1x512xi32>
    %78 = vector.broadcast %77 : vector<1x512xi32> to vector<4x512xi32>
    %79 = vector.shape_cast %6 : vector<1x512xi32> to vector<1x512xi32>
    %80 = vector.broadcast %79 : vector<1x512xi32> to vector<4x512xi32>
    %c0_i32 = arith.constant 0 : i32
    %81 = vector.broadcast %c0_i32 : i32 to vector<4x512xi32>
    %82 = arith.cmpi eq, %78, %81 : vector<4x512xi32>
    %c15_i32_36 = arith.constant 15 : i32
    %83 = vector.broadcast %c15_i32_36 : i32 to vector<4x512xi32>
    %84 = arith.cmpi eq, %78, %83 : vector<4x512xi32>
    %c0_i32_37 = arith.constant 0 : i32
    %85 = vector.broadcast %c0_i32_37 : i32 to vector<4x512xi32>
    %86 = arith.cmpi eq, %80, %85 : vector<4x512xi32>
    %c15_i32_38 = arith.constant 15 : i32
    %87 = vector.broadcast %c15_i32_38 : i32 to vector<4x512xi32>
    %88 = arith.cmpi eq, %80, %87 : vector<4x512xi32>
    %c16_i32 = arith.constant 16 : i32
    %89 = tpu.dynamic_rotate %76 by %c16_i32 dim 1 : vector<4x512xf32>, i32 -> vector<4x512xf32>
    %c496_i32 = arith.constant 496 : i32
    %90 = tpu.dynamic_rotate %76 by %c496_i32 dim 1 : vector<4x512xf32>, i32 -> vector<4x512xf32>
    %91 = arith.select %86, %90, %89 : vector<4x512xi1>, vector<4x512xf32>
    %92 = arith.select %88, %89, %90 : vector<4x512xi1>, vector<4x512xf32>
    %c1_i32 = arith.constant 1 : i32
    %93 = tpu.dynamic_rotate %91 by %c1_i32 dim 1 : vector<4x512xf32>, i32 -> vector<4x512xf32>
    %c511_i32 = arith.constant 511 : i32
    %94 = tpu.dynamic_rotate %91 by %c511_i32 dim 1 : vector<4x512xf32>, i32 -> vector<4x512xf32>
    %95 = arith.select %82, %94, %93 : vector<4x512xi1>, vector<4x512xf32>
    %96 = arith.select %84, %93, %94 : vector<4x512xi1>, vector<4x512xf32>
    %c1_i32_39 = arith.constant 1 : i32
    %97 = tpu.dynamic_rotate %76 by %c1_i32_39 dim 1 : vector<4x512xf32>, i32 -> vector<4x512xf32>
    %c511_i32_40 = arith.constant 511 : i32
    %98 = tpu.dynamic_rotate %76 by %c511_i32_40 dim 1 : vector<4x512xf32>, i32 -> vector<4x512xf32>
    %99 = arith.select %82, %98, %97 : vector<4x512xi1>, vector<4x512xf32>
    %100 = arith.select %84, %97, %98 : vector<4x512xi1>, vector<4x512xf32>
    %c1_i32_41 = arith.constant 1 : i32
    %101 = tpu.dynamic_rotate %92 by %c1_i32_41 dim 1 : vector<4x512xf32>, i32 -> vector<4x512xf32>
    %c511_i32_42 = arith.constant 511 : i32
    %102 = tpu.dynamic_rotate %92 by %c511_i32_42 dim 1 : vector<4x512xf32>, i32 -> vector<4x512xf32>
    %103 = arith.select %82, %102, %101 : vector<4x512xi1>, vector<4x512xf32>
    %104 = arith.select %84, %101, %102 : vector<4x512xi1>, vector<4x512xf32>
    %105 = vector.extract_strided_slice %46 {offsets = [0, 0], sizes = [4, 1], strides = [1, 1]} : vector<4x18xf32> to vector<4x1xf32>
    %106 = vector.broadcast %105 : vector<4x1xf32> to vector<4x512xf32>
    %107 = arith.mulf %95, %106 : vector<4x512xf32>
    %108 = vector.extract_strided_slice %46 {offsets = [0, 1], sizes = [4, 1], strides = [1, 1]} : vector<4x18xf32> to vector<4x1xf32>
    %109 = vector.broadcast %108 : vector<4x1xf32> to vector<4x512xf32>
    %110 = arith.mulf %91, %109 : vector<4x512xf32>
    %111 = arith.addf %107, %110 : vector<4x512xf32>
    %112 = vector.extract_strided_slice %46 {offsets = [0, 2], sizes = [4, 1], strides = [1, 1]} : vector<4x18xf32> to vector<4x1xf32>
    %113 = vector.broadcast %112 : vector<4x1xf32> to vector<4x512xf32>
    %114 = arith.mulf %96, %113 : vector<4x512xf32>
    %115 = arith.addf %111, %114 : vector<4x512xf32>
    %116 = vector.extract_strided_slice %46 {offsets = [0, 3], sizes = [4, 1], strides = [1, 1]} : vector<4x18xf32> to vector<4x1xf32>
    %117 = vector.broadcast %116 : vector<4x1xf32> to vector<4x512xf32>
    %118 = arith.mulf %99, %117 : vector<4x512xf32>
    %119 = arith.addf %115, %118 : vector<4x512xf32>
    %120 = vector.extract_strided_slice %46 {offsets = [0, 4], sizes = [4, 1], strides = [1, 1]} : vector<4x18xf32> to vector<4x1xf32>
    %121 = vector.broadcast %120 : vector<4x1xf32> to vector<4x512xf32>
    %122 = arith.mulf %76, %121 : vector<4x512xf32>
    %123 = arith.addf %119, %122 : vector<4x512xf32>
    %124 = vector.extract_strided_slice %46 {offsets = [0, 5], sizes = [4, 1], strides = [1, 1]} : vector<4x18xf32> to vector<4x1xf32>
    %125 = vector.broadcast %124 : vector<4x1xf32> to vector<4x512xf32>
    %126 = arith.mulf %100, %125 : vector<4x512xf32>
    %127 = arith.addf %123, %126 : vector<4x512xf32>
    %128 = vector.extract_strided_slice %46 {offsets = [0, 6], sizes = [4, 1], strides = [1, 1]} : vector<4x18xf32> to vector<4x1xf32>
    %129 = vector.broadcast %128 : vector<4x1xf32> to vector<4x512xf32>
    %130 = arith.mulf %103, %129 : vector<4x512xf32>
    %131 = arith.addf %127, %130 : vector<4x512xf32>
    %132 = vector.extract_strided_slice %46 {offsets = [0, 7], sizes = [4, 1], strides = [1, 1]} : vector<4x18xf32> to vector<4x1xf32>
    %133 = vector.broadcast %132 : vector<4x1xf32> to vector<4x512xf32>
    %134 = arith.mulf %92, %133 : vector<4x512xf32>
    %135 = arith.addf %131, %134 : vector<4x512xf32>
    %136 = vector.extract_strided_slice %46 {offsets = [0, 8], sizes = [4, 1], strides = [1, 1]} : vector<4x18xf32> to vector<4x1xf32>
    %137 = vector.broadcast %136 : vector<4x1xf32> to vector<4x512xf32>
    %138 = arith.mulf %104, %137 : vector<4x512xf32>
    %139 = arith.addf %135, %138 : vector<4x512xf32>
    %140 = vector.extract_strided_slice %46 {offsets = [0, 9], sizes = [4, 1], strides = [1, 1]} : vector<4x18xf32> to vector<4x1xf32>
    %141 = vector.broadcast %140 : vector<4x1xf32> to vector<4x512xf32>
    %142 = arith.mulf %95, %141 : vector<4x512xf32>
    %143 = vector.extract_strided_slice %46 {offsets = [0, 10], sizes = [4, 1], strides = [1, 1]} : vector<4x18xf32> to vector<4x1xf32>
    %144 = vector.broadcast %143 : vector<4x1xf32> to vector<4x512xf32>
    %145 = arith.mulf %91, %144 : vector<4x512xf32>
    %146 = arith.addf %142, %145 : vector<4x512xf32>
    %147 = vector.extract_strided_slice %46 {offsets = [0, 11], sizes = [4, 1], strides = [1, 1]} : vector<4x18xf32> to vector<4x1xf32>
    %148 = vector.broadcast %147 : vector<4x1xf32> to vector<4x512xf32>
    %149 = arith.mulf %96, %148 : vector<4x512xf32>
    %150 = arith.addf %146, %149 : vector<4x512xf32>
    %151 = vector.extract_strided_slice %46 {offsets = [0, 12], sizes = [4, 1], strides = [1, 1]} : vector<4x18xf32> to vector<4x1xf32>
    %152 = vector.broadcast %151 : vector<4x1xf32> to vector<4x512xf32>
    %153 = arith.mulf %99, %152 : vector<4x512xf32>
    %154 = arith.addf %150, %153 : vector<4x512xf32>
    %155 = vector.extract_strided_slice %46 {offsets = [0, 13], sizes = [4, 1], strides = [1, 1]} : vector<4x18xf32> to vector<4x1xf32>
    %156 = vector.broadcast %155 : vector<4x1xf32> to vector<4x512xf32>
    %157 = arith.mulf %76, %156 : vector<4x512xf32>
    %158 = arith.addf %154, %157 : vector<4x512xf32>
    %159 = vector.extract_strided_slice %46 {offsets = [0, 14], sizes = [4, 1], strides = [1, 1]} : vector<4x18xf32> to vector<4x1xf32>
    %160 = vector.broadcast %159 : vector<4x1xf32> to vector<4x512xf32>
    %161 = arith.mulf %100, %160 : vector<4x512xf32>
    %162 = arith.addf %158, %161 : vector<4x512xf32>
    %163 = vector.extract_strided_slice %46 {offsets = [0, 15], sizes = [4, 1], strides = [1, 1]} : vector<4x18xf32> to vector<4x1xf32>
    %164 = vector.broadcast %163 : vector<4x1xf32> to vector<4x512xf32>
    %165 = arith.mulf %103, %164 : vector<4x512xf32>
    %166 = arith.addf %162, %165 : vector<4x512xf32>
    %167 = vector.extract_strided_slice %46 {offsets = [0, 16], sizes = [4, 1], strides = [1, 1]} : vector<4x18xf32> to vector<4x1xf32>
    %168 = vector.broadcast %167 : vector<4x1xf32> to vector<4x512xf32>
    %169 = arith.mulf %92, %168 : vector<4x512xf32>
    %170 = arith.addf %166, %169 : vector<4x512xf32>
    %171 = vector.extract_strided_slice %46 {offsets = [0, 17], sizes = [4, 1], strides = [1, 1]} : vector<4x18xf32> to vector<4x1xf32>
    %172 = vector.broadcast %171 : vector<4x1xf32> to vector<4x512xf32>
    %173 = arith.mulf %104, %172 : vector<4x512xf32>
    %174 = arith.addf %170, %173 : vector<4x512xf32>
    %175 = vector.extract_strided_slice %47 {offsets = [0, 0], sizes = [4, 4], strides = [1, 1]} : vector<4x8xf32> to vector<4x4xf32>
    %cst_43 = arith.constant dense<0.000000e+00> : vector<4x512xf32>
    %176 = tpu.matmul %175, %139, %cst_43 {dimension_numbers = #tpu.dot_dimension_numbers<[1], [0], [0], [1], [0, 0, 1, 1], [], []>} : vector<4x4xf32>, vector<4x512xf32>, vector<4x512xf32> -> vector<4x512xf32>
    %177 = vector.extract_strided_slice %47 {offsets = [0, 4], sizes = [4, 4], strides = [1, 1]} : vector<4x8xf32> to vector<4x4xf32>
    %cst_44 = arith.constant dense<0.000000e+00> : vector<4x512xf32>
    %178 = tpu.matmul %177, %174, %cst_44 {dimension_numbers = #tpu.dot_dimension_numbers<[1], [0], [0], [1], [0, 0, 1, 1], [], []>} : vector<4x4xf32>, vector<4x512xf32>, vector<4x512xf32> -> vector<4x512xf32>
    %179 = arith.addf %176, %178 : vector<4x512xf32>
    %cst_45 = arith.constant dense<0.000000e+00> : vector<1x512xf32>
    %180 = tpu.matmul %48, %76, %cst_45 {dimension_numbers = #tpu.dot_dimension_numbers<[1], [0], [0], [1], [0, 0, 1, 1], [], []>} : vector<1x4xf32>, vector<4x512xf32>, vector<1x512xf32> -> vector<1x512xf32>
    %cst_46 = arith.constant dense<0.000000e+00> : vector<1xf32>
    %181 = vector.multi_reduction <add>, %180, %cst_46 [1] : vector<1x512xf32> to vector<1xf32>
    %182 = vector.shape_cast %181 : vector<1xf32> to vector<1x1xf32>
    %cst_47 = arith.constant 5.120000e+02 : f32
    %183 = vector.broadcast %cst_47 : f32 to vector<1x1xf32>
    %184 = arith.divf %182, %183 : vector<1x1xf32>
    %185 = vector.broadcast %184 : vector<1x1xf32> to vector<1x512xf32>
    %186 = arith.subf %180, %185 : vector<1x512xf32>
    %187 = arith.mulf %186, %186 : vector<1x512xf32>
    %cst_48 = arith.constant dense<0.000000e+00> : vector<1xf32>
    %188 = vector.multi_reduction <add>, %187, %cst_48 [1] : vector<1x512xf32> to vector<1xf32>
    %189 = vector.shape_cast %188 : vector<1xf32> to vector<1x1xf32>
    %cst_49 = arith.constant 5.120000e+02 : f32
    %190 = vector.broadcast %cst_49 : f32 to vector<1x1xf32>
    %191 = arith.divf %189, %190 : vector<1x1xf32>
    %192 = vector.broadcast %184 : vector<1x1xf32> to vector<1x512xf32>
    %193 = arith.subf %180, %192 : vector<1x512xf32>
    %cst_50 = arith.constant 9.99999974E-6 : f32
    %194 = vector.broadcast %cst_50 : f32 to vector<1x1xf32>
    %195 = arith.addf %191, %194 : vector<1x1xf32>
    %196 = math.rsqrt %195 : vector<1x1xf32>
    %197 = vector.broadcast %196 : vector<1x1xf32> to vector<1x512xf32>
    %198 = arith.mulf %193, %197 : vector<1x512xf32>
    %199 = vector.extract_strided_slice %49 {offsets = [0, 0], sizes = [1, 1], strides = [1, 1]} : vector<1x2xf32> to vector<1x1xf32>
    %200 = vector.broadcast %199 : vector<1x1xf32> to vector<1x512xf32>
    %201 = arith.mulf %198, %200 : vector<1x512xf32>
    %202 = vector.extract_strided_slice %49 {offsets = [0, 1], sizes = [1, 1], strides = [1, 1]} : vector<1x2xf32> to vector<1x1xf32>
    %203 = vector.broadcast %202 : vector<1x1xf32> to vector<1x512xf32>
    %204 = arith.addf %201, %203 : vector<1x512xf32>
    %cst_51 = arith.constant 0.000000e+00 : f32
    %205 = vector.broadcast %cst_51 : f32 to vector<1x512xf32>
    %206 = arith.maximumf %204, %205 : vector<1x512xf32>
    %c0_52 = arith.constant 0 : index
    %c0_53 = arith.constant 0 : index
    %207 = vector.load %arg11[%c0_52, %c0_53] : memref<4x512xf32, #tpu.memory_space<vmem>>, vector<4x512xf32>
    tpu.vector_store %arg11[%c0_52, %c0_53], %179 {strides = array<i32>} : memref<4x512xf32, #tpu.memory_space<vmem>>, vector<4x512xf32>,
    %c0_54 = arith.constant 0 : index
    %c0_55 = arith.constant 0 : index
    %208 = vector.load %arg12[%c0_54, %c0_55] : memref<1x512xf32, #tpu.memory_space<vmem>>, vector<1x512xf32>
    tpu.vector_store %arg12[%c0_54, %c0_55], %206 {strides = array<i32>} : memref<1x512xf32, #tpu.memory_space<vmem>>, vector<1x512xf32>,
    return
  }
}

module attributes {stable_mosaic.version = 11 : i64} {
  func.func @_post_pre_kernel(%arg0: memref<4x512xf32, #tpu.memory_space<vmem>>, %arg1: memref<1x512xf32, #tpu.memory_space<vmem>>, %arg2: memref<1x512xf32, #tpu.memory_space<vmem>>, %arg3: memref<16x512xf32, #tpu.memory_space<vmem>>, %arg4: memref<16x5xf32, #tpu.memory_space<vmem>>, %arg5: memref<16x2xf32, #tpu.memory_space<vmem>>, %arg6: memref<4x16xf32, #tpu.memory_space<vmem>>, %arg7: memref<4x2xf32, #tpu.memory_space<vmem>>, %arg8: memref<4x18xf32, #tpu.memory_space<vmem>>, %arg9: memref<4x8xf32, #tpu.memory_space<vmem>>, %arg10: memref<1x4xf32, #tpu.memory_space<vmem>>, %arg11: memref<1x2xf32, #tpu.memory_space<vmem>>, %arg12: memref<16x512xf32, #tpu.memory_space<vmem>>, %arg13: memref<4x512xf32, #tpu.memory_space<vmem>>, %arg14: memref<1x512xf32, #tpu.memory_space<vmem>>) attributes {dimension_semantics = [], scalar_prefetch = 0 : i64, scratch_operands = 0 : i64, tpu.core_type = #tpu.core_type<tc>} {
    %0 = tpu.iota {dimensions = array<i32: 1>} : vector<1x512xi32>
    %c15_i32 = arith.constant 15 : i32
    %1 = vector.broadcast %c15_i32 : i32 to vector<1x512xi32>
    %2 = arith.andi %0, %1 : vector<1x512xi32>
    %c4_i32 = arith.constant 4 : i32
    %3 = vector.broadcast %c4_i32 : i32 to vector<1x512xi32>
    %4 = arith.shrsi %0, %3 : vector<1x512xi32>
    %c15_i32_0 = arith.constant 15 : i32
    %5 = vector.broadcast %c15_i32_0 : i32 to vector<1x512xi32>
    %6 = arith.andi %4, %5 : vector<1x512xi32>
    %c0 = arith.constant 0 : index
    %c0_1 = arith.constant 0 : index
    %7 = vector.load %arg0[%c0, %c0_1] : memref<4x512xf32, #tpu.memory_space<vmem>>, vector<4x512xf32>
    %c0_2 = arith.constant 0 : index
    %c0_3 = arith.constant 0 : index
    %8 = vector.load %arg1[%c0_2, %c0_3] : memref<1x512xf32, #tpu.memory_space<vmem>>, vector<1x512xf32>
    %c0_4 = arith.constant 0 : index
    %c0_5 = arith.constant 0 : index
    %9 = vector.load %arg2[%c0_4, %c0_5] : memref<1x512xf32, #tpu.memory_space<vmem>>, vector<1x512xf32>
    %10 = arith.addf %8, %9 : vector<1x512xf32>
    %c0_6 = arith.constant 0 : index
    %c0_7 = arith.constant 0 : index
    %11 = vector.load %arg4[%c0_6, %c0_7] : memref<16x5xf32, #tpu.memory_space<vmem>>, vector<16x5xf32>
    %c0_8 = arith.constant 0 : index
    %c0_9 = arith.constant 0 : index
    %12 = vector.load %arg5[%c0_8, %c0_9] : memref<16x2xf32, #tpu.memory_space<vmem>>, vector<16x2xf32>
    %13 = vector.extract_strided_slice %11 {offsets = [0, 0], sizes = [16, 4], strides = [1, 1]} : vector<16x5xf32> to vector<16x4xf32>
    %cst = arith.constant dense<0.000000e+00> : vector<16x512xf32>
    %14 = tpu.matmul %13, %7, %cst {dimension_numbers = #tpu.dot_dimension_numbers<[1], [0], [0], [1], [0, 0, 1, 1], [], []>} : vector<16x4xf32>, vector<4x512xf32>, vector<16x512xf32> -> vector<16x512xf32>
    %15 = vector.extract_strided_slice %11 {offsets = [0, 4], sizes = [16, 1], strides = [1, 1]} : vector<16x5xf32> to vector<16x1xf32>
    %cst_10 = arith.constant dense<0.000000e+00> : vector<16x512xf32>
    %16 = tpu.matmul %15, %10, %cst_10 {dimension_numbers = #tpu.dot_dimension_numbers<[1], [0], [0], [1], [0, 0, 1, 1], [], []>} : vector<16x1xf32>, vector<1x512xf32>, vector<16x512xf32> -> vector<16x512xf32>
    %17 = arith.addf %14, %16 : vector<16x512xf32>
    %cst_11 = arith.constant dense<0.000000e+00> : vector<16xf32>
    %18 = vector.multi_reduction <add>, %17, %cst_11 [1] : vector<16x512xf32> to vector<16xf32>
    %19 = vector.shape_cast %18 : vector<16xf32> to vector<16x1xf32>
    %cst_12 = arith.constant 5.120000e+02 : f32
    %20 = vector.broadcast %cst_12 : f32 to vector<16x1xf32>
    %21 = arith.divf %19, %20 : vector<16x1xf32>
    %22 = vector.broadcast %21 : vector<16x1xf32> to vector<16x512xf32>
    %23 = arith.subf %17, %22 : vector<16x512xf32>
    %24 = arith.mulf %23, %23 : vector<16x512xf32>
    %cst_13 = arith.constant dense<0.000000e+00> : vector<16xf32>
    %25 = vector.multi_reduction <add>, %24, %cst_13 [1] : vector<16x512xf32> to vector<16xf32>
    %26 = vector.shape_cast %25 : vector<16xf32> to vector<16x1xf32>
    %cst_14 = arith.constant 5.120000e+02 : f32
    %27 = vector.broadcast %cst_14 : f32 to vector<16x1xf32>
    %28 = arith.divf %26, %27 : vector<16x1xf32>
    %29 = vector.broadcast %21 : vector<16x1xf32> to vector<16x512xf32>
    %30 = arith.subf %17, %29 : vector<16x512xf32>
    %cst_15 = arith.constant 9.99999974E-6 : f32
    %31 = vector.broadcast %cst_15 : f32 to vector<16x1xf32>
    %32 = arith.addf %28, %31 : vector<16x1xf32>
    %33 = math.rsqrt %32 : vector<16x1xf32>
    %34 = vector.broadcast %33 : vector<16x1xf32> to vector<16x512xf32>
    %35 = arith.mulf %30, %34 : vector<16x512xf32>
    %36 = vector.extract_strided_slice %12 {offsets = [0, 0], sizes = [16, 1], strides = [1, 1]} : vector<16x2xf32> to vector<16x1xf32>
    %37 = vector.broadcast %36 : vector<16x1xf32> to vector<16x512xf32>
    %38 = arith.mulf %35, %37 : vector<16x512xf32>
    %39 = vector.extract_strided_slice %12 {offsets = [0, 1], sizes = [16, 1], strides = [1, 1]} : vector<16x2xf32> to vector<16x1xf32>
    %40 = vector.broadcast %39 : vector<16x1xf32> to vector<16x512xf32>
    %41 = arith.addf %38, %40 : vector<16x512xf32>
    %c0_16 = arith.constant 0 : index
    %c0_17 = arith.constant 0 : index
    %42 = vector.load %arg3[%c0_16, %c0_17] : memref<16x512xf32, #tpu.memory_space<vmem>>, vector<16x512xf32>
    %43 = arith.addf %41, %42 : vector<16x512xf32>
    %c0_18 = arith.constant 0 : index
    %c0_19 = arith.constant 0 : index
    %44 = vector.load %arg12[%c0_18, %c0_19] : memref<16x512xf32, #tpu.memory_space<vmem>>, vector<16x512xf32>
    tpu.vector_store %arg12[%c0_18, %c0_19], %43 {strides = array<i32>} : memref<16x512xf32, #tpu.memory_space<vmem>>, vector<16x512xf32>,
    %c0_20 = arith.constant 0 : index
    %c0_21 = arith.constant 0 : index
    %45 = vector.load %arg6[%c0_20, %c0_21] : memref<4x16xf32, #tpu.memory_space<vmem>>, vector<4x16xf32>
    %c0_22 = arith.constant 0 : index
    %c0_23 = arith.constant 0 : index
    %46 = vector.load %arg7[%c0_22, %c0_23] : memref<4x2xf32, #tpu.memory_space<vmem>>, vector<4x2xf32>
    %c0_24 = arith.constant 0 : index
    %c0_25 = arith.constant 0 : index
    %47 = vector.load %arg8[%c0_24, %c0_25] : memref<4x18xf32, #tpu.memory_space<vmem>>, vector<4x18xf32>
    %c0_26 = arith.constant 0 : index
    %c0_27 = arith.constant 0 : index
    %48 = vector.load %arg9[%c0_26, %c0_27] : memref<4x8xf32, #tpu.memory_space<vmem>>, vector<4x8xf32>
    %c0_28 = arith.constant 0 : index
    %c0_29 = arith.constant 0 : index
    %49 = vector.load %arg10[%c0_28, %c0_29] : memref<1x4xf32, #tpu.memory_space<vmem>>, vector<1x4xf32>
    %c0_30 = arith.constant 0 : index
    %c0_31 = arith.constant 0 : index
    %50 = vector.load %arg11[%c0_30, %c0_31] : memref<1x2xf32, #tpu.memory_space<vmem>>, vector<1x2xf32>
    %cst_32 = arith.constant dense<0.000000e+00> : vector<4x512xf32>
    %51 = tpu.matmul %45, %43, %cst_32 {dimension_numbers = #tpu.dot_dimension_numbers<[1], [0], [0], [1], [0, 0, 1, 1], [], []>} : vector<4x16xf32>, vector<16x512xf32>, vector<4x512xf32> -> vector<4x512xf32>
    %cst_33 = arith.constant dense<0.000000e+00> : vector<4xf32>
    %52 = vector.multi_reduction <add>, %51, %cst_33 [1] : vector<4x512xf32> to vector<4xf32>
    %53 = vector.shape_cast %52 : vector<4xf32> to vector<4x1xf32>
    %cst_34 = arith.constant 5.120000e+02 : f32
    %54 = vector.broadcast %cst_34 : f32 to vector<4x1xf32>
    %55 = arith.divf %53, %54 : vector<4x1xf32>
    %56 = vector.broadcast %55 : vector<4x1xf32> to vector<4x512xf32>
    %57 = arith.subf %51, %56 : vector<4x512xf32>
    %58 = arith.mulf %57, %57 : vector<4x512xf32>
    %cst_35 = arith.constant dense<0.000000e+00> : vector<4xf32>
    %59 = vector.multi_reduction <add>, %58, %cst_35 [1] : vector<4x512xf32> to vector<4xf32>
    %60 = vector.shape_cast %59 : vector<4xf32> to vector<4x1xf32>
    %cst_36 = arith.constant 5.120000e+02 : f32
    %61 = vector.broadcast %cst_36 : f32 to vector<4x1xf32>
    %62 = arith.divf %60, %61 : vector<4x1xf32>
    %63 = vector.broadcast %55 : vector<4x1xf32> to vector<4x512xf32>
    %64 = arith.subf %51, %63 : vector<4x512xf32>
    %cst_37 = arith.constant 9.99999974E-6 : f32
    %65 = vector.broadcast %cst_37 : f32 to vector<4x1xf32>
    %66 = arith.addf %62, %65 : vector<4x1xf32>
    %67 = math.rsqrt %66 : vector<4x1xf32>
    %68 = vector.broadcast %67 : vector<4x1xf32> to vector<4x512xf32>
    %69 = arith.mulf %64, %68 : vector<4x512xf32>
    %70 = vector.extract_strided_slice %46 {offsets = [0, 0], sizes = [4, 1], strides = [1, 1]} : vector<4x2xf32> to vector<4x1xf32>
    %71 = vector.broadcast %70 : vector<4x1xf32> to vector<4x512xf32>
    %72 = arith.mulf %69, %71 : vector<4x512xf32>
    %73 = vector.extract_strided_slice %46 {offsets = [0, 1], sizes = [4, 1], strides = [1, 1]} : vector<4x2xf32> to vector<4x1xf32>
    %74 = vector.broadcast %73 : vector<4x1xf32> to vector<4x512xf32>
    %75 = arith.addf %72, %74 : vector<4x512xf32>
    %cst_38 = arith.constant 0.000000e+00 : f32
    %76 = vector.broadcast %cst_38 : f32 to vector<4x512xf32>
    %77 = arith.maximumf %75, %76 : vector<4x512xf32>
    %78 = vector.shape_cast %2 : vector<1x512xi32> to vector<1x512xi32>
    %79 = vector.broadcast %78 : vector<1x512xi32> to vector<4x512xi32>
    %80 = vector.shape_cast %6 : vector<1x512xi32> to vector<1x512xi32>
    %81 = vector.broadcast %80 : vector<1x512xi32> to vector<4x512xi32>
    %c0_i32 = arith.constant 0 : i32
    %82 = vector.broadcast %c0_i32 : i32 to vector<4x512xi32>
    %83 = arith.cmpi eq, %79, %82 : vector<4x512xi32>
    %c15_i32_39 = arith.constant 15 : i32
    %84 = vector.broadcast %c15_i32_39 : i32 to vector<4x512xi32>
    %85 = arith.cmpi eq, %79, %84 : vector<4x512xi32>
    %c0_i32_40 = arith.constant 0 : i32
    %86 = vector.broadcast %c0_i32_40 : i32 to vector<4x512xi32>
    %87 = arith.cmpi eq, %81, %86 : vector<4x512xi32>
    %c15_i32_41 = arith.constant 15 : i32
    %88 = vector.broadcast %c15_i32_41 : i32 to vector<4x512xi32>
    %89 = arith.cmpi eq, %81, %88 : vector<4x512xi32>
    %c16_i32 = arith.constant 16 : i32
    %90 = tpu.dynamic_rotate %77 by %c16_i32 dim 1 : vector<4x512xf32>, i32 -> vector<4x512xf32>
    %c496_i32 = arith.constant 496 : i32
    %91 = tpu.dynamic_rotate %77 by %c496_i32 dim 1 : vector<4x512xf32>, i32 -> vector<4x512xf32>
    %92 = arith.select %87, %91, %90 : vector<4x512xi1>, vector<4x512xf32>
    %93 = arith.select %89, %90, %91 : vector<4x512xi1>, vector<4x512xf32>
    %c1_i32 = arith.constant 1 : i32
    %94 = tpu.dynamic_rotate %92 by %c1_i32 dim 1 : vector<4x512xf32>, i32 -> vector<4x512xf32>
    %c511_i32 = arith.constant 511 : i32
    %95 = tpu.dynamic_rotate %92 by %c511_i32 dim 1 : vector<4x512xf32>, i32 -> vector<4x512xf32>
    %96 = arith.select %83, %95, %94 : vector<4x512xi1>, vector<4x512xf32>
    %97 = arith.select %85, %94, %95 : vector<4x512xi1>, vector<4x512xf32>
    %c1_i32_42 = arith.constant 1 : i32
    %98 = tpu.dynamic_rotate %77 by %c1_i32_42 dim 1 : vector<4x512xf32>, i32 -> vector<4x512xf32>
    %c511_i32_43 = arith.constant 511 : i32
    %99 = tpu.dynamic_rotate %77 by %c511_i32_43 dim 1 : vector<4x512xf32>, i32 -> vector<4x512xf32>
    %100 = arith.select %83, %99, %98 : vector<4x512xi1>, vector<4x512xf32>
    %101 = arith.select %85, %98, %99 : vector<4x512xi1>, vector<4x512xf32>
    %c1_i32_44 = arith.constant 1 : i32
    %102 = tpu.dynamic_rotate %93 by %c1_i32_44 dim 1 : vector<4x512xf32>, i32 -> vector<4x512xf32>
    %c511_i32_45 = arith.constant 511 : i32
    %103 = tpu.dynamic_rotate %93 by %c511_i32_45 dim 1 : vector<4x512xf32>, i32 -> vector<4x512xf32>
    %104 = arith.select %83, %103, %102 : vector<4x512xi1>, vector<4x512xf32>
    %105 = arith.select %85, %102, %103 : vector<4x512xi1>, vector<4x512xf32>
    %106 = vector.extract_strided_slice %47 {offsets = [0, 0], sizes = [4, 1], strides = [1, 1]} : vector<4x18xf32> to vector<4x1xf32>
    %107 = vector.broadcast %106 : vector<4x1xf32> to vector<4x512xf32>
    %108 = arith.mulf %96, %107 : vector<4x512xf32>
    %109 = vector.extract_strided_slice %47 {offsets = [0, 1], sizes = [4, 1], strides = [1, 1]} : vector<4x18xf32> to vector<4x1xf32>
    %110 = vector.broadcast %109 : vector<4x1xf32> to vector<4x512xf32>
    %111 = arith.mulf %92, %110 : vector<4x512xf32>
    %112 = arith.addf %108, %111 : vector<4x512xf32>
    %113 = vector.extract_strided_slice %47 {offsets = [0, 2], sizes = [4, 1], strides = [1, 1]} : vector<4x18xf32> to vector<4x1xf32>
    %114 = vector.broadcast %113 : vector<4x1xf32> to vector<4x512xf32>
    %115 = arith.mulf %97, %114 : vector<4x512xf32>
    %116 = arith.addf %112, %115 : vector<4x512xf32>
    %117 = vector.extract_strided_slice %47 {offsets = [0, 3], sizes = [4, 1], strides = [1, 1]} : vector<4x18xf32> to vector<4x1xf32>
    %118 = vector.broadcast %117 : vector<4x1xf32> to vector<4x512xf32>
    %119 = arith.mulf %100, %118 : vector<4x512xf32>
    %120 = arith.addf %116, %119 : vector<4x512xf32>
    %121 = vector.extract_strided_slice %47 {offsets = [0, 4], sizes = [4, 1], strides = [1, 1]} : vector<4x18xf32> to vector<4x1xf32>
    %122 = vector.broadcast %121 : vector<4x1xf32> to vector<4x512xf32>
    %123 = arith.mulf %77, %122 : vector<4x512xf32>
    %124 = arith.addf %120, %123 : vector<4x512xf32>
    %125 = vector.extract_strided_slice %47 {offsets = [0, 5], sizes = [4, 1], strides = [1, 1]} : vector<4x18xf32> to vector<4x1xf32>
    %126 = vector.broadcast %125 : vector<4x1xf32> to vector<4x512xf32>
    %127 = arith.mulf %101, %126 : vector<4x512xf32>
    %128 = arith.addf %124, %127 : vector<4x512xf32>
    %129 = vector.extract_strided_slice %47 {offsets = [0, 6], sizes = [4, 1], strides = [1, 1]} : vector<4x18xf32> to vector<4x1xf32>
    %130 = vector.broadcast %129 : vector<4x1xf32> to vector<4x512xf32>
    %131 = arith.mulf %104, %130 : vector<4x512xf32>
    %132 = arith.addf %128, %131 : vector<4x512xf32>
    %133 = vector.extract_strided_slice %47 {offsets = [0, 7], sizes = [4, 1], strides = [1, 1]} : vector<4x18xf32> to vector<4x1xf32>
    %134 = vector.broadcast %133 : vector<4x1xf32> to vector<4x512xf32>
    %135 = arith.mulf %93, %134 : vector<4x512xf32>
    %136 = arith.addf %132, %135 : vector<4x512xf32>
    %137 = vector.extract_strided_slice %47 {offsets = [0, 8], sizes = [4, 1], strides = [1, 1]} : vector<4x18xf32> to vector<4x1xf32>
    %138 = vector.broadcast %137 : vector<4x1xf32> to vector<4x512xf32>
    %139 = arith.mulf %105, %138 : vector<4x512xf32>
    %140 = arith.addf %136, %139 : vector<4x512xf32>
    %141 = vector.extract_strided_slice %47 {offsets = [0, 9], sizes = [4, 1], strides = [1, 1]} : vector<4x18xf32> to vector<4x1xf32>
    %142 = vector.broadcast %141 : vector<4x1xf32> to vector<4x512xf32>
    %143 = arith.mulf %96, %142 : vector<4x512xf32>
    %144 = vector.extract_strided_slice %47 {offsets = [0, 10], sizes = [4, 1], strides = [1, 1]} : vector<4x18xf32> to vector<4x1xf32>
    %145 = vector.broadcast %144 : vector<4x1xf32> to vector<4x512xf32>
    %146 = arith.mulf %92, %145 : vector<4x512xf32>
    %147 = arith.addf %143, %146 : vector<4x512xf32>
    %148 = vector.extract_strided_slice %47 {offsets = [0, 11], sizes = [4, 1], strides = [1, 1]} : vector<4x18xf32> to vector<4x1xf32>
    %149 = vector.broadcast %148 : vector<4x1xf32> to vector<4x512xf32>
    %150 = arith.mulf %97, %149 : vector<4x512xf32>
    %151 = arith.addf %147, %150 : vector<4x512xf32>
    %152 = vector.extract_strided_slice %47 {offsets = [0, 12], sizes = [4, 1], strides = [1, 1]} : vector<4x18xf32> to vector<4x1xf32>
    %153 = vector.broadcast %152 : vector<4x1xf32> to vector<4x512xf32>
    %154 = arith.mulf %100, %153 : vector<4x512xf32>
    %155 = arith.addf %151, %154 : vector<4x512xf32>
    %156 = vector.extract_strided_slice %47 {offsets = [0, 13], sizes = [4, 1], strides = [1, 1]} : vector<4x18xf32> to vector<4x1xf32>
    %157 = vector.broadcast %156 : vector<4x1xf32> to vector<4x512xf32>
    %158 = arith.mulf %77, %157 : vector<4x512xf32>
    %159 = arith.addf %155, %158 : vector<4x512xf32>
    %160 = vector.extract_strided_slice %47 {offsets = [0, 14], sizes = [4, 1], strides = [1, 1]} : vector<4x18xf32> to vector<4x1xf32>
    %161 = vector.broadcast %160 : vector<4x1xf32> to vector<4x512xf32>
    %162 = arith.mulf %101, %161 : vector<4x512xf32>
    %163 = arith.addf %159, %162 : vector<4x512xf32>
    %164 = vector.extract_strided_slice %47 {offsets = [0, 15], sizes = [4, 1], strides = [1, 1]} : vector<4x18xf32> to vector<4x1xf32>
    %165 = vector.broadcast %164 : vector<4x1xf32> to vector<4x512xf32>
    %166 = arith.mulf %104, %165 : vector<4x512xf32>
    %167 = arith.addf %163, %166 : vector<4x512xf32>
    %168 = vector.extract_strided_slice %47 {offsets = [0, 16], sizes = [4, 1], strides = [1, 1]} : vector<4x18xf32> to vector<4x1xf32>
    %169 = vector.broadcast %168 : vector<4x1xf32> to vector<4x512xf32>
    %170 = arith.mulf %93, %169 : vector<4x512xf32>
    %171 = arith.addf %167, %170 : vector<4x512xf32>
    %172 = vector.extract_strided_slice %47 {offsets = [0, 17], sizes = [4, 1], strides = [1, 1]} : vector<4x18xf32> to vector<4x1xf32>
    %173 = vector.broadcast %172 : vector<4x1xf32> to vector<4x512xf32>
    %174 = arith.mulf %105, %173 : vector<4x512xf32>
    %175 = arith.addf %171, %174 : vector<4x512xf32>
    %176 = vector.extract_strided_slice %48 {offsets = [0, 0], sizes = [4, 4], strides = [1, 1]} : vector<4x8xf32> to vector<4x4xf32>
    %cst_46 = arith.constant dense<0.000000e+00> : vector<4x512xf32>
    %177 = tpu.matmul %176, %140, %cst_46 {dimension_numbers = #tpu.dot_dimension_numbers<[1], [0], [0], [1], [0, 0, 1, 1], [], []>} : vector<4x4xf32>, vector<4x512xf32>, vector<4x512xf32> -> vector<4x512xf32>
    %178 = vector.extract_strided_slice %48 {offsets = [0, 4], sizes = [4, 4], strides = [1, 1]} : vector<4x8xf32> to vector<4x4xf32>
    %cst_47 = arith.constant dense<0.000000e+00> : vector<4x512xf32>
    %179 = tpu.matmul %178, %175, %cst_47 {dimension_numbers = #tpu.dot_dimension_numbers<[1], [0], [0], [1], [0, 0, 1, 1], [], []>} : vector<4x4xf32>, vector<4x512xf32>, vector<4x512xf32> -> vector<4x512xf32>
    %180 = arith.addf %177, %179 : vector<4x512xf32>
    %cst_48 = arith.constant dense<0.000000e+00> : vector<1x512xf32>
    %181 = tpu.matmul %49, %77, %cst_48 {dimension_numbers = #tpu.dot_dimension_numbers<[1], [0], [0], [1], [0, 0, 1, 1], [], []>} : vector<1x4xf32>, vector<4x512xf32>, vector<1x512xf32> -> vector<1x512xf32>
    %cst_49 = arith.constant dense<0.000000e+00> : vector<1xf32>
    %182 = vector.multi_reduction <add>, %181, %cst_49 [1] : vector<1x512xf32> to vector<1xf32>
    %183 = vector.shape_cast %182 : vector<1xf32> to vector<1x1xf32>
    %cst_50 = arith.constant 5.120000e+02 : f32
    %184 = vector.broadcast %cst_50 : f32 to vector<1x1xf32>
    %185 = arith.divf %183, %184 : vector<1x1xf32>
    %186 = vector.broadcast %185 : vector<1x1xf32> to vector<1x512xf32>
    %187 = arith.subf %181, %186 : vector<1x512xf32>
    %188 = arith.mulf %187, %187 : vector<1x512xf32>
    %cst_51 = arith.constant dense<0.000000e+00> : vector<1xf32>
    %189 = vector.multi_reduction <add>, %188, %cst_51 [1] : vector<1x512xf32> to vector<1xf32>
    %190 = vector.shape_cast %189 : vector<1xf32> to vector<1x1xf32>
    %cst_52 = arith.constant 5.120000e+02 : f32
    %191 = vector.broadcast %cst_52 : f32 to vector<1x1xf32>
    %192 = arith.divf %190, %191 : vector<1x1xf32>
    %193 = vector.broadcast %185 : vector<1x1xf32> to vector<1x512xf32>
    %194 = arith.subf %181, %193 : vector<1x512xf32>
    %cst_53 = arith.constant 9.99999974E-6 : f32
    %195 = vector.broadcast %cst_53 : f32 to vector<1x1xf32>
    %196 = arith.addf %192, %195 : vector<1x1xf32>
    %197 = math.rsqrt %196 : vector<1x1xf32>
    %198 = vector.broadcast %197 : vector<1x1xf32> to vector<1x512xf32>
    %199 = arith.mulf %194, %198 : vector<1x512xf32>
    %200 = vector.extract_strided_slice %50 {offsets = [0, 0], sizes = [1, 1], strides = [1, 1]} : vector<1x2xf32> to vector<1x1xf32>
    %201 = vector.broadcast %200 : vector<1x1xf32> to vector<1x512xf32>
    %202 = arith.mulf %199, %201 : vector<1x512xf32>
    %203 = vector.extract_strided_slice %50 {offsets = [0, 1], sizes = [1, 1], strides = [1, 1]} : vector<1x2xf32> to vector<1x1xf32>
    %204 = vector.broadcast %203 : vector<1x1xf32> to vector<1x512xf32>
    %205 = arith.addf %202, %204 : vector<1x512xf32>
    %cst_54 = arith.constant 0.000000e+00 : f32
    %206 = vector.broadcast %cst_54 : f32 to vector<1x512xf32>
    %207 = arith.maximumf %205, %206 : vector<1x512xf32>
    %c0_55 = arith.constant 0 : index
    %c0_56 = arith.constant 0 : index
    %208 = vector.load %arg13[%c0_55, %c0_56] : memref<4x512xf32, #tpu.memory_space<vmem>>, vector<4x512xf32>
    tpu.vector_store %arg13[%c0_55, %c0_56], %180 {strides = array<i32>} : memref<4x512xf32, #tpu.memory_space<vmem>>, vector<4x512xf32>,
    %c0_57 = arith.constant 0 : index
    %c0_58 = arith.constant 0 : index
    %209 = vector.load %arg14[%c0_57, %c0_58] : memref<1x512xf32, #tpu.memory_space<vmem>>, vector<1x512xf32>
    tpu.vector_store %arg14[%c0_57, %c0_58], %207 {strides = array<i32>} : memref<1x512xf32, #tpu.memory_space<vmem>>, vector<1x512xf32>,
    return
  }
}

module attributes {stable_mosaic.version = 11 : i64} {
  func.func @_final_kernel(%arg0: memref<4x512xf32, #tpu.memory_space<vmem>>, %arg1: memref<1x512xf32, #tpu.memory_space<vmem>>, %arg2: memref<1x512xf32, #tpu.memory_space<vmem>>, %arg3: memref<16x512xf32, #tpu.memory_space<vmem>>, %arg4: memref<16x512xf32, #tpu.memory_space<vmem>>, %arg5: memref<16x5xf32, #tpu.memory_space<vmem>>, %arg6: memref<16x2xf32, #tpu.memory_space<vmem>>, %arg7: memref<16x512xf32, #tpu.memory_space<vmem>>) attributes {dimension_semantics = [], scalar_prefetch = 0 : i64, scratch_operands = 0 : i64, tpu.core_type = #tpu.core_type<tc>} {
    %c0 = arith.constant 0 : index
    %c0_0 = arith.constant 0 : index
    %0 = vector.load %arg0[%c0, %c0_0] : memref<4x512xf32, #tpu.memory_space<vmem>>, vector<4x512xf32>
    %c0_1 = arith.constant 0 : index
    %c0_2 = arith.constant 0 : index
    %1 = vector.load %arg1[%c0_1, %c0_2] : memref<1x512xf32, #tpu.memory_space<vmem>>, vector<1x512xf32>
    %c0_3 = arith.constant 0 : index
    %c0_4 = arith.constant 0 : index
    %2 = vector.load %arg2[%c0_3, %c0_4] : memref<1x512xf32, #tpu.memory_space<vmem>>, vector<1x512xf32>
    %3 = arith.addf %1, %2 : vector<1x512xf32>
    %c0_5 = arith.constant 0 : index
    %c0_6 = arith.constant 0 : index
    %4 = vector.load %arg5[%c0_5, %c0_6] : memref<16x5xf32, #tpu.memory_space<vmem>>, vector<16x5xf32>
    %c0_7 = arith.constant 0 : index
    %c0_8 = arith.constant 0 : index
    %5 = vector.load %arg6[%c0_7, %c0_8] : memref<16x2xf32, #tpu.memory_space<vmem>>, vector<16x2xf32>
    %6 = vector.extract_strided_slice %4 {offsets = [0, 0], sizes = [16, 4], strides = [1, 1]} : vector<16x5xf32> to vector<16x4xf32>
    %cst = arith.constant dense<0.000000e+00> : vector<16x512xf32>
    %7 = tpu.matmul %6, %0, %cst {dimension_numbers = #tpu.dot_dimension_numbers<[1], [0], [0], [1], [0, 0, 1, 1], [], []>} : vector<16x4xf32>, vector<4x512xf32>, vector<16x512xf32> -> vector<16x512xf32>
    %8 = vector.extract_strided_slice %4 {offsets = [0, 4], sizes = [16, 1], strides = [1, 1]} : vector<16x5xf32> to vector<16x1xf32>
    %cst_9 = arith.constant dense<0.000000e+00> : vector<16x512xf32>
    %9 = tpu.matmul %8, %3, %cst_9 {dimension_numbers = #tpu.dot_dimension_numbers<[1], [0], [0], [1], [0, 0, 1, 1], [], []>} : vector<16x1xf32>, vector<1x512xf32>, vector<16x512xf32> -> vector<16x512xf32>
    %10 = arith.addf %7, %9 : vector<16x512xf32>
    %cst_10 = arith.constant dense<0.000000e+00> : vector<16xf32>
    %11 = vector.multi_reduction <add>, %10, %cst_10 [1] : vector<16x512xf32> to vector<16xf32>
    %12 = vector.shape_cast %11 : vector<16xf32> to vector<16x1xf32>
    %cst_11 = arith.constant 5.120000e+02 : f32
    %13 = vector.broadcast %cst_11 : f32 to vector<16x1xf32>
    %14 = arith.divf %12, %13 : vector<16x1xf32>
    %15 = vector.broadcast %14 : vector<16x1xf32> to vector<16x512xf32>
    %16 = arith.subf %10, %15 : vector<16x512xf32>
    %17 = arith.mulf %16, %16 : vector<16x512xf32>
    %cst_12 = arith.constant dense<0.000000e+00> : vector<16xf32>
    %18 = vector.multi_reduction <add>, %17, %cst_12 [1] : vector<16x512xf32> to vector<16xf32>
    %19 = vector.shape_cast %18 : vector<16xf32> to vector<16x1xf32>
    %cst_13 = arith.constant 5.120000e+02 : f32
    %20 = vector.broadcast %cst_13 : f32 to vector<16x1xf32>
    %21 = arith.divf %19, %20 : vector<16x1xf32>
    %22 = vector.broadcast %14 : vector<16x1xf32> to vector<16x512xf32>
    %23 = arith.subf %10, %22 : vector<16x512xf32>
    %cst_14 = arith.constant 9.99999974E-6 : f32
    %24 = vector.broadcast %cst_14 : f32 to vector<16x1xf32>
    %25 = arith.addf %21, %24 : vector<16x1xf32>
    %26 = math.rsqrt %25 : vector<16x1xf32>
    %27 = vector.broadcast %26 : vector<16x1xf32> to vector<16x512xf32>
    %28 = arith.mulf %23, %27 : vector<16x512xf32>
    %29 = vector.extract_strided_slice %5 {offsets = [0, 0], sizes = [16, 1], strides = [1, 1]} : vector<16x2xf32> to vector<16x1xf32>
    %30 = vector.broadcast %29 : vector<16x1xf32> to vector<16x512xf32>
    %31 = arith.mulf %28, %30 : vector<16x512xf32>
    %32 = vector.extract_strided_slice %5 {offsets = [0, 1], sizes = [16, 1], strides = [1, 1]} : vector<16x2xf32> to vector<16x1xf32>
    %33 = vector.broadcast %32 : vector<16x1xf32> to vector<16x512xf32>
    %34 = arith.addf %31, %33 : vector<16x512xf32>
    %c0_15 = arith.constant 0 : index
    %c0_16 = arith.constant 0 : index
    %35 = vector.load %arg3[%c0_15, %c0_16] : memref<16x512xf32, #tpu.memory_space<vmem>>, vector<16x512xf32>
    %36 = arith.addf %34, %35 : vector<16x512xf32>
    %c0_17 = arith.constant 0 : index
    %c0_18 = arith.constant 0 : index
    %37 = vector.load %arg4[%c0_17, %c0_18] : memref<16x512xf32, #tpu.memory_space<vmem>>, vector<16x512xf32>
    %38 = arith.addf %36, %37 : vector<16x512xf32>
    %c0_19 = arith.constant 0 : index
    %c0_20 = arith.constant 0 : index
    %39 = vector.load %arg7[%c0_19, %c0_20] : memref<16x512xf32, #tpu.memory_space<vmem>>, vector<16x512xf32>
    tpu.vector_store %arg7[%c0_19, %c0_20], %38 {strides = array<i32>} : memref<16x512xf32, #tpu.memory_space<vmem>>, vector<16x512xf32>,
    return
  }
}

</mosaic_0001>

<llo_original>
// kernel: reverse.9
$region0: #{reverse.9}
  %s0 = inlined_call_operand.vmem [shape: f32[1,2,16,7], index: 0, kind: input, shape index: {}]
  %s1 = inlined_call_operand.vmem [shape: f32[1,2,16,7], index: 1, kind: output, shape index: {}]
  $region1: #{reverse.9} parent=0
    #allocation0 [shape = 'u8[16384]{0}', space=vmem, size = 0x4000, scoped, tag = 'operand span for operand 0']
    #allocation1 [shape = 'u8[8192]{0}', space=vmem, size = 0x2000, scoped, tag = 'operand span for operand 1']
    %s2 = scalar_lea.vmem [#allocation0], 8
    // Predicated region
    $region2: #{reverse.9} parent=1 // pred_check
      _
    $region3: #{reverse.9} parent=1 // pred_check_branch
      %4 = sbr.rel (0) target = $region5
    $region4: #{reverse.9} parent=1 // pred_region
      // Predicated region
      $region6: #{reverse.9} parent=4 // pred_check
        _
      $region7: #{reverse.9} parent=4 // pred_check_branch
        %6 = sbr.rel (0) target = $region9
      $region8: #{reverse.9} parent=4 // pred_region
        // Predicated region
        $region21: #{reverse.9} parent=8 // pred_check
          _
        $region22: #{reverse.9} parent=8 // pred_check_branch
          %23 = sbr.rel (0) target = $region24
        $region23: #{reverse.9} parent=8 // pred_region
          loop: start=0, step=1, limit=1
          $region25: #{reverse.9} parent=23 // loop_pre_header
            _
          $region26: #{reverse.9} parent=23 // loop_header
            %s25 = sphi 0, %s29
            %p26 = scmp.ge.s32.totalorder %s25, 1
            %s30 = sphi %s0, %s0
            %s31 = sphi %s2, %s2
          $region27: #{reverse.9} parent=23 // loop_header_branch
            %28 = sbr.rel (%p26) target = $region31
          $region28: #{reverse.9} parent=23 // loop_body
            %v32 = vld [vmem:[%s30] sm:$0xff]
            %33 = vst [vmem:[%s31] sm:$0xff] %v32
            %v34 = vld [vmem:[%s30 + $0x8] sm:$0xff]
            %35 = vst [vmem:[%s31 + $0x10] sm:$0xff] %v34
          $region29: #{reverse.9} parent=23 // loop_footer
            %s29 = sadd.s32 1, %s25
          $region30: #{reverse.9} parent=23 // loop_footer_branch
            %24 = sbr.rel target = $region26
          $region31: #{reverse.9} parent=23 // loop_exit
            _
        $region24: #{reverse.9} parent=8 // pred_fallthru
          _
        // Predicated region
        $region32: #{reverse.9} parent=8 // pred_check
          _
        $region33: #{reverse.9} parent=8 // pred_check_branch
          %37 = sbr.rel target = $region35
        $region34: #{reverse.9} parent=8 // pred_region
          _
        $region35: #{reverse.9} parent=8 // pred_fallthru
          _
      $region9: #{reverse.9} parent=4 // pred_fallthru
        _
      // Predicated region
      $region10: #{reverse.9} parent=4 // pred_check
        _
      $region11: #{reverse.9} parent=4 // pred_check_branch
        %8 = sbr.rel target = $region13
      $region12: #{reverse.9} parent=4 // pred_region
        loop: start=0, step=1, limit=1
        $region14: #{reverse.9} parent=12 // loop_pre_header
          _
        $region15: #{reverse.9} parent=12 // loop_header
          %s11 = sphi 0, %s15
          %p12 = scmp.ge.s32.totalorder %s11, 1
          %s16 = sphi %s0, %s0
          %s17 = sphi %s2, %s2
        $region16: #{reverse.9} parent=12 // loop_header_branch
          %14 = sbr.rel (%p12) target = $region20
        $region17: #{reverse.9} parent=12 // loop_body
          %v18 = vld [vmem:[%s16] sm:$0xff]
          %19 = vst [vmem:[%s17] sm:$0xff] %v18
          %v20 = vld [vmem:[%s16 + $0x8] sm:$0xff]
          %21 = vst [vmem:[%s17 + $0x10] sm:$0xff] %v20
        $region18: #{reverse.9} parent=12 // loop_footer
          %s15 = sadd.s32 1, %s11
        $region19: #{reverse.9} parent=12 // loop_footer_branch
          %10 = sbr.rel target = $region15
        $region20: #{reverse.9} parent=12 // loop_exit
          _
      $region13: #{reverse.9} parent=4 // pred_fallthru
        _
    $region5: #{reverse.9} parent=1 // pred_fallthru
      _
    %38 = vnop
    %s39 = scalar_lea.vmem [#allocation0], 7
    %v40 = vld [vmem:[%s39] ss:$-1 sm:$0xff]
    %v41 = vrot.slane %v40, 1
    %42 = vst [vmem:[#allocation1] sm:$0xff] %v41
    %s43 = scalar_lea.vmem [#allocation0], 8
    %s44 = scalar_lea.vmem %s43, 7 [#allocation0]
    %v45 = vld [vmem:[%s44] ss:$-1 sm:$0xff]
    %v46 = vrot.slane %v45, 1
    %v47 = vlaneseq
    %v48 = vshrl.u32 %v47, 7
    %vm49 = vcmp.lt.s32.totalorder %v48, 7
    %50 = vst.msk [vmem:[#allocation1] sm:$0xff] %vm49, %v46
    %s51 = scalar_lea.vmem [#allocation1], 8
    %s52 = scalar_lea.vmem [#allocation0], 16
    %s53 = scalar_lea.vmem %s52, 7 [#allocation0]
    %v54 = vld [vmem:[%s53] ss:$-1 sm:$0xff]
    %v55 = vrot.slane %v54, 1
    %56 = vst [vmem:[%s51] sm:$0xff] %v55
    %s57 = scalar_lea.vmem %s52, 8 [#allocation0]
    %s58 = scalar_lea.vmem %s57, 7 [#allocation0]
    %v59 = vld [vmem:[%s58] ss:$-1 sm:$0xff]
    %v60 = vrot.slane %v59, 1
    %v61 = vlaneseq
    %v62 = vshrl.u32 %v61, 7
    %vm63 = vcmp.lt.s32.totalorder %v62, 7
    %64 = vst.msk [vmem:[%s51] sm:$0xff] %vm63, %v60
    // Predicated region
    $region36: #{reverse.9} parent=1 // pred_check
      _
    $region37: #{reverse.9} parent=1 // pred_check_branch
      %66 = sbr.rel (0) target = $region39
    $region38: #{reverse.9} parent=1 // pred_region
      // Predicated region
      $region40: #{reverse.9} parent=38 // pred_check
        _
      $region41: #{reverse.9} parent=38 // pred_check_branch
        %68 = sbr.rel (0) target = $region43
      $region42: #{reverse.9} parent=38 // pred_region
        // Predicated region
        $region55: #{reverse.9} parent=42 // pred_check
          _
        $region56: #{reverse.9} parent=42 // pred_check_branch
          %85 = sbr.rel (0) target = $region58
        $region57: #{reverse.9} parent=42 // pred_region
          loop: start=0, step=1, limit=1
          $region59: #{reverse.9} parent=57 // loop_pre_header
            _
          $region60: #{reverse.9} parent=57 // loop_header
            %s87 = sphi 0, %s91
            %p88 = scmp.ge.s32.totalorder %s87, 1
            %s92 = sphi [#allocation1], [#allocation1]
            %s93 = sphi %s1, %s1
          $region61: #{reverse.9} parent=57 // loop_header_branch
            %90 = sbr.rel (%p88) target = $region65
          $region62: #{reverse.9} parent=57 // loop_body
            %v94 = vld [vmem:[%s92] sm:$0xff]
            %95 = vst [vmem:[%s93] sm:$0xff] %v94
            %v96 = vld [vmem:[%s92 + $0x8] sm:$0xff]
            %97 = vst [vmem:[%s93 + $0x8] sm:$0xff] %v96
          $region63: #{reverse.9} parent=57 // loop_footer
            %s91 = sadd.s32 1, %s87
          $region64: #{reverse.9} parent=57 // loop_footer_branch
            %86 = sbr.rel target = $region60
          $region65: #{reverse.9} parent=57 // loop_exit
            _
        $region58: #{reverse.9} parent=42 // pred_fallthru
          _
        // Predicated region
        $region66: #{reverse.9} parent=42 // pred_check
          _
        $region67: #{reverse.9} parent=42 // pred_check_branch
          %99 = sbr.rel target = $region69
        $region68: #{reverse.9} parent=42 // pred_region
          _
        $region69: #{reverse.9} parent=42 // pred_fallthru
          _
      $region43: #{reverse.9} parent=38 // pred_fallthru
        _
      // Predicated region
      $region44: #{reverse.9} parent=38 // pred_check
        _
      $region45: #{reverse.9} parent=38 // pred_check_branch
        %70 = sbr.rel target = $region47
      $region46: #{reverse.9} parent=38 // pred_region
        loop: start=0, step=1, limit=1
        $region48: #{reverse.9} parent=46 // loop_pre_header
          _
        $region49: #{reverse.9} parent=46 // loop_header
          %s73 = sphi 0, %s77
          %p74 = scmp.ge.s32.totalorder %s73, 1
          %s78 = sphi [#allocation1], [#allocation1]
          %s79 = sphi %s1, %s1
        $region50: #{reverse.9} parent=46 // loop_header_branch
          %76 = sbr.rel (%p74) target = $region54
        $region51: #{reverse.9} parent=46 // loop_body
          %v80 = vld [vmem:[%s78] sm:$0xff]
          %81 = vst [vmem:[%s79] sm:$0xff] %v80
          %v82 = vld [vmem:[%s78 + $0x8] sm:$0xff]
          %83 = vst [vmem:[%s79 + $0x8] sm:$0xff] %v82
        $region52: #{reverse.9} parent=46 // loop_footer
          %s77 = sadd.s32 1, %s73
        $region53: #{reverse.9} parent=46 // loop_footer_branch
          %72 = sbr.rel target = $region49
        $region54: #{reverse.9} parent=46 // loop_exit
          _
      $region47: #{reverse.9} parent=38 // pred_fallthru
        _
    $region39: #{reverse.9} parent=1 // pred_fallthru
      _
    %100 = vnop

// kernel: fused_lffc_resnet_block.5
$region0: #{fused_lffc_resnet_block.5}
  #allocation0 [shape = 'u32[]', space=smem, size = 0x4, offset = 0x4, fixed_abs, tag = 'smem constant byte address 0x4 - core index']
  #allocation1 [shape = 'u32[144,128]{1,0:T(1,128)}', space=vmem, size = 0x12000, scoped, tag = 'internal scratch']
  %s0 = inlined_call_operand.vmem [shape: f32[16,512], index: 0, kind: input, shape index: {}]
  %s1 = inlined_call_operand.vmem [shape: f32[8,16], index: 1, kind: input, shape index: {}]
  %s2 = inlined_call_operand.vmem [shape: f32[8,2], index: 2, kind: input, shape index: {}]
  %s3 = inlined_call_operand.vmem [shape: f32[8,18], index: 3, kind: input, shape index: {}]
  %s4 = inlined_call_operand.vmem [shape: f32[16,16], index: 4, kind: input, shape index: {}]
  %s5 = inlined_call_operand.vmem [shape: f32[16,2], index: 5, kind: input, shape index: {}]
  %s6 = inlined_call_operand.vmem [shape: f32[4,16], index: 6, kind: input, shape index: {}]
  %s7 = inlined_call_operand.vmem [shape: f32[4,2], index: 7, kind: input, shape index: {}]
  %s8 = inlined_call_operand.vmem [shape: f32[4,18], index: 8, kind: input, shape index: {}]
  %s9 = inlined_call_operand.vmem [shape: f32[4,8], index: 9, kind: input, shape index: {}]
  %s10 = inlined_call_operand.vmem [shape: f32[1,4], index: 10, kind: input, shape index: {}]
  %s11 = inlined_call_operand.vmem [shape: f32[1,2], index: 11, kind: input, shape index: {}]
  %s12 = inlined_call_operand.vmem [shape: f32[16,512], index: 12, kind: output, shape index: {0}]
  %s13 = inlined_call_operand.vmem [shape: f32[4,512], index: 13, kind: output, shape index: {1}]
  %s14 = inlined_call_operand.vmem [shape: f32[1,512], index: 14, kind: output, shape index: {2}]
  %15 = xla_tuple %s12, %s13, %s14
  %s16 = sld [smem:[#allocation0]]
  $region74: #{fused_lffc_resnet_block.5} parent=0
    _
  %s18 = ssub.s32 1, %s16
  %s19 = scalar_select 0, %s18, %s16
  // Predicated region
  $region2: #{fused_lffc_resnet_block.5} parent=0 // pred_check
    _
  $region3: #{fused_lffc_resnet_block.5} parent=0 // pred_check_branch
    %21 = sbr.rel (0) target = $region5
  $region4: #{fused_lffc_resnet_block.5} parent=0 // pred_region
    _
  $region5: #{fused_lffc_resnet_block.5} parent=0 // pred_fallthru
    _
  // Predicated region
  $region6: #{fused_lffc_resnet_block.5} parent=0 // pred_check
    _
  $region7: #{fused_lffc_resnet_block.5} parent=0 // pred_check_branch
    %23 = sbr.rel (0) target = $region9
  $region8: #{fused_lffc_resnet_block.5} parent=0 // pred_region
    _
  $region9: #{fused_lffc_resnet_block.5} parent=0 // pred_fallthru
    _
  // Predicated region
  $region10: #{fused_lffc_resnet_block.5} parent=0 // pred_check
    _
  $region11: #{fused_lffc_resnet_block.5} parent=0 // pred_check_branch
    %25 = sbr.rel (0) target = $region13
  $region12: #{fused_lffc_resnet_block.5} parent=0 // pred_region
    _
  $region13: #{fused_lffc_resnet_block.5} parent=0 // pred_fallthru
    _
  // Predicated region
  $region14: #{fused_lffc_resnet_block.5} parent=0 // pred_check
    _
  $region15: #{fused_lffc_resnet_block.5} parent=0 // pred_check_branch
    %27 = sbr.rel (0) target = $region17
  $region16: #{fused_lffc_resnet_block.5} parent=0 // pred_region
    _
  $region17: #{fused_lffc_resnet_block.5} parent=0 // pred_fallthru
    _
  // Predicated region
  $region18: #{fused_lffc_resnet_block.5} parent=0 // pred_check
    _
  $region19: #{fused_lffc_resnet_block.5} parent=0 // pred_check_branch
    %29 = sbr.rel (0) target = $region21
  $region20: #{fused_lffc_resnet_block.5} parent=0 // pred_region
    _
  $region21: #{fused_lffc_resnet_block.5} parent=0 // pred_fallthru
    _
  // Predicated region
  $region22: #{fused_lffc_resnet_block.5} parent=0 // pred_check
    _
  $region23: #{fused_lffc_resnet_block.5} parent=0 // pred_check_branch
    %31 = sbr.rel (0) target = $region25
  $region24: #{fused_lffc_resnet_block.5} parent=0 // pred_region
    _
  $region25: #{fused_lffc_resnet_block.5} parent=0 // pred_fallthru
    _
  // Predicated region
  $region26: #{fused_lffc_resnet_block.5} parent=0 // pred_check
    _
  $region27: #{fused_lffc_resnet_block.5} parent=0 // pred_check_branch
    %33 = sbr.rel (0) target = $region29
  $region28: #{fused_lffc_resnet_block.5} parent=0 // pred_region
    _
  $region29: #{fused_lffc_resnet_block.5} parent=0 // pred_fallthru
    _
  // Predicated region
  $region30: #{fused_lffc_resnet_block.5} parent=0 // pred_check
    _
  $region31: #{fused_lffc_resnet_block.5} parent=0 // pred_check_branch
    %35 = sbr.rel (0) target = $region33
  $region32: #{fused_lffc_resnet_block.5} parent=0 // pred_region
    _
  $region33: #{fused_lffc_resnet_block.5} parent=0 // pred_fallthru
    _
  // Predicated region
  $region34: #{fused_lffc_resnet_block.5} parent=0 // pred_check
    _
  $region35: #{fused_lffc_resnet_block.5} parent=0 // pred_check_branch
    %37 = sbr.rel (0) target = $region37
  $region36: #{fused_lffc_resnet_block.5} parent=0 // pred_region
    _
  $region37: #{fused_lffc_resnet_block.5} parent=0 // pred_fallthru
    _
  // Predicated region
  $region38: #{fused_lffc_resnet_block.5} parent=0 // pred_check
    _
  $region39: #{fused_lffc_resnet_block.5} parent=0 // pred_check_branch
    %39 = sbr.rel (0) target = $region41
  $region40: #{fused_lffc_resnet_block.5} parent=0 // pred_region
    _
  $region41: #{fused_lffc_resnet_block.5} parent=0 // pred_fallthru
    _
  // Predicated region
  $region42: #{fused_lffc_resnet_block.5} parent=0 // pred_check
    _
  $region43: #{fused_lffc_resnet_block.5} parent=0 // pred_check_branch
    %41 = sbr.rel (0) target = $region45
  $region44: #{fused_lffc_resnet_block.5} parent=0 // pred_region
    _
  $region45: #{fused_lffc_resnet_block.5} parent=0 // pred_fallthru
    _
  // Predicated region
  $region46: #{fused_lffc_resnet_block.5} parent=0 // pred_check
    _
  $region47: #{fused_lffc_resnet_block.5} parent=0 // pred_check_branch
    %43 = sbr.rel (0) target = $region49
  $region48: #{fused_lffc_resnet_block.5} parent=0 // pred_region
    _
  $region49: #{fused_lffc_resnet_block.5} parent=0 // pred_fallthru
    _
  %v44 = vlaneseq
  %v45 = vand.u32 %v44, 127
  %v46 = vadd.s32 %v45, 128
  %v47 = vadd.s32 %v45, 256
  %v48 = vadd.s32 %v45, 384
  %v49 = vand.u32 %v45, 15
  %v50 = vand.u32 %v46, 15
  %v51 = vand.u32 %v47, 15
  %v52 = vand.u32 %v48, 15
  %v53 = vshra.s32 %v45, 4
  %v54 = vshra.s32 %v46, 4
  %v55 = vshra.s32 %v47, 4
  %v56 = vshra.s32 %v48, 4
  %v57 = vand.u32 %v53, 15
  %v58 = vand.u32 %v54, 15
  %v59 = vand.u32 %v55, 15
  %v60 = vand.u32 %v56, 15
  %v61 = vld [vmem:[%s1] sm:$0xff]
  %v62 = vld [vmem:[%s0] sm:$0xff]
  %v63 = vld [vmem:[%s0 + $0x8] sm:$0xff]
  %v64 = vld [vmem:[%s0 + $0x10] sm:$0xff]
  %v65 = vld [vmem:[%s0 + $0x18] sm:$0xff]
  %v66 = vld [vmem:[%s0 + $0x20] sm:$0xff]
  %v67 = vld [vmem:[%s0 + $0x28] sm:$0xff]
  %v68 = vld [vmem:[%s0 + $0x30] sm:$0xff]
  %v69 = vld [vmem:[%s0 + $0x38] sm:$0xff]
  %vm70 = vcmask 130048
  %v72 = vsel %vm70, %v61, 0
  %74 = vmatprep.subr.mxu0 %v63
  %75 = vmatpush1.msra.mxu0 %v62
  %76 = vmatprep.subr.mxu0 %v67
  %77 = vmatpush1.msra.mxu0 %v66
  %78 = vmatprep.subr.mxu0 0.0
  %79 = vmatpush1.msra.mxu0 0.0
  %80 = vmatprep.subr.mxu0 0.0
  %81 = vmatpush1.msra.mxu0 0.0
  %82 = vmatprep.subr.mxu0 0.0
  %83 = vmatpush1.msra.mxu0 0.0
  %84 = vmatprep.subr.mxu0 0.0
  %85 = vmatpush1.msra.mxu0 0.0
  %86 = vmatprep.subr.mxu0 0.0
  %87 = vmatpush1.msra.mxu0 0.0
  %88 = vmatprep.subr.mxu0 0.0
  %89 = vmatpush1.msra.mxu0 0.0
  %90 = vmatprep.subr.mxu0 0.0
  %91 = vmatpush1.msra.mxu0 0.0
  %92 = vmatprep.subr.mxu0 0.0
  %93 = vmatpush1.msra.mxu0 0.0
  %94 = vmatprep.subr.mxu0 0.0
  %95 = vmatpush1.msra.mxu0 0.0
  %96 = vmatprep.subr.mxu0 0.0
  %97 = vmatpush1.msra.mxu0 0.0
  %98 = vmatprep.subr.mxu0 0.0
  %99 = vmatpush1.msra.mxu0 0.0
  %100 = vmatprep.subr.mxu0 0.0
  %101 = vmatpush1.msra.mxu0 0.0
  %102 = vmatprep.subr.mxu0 0.0
  %103 = vmatpush1.msra.mxu0 0.0
  %104 = vmatprep.subr.mxu0 0.0
  %105 = vmatpush1.msra.mxu0 0.0
  %106 = vmatprep.subr.mxu0 0.0
  %107 = vmatpush1.msra.mxu0 0.0
  %108 = vmatprep.subr.mxu0 0.0
  %109 = vmatpush1.msra.mxu0 0.0
  %110 = vmatprep.subr.mxu0 0.0
  %111 = vmatpush1.msra.mxu0 0.0
  %112 = vmatprep.subr.mxu0 0.0
  %113 = vmatpush1.msra.mxu0 0.0
  %114 = vmatprep.subr.mxu0 0.0
  %115 = vmatpush1.msra.mxu0 0.0
  %116 = vmatprep.subr.mxu0 0.0
  %117 = vmatpush1.msra.mxu0 0.0
  %118 = vmatprep.subr.mxu0 0.0
  %119 = vmatpush1.msra.mxu0 0.0
  %120 = vmatprep.subr.mxu0 0.0
  %121 = vmatpush1.msra.mxu0 0.0
  %122 = vmatprep.subr.mxu0 0.0
  %123 = vmatpush1.msra.mxu0 0.0
  %124 = vmatprep.subr.mxu0 0.0
  %125 = vmatpush1.msra.mxu0 0.0
  %126 = vmatprep.subr.mxu0 0.0
  %127 = vmatpush1.msra.mxu0 0.0
  %128 = vmatprep.subr.mxu0 0.0
  %129 = vmatpush1.msra.mxu0 0.0
  %130 = vmatprep.subr.mxu0 0.0
  %131 = vmatpush1.msra.mxu0 0.0
  %132 = vmatprep.subr.mxu0 0.0
  %133 = vmatpush1.msra.mxu0 0.0
  %134 = vmatprep.subr.mxu0 0.0
  %135 = vmatpush1.msra.mxu0 0.0
  %136 = vmatprep.subr.mxu0 0.0
  %137 = vmatpush1.msra.mxu0 0.0
  %138 = vmatprep.mubr.f32.mxu0 0.0
  %139 = vmatmul.mubr.f32.gmra.mrb[0].mxu0 %v72
  %v140 = vpop.f32.mrb[0].mxu0
  %v141 = vadd.f32 0.0, %v140
  %v142 = vpop.f32.mrb[0].mxu0
  %v143 = vadd.f32 0.0, %v142
  %144 = vdwg.mxu0
  %145 = vmatprep.subr.mxu0 %v65
  %146 = vmatpush1.msra.mxu0 %v64
  %147 = vmatprep.subr.mxu0 %v69
  %148 = vmatpush1.msra.mxu0 %v68
  %149 = vmatprep.subr.mxu0 0.0
  %150 = vmatpush1.msra.mxu0 0.0
  %151 = vmatprep.subr.mxu0 0.0
  %152 = vmatpush1.msra.mxu0 0.0
  %153 = vmatprep.subr.mxu0 0.0
  %154 = vmatpush1.msra.mxu0 0.0
  %155 = vmatprep.subr.mxu0 0.0
  %156 = vmatpush1.msra.mxu0 0.0
  %157 = vmatprep.subr.mxu0 0.0
  %158 = vmatpush1.msra.mxu0 0.0
  %159 = vmatprep.subr.mxu0 0.0
  %160 = vmatpush1.msra.mxu0 0.0
  %161 = vmatprep.subr.mxu0 0.0
  %162 = vmatpush1.msra.mxu0 0.0
  %163 = vmatprep.subr.mxu0 0.0
  %164 = vmatpush1.msra.mxu0 0.0
  %165 = vmatprep.subr.mxu0 0.0
  %166 = vmatpush1.msra.mxu0 0.0
  %167 = vmatprep.subr.mxu0 0.0
  %168 = vmatpush1.msra.mxu0 0.0
  %169 = vmatprep.subr.mxu0 0.0
  %170 = vmatpush1.msra.mxu0 0.0
  %171 = vmatprep.subr.mxu0 0.0
  %172 = vmatpush1.msra.mxu0 0.0
  %173 = vmatprep.subr.mxu0 0.0
  %174 = vmatpush1.msra.mxu0 0.0
  %175 = vmatprep.subr.mxu0 0.0
  %176 = vmatpush1.msra.mxu0 0.0
  %177 = vmatprep.subr.mxu0 0.0
  %178 = vmatpush1.msra.mxu0 0.0
  %179 = vmatprep.subr.mxu0 0.0
  %180 = vmatpush1.msra.mxu0 0.0
  %181 = vmatprep.subr.mxu0 0.0
  %182 = vmatpush1.msra.mxu0 0.0
  %183 = vmatprep.subr.mxu0 0.0
  %184 = vmatpush1.msra.mxu0 0.0
  %185 = vmatprep.subr.mxu0 0.0
  %186 = vmatpush1.msra.mxu0 0.0
  %187 = vmatprep.subr.mxu0 0.0
  %188 = vmatpush1.msra.mxu0 0.0
  %189 = vmatprep.subr.mxu0 0.0
  %190 = vmatpush1.msra.mxu0 0.0
  %191 = vmatprep.subr.mxu0 0.0
  %192 = vmatpush1.msra.mxu0 0.0
  %193 = vmatprep.subr.mxu0 0.0
  %194 = vmatpush1.msra.mxu0 0.0
  %195 = vmatprep.subr.mxu0 0.0
  %196 = vmatpush1.msra.mxu0 0.0
  %197 = vmatprep.subr.mxu0 0.0
  %198 = vmatpush1.msra.mxu0 0.0
  %199 = vmatprep.subr.mxu0 0.0
  %200 = vmatpush1.msra.mxu0 0.0
  %201 = vmatprep.subr.mxu0 0.0
  %202 = vmatpush1.msra.mxu0 0.0
  %203 = vmatprep.subr.mxu0 0.0
  %204 = vmatpush1.msra.mxu0 0.0
  %205 = vmatprep.subr.mxu0 0.0
  %206 = vmatpush1.msra.mxu0 0.0
  %207 = vmatprep.subr.mxu0 0.0
  %208 = vmatpush1.msra.mxu0 0.0
  %209 = vmatprep.mubr.f32.mxu0 0.0
  %210 = vmatmul.mubr.f32.gmra.mrb[0].mxu0 %v72
  %v211 = vpop.f32.mrb[0].mxu0
  %v212 = vadd.f32 0.0, %v211
  %v213 = vpop.f32.mrb[0].mxu0
  %v214 = vadd.f32 0.0, %v213
  %215 = vdwg.mxu0
  %v216 = vld [vmem:[%s2] sm:$0xff]
  %v217 = vadd.f32 %v141, %v143
  %v218 = vadd.f32 %v217, %v212
  %v219 = vadd.f32 %v218, %v214
  %220 = vadd.xlane.f32.xlu0 %v219
  %v221 = vpop.xlane.xlu0 %220
  %v222 = vrcp.pop 512.0
  %v223 = vmul.f32 %v221, %v222
  %v224 = vsub.f32 %v141, %v223
  %v225 = vsub.f32 %v143, %v223
  %v226 = vsub.f32 %v212, %v223
  %v227 = vsub.f32 %v214, %v223
  %v228 = vmul.f32 %v224, %v224
  %v229 = vmul.f32 %v225, %v225
  %v230 = vmul.f32 %v226, %v226
  %v231 = vmul.f32 %v227, %v227
  %v232 = vadd.f32 %v228, %v229
  %v233 = vadd.f32 %v232, %v230
  %v234 = vadd.f32 %v233, %v231
  %235 = vadd.xlane.f32.xlu0 %v234
  %v236 = vpop.xlane.xlu0 %235
  %v237 = vmul.f32 %v236, %v222
  %v238 = vadd.f32 %v237, 1e-05
  %v239 = vrsqrt.pop %v238
  %v240 = vmul.f32 %v224, %v239
  %v241 = vmul.f32 %v225, %v239
  %v242 = vmul.f32 %v226, %v239
  %v243 = vmul.f32 %v227, %v239
  %245 = vset.pattern.permute.xlu0 0
  %246 = vperm.xlu0 %245, %v216
  %v247 = vpop.permute.xlu0 %246
  %v249 = vmul.f32 %v240, %v247
  %v250 = vmul.f32 %v241, %v247
  %v251 = vmul.f32 %v242, %v247
  %v252 = vmul.f32 %v243, %v247
  %253 = vset.pattern.permute.xlu0 1
  %254 = vperm.xlu0 %253, %v216
  %v255 = vpop.permute.xlu0 %254
  %v257 = vadd.f32 %v249, %v255
  %v258 = vadd.f32 %v250, %v255
  %v259 = vadd.f32 %v251, %v255
  %v260 = vadd.f32 %v252, %v255
  %v261 = vmax.f32 %v257, 0.0
  %v262 = vmax.f32 %v258, 0.0
  %v263 = vmax.f32 %v259, 0.0
  %v264 = vmax.f32 %v260, 0.0
  %vm265 = vcmp.eq.s32.totalorder %v49, 0
  %vm266 = vcmp.eq.s32.totalorder %v50, 0
  %vm267 = vcmp.eq.s32.totalorder %v51, 0
  %vm268 = vcmp.eq.s32.totalorder %v52, 0
  %vm269 = vcmp.eq.s32.totalorder %v49, 15
  %vm270 = vcmp.eq.s32.totalorder %v50, 15
  %vm271 = vcmp.eq.s32.totalorder %v51, 15
  %vm272 = vcmp.eq.s32.totalorder %v52, 15
  %vm273 = vcmp.eq.s32.totalorder %v57, 0
  %vm274 = vcmp.eq.s32.totalorder %v58, 0
  %vm275 = vcmp.eq.s32.totalorder %v59, 0
  %vm276 = vcmp.eq.s32.totalorder %v60, 0
  %vm277 = vcmp.eq.s32.totalorder %v57, 15
  %vm278 = vcmp.eq.s32.totalorder %v58, 15
  %vm279 = vcmp.eq.s32.totalorder %v59, 15
  %vm280 = vcmp.eq.s32.totalorder %v60, 15
  %281 = vrot.lane.b32.xlu0 %v261, 16
  %v282 = vpop.permute.xlu0 %281
  %283 = vrot.lane.b32.xlu0 %v262, 16
  %v284 = vpop.permute.xlu0 %283
  %285 = vrot.lane.b32.xlu0 %v263, 16
  %v286 = vpop.permute.xlu0 %285
  %287 = vrot.lane.b32.xlu0 %v264, 16
  %v288 = vpop.permute.xlu0 %287
  %vm289 = vcmp.lt.s32.totalorder %v45, 16
  %v290 = vsel %vm289, %v286, %v288
  %v291 = vsel %vm289, %v284, %v286
  %v292 = vsel %vm289, %v282, %v284
  %v293 = vsel %vm289, %v288, %v282
  %294 = vrot.lane.b32.xlu0 %v261, 112
  %v295 = vpop.permute.xlu0 %294
  %296 = vrot.lane.b32.xlu0 %v262, 112
  %v297 = vpop.permute.xlu0 %296
  %298 = vrot.lane.b32.xlu0 %v263, 112
  %v299 = vpop.permute.xlu0 %298
  %300 = vrot.lane.b32.xlu0 %v264, 112
  %v301 = vpop.permute.xlu0 %300
  %vm302 = vcmp.lt.s32.totalorder %v45, 112
  %v303 = vsel %vm302, %v299, %v301
  %v304 = vsel %vm302, %v297, %v299
  %v305 = vsel %vm302, %v295, %v297
  %v306 = vsel %vm302, %v301, %v295
  %v307 = vsel %vm273, %v305, %v293
  %v308 = vsel %vm274, %v304, %v292
  %v309 = vsel %vm275, %v303, %v291
  %v310 = vsel %vm276, %v306, %v290
  %v311 = vsel %vm277, %v293, %v305
  %v312 = vsel %vm278, %v292, %v304
  %v313 = vsel %vm279, %v291, %v303
  %v314 = vsel %vm280, %v290, %v306
  %315 = vrot.lane.b32.xlu0 %v307, 1
  %v316 = vpop.permute.xlu0 %315
  %317 = vrot.lane.b32.xlu0 %v308, 1
  %v318 = vpop.permute.xlu0 %317
  %319 = vrot.lane.b32.xlu0 %v309, 1
  %v320 = vpop.permute.xlu0 %319
  %321 = vrot.lane.b32.xlu0 %v310, 1
  %v322 = vpop.permute.xlu0 %321
  %vm323 = vcmp.lt.s32.totalorder %v45, 1
  %v324 = vsel %vm323, %v320, %v322
  %v325 = vsel %vm323, %v318, %v320
  %v326 = vsel %vm323, %v316, %v318
  %v327 = vsel %vm323, %v322, %v316
  %328 = vrot.lane.b32.xlu0 %v307, 127
  %v329 = vpop.permute.xlu0 %328
  %330 = vrot.lane.b32.xlu0 %v308, 127
  %v331 = vpop.permute.xlu0 %330
  %332 = vrot.lane.b32.xlu0 %v309, 127
  %v333 = vpop.permute.xlu0 %332
  %334 = vrot.lane.b32.xlu0 %v310, 127
  %v335 = vpop.permute.xlu0 %334
  %vm336 = vcmp.lt.s32.totalorder %v45, 127
  %v337 = vsel %vm336, %v333, %v335
  %v338 = vsel %vm336, %v331, %v333
  %v339 = vsel %vm336, %v329, %v331
  %v340 = vsel %vm336, %v335, %v329
  %v341 = vsel %vm265, %v339, %v327
  %v342 = vsel %vm266, %v338, %v326
  %v343 = vsel %vm267, %v337, %v325
  %v344 = vsel %vm268, %v340, %v324
  %v345 = vsel %vm269, %v327, %v339
  %v346 = vsel %vm270, %v326, %v338
  %v347 = vsel %vm271, %v325, %v337
  %v348 = vsel %vm272, %v324, %v340
  %349 = vrot.lane.b32.xlu0 %v261, 1
  %v350 = vpop.permute.xlu0 %349
  %351 = vrot.lane.b32.xlu0 %v262, 1
  %v352 = vpop.permute.xlu0 %351
  %353 = vrot.lane.b32.xlu0 %v263, 1
  %v354 = vpop.permute.xlu0 %353
  %355 = vrot.lane.b32.xlu0 %v264, 1
  %v356 = vpop.permute.xlu0 %355
  %v357 = vsel %vm323, %v354, %v356
  %v358 = vsel %vm323, %v352, %v354
  %v359 = vsel %vm323, %v350, %v352
  %v360 = vsel %vm323, %v356, %v350
  %361 = vrot.lane.b32.xlu0 %v261, 127
  %v362 = vpop.permute.xlu0 %361
  %363 = vrot.lane.b32.xlu0 %v262, 127
  %v364 = vpop.permute.xlu0 %363
  %365 = vrot.lane.b32.xlu0 %v263, 127
  %v366 = vpop.permute.xlu0 %365
  %367 = vrot.lane.b32.xlu0 %v264, 127
  %v368 = vpop.permute.xlu0 %367
  %v369 = vsel %vm336, %v366, %v368
  %v370 = vsel %vm336, %v364, %v366
  %v371 = vsel %vm336, %v362, %v364
  %v372 = vsel %vm336, %v368, %v362
  %v373 = vsel %vm265, %v371, %v360
  %v374 = vsel %vm266, %v370, %v359
  %v375 = vsel %vm267, %v369, %v358
  %v376 = vsel %vm268, %v372, %v357
  %v377 = vsel %vm269, %v360, %v371
  %v378 = vsel %vm270, %v359, %v370
  %v379 = vsel %vm271, %v358, %v369
  %v380 = vsel %vm272, %v357, %v372
  %381 = vrot.lane.b32.xlu0 %v311, 1
  %v382 = vpop.permute.xlu0 %381
  %383 = vrot.lane.b32.xlu0 %v312, 1
  %v384 = vpop.permute.xlu0 %383
  %385 = vrot.lane.b32.xlu0 %v313, 1
  %v386 = vpop.permute.xlu0 %385
  %387 = vrot.lane.b32.xlu0 %v314, 1
  %v388 = vpop.permute.xlu0 %387
  %v389 = vsel %vm323, %v386, %v388
  %v390 = vsel %vm323, %v384, %v386
  %v391 = vsel %vm323, %v382, %v384
  %v392 = vsel %vm323, %v388, %v382
  %393 = vrot.lane.b32.xlu0 %v311, 127
  %v394 = vpop.permute.xlu0 %393
  %395 = vrot.lane.b32.xlu0 %v312, 127
  %v396 = vpop.permute.xlu0 %395
  %397 = vrot.lane.b32.xlu0 %v313, 127
  %v398 = vpop.permute.xlu0 %397
  %399 = vrot.lane.b32.xlu0 %v314, 127
  %v400 = vpop.permute.xlu0 %399
  %v401 = vsel %vm336, %v398, %v400
  %v402 = vsel %vm336, %v396, %v398
  %v403 = vsel %vm336, %v394, %v396
  %v404 = vsel %vm336, %v400, %v394
  %v405 = vsel %vm265, %v403, %v392
  %v406 = vsel %vm266, %v402, %v391
  %v407 = vsel %vm267, %v401, %v390
  %v408 = vsel %vm268, %v404, %v389
  %v409 = vsel %vm269, %v392, %v403
  %v410 = vsel %vm270, %v391, %v402
  %v411 = vsel %vm271, %v390, %v401
  %v412 = vsel %vm272, %v389, %v404
  %v413 = vld [vmem:[%s3] sm:$0xff]
  %415 = vset.pattern.permute.xlu0 0
  %416 = vperm.xlu0 %415, %v413
  %v417 = vpop.permute.xlu0 %416
  %v419 = vmul.f32 %v341, %v417
  %v420 = vmul.f32 %v342, %v417
  %v421 = vmul.f32 %v343, %v417
  %v422 = vmul.f32 %v344, %v417
  %423 = vset.pattern.permute.xlu0 1
  %424 = vperm.xlu0 %423, %v413
  %v425 = vpop.permute.xlu0 %424
  %v427 = vmul.f32 %v307, %v425
  %v428 = vmul.f32 %v308, %v425
  %v429 = vmul.f32 %v309, %v425
  %v430 = vmul.f32 %v310, %v425
  %v431 = vadd.f32 %v419, %v427
  %v432 = vadd.f32 %v420, %v428
  %v433 = vadd.f32 %v421, %v429
  %v434 = vadd.f32 %v422, %v430
  %435 = vset.pattern.permute.xlu0 2
  %436 = vperm.xlu0 %435, %v413
  %v437 = vpop.permute.xlu0 %436
  %v439 = vmul.f32 %v345, %v437
  %v440 = vmul.f32 %v346, %v437
  %v441 = vmul.f32 %v347, %v437
  %v442 = vmul.f32 %v348, %v437
  %v443 = vadd.f32 %v431, %v439
  %v444 = vadd.f32 %v432, %v440
  %v445 = vadd.f32 %v433, %v441
  %v446 = vadd.f32 %v434, %v442
  %447 = vset.pattern.permute.xlu0 3
  %448 = vperm.xlu0 %447, %v413
  %v449 = vpop.permute.xlu0 %448
  %v451 = vmul.f32 %v373, %v449
  %v452 = vmul.f32 %v374, %v449
  %v453 = vmul.f32 %v375, %v449
  %v454 = vmul.f32 %v376, %v449
  %v455 = vadd.f32 %v443, %v451
  %v456 = vadd.f32 %v444, %v452
  %v457 = vadd.f32 %v445, %v453
  %v458 = vadd.f32 %v446, %v454
  %459 = vset.pattern.permute.xlu0 4
  %460 = vperm.xlu0 %459, %v413
  %v461 = vpop.permute.xlu0 %460
  %v463 = vmul.f32 %v261, %v461
  %v464 = vmul.f32 %v262, %v461
  %v465 = vmul.f32 %v263, %v461
  %v466 = vmul.f32 %v264, %v461
  %v467 = vadd.f32 %v455, %v463
  %v468 = vadd.f32 %v456, %v464
  %v469 = vadd.f32 %v457, %v465
  %v470 = vadd.f32 %v458, %v466
  %471 = vset.pattern.permute.xlu0 5
  %472 = vperm.xlu0 %471, %v413
  %v473 = vpop.permute.xlu0 %472
  %v475 = vmul.f32 %v377, %v473
  %v476 = vmul.f32 %v378, %v473
  %v477 = vmul.f32 %v379, %v473
  %v478 = vmul.f32 %v380, %v473
  %v479 = vadd.f32 %v467, %v475
  %v480 = vadd.f32 %v468, %v476
  %v481 = vadd.f32 %v469, %v477
  %v482 = vadd.f32 %v470, %v478
  %483 = vset.pattern.permute.xlu0 6
  %484 = vperm.xlu0 %483, %v413
  %v485 = vpop.permute.xlu0 %484
  %v487 = vmul.f32 %v405, %v485
  %v488 = vmul.f32 %v406, %v485
  %v489 = vmul.f32 %v407, %v485
  %v490 = vmul.f32 %v408, %v485
  %v491 = vadd.f32 %v479, %v487
  %v492 = vadd.f32 %v480, %v488
  %v493 = vadd.f32 %v481, %v489
  %v494 = vadd.f32 %v482, %v490
  %495 = vset.pattern.permute.xlu0 7
  %496 = vperm.xlu0 %495, %v413
  %v497 = vpop.permute.xlu0 %496
  %v499 = vmul.f32 %v311, %v497
  %v500 = vmul.f32 %v312, %v497
  %v501 = vmul.f32 %v313, %v497
  %v502 = vmul.f32 %v314, %v497
  %v503 = vadd.f32 %v491, %v499
  %v504 = vadd.f32 %v492, %v500
  %v505 = vadd.f32 %v493, %v501
  %v506 = vadd.f32 %v494, %v502
  %507 = vset.pattern.permute.xlu0 8
  %508 = vperm.xlu0 %507, %v413
  %v509 = vpop.permute.xlu0 %508
  %v511 = vmul.f32 %v409, %v509
  %v512 = vmul.f32 %v410, %v509
  %v513 = vmul.f32 %v411, %v509
  %v514 = vmul.f32 %v412, %v509
  %v515 = vadd.f32 %v503, %v511
  %v516 = vadd.f32 %v504, %v512
  %v517 = vadd.f32 %v505, %v513
  %v518 = vadd.f32 %v506, %v514
  %519 = vset.pattern.permute.xlu0 9
  %520 = vperm.xlu0 %519, %v413
  %v521 = vpop.permute.xlu0 %520
  %v523 = vmul.f32 %v341, %v521
  %v524 = vmul.f32 %v342, %v521
  %v525 = vmul.f32 %v343, %v521
  %v526 = vmul.f32 %v344, %v521
  %527 = vset.pattern.permute.xlu0 10
  %528 = vperm.xlu0 %527, %v413
  %v529 = vpop.permute.xlu0 %528
  %v531 = vmul.f32 %v307, %v529
  %v532 = vmul.f32 %v308, %v529
  %v533 = vmul.f32 %v309, %v529
  %v534 = vmul.f32 %v310, %v529
  %v535 = vadd.f32 %v523, %v531
  %v536 = vadd.f32 %v524, %v532
  %v537 = vadd.f32 %v525, %v533
  %v538 = vadd.f32 %v526, %v534
  %539 = vset.pattern.permute.xlu0 11
  %540 = vperm.xlu0 %539, %v413
  %v541 = vpop.permute.xlu0 %540
  %v543 = vmul.f32 %v345, %v541
  %v544 = vmul.f32 %v346, %v541
  %v545 = vmul.f32 %v347, %v541
  %v546 = vmul.f32 %v348, %v541
  %v547 = vadd.f32 %v535, %v543
  %v548 = vadd.f32 %v536, %v544
  %v549 = vadd.f32 %v537, %v545
  %v550 = vadd.f32 %v538, %v546
  %551 = vset.pattern.permute.xlu0 12
  %552 = vperm.xlu0 %551, %v413
  %v553 = vpop.permute.xlu0 %552
  %v555 = vmul.f32 %v373, %v553
  %v556 = vmul.f32 %v374, %v553
  %v557 = vmul.f32 %v375, %v553
  %v558 = vmul.f32 %v376, %v553
  %v559 = vadd.f32 %v547, %v555
  %v560 = vadd.f32 %v548, %v556
  %v561 = vadd.f32 %v549, %v557
  %v562 = vadd.f32 %v550, %v558
  %563 = vset.pattern.permute.xlu0 13
  %564 = vperm.xlu0 %563, %v413
  %v565 = vpop.permute.xlu0 %564
  %v567 = vmul.f32 %v261, %v565
  %v568 = vmul.f32 %v262, %v565
  %v569 = vmul.f32 %v263, %v565
  %v570 = vmul.f32 %v264, %v565
  %v571 = vadd.f32 %v559, %v567
  %v572 = vadd.f32 %v560, %v568
  %v573 = vadd.f32 %v561, %v569
  %v574 = vadd.f32 %v562, %v570
  %575 = vset.pattern.permute.xlu0 14
  %576 = vperm.xlu0 %575, %v413
  %v577 = vpop.permute.xlu0 %576
  %v579 = vmul.f32 %v377, %v577
  %v580 = vmul.f32 %v378, %v577
  %v581 = vmul.f32 %v379, %v577
  %v582 = vmul.f32 %v380, %v577
  %v583 = vadd.f32 %v571, %v579
  %v584 = vadd.f32 %v572, %v580
  %v585 = vadd.f32 %v573, %v581
  %v586 = vadd.f32 %v574, %v582
  %587 = vset.pattern.permute.xlu0 15
  %588 = vperm.xlu0 %587, %v413
  %v589 = vpop.permute.xlu0 %588
  %v591 = vmul.f32 %v405, %v589
  %v592 = vmul.f32 %v406, %v589
  %v593 = vmul.f32 %v407, %v589
  %v594 = vmul.f32 %v408, %v589
  %v595 = vadd.f32 %v583, %v591
  %v596 = vadd.f32 %v584, %v592
  %v597 = vadd.f32 %v585, %v593
  %v598 = vadd.f32 %v586, %v594
  %599 = vset.pattern.permute.xlu0 16
  %600 = vperm.xlu0 %599, %v413
  %v601 = vpop.permute.xlu0 %600
  %v603 = vmul.f32 %v311, %v601
  %v604 = vmul.f32 %v312, %v601
  %v605 = vmul.f32 %v313, %v601
  %v606 = vmul.f32 %v314, %v601
  %v607 = vadd.f32 %v595, %v603
  %v608 = vadd.f32 %v596, %v604
  %v609 = vadd.f32 %v597, %v605
  %v610 = vadd.f32 %v598, %v606
  %611 = vset.pattern.permute.xlu0 17
  %612 = vperm.xlu0 %611, %v413
  %v613 = vpop.permute.xlu0 %612
  %v615 = vmul.f32 %v409, %v613
  %v616 = vmul.f32 %v410, %v613
  %v617 = vmul.f32 %v411, %v613
  %v618 = vmul.f32 %v412, %v613
  %v619 = vadd.f32 %v607, %v615
  %v620 = vadd.f32 %v608, %v616
  %v621 = vadd.f32 %v609, %v617
  %v622 = vadd.f32 %v610, %v618
  %v623 = vld [vmem:[%s4] sm:$0xff]
  %v624 = vld [vmem:[%s4 + $0x8] sm:$0xff]
  %627 = vrot.lane.b32.xlu0 %v623, 120
  %v628 = vpop.permute.xlu0 %627
  %629 = vrot.lane.b32.xlu0 %v624, 120
  %v630 = vpop.permute.xlu0 %629
  %vm631 = vcmask 64512
  %v632 = vsel %vm631, %v628, 0
  %v634 = vsel %vm631, %v630, 0
  %636 = vmatprep.subr.mxu0 %v620
  %637 = vmatpush1.msra.mxu0 %v619
  %638 = vmatprep.subr.mxu0 0.0
  %639 = vmatpush1.msra.mxu0 0.0
  %640 = vmatprep.subr.mxu0 0.0
  %641 = vmatpush1.msra.mxu0 0.0
  %642 = vmatprep.subr.mxu0 0.0
  %643 = vmatpush1.msra.mxu0 0.0
  %644 = vmatprep.subr.mxu0 0.0
  %645 = vmatpush1.msra.mxu0 0.0
  %646 = vmatprep.subr.mxu0 0.0
  %647 = vmatpush1.msra.mxu0 0.0
  %648 = vmatprep.subr.mxu0 0.0
  %649 = vmatpush1.msra.mxu0 0.0
  %650 = vmatprep.subr.mxu0 0.0
  %651 = vmatpush1.msra.mxu0 0.0
  %652 = vmatprep.subr.mxu0 0.0
  %653 = vmatpush1.msra.mxu0 0.0
  %654 = vmatprep.subr.mxu0 0.0
  %655 = vmatpush1.msra.mxu0 0.0
  %656 = vmatprep.subr.mxu0 0.0
  %657 = vmatpush1.msra.mxu0 0.0
  %658 = vmatprep.subr.mxu0 0.0
  %659 = vmatpush1.msra.mxu0 0.0
  %660 = vmatprep.subr.mxu0 0.0
  %661 = vmatpush1.msra.mxu0 0.0
  %662 = vmatprep.subr.mxu0 0.0
  %663 = vmatpush1.msra.mxu0 0.0
  %664 = vmatprep.subr.mxu0 0.0
  %665 = vmatpush1.msra.mxu0 0.0
  %666 = vmatprep.subr.mxu0 0.0
  %667 = vmatpush1.msra.mxu0 0.0
  %668 = vmatprep.subr.mxu0 0.0
  %669 = vmatpush1.msra.mxu0 0.0
  %670 = vmatprep.subr.mxu0 0.0
  %671 = vmatpush1.msra.mxu0 0.0
  %672 = vmatprep.subr.mxu0 0.0
  %673 = vmatpush1.msra.mxu0 0.0
  %674 = vmatprep.subr.mxu0 0.0
  %675 = vmatpush1.msra.mxu0 0.0
  %676 = vmatprep.subr.mxu0 0.0
  %677 = vmatpush1.msra.mxu0 0.0
  %678 = vmatprep.subr.mxu0 0.0
  %679 = vmatpush1.msra.mxu0 0.0
  %680 = vmatprep.subr.mxu0 0.0
  %681 = vmatpush1.msra.mxu0 0.0
  %682 = vmatprep.subr.mxu0 0.0
  %683 = vmatpush1.msra.mxu0 0.0
  %684 = vmatprep.subr.mxu0 0.0
  %685 = vmatpush1.msra.mxu0 0.0
  %686 = vmatprep.subr.mxu0 0.0
  %687 = vmatpush1.msra.mxu0 0.0
  %688 = vmatprep.subr.mxu0 0.0
  %689 = vmatpush1.msra.mxu0 0.0
  %690 = vmatprep.subr.mxu0 0.0
  %691 = vmatpush1.msra.mxu0 0.0
  %692 = vmatprep.subr.mxu0 0.0
  %693 = vmatpush1.msra.mxu0 0.0
  %694 = vmatprep.subr.mxu0 0.0
  %695 = vmatpush1.msra.mxu0 0.0
  %696 = vmatprep.subr.mxu0 0.0
  %697 = vmatpush1.msra.mxu0 0.0
  %698 = vmatprep.subr.mxu0 0.0
  %699 = vmatpush1.msra.mxu0 0.0
  %700 = vmatprep.mubr.f32.mxu0 0.0
  %701 = vmatmul.mubr.f32.gmra.mrb[0].mxu0 %v632
  %v702 = vpop.f32.mrb[0].mxu0
  %v703 = vadd.f32 0.0, %v702
  %v704 = vpop.f32.mrb[0].mxu0
  %v705 = vadd.f32 0.0, %v704
  %706 = vmatprep.mubr.f32.mxu0 0.0
  %707 = vmatmul.mubr.f32.gmra.mrb[0].mxu0 %v634
  %v708 = vpop.f32.mrb[0].mxu0
  %v709 = vadd.f32 0.0, %v708
  %v710 = vpop.f32.mrb[0].mxu0
  %v711 = vadd.f32 0.0, %v710
  %712 = vdwg.mxu0
  %713 = vmatprep.subr.mxu0 %v622
  %714 = vmatpush1.msra.mxu0 %v621
  %715 = vmatprep.subr.mxu0 0.0
  %716 = vmatpush1.msra.mxu0 0.0
  %717 = vmatprep.subr.mxu0 0.0
  %718 = vmatpush1.msra.mxu0 0.0
  %719 = vmatprep.subr.mxu0 0.0
  %720 = vmatpush1.msra.mxu0 0.0
  %721 = vmatprep.subr.mxu0 0.0
  %722 = vmatpush1.msra.mxu0 0.0
  %723 = vmatprep.subr.mxu0 0.0
  %724 = vmatpush1.msra.mxu0 0.0
  %725 = vmatprep.subr.mxu0 0.0
  %726 = vmatpush1.msra.mxu0 0.0
  %727 = vmatprep.subr.mxu0 0.0
  %728 = vmatpush1.msra.mxu0 0.0
  %729 = vmatprep.subr.mxu0 0.0
  %730 = vmatpush1.msra.mxu0 0.0
  %731 = vmatprep.subr.mxu0 0.0
  %732 = vmatpush1.msra.mxu0 0.0
  %733 = vmatprep.subr.mxu0 0.0
  %734 = vmatpush1.msra.mxu0 0.0
  %735 = vmatprep.subr.mxu0 0.0
  %736 = vmatpush1.msra.mxu0 0.0
  %737 = vmatprep.subr.mxu0 0.0
  %738 = vmatpush1.msra.mxu0 0.0
  %739 = vmatprep.subr.mxu0 0.0
  %740 = vmatpush1.msra.mxu0 0.0
  %741 = vmatprep.subr.mxu0 0.0
  %742 = vmatpush1.msra.mxu0 0.0
  %743 = vmatprep.subr.mxu0 0.0
  %744 = vmatpush1.msra.mxu0 0.0
  %745 = vmatprep.subr.mxu0 0.0
  %746 = vmatpush1.msra.mxu0 0.0
  %747 = vmatprep.subr.mxu0 0.0
  %748 = vmatpush1.msra.mxu0 0.0
  %749 = vmatprep.subr.mxu0 0.0
  %750 = vmatpush1.msra.mxu0 0.0
  %751 = vmatprep.subr.mxu0 0.0
  %752 = vmatpush1.msra.mxu0 0.0
  %753 = vmatprep.subr.mxu0 0.0
  %754 = vmatpush1.msra.mxu0 0.0
  %755 = vmatprep.subr.mxu0 0.0
  %756 = vmatpush1.msra.mxu0 0.0
  %757 = vmatprep.subr.mxu0 0.0
  %758 = vmatpush1.msra.mxu0 0.0
  %759 = vmatprep.subr.mxu0 0.0
  %760 = vmatpush1.msra.mxu0 0.0
  %761 = vmatprep.subr.mxu0 0.0
  %762 = vmatpush1.msra.mxu0 0.0
  %763 = vmatprep.subr.mxu0 0.0
  %764 = vmatpush1.msra.mxu0 0.0
  %765 = vmatprep.subr.mxu0 0.0
  %766 = vmatpush1.msra.mxu0 0.0
  %767 = vmatprep.subr.mxu0 0.0
  %768 = vmatpush1.msra.mxu0 0.0
  %769 = vmatprep.subr.mxu0 0.0
  %770 = vmatpush1.msra.mxu0 0.0
  %771 = vmatprep.subr.mxu0 0.0
  %772 = vmatpush1.msra.mxu0 0.0
  %773 = vmatprep.subr.mxu0 0.0
  %774 = vmatpush1.msra.mxu0 0.0
  %775 = vmatprep.subr.mxu0 0.0
  %776 = vmatpush1.msra.mxu0 0.0
  %777 = vmatprep.mubr.f32.mxu0 0.0
  %778 = vmatmul.mubr.f32.gmra.mrb[0].mxu0 %v632
  %v779 = vpop.f32.mrb[0].mxu0
  %v780 = vadd.f32 0.0, %v779
  %v781 = vpop.f32.mrb[0].mxu0
  %v782 = vadd.f32 0.0, %v781
  %783 = vmatprep.mubr.f32.mxu0 0.0
  %784 = vmatmul.mubr.f32.gmra.mrb[0].mxu0 %v634
  %v785 = vpop.f32.mrb[0].mxu0
  %v786 = vadd.f32 0.0, %v785
  %v787 = vpop.f32.mrb[0].mxu0
  %v788 = vadd.f32 0.0, %v787
  %789 = vdwg.mxu0
  %v790 = vsel %vm631, %v623, 0
  %v792 = vsel %vm631, %v624, 0
  %794 = vmatprep.subr.mxu0 %v516
  %795 = vmatpush1.msra.mxu0 %v515
  %796 = vmatprep.subr.mxu0 0.0
  %797 = vmatpush1.msra.mxu0 0.0
  %798 = vmatprep.subr.mxu0 0.0
  %799 = vmatpush1.msra.mxu0 0.0
  %800 = vmatprep.subr.mxu0 0.0
  %801 = vmatpush1.msra.mxu0 0.0
  %802 = vmatprep.subr.mxu0 0.0
  %803 = vmatpush1.msra.mxu0 0.0
  %804 = vmatprep.subr.mxu0 0.0
  %805 = vmatpush1.msra.mxu0 0.0
  %806 = vmatprep.subr.mxu0 0.0
  %807 = vmatpush1.msra.mxu0 0.0
  %808 = vmatprep.subr.mxu0 0.0
  %809 = vmatpush1.msra.mxu0 0.0
  %810 = vmatprep.subr.mxu0 0.0
  %811 = vmatpush1.msra.mxu0 0.0
  %812 = vmatprep.subr.mxu0 0.0
  %813 = vmatpush1.msra.mxu0 0.0
  %814 = vmatprep.subr.mxu0 0.0
  %815 = vmatpush1.msra.mxu0 0.0
  %816 = vmatprep.subr.mxu0 0.0
  %817 = vmatpush1.msra.mxu0 0.0
  %818 = vmatprep.subr.mxu0 0.0
  %819 = vmatpush1.msra.mxu0 0.0
  %820 = vmatprep.subr.mxu0 0.0
  %821 = vmatpush1.msra.mxu0 0.0
  %822 = vmatprep.subr.mxu0 0.0
  %823 = vmatpush1.msra.mxu0 0.0
  %824 = vmatprep.subr.mxu0 0.0
  %825 = vmatpush1.msra.mxu0 0.0
  %826 = vmatprep.subr.mxu0 0.0
  %827 = vmatpush1.msra.mxu0 0.0
  %828 = vmatprep.subr.mxu0 0.0
  %829 = vmatpush1.msra.mxu0 0.0
  %830 = vmatprep.subr.mxu0 0.0
  %831 = vmatpush1.msra.mxu0 0.0
  %832 = vmatprep.subr.mxu0 0.0
  %833 = vmatpush1.msra.mxu0 0.0
  %834 = vmatprep.subr.mxu0 0.0
  %835 = vmatpush1.msra.mxu0 0.0
  %836 = vmatprep.subr.mxu0 0.0
  %837 = vmatpush1.msra.mxu0 0.0
  %838 = vmatprep.subr.mxu0 0.0
  %839 = vmatpush1.msra.mxu0 0.0
  %840 = vmatprep.subr.mxu0 0.0
  %841 = vmatpush1.msra.mxu0 0.0
  %842 = vmatprep.subr.mxu0 0.0
  %843 = vmatpush1.msra.mxu0 0.0
  %844 = vmatprep.subr.mxu0 0.0
  %845 = vmatpush1.msra.mxu0 0.0
  %846 = vmatprep.subr.mxu0 0.0
  %847 = vmatpush1.msra.mxu0 0.0
  %848 = vmatprep.subr.mxu0 0.0
  %849 = vmatpush1.msra.mxu0 0.0
  %850 = vmatprep.subr.mxu0 0.0
  %851 = vmatpush1.msra.mxu0 0.0
  %852 = vmatprep.subr.mxu0 0.0
  %853 = vmatpush1.msra.mxu0 0.0
  %854 = vmatprep.subr.mxu0 0.0
  %855 = vmatpush1.msra.mxu0 0.0
  %856 = vmatprep.subr.mxu0 0.0
  %857 = vmatpush1.msra.mxu0 0.0
  %858 = vmatprep.mubr.f32.mxu0 0.0
  %859 = vmatmul.mubr.f32.gmra.mrb[0].mxu0 %v790
  %v860 = vpop.f32.mrb[0].mxu0
  %v861 = vadd.f32 %v703, %v860
  %v862 = vpop.f32.mrb[0].mxu0
  %v863 = vadd.f32 %v705, %v862
  %864 = vmatprep.mubr.f32.mxu0 0.0
  %865 = vmatmul.mubr.f32.gmra.mrb[0].mxu0 %v792
  %v866 = vpop.f32.mrb[0].mxu0
  %v867 = vadd.f32 %v709, %v866
  %v868 = vpop.f32.mrb[0].mxu0
  %v869 = vadd.f32 %v711, %v868
  %870 = vdwg.mxu0
  %871 = vmatprep.subr.mxu0 %v518
  %872 = vmatpush1.msra.mxu0 %v517
  %873 = vmatprep.subr.mxu0 0.0
  %874 = vmatpush1.msra.mxu0 0.0
  %875 = vmatprep.subr.mxu0 0.0
  %876 = vmatpush1.msra.mxu0 0.0
  %877 = vmatprep.subr.mxu0 0.0
  %878 = vmatpush1.msra.mxu0 0.0
  %879 = vmatprep.subr.mxu0 0.0
  %880 = vmatpush1.msra.mxu0 0.0
  %881 = vmatprep.subr.mxu0 0.0
  %882 = vmatpush1.msra.mxu0 0.0
  %883 = vmatprep.subr.mxu0 0.0
  %884 = vmatpush1.msra.mxu0 0.0
  %885 = vmatprep.subr.mxu0 0.0
  %886 = vmatpush1.msra.mxu0 0.0
  %887 = vmatprep.subr.mxu0 0.0
  %888 = vmatpush1.msra.mxu0 0.0
  %889 = vmatprep.subr.mxu0 0.0
  %890 = vmatpush1.msra.mxu0 0.0
  %891 = vmatprep.subr.mxu0 0.0
  %892 = vmatpush1.msra.mxu0 0.0
  %893 = vmatprep.subr.mxu0 0.0
  %894 = vmatpush1.msra.mxu0 0.0
  %895 = vmatprep.subr.mxu0 0.0
  %896 = vmatpush1.msra.mxu0 0.0
  %897 = vmatprep.subr.mxu0 0.0
  %898 = vmatpush1.msra.mxu0 0.0
  %899 = vmatprep.subr.mxu0 0.0
  %900 = vmatpush1.msra.mxu0 0.0
  %901 = vmatprep.subr.mxu0 0.0
  %902 = vmatpush1.msra.mxu0 0.0
  %903 = vmatprep.subr.mxu0 0.0
  %904 = vmatpush1.msra.mxu0 0.0
  %905 = vmatprep.subr.mxu0 0.0
  %906 = vmatpush1.msra.mxu0 0.0
  %907 = vmatprep.subr.mxu0 0.0
  %908 = vmatpush1.msra.mxu0 0.0
  %909 = vmatprep.subr.mxu0 0.0
  %910 = vmatpush1.msra.mxu0 0.0
  %911 = vmatprep.subr.mxu0 0.0
  %912 = vmatpush1.msra.mxu0 0.0
  %913 = vmatprep.subr.mxu0 0.0
  %914 = vmatpush1.msra.mxu0 0.0
  %915 = vmatprep.subr.mxu0 0.0
  %916 = vmatpush1.msra.mxu0 0.0
  %917 = vmatprep.subr.mxu0 0.0
  %918 = vmatpush1.msra.mxu0 0.0
  %919 = vmatprep.subr.mxu0 0.0
  %920 = vmatpush1.msra.mxu0 0.0
  %921 = vmatprep.subr.mxu0 0.0
  %922 = vmatpush1.msra.mxu0 0.0
  %923 = vmatprep.subr.mxu0 0.0
  %924 = vmatpush1.msra.mxu0 0.0
  %925 = vmatprep.subr.mxu0 0.0
  %926 = vmatpush1.msra.mxu0 0.0
  %927 = vmatprep.subr.mxu0 0.0
  %928 = vmatpush1.msra.mxu0 0.0
  %929 = vmatprep.subr.mxu0 0.0
  %930 = vmatpush1.msra.mxu0 0.0
  %931 = vmatprep.subr.mxu0 0.0
  %932 = vmatpush1.msra.mxu0 0.0
  %933 = vmatprep.subr.mxu0 0.0
  %934 = vmatpush1.msra.mxu0 0.0
  %935 = vmatprep.mubr.f32.mxu0 0.0
  %936 = vmatmul.mubr.f32.gmra.mrb[0].mxu0 %v790
  %v937 = vpop.f32.mrb[0].mxu0
  %v938 = vadd.f32 %v780, %v937
  %v939 = vpop.f32.mrb[0].mxu0
  %v940 = vadd.f32 %v782, %v939
  %941 = vmatprep.mubr.f32.mxu0 0.0
  %942 = vmatmul.mubr.f32.gmra.mrb[0].mxu0 %v792
  %v943 = vpop.f32.mrb[0].mxu0
  %v944 = vadd.f32 %v786, %v943
  %v945 = vpop.f32.mrb[0].mxu0
  %v946 = vadd.f32 %v788, %v945
  %947 = vdwg.mxu0
  %v948 = vld [vmem:[%s5] sm:$0xff]
  %v949 = vld [vmem:[%s5 + $0x8] sm:$0xff]
  %v950 = vadd.f32 %v861, %v863
  %v951 = vadd.f32 %v950, %v938
  %v952 = vadd.f32 %v951, %v940
  %953 = vadd.xlane.f32.xlu0 %v952
  %v954 = vpop.xlane.xlu0 %953
  %v955 = vadd.f32 %v867, %v869
  %v956 = vadd.f32 %v955, %v944
  %v957 = vadd.f32 %v956, %v946
  %958 = vadd.xlane.f32.xlu0 %v957
  %v959 = vpop.xlane.xlu0 %958
  %v960 = vmul.f32 %v954, %v222
  %v961 = vmul.f32 %v959, %v222
  %v962 = vsub.f32 %v861, %v960
  %v963 = vsub.f32 %v863, %v960
  %v964 = vsub.f32 %v938, %v960
  %v965 = vsub.f32 %v940, %v960
  %v966 = vsub.f32 %v867, %v961
  %v967 = vsub.f32 %v869, %v961
  %v968 = vsub.f32 %v944, %v961
  %v969 = vsub.f32 %v946, %v961
  %v970 = vmul.f32 %v962, %v962
  %v971 = vmul.f32 %v963, %v963
  %v972 = vmul.f32 %v964, %v964
  %v973 = vmul.f32 %v965, %v965
  %v974 = vmul.f32 %v966, %v966
  %v975 = vmul.f32 %v967, %v967
  %v976 = vmul.f32 %v968, %v968
  %v977 = vmul.f32 %v969, %v969
  %v978 = vadd.f32 %v970, %v971
  %v979 = vadd.f32 %v978, %v972
  %v980 = vadd.f32 %v979, %v973
  %981 = vadd.xlane.f32.xlu0 %v980
  %v982 = vpop.xlane.xlu0 %981
  %v983 = vadd.f32 %v974, %v975
  %v984 = vadd.f32 %v983, %v976
  %v985 = vadd.f32 %v984, %v977
  %986 = vadd.xlane.f32.xlu0 %v985
  %v987 = vpop.xlane.xlu0 %986
  %v988 = vmul.f32 %v982, %v222
  %v989 = vmul.f32 %v987, %v222
  %v990 = vadd.f32 %v988, 1e-05
  %v991 = vadd.f32 %v989, 1e-05
  %v992 = vrsqrt.pop %v990
  %v993 = vrsqrt.pop %v991
  %v994 = vmul.f32 %v962, %v992
  %v995 = vmul.f32 %v963, %v992
  %v996 = vmul.f32 %v964, %v992
  %v997 = vmul.f32 %v965, %v992
  %v998 = vmul.f32 %v966, %v993
  %v999 = vmul.f32 %v967, %v993
  %v1000 = vmul.f32 %v968, %v993
  %v1001 = vmul.f32 %v969, %v993
  %1003 = vset.pattern.permute.xlu0 0
  %1004 = vperm.xlu0 %1003, %v948
  %v1005 = vpop.permute.xlu0 %1004
  %1008 = vset.pattern.permute.xlu0 0
  %1009 = vperm.xlu0 %1008, %v949
  %v1010 = vpop.permute.xlu0 %1009
  %v1012 = vmul.f32 %v994, %v1005
  %v1013 = vmul.f32 %v995, %v1005
  %v1014 = vmul.f32 %v996, %v1005
  %v1015 = vmul.f32 %v997, %v1005
  %v1016 = vmul.f32 %v998, %v1010
  %v1017 = vmul.f32 %v999, %v1010
  %v1018 = vmul.f32 %v1000, %v1010
  %v1019 = vmul.f32 %v1001, %v1010
  %1020 = vset.pattern.permute.xlu0 1
  %1021 = vperm.xlu0 %1020, %v948
  %v1022 = vpop.permute.xlu0 %1021
  %1024 = vset.pattern.permute.xlu0 1
  %1025 = vperm.xlu0 %1024, %v949
  %v1026 = vpop.permute.xlu0 %1025
  %v1028 = vadd.f32 %v1012, %v1022
  %v1029 = vadd.f32 %v1013, %v1022
  %v1030 = vadd.f32 %v1014, %v1022
  %v1031 = vadd.f32 %v1015, %v1022
  %v1032 = vadd.f32 %v1016, %v1026
  %v1033 = vadd.f32 %v1017, %v1026
  %v1034 = vadd.f32 %v1018, %v1026
  %v1035 = vadd.f32 %v1019, %v1026
  %v1036 = vmax.f32 %v1028, 0.0
  %v1037 = vmax.f32 %v1029, 0.0
  %v1038 = vmax.f32 %v1030, 0.0
  %v1039 = vmax.f32 %v1031, 0.0
  %v1040 = vmax.f32 %v1032, 0.0
  %v1041 = vmax.f32 %v1033, 0.0
  %v1042 = vmax.f32 %v1034, 0.0
  %v1043 = vmax.f32 %v1035, 0.0
  %1044 = vst [vmem:[%s12] sm:$0xff] %v1036
  %1045 = vst [vmem:[%s12 + $0x8] sm:$0xff] %v1037
  %1046 = vst [vmem:[%s12 + $0x10] sm:$0xff] %v1038
  %1047 = vst [vmem:[%s12 + $0x18] sm:$0xff] %v1039
  %1048 = vst [vmem:[%s12 + $0x20] sm:$0xff] %v1040
  %1049 = vst [vmem:[%s12 + $0x28] sm:$0xff] %v1041
  %1050 = vst [vmem:[%s12 + $0x30] sm:$0xff] %v1042
  %1051 = vst [vmem:[%s12 + $0x38] sm:$0xff] %v1043
  %v1052 = vld [vmem:[%s6] sm:$0xf]
  %v1053 = vld [vmem:[%s7] sm:$0xf]
  %v1054 = vld [vmem:[%s8] sm:$0xf]
  %v1055 = vld [vmem:[%s9] sm:$0xf]
  %v1056 = vld [vmem:[%s10] sm:$0x1]
  %v1057 = vld [vmem:[%s11] sm:$0x1]
  %v1059 = vsel %vm70, %v1052, 0
  %1061 = vmatprep.subr.mxu0 %v1037
  %1062 = vmatpush1.msra.mxu0 %v1036
  %1063 = vmatprep.subr.mxu0 %v1041
  %1064 = vmatpush1.msra.mxu0 %v1040
  %1065 = vmatprep.subr.mxu0 0.0
  %1066 = vmatpush1.msra.mxu0 0.0
  %1067 = vmatprep.subr.mxu0 0.0
  %1068 = vmatpush1.msra.mxu0 0.0
  %1069 = vmatprep.subr.mxu0 0.0
  %1070 = vmatpush1.msra.mxu0 0.0
  %1071 = vmatprep.subr.mxu0 0.0
  %1072 = vmatpush1.msra.mxu0 0.0
  %1073 = vmatprep.subr.mxu0 0.0
  %1074 = vmatpush1.msra.mxu0 0.0
  %1075 = vmatprep.subr.mxu0 0.0
  %1076 = vmatpush1.msra.mxu0 0.0
  %1077 = vmatprep.subr.mxu0 0.0
  %1078 = vmatpush1.msra.mxu0 0.0
  %1079 = vmatprep.subr.mxu0 0.0
  %1080 = vmatpush1.msra.mxu0 0.0
  %1081 = vmatprep.subr.mxu0 0.0
  %1082 = vmatpush1.msra.mxu0 0.0
  %1083 = vmatprep.subr.mxu0 0.0
  %1084 = vmatpush1.msra.mxu0 0.0
  %1085 = vmatprep.subr.mxu0 0.0
  %1086 = vmatpush1.msra.mxu0 0.0
  %1087 = vmatprep.subr.mxu0 0.0
  %1088 = vmatpush1.msra.mxu0 0.0
  %1089 = vmatprep.subr.mxu0 0.0
  %1090 = vmatpush1.msra.mxu0 0.0
  %1091 = vmatprep.subr.mxu0 0.0
  %1092 = vmatpush1.msra.mxu0 0.0
  %1093 = vmatprep.subr.mxu0 0.0
  %1094 = vmatpush1.msra.mxu0 0.0
  %1095 = vmatprep.subr.mxu0 0.0
  %1096 = vmatpush1.msra.mxu0 0.0
  %1097 = vmatprep.subr.mxu0 0.0
  %1098 = vmatpush1.msra.mxu0 0.0
  %1099 = vmatprep.subr.mxu0 0.0
  %1100 = vmatpush1.msra.mxu0 0.0
  %1101 = vmatprep.subr.mxu0 0.0
  %1102 = vmatpush1.msra.mxu0 0.0
  %1103 = vmatprep.subr.mxu0 0.0
  %1104 = vmatpush1.msra.mxu0 0.0
  %1105 = vmatprep.subr.mxu0 0.0
  %1106 = vmatpush1.msra.mxu0 0.0
  %1107 = vmatprep.subr.mxu0 0.0
  %1108 = vmatpush1.msra.mxu0 0.0
  %1109 = vmatprep.subr.mxu0 0.0
  %1110 = vmatpush1.msra.mxu0 0.0
  %1111 = vmatprep.subr.mxu0 0.0
  %1112 = vmatpush1.msra.mxu0 0.0
  %1113 = vmatprep.subr.mxu0 0.0
  %1114 = vmatpush1.msra.mxu0 0.0
  %1115 = vmatprep.subr.mxu0 0.0
  %1116 = vmatpush1.msra.mxu0 0.0
  %1117 = vmatprep.subr.mxu0 0.0
  %1118 = vmatpush1.msra.mxu0 0.0
  %1119 = vmatprep.subr.mxu0 0.0
  %1120 = vmatpush1.msra.mxu0 0.0
  %1121 = vmatprep.subr.mxu0 0.0
  %1122 = vmatpush1.msra.mxu0 0.0
  %1123 = vmatprep.subr.mxu0 0.0
  %1124 = vmatpush1.msra.mxu0 0.0
  %1125 = vmatprep.mubr.f32.mxu0 0.0
  %1126 = vmatmul.mubr.f32.gmra.mrb[0].mxu0 %v1059
  %v1127 = vpop.f32.mrb[0].mxu0
  %v1128 = vadd.f32 0.0, %v1127
  %v1129 = vpop.f32.mrb[0].mxu0
  %v1130 = vadd.f32 0.0, %v1129
  %1131 = vdwg.mxu0
  %1132 = vmatprep.subr.mxu0 %v1039
  %1133 = vmatpush1.msra.mxu0 %v1038
  %1134 = vmatprep.subr.mxu0 %v1043
  %1135 = vmatpush1.msra.mxu0 %v1042
  %1136 = vmatprep.subr.mxu0 0.0
  %1137 = vmatpush1.msra.mxu0 0.0
  %1138 = vmatprep.subr.mxu0 0.0
  %1139 = vmatpush1.msra.mxu0 0.0
  %1140 = vmatprep.subr.mxu0 0.0
  %1141 = vmatpush1.msra.mxu0 0.0
  %1142 = vmatprep.subr.mxu0 0.0
  %1143 = vmatpush1.msra.mxu0 0.0
  %1144 = vmatprep.subr.mxu0 0.0
  %1145 = vmatpush1.msra.mxu0 0.0
  %1146 = vmatprep.subr.mxu0 0.0
  %1147 = vmatpush1.msra.mxu0 0.0
  %1148 = vmatprep.subr.mxu0 0.0
  %1149 = vmatpush1.msra.mxu0 0.0
  %1150 = vmatprep.subr.mxu0 0.0
  %1151 = vmatpush1.msra.mxu0 0.0
  %1152 = vmatprep.subr.mxu0 0.0
  %1153 = vmatpush1.msra.mxu0 0.0
  %1154 = vmatprep.subr.mxu0 0.0
  %1155 = vmatpush1.msra.mxu0 0.0
  %1156 = vmatprep.subr.mxu0 0.0
  %1157 = vmatpush1.msra.mxu0 0.0
  %1158 = vmatprep.subr.mxu0 0.0
  %1159 = vmatpush1.msra.mxu0 0.0
  %1160 = vmatprep.subr.mxu0 0.0
  %1161 = vmatpush1.msra.mxu0 0.0
  %1162 = vmatprep.subr.mxu0 0.0
  %1163 = vmatpush1.msra.mxu0 0.0
  %1164 = vmatprep.subr.mxu0 0.0
  %1165 = vmatpush1.msra.mxu0 0.0
  %1166 = vmatprep.subr.mxu0 0.0
  %1167 = vmatpush1.msra.mxu0 0.0
  %1168 = vmatprep.subr.mxu0 0.0
  %1169 = vmatpush1.msra.mxu0 0.0
  %1170 = vmatprep.subr.mxu0 0.0
  %1171 = vmatpush1.msra.mxu0 0.0
  %1172 = vmatprep.subr.mxu0 0.0
  %1173 = vmatpush1.msra.mxu0 0.0
  %1174 = vmatprep.subr.mxu0 0.0
  %1175 = vmatpush1.msra.mxu0 0.0
  %1176 = vmatprep.subr.mxu0 0.0
  %1177 = vmatpush1.msra.mxu0 0.0
  %1178 = vmatprep.subr.mxu0 0.0
  %1179 = vmatpush1.msra.mxu0 0.0
  %1180 = vmatprep.subr.mxu0 0.0
  %1181 = vmatpush1.msra.mxu0 0.0
  %1182 = vmatprep.subr.mxu0 0.0
  %1183 = vmatpush1.msra.mxu0 0.0
  %1184 = vmatprep.subr.mxu0 0.0
  %1185 = vmatpush1.msra.mxu0 0.0
  %1186 = vmatprep.subr.mxu0 0.0
  %1187 = vmatpush1.msra.mxu0 0.0
  %1188 = vmatprep.subr.mxu0 0.0
  %1189 = vmatpush1.msra.mxu0 0.0
  %1190 = vmatprep.subr.mxu0 0.0
  %1191 = vmatpush1.msra.mxu0 0.0
  %1192 = vmatprep.subr.mxu0 0.0
  %1193 = vmatpush1.msra.mxu0 0.0
  %1194 = vmatprep.subr.mxu0 0.0
  %1195 = vmatpush1.msra.mxu0 0.0
  %1196 = vmatprep.mubr.f32.mxu0 0.0
  %1197 = vmatmul.mubr.f32.gmra.mrb[0].mxu0 %v1059
  %v1198 = vpop.f32.mrb[0].mxu0
  %v1199 = vadd.f32 0.0, %v1198
  %v1200 = vpop.f32.mrb[0].mxu0
  %v1201 = vadd.f32 0.0, %v1200
  %1202 = vdwg.mxu0
  %vm1203 = vcmask 1043456
  %v1204 = vsel %vm1203, %v1128, 0.0
  %v1205 = vsel %vm1203, %v1130, 0.0
  %v1206 = vadd.f32 %v1204, %v1205
  %v1207 = vsel %vm1203, %v1199, 0.0
  %v1208 = vadd.f32 %v1206, %v1207
  %v1209 = vsel %vm1203, %v1201, 0.0
  %v1210 = vadd.f32 %v1208, %v1209
  %1211 = vadd.xlane.f32.xlu0 %v1210
  %v1212 = vpop.xlane.xlu0 %1211
  %v1213 = vmul.f32 %v1212, %v222
  %v1214 = vsub.f32 %v1128, %v1213
  %v1215 = vsub.f32 %v1130, %v1213
  %v1216 = vsub.f32 %v1199, %v1213
  %v1217 = vsub.f32 %v1201, %v1213
  %v1218 = vmul.f32 %v1214, %v1214
  %v1219 = vmul.f32 %v1215, %v1215
  %v1220 = vmul.f32 %v1216, %v1216
  %v1221 = vmul.f32 %v1217, %v1217
  %v1222 = vsel %vm1203, %v1218, 0.0
  %v1223 = vsel %vm1203, %v1219, 0.0
  %v1224 = vadd.f32 %v1222, %v1223
  %v1225 = vsel %vm1203, %v1220, 0.0
  %v1226 = vadd.f32 %v1224, %v1225
  %v1227 = vsel %vm1203, %v1221, 0.0
  %v1228 = vadd.f32 %v1226, %v1227
  %1229 = vadd.xlane.f32.xlu0 %v1228
  %v1230 = vpop.xlane.xlu0 %1229
  %v1231 = vmul.f32 %v1230, %v222
  %v1232 = vadd.f32 %v1231, 1e-05
  %v1233 = vrsqrt.pop %v1232
  %v1234 = vmul.f32 %v1214, %v1233
  %v1235 = vmul.f32 %v1215, %v1233
  %v1236 = vmul.f32 %v1216, %v1233
  %v1237 = vmul.f32 %v1217, %v1233
  %1239 = vset.pattern.permute.xlu0 0
  %1240 = vperm.xlu0 %1239, %v1053
  %v1241 = vpop.permute.xlu0 %1240
  %v1243 = vmul.f32 %v1234, %v1241
  %v1244 = vmul.f32 %v1235, %v1241
  %v1245 = vmul.f32 %v1236, %v1241
  %v1246 = vmul.f32 %v1237, %v1241
  %1247 = vset.pattern.permute.xlu0 1
  %1248 = vperm.xlu0 %1247, %v1053
  %v1249 = vpop.permute.xlu0 %1248
  %v1251 = vadd.f32 %v1243, %v1249
  %v1252 = vadd.f32 %v1244, %v1249
  %v1253 = vadd.f32 %v1245, %v1249
  %v1254 = vadd.f32 %v1246, %v1249
  %v1255 = vmax.f32 %v1251, 0.0
  %v1256 = vmax.f32 %v1252, 0.0
  %v1257 = vmax.f32 %v1253, 0.0
  %v1258 = vmax.f32 %v1254, 0.0
  %1259 = vrot.lane.b32.xlu0 %v1255, 16
  %v1260 = vpop.permute.xlu0 %1259
  %1261 = vrot.lane.b32.xlu0 %v1256, 16
  %v1262 = vpop.permute.xlu0 %1261
  %1263 = vrot.lane.b32.xlu0 %v1257, 16
  %v1264 = vpop.permute.xlu0 %1263
  %1265 = vrot.lane.b32.xlu0 %v1258, 16
  %v1266 = vpop.permute.xlu0 %1265
  %v1267 = vsel %vm289, %v1264, %v1266
  %v1268 = vsel %vm289, %v1262, %v1264
  %v1269 = vsel %vm289, %v1260, %v1262
  %v1270 = vsel %vm289, %v1266, %v1260
  %1271 = vrot.lane.b32.xlu0 %v1255, 112
  %v1272 = vpop.permute.xlu0 %1271
  %1273 = vrot.lane.b32.xlu0 %v1256, 112
  %v1274 = vpop.permute.xlu0 %1273
  %1275 = vrot.lane.b32.xlu0 %v1257, 112
  %v1276 = vpop.permute.xlu0 %1275
  %1277 = vrot.lane.b32.xlu0 %v1258, 112
  %v1278 = vpop.permute.xlu0 %1277
  %v1279 = vsel %vm302, %v1276, %v1278
  %v1280 = vsel %vm302, %v1274, %v1276
  %v1281 = vsel %vm302, %v1272, %v1274
  %v1282 = vsel %vm302, %v1278, %v1272
  %v1283 = vsel %vm273, %v1281, %v1270
  %v1284 = vsel %vm274, %v1280, %v1269
  %v1285 = vsel %vm275, %v1279, %v1268
  %v1286 = vsel %vm276, %v1282, %v1267
  %v1287 = vsel %vm277, %v1270, %v1281
  %v1288 = vsel %vm278, %v1269, %v1280
  %v1289 = vsel %vm279, %v1268, %v1279
  %v1290 = vsel %vm280, %v1267, %v1282
  %1291 = vrot.lane.b32.xlu0 %v1283, 1
  %v1292 = vpop.permute.xlu0 %1291
  %1293 = vrot.lane.b32.xlu0 %v1284, 1
  %v1294 = vpop.permute.xlu0 %1293
  %1295 = vrot.lane.b32.xlu0 %v1285, 1
  %v1296 = vpop.permute.xlu0 %1295
  %1297 = vrot.lane.b32.xlu0 %v1286, 1
  %v1298 = vpop.permute.xlu0 %1297
  %v1299 = vsel %vm323, %v1296, %v1298
  %v1300 = vsel %vm323, %v1294, %v1296
  %v1301 = vsel %vm323, %v1292, %v1294
  %v1302 = vsel %vm323, %v1298, %v1292
  %1303 = vrot.lane.b32.xlu0 %v1283, 127
  %v1304 = vpop.permute.xlu0 %1303
  %1305 = vrot.lane.b32.xlu0 %v1284, 127
  %v1306 = vpop.permute.xlu0 %1305
  %1307 = vrot.lane.b32.xlu0 %v1285, 127
  %v1308 = vpop.permute.xlu0 %1307
  %1309 = vrot.lane.b32.xlu0 %v1286, 127
  %v1310 = vpop.permute.xlu0 %1309
  %v1311 = vsel %vm336, %v1308, %v1310
  %v1312 = vsel %vm336, %v1306, %v1308
  %v1313 = vsel %vm336, %v1304, %v1306
  %v1314 = vsel %vm336, %v1310, %v1304
  %v1315 = vsel %vm265, %v1313, %v1302
  %v1316 = vsel %vm266, %v1312, %v1301
  %v1317 = vsel %vm267, %v1311, %v1300
  %v1318 = vsel %vm268, %v1314, %v1299
  %v1319 = vsel %vm269, %v1302, %v1313
  %v1320 = vsel %vm270, %v1301, %v1312
  %v1321 = vsel %vm271, %v1300, %v1311
  %v1322 = vsel %vm272, %v1299, %v1314
  %1323 = vrot.lane.b32.xlu0 %v1255, 1
  %v1324 = vpop.permute.xlu0 %1323
  %1325 = vrot.lane.b32.xlu0 %v1256, 1
  %v1326 = vpop.permute.xlu0 %1325
  %1327 = vrot.lane.b32.xlu0 %v1257, 1
  %v1328 = vpop.permute.xlu0 %1327
  %1329 = vrot.lane.b32.xlu0 %v1258, 1
  %v1330 = vpop.permute.xlu0 %1329
  %v1331 = vsel %vm323, %v1328, %v1330
  %v1332 = vsel %vm323, %v1326, %v1328
  %v1333 = vsel %vm323, %v1324, %v1326
  %v1334 = vsel %vm323, %v1330, %v1324
  %1335 = vrot.lane.b32.xlu0 %v1255, 127
  %v1336 = vpop.permute.xlu0 %1335
  %1337 = vrot.lane.b32.xlu0 %v1256, 127
  %v1338 = vpop.permute.xlu0 %1337
  %1339 = vrot.lane.b32.xlu0 %v1257, 127
  %v1340 = vpop.permute.xlu0 %1339
  %1341 = vrot.lane.b32.xlu0 %v1258, 127
  %v1342 = vpop.permute.xlu0 %1341
  %v1343 = vsel %vm336, %v1340, %v1342
  %v1344 = vsel %vm336, %v1338, %v1340
  %v1345 = vsel %vm336, %v1336, %v1338
  %v1346 = vsel %vm336, %v1342, %v1336
  %v1347 = vsel %vm265, %v1345, %v1334
  %v1348 = vsel %vm266, %v1344, %v1333
  %v1349 = vsel %vm267, %v1343, %v1332
  %v1350 = vsel %vm268, %v1346, %v1331
  %v1351 = vsel %vm269, %v1334, %v1345
  %v1352 = vsel %vm270, %v1333, %v1344
  %v1353 = vsel %vm271, %v1332, %v1343
  %v1354 = vsel %vm272, %v1331, %v1346
  %1355 = vrot.lane.b32.xlu0 %v1287, 1
  %v1356 = vpop.permute.xlu0 %1355
  %1357 = vrot.lane.b32.xlu0 %v1288, 1
  %v1358 = vpop.permute.xlu0 %1357
  %1359 = vrot.lane.b32.xlu0 %v1289, 1
  %v1360 = vpop.permute.xlu0 %1359
  %1361 = vrot.lane.b32.xlu0 %v1290, 1
  %v1362 = vpop.permute.xlu0 %1361
  %v1363 = vsel %vm323, %v1360, %v1362
  %v1364 = vsel %vm323, %v1358, %v1360
  %v1365 = vsel %vm323, %v1356, %v1358
  %v1366 = vsel %vm323, %v1362, %v1356
  %1367 = vrot.lane.b32.xlu0 %v1287, 127
  %v1368 = vpop.permute.xlu0 %1367
  %1369 = vrot.lane.b32.xlu0 %v1288, 127
  %v1370 = vpop.permute.xlu0 %1369
  %1371 = vrot.lane.b32.xlu0 %v1289, 127
  %v1372 = vpop.permute.xlu0 %1371
  %1373 = vrot.lane.b32.xlu0 %v1290, 127
  %v1374 = vpop.permute.xlu0 %1373
  %v1375 = vsel %vm336, %v1372, %v1374
  %v1376 = vsel %vm336, %v1370, %v1372
  %v1377 = vsel %vm336, %v1368, %v1370
  %v1378 = vsel %vm336, %v1374, %v1368
  %v1379 = vsel %vm265, %v1377, %v1366
  %v1380 = vsel %vm266, %v1376, %v1365
  %v1381 = vsel %vm267, %v1375, %v1364
  %v1382 = vsel %vm268, %v1378, %v1363
  %v1383 = vsel %vm269, %v1366, %v1377
  %v1384 = vsel %vm270, %v1365, %v1376
  %v1385 = vsel %vm271, %v1364, %v1375
  %v1386 = vsel %vm272, %v1363, %v1378
  %1388 = vset.pattern.permute.xlu0 0
  %1389 = vperm.xlu0 %1388, %v1054
  %v1390 = vpop.permute.xlu0 %1389
  %v1392 = vmul.f32 %v1315, %v1390
  %v1393 = vmul.f32 %v1316, %v1390
  %v1394 = vmul.f32 %v1317, %v1390
  %v1395 = vmul.f32 %v1318, %v1390
  %1396 = vset.pattern.permute.xlu0 1
  %1397 = vperm.xlu0 %1396, %v1054
  %v1398 = vpop.permute.xlu0 %1397
  %v1400 = vmul.f32 %v1283, %v1398
  %v1401 = vmul.f32 %v1284, %v1398
  %v1402 = vmul.f32 %v1285, %v1398
  %v1403 = vmul.f32 %v1286, %v1398
  %v1404 = vadd.f32 %v1392, %v1400
  %v1405 = vadd.f32 %v1393, %v1401
  %v1406 = vadd.f32 %v1394, %v1402
  %v1407 = vadd.f32 %v1395, %v1403
  %1408 = vset.pattern.permute.xlu0 2
  %1409 = vperm.xlu0 %1408, %v1054
  %v1410 = vpop.permute.xlu0 %1409
  %v1412 = vmul.f32 %v1319, %v1410
  %v1413 = vmul.f32 %v1320, %v1410
  %v1414 = vmul.f32 %v1321, %v1410
  %v1415 = vmul.f32 %v1322, %v1410
  %v1416 = vadd.f32 %v1404, %v1412
  %v1417 = vadd.f32 %v1405, %v1413
  %v1418 = vadd.f32 %v1406, %v1414
  %v1419 = vadd.f32 %v1407, %v1415
  %1420 = vset.pattern.permute.xlu0 3
  %1421 = vperm.xlu0 %1420, %v1054
  %v1422 = vpop.permute.xlu0 %1421
  %v1424 = vmul.f32 %v1347, %v1422
  %v1425 = vmul.f32 %v1348, %v1422
  %v1426 = vmul.f32 %v1349, %v1422
  %v1427 = vmul.f32 %v1350, %v1422
  %v1428 = vadd.f32 %v1416, %v1424
  %v1429 = vadd.f32 %v1417, %v1425
  %v1430 = vadd.f32 %v1418, %v1426
  %v1431 = vadd.f32 %v1419, %v1427
  %1432 = vset.pattern.permute.xlu0 4
  %1433 = vperm.xlu0 %1432, %v1054
  %v1434 = vpop.permute.xlu0 %1433
  %v1436 = vmul.f32 %v1255, %v1434
  %v1437 = vmul.f32 %v1256, %v1434
  %v1438 = vmul.f32 %v1257, %v1434
  %v1439 = vmul.f32 %v1258, %v1434
  %v1440 = vadd.f32 %v1428, %v1436
  %v1441 = vadd.f32 %v1429, %v1437
  %v1442 = vadd.f32 %v1430, %v1438
  %v1443 = vadd.f32 %v1431, %v1439
  %1444 = vset.pattern.permute.xlu0 5
  %1445 = vperm.xlu0 %1444, %v1054
  %v1446 = vpop.permute.xlu0 %1445
  %v1448 = vmul.f32 %v1351, %v1446
  %v1449 = vmul.f32 %v1352, %v1446
  %v1450 = vmul.f32 %v1353, %v1446
  %v1451 = vmul.f32 %v1354, %v1446
  %v1452 = vadd.f32 %v1440, %v1448
  %v1453 = vadd.f32 %v1441, %v1449
  %v1454 = vadd.f32 %v1442, %v1450
  %v1455 = vadd.f32 %v1443, %v1451
  %1456 = vset.pattern.permute.xlu0 6
  %1457 = vperm.xlu0 %1456, %v1054
  %v1458 = vpop.permute.xlu0 %1457
  %v1460 = vmul.f32 %v1379, %v1458
  %v1461 = vmul.f32 %v1380, %v1458
  %v1462 = vmul.f32 %v1381, %v1458
  %v1463 = vmul.f32 %v1382, %v1458
  %v1464 = vadd.f32 %v1452, %v1460
  %v1465 = vadd.f32 %v1453, %v1461
  %v1466 = vadd.f32 %v1454, %v1462
  %v1467 = vadd.f32 %v1455, %v1463
  %1468 = vset.pattern.permute.xlu0 7
  %1469 = vperm.xlu0 %1468, %v1054
  %v1470 = vpop.permute.xlu0 %1469
  %v1472 = vmul.f32 %v1287, %v1470
  %v1473 = vmul.f32 %v1288, %v1470
  %v1474 = vmul.f32 %v1289, %v1470
  %v1475 = vmul.f32 %v1290, %v1470
  %v1476 = vadd.f32 %v1464, %v1472
  %v1477 = vadd.f32 %v1465, %v1473
  %v1478 = vadd.f32 %v1466, %v1474
  %v1479 = vadd.f32 %v1467, %v1475
  %1480 = vset.pattern.permute.xlu0 8
  %1481 = vperm.xlu0 %1480, %v1054
  %v1482 = vpop.permute.xlu0 %1481
  %v1484 = vmul.f32 %v1383, %v1482
  %v1485 = vmul.f32 %v1384, %v1482
  %v1486 = vmul.f32 %v1385, %v1482
  %v1487 = vmul.f32 %v1386, %v1482
  %v1488 = vadd.f32 %v1476, %v1484
  %v1489 = vadd.f32 %v1477, %v1485
  %v1490 = vadd.f32 %v1478, %v1486
  %v1491 = vadd.f32 %v1479, %v1487
  %1492 = vset.pattern.permute.xlu0 9
  %1493 = vperm.xlu0 %1492, %v1054
  %v1494 = vpop.permute.xlu0 %1493
  %v1496 = vmul.f32 %v1315, %v1494
  %v1497 = vmul.f32 %v1316, %v1494
  %v1498 = vmul.f32 %v1317, %v1494
  %v1499 = vmul.f32 %v1318, %v1494
  %1500 = vset.pattern.permute.xlu0 10
  %1501 = vperm.xlu0 %1500, %v1054
  %v1502 = vpop.permute.xlu0 %1501
  %v1504 = vmul.f32 %v1283, %v1502
  %v1505 = vmul.f32 %v1284, %v1502
  %v1506 = vmul.f32 %v1285, %v1502
  %v1507 = vmul.f32 %v1286, %v1502
  %v1508 = vadd.f32 %v1496, %v1504
  %v1509 = vadd.f32 %v1497, %v1505
  %v1510 = vadd.f32 %v1498, %v1506
  %v1511 = vadd.f32 %v1499, %v1507
  %1512 = vset.pattern.permute.xlu0 11
  %1513 = vperm.xlu0 %1512, %v1054
  %v1514 = vpop.permute.xlu0 %1513
  %v1516 = vmul.f32 %v1319, %v1514
  %v1517 = vmul.f32 %v1320, %v1514
  %v1518 = vmul.f32 %v1321, %v1514
  %v1519 = vmul.f32 %v1322, %v1514
  %v1520 = vadd.f32 %v1508, %v1516
  %v1521 = vadd.f32 %v1509, %v1517
  %v1522 = vadd.f32 %v1510, %v1518
  %v1523 = vadd.f32 %v1511, %v1519
  %1524 = vset.pattern.permute.xlu0 12
  %1525 = vperm.xlu0 %1524, %v1054
  %v1526 = vpop.permute.xlu0 %1525
  %v1528 = vmul.f32 %v1347, %v1526
  %v1529 = vmul.f32 %v1348, %v1526
  %v1530 = vmul.f32 %v1349, %v1526
  %v1531 = vmul.f32 %v1350, %v1526
  %v1532 = vadd.f32 %v1520, %v1528
  %v1533 = vadd.f32 %v1521, %v1529
  %v1534 = vadd.f32 %v1522, %v1530
  %v1535 = vadd.f32 %v1523, %v1531
  %1536 = vset.pattern.permute.xlu0 13
  %1537 = vperm.xlu0 %1536, %v1054
  %v1538 = vpop.permute.xlu0 %1537
  %v1540 = vmul.f32 %v1255, %v1538
  %v1541 = vmul.f32 %v1256, %v1538
  %v1542 = vmul.f32 %v1257, %v1538
  %v1543 = vmul.f32 %v1258, %v1538
  %v1544 = vadd.f32 %v1532, %v1540
  %v1545 = vadd.f32 %v1533, %v1541
  %v1546 = vadd.f32 %v1534, %v1542
  %v1547 = vadd.f32 %v1535, %v1543
  %1548 = vset.pattern.permute.xlu0 14
  %1549 = vperm.xlu0 %1548, %v1054
  %v1550 = vpop.permute.xlu0 %1549
  %v1552 = vmul.f32 %v1351, %v1550
  %v1553 = vmul.f32 %v1352, %v1550
  %v1554 = vmul.f32 %v1353, %v1550
  %v1555 = vmul.f32 %v1354, %v1550
  %v1556 = vadd.f32 %v1544, %v1552
  %v1557 = vadd.f32 %v1545, %v1553
  %v1558 = vadd.f32 %v1546, %v1554
  %v1559 = vadd.f32 %v1547, %v1555
  %1560 = vset.pattern.permute.xlu0 15
  %1561 = vperm.xlu0 %1560, %v1054
  %v1562 = vpop.permute.xlu0 %1561
  %v1564 = vmul.f32 %v1379, %v1562
  %v1565 = vmul.f32 %v1380, %v1562
  %v1566 = vmul.f32 %v1381, %v1562
  %v1567 = vmul.f32 %v1382, %v1562
  %v1568 = vadd.f32 %v1556, %v1564
  %v1569 = vadd.f32 %v1557, %v1565
  %v1570 = vadd.f32 %v1558, %v1566
  %v1571 = vadd.f32 %v1559, %v1567
  %1572 = vset.pattern.permute.xlu0 16
  %1573 = vperm.xlu0 %1572, %v1054
  %v1574 = vpop.permute.xlu0 %1573
  %v1576 = vmul.f32 %v1287, %v1574
  %v1577 = vmul.f32 %v1288, %v1574
  %v1578 = vmul.f32 %v1289, %v1574
  %v1579 = vmul.f32 %v1290, %v1574
  %v1580 = vadd.f32 %v1568, %v1576
  %v1581 = vadd.f32 %v1569, %v1577
  %v1582 = vadd.f32 %v1570, %v1578
  %v1583 = vadd.f32 %v1571, %v1579
  %1584 = vset.pattern.permute.xlu0 17
  %1585 = vperm.xlu0 %1584, %v1054
  %v1586 = vpop.permute.xlu0 %1585
  %v1588 = vmul.f32 %v1383, %v1586
  %v1589 = vmul.f32 %v1384, %v1586
  %v1590 = vmul.f32 %v1385, %v1586
  %v1591 = vmul.f32 %v1386, %v1586
  %v1592 = vadd.f32 %v1580, %v1588
  %v1593 = vadd.f32 %v1581, %v1589
  %v1594 = vadd.f32 %v1582, %v1590
  %v1595 = vadd.f32 %v1583, %v1591
  %1597 = vrot.lane.b32.xlu0 %v1055, 124
  %v1598 = vpop.permute.xlu0 %1597
  %vm1599 = vcmask 31744
  %v1600 = vsel %vm1599, %v1598, 0
  %v1603 = vsel %vm1203, %v1592, 0
  %v1606 = vsel %vm1203, %v1593, 0
  %v1609 = vsel %vm1203, %v1594, 0
  %v1612 = vsel %vm1203, %v1595, 0
  %1614 = vmatprep.subr.mxu0 %v1606
  %1615 = vmatpush1.msra.mxu0 %v1603
  %1616 = vmatprep.subr.mxu0 0.0
  %1617 = vmatpush1.msra.mxu0 0.0
  %1618 = vmatprep.subr.mxu0 0.0
  %1619 = vmatpush1.msra.mxu0 0.0
  %1620 = vmatprep.subr.mxu0 0.0
  %1621 = vmatpush1.msra.mxu0 0.0
  %1622 = vmatprep.subr.mxu0 0.0
  %1623 = vmatpush1.msra.mxu0 0.0
  %1624 = vmatprep.subr.mxu0 0.0
  %1625 = vmatpush1.msra.mxu0 0.0
  %1626 = vmatprep.subr.mxu0 0.0
  %1627 = vmatpush1.msra.mxu0 0.0
  %1628 = vmatprep.subr.mxu0 0.0
  %1629 = vmatpush1.msra.mxu0 0.0
  %1630 = vmatprep.subr.mxu0 0.0
  %1631 = vmatpush1.msra.mxu0 0.0
  %1632 = vmatprep.subr.mxu0 0.0
  %1633 = vmatpush1.msra.mxu0 0.0
  %1634 = vmatprep.subr.mxu0 0.0
  %1635 = vmatpush1.msra.mxu0 0.0
  %1636 = vmatprep.subr.mxu0 0.0
  %1637 = vmatpush1.msra.mxu0 0.0
  %1638 = vmatprep.subr.mxu0 0.0
  %1639 = vmatpush1.msra.mxu0 0.0
  %1640 = vmatprep.subr.mxu0 0.0
  %1641 = vmatpush1.msra.mxu0 0.0
  %1642 = vmatprep.subr.mxu0 0.0
  %1643 = vmatpush1.msra.mxu0 0.0
  %1644 = vmatprep.subr.mxu0 0.0
  %1645 = vmatpush1.msra.mxu0 0.0
  %1646 = vmatprep.subr.mxu0 0.0
  %1647 = vmatpush1.msra.mxu0 0.0
  %1648 = vmatprep.subr.mxu0 0.0
  %1649 = vmatpush1.msra.mxu0 0.0
  %1650 = vmatprep.subr.mxu0 0.0
  %1651 = vmatpush1.msra.mxu0 0.0
  %1652 = vmatprep.subr.mxu0 0.0
  %1653 = vmatpush1.msra.mxu0 0.0
  %1654 = vmatprep.subr.mxu0 0.0
  %1655 = vmatpush1.msra.mxu0 0.0
  %1656 = vmatprep.subr.mxu0 0.0
  %1657 = vmatpush1.msra.mxu0 0.0
  %1658 = vmatprep.subr.mxu0 0.0
  %1659 = vmatpush1.msra.mxu0 0.0
  %1660 = vmatprep.subr.mxu0 0.0
  %1661 = vmatpush1.msra.mxu0 0.0
  %1662 = vmatprep.subr.mxu0 0.0
  %1663 = vmatpush1.msra.mxu0 0.0
  %1664 = vmatprep.subr.mxu0 0.0
  %1665 = vmatpush1.msra.mxu0 0.0
  %1666 = vmatprep.subr.mxu0 0.0
  %1667 = vmatpush1.msra.mxu0 0.0
  %1668 = vmatprep.subr.mxu0 0.0
  %1669 = vmatpush1.msra.mxu0 0.0
  %1670 = vmatprep.subr.mxu0 0.0
  %1671 = vmatpush1.msra.mxu0 0.0
  %1672 = vmatprep.subr.mxu0 0.0
  %1673 = vmatpush1.msra.mxu0 0.0
  %1674 = vmatprep.subr.mxu0 0.0
  %1675 = vmatpush1.msra.mxu0 0.0
  %1676 = vmatprep.subr.mxu0 0.0
  %1677 = vmatpush1.msra.mxu0 0.0
  %1678 = vmatprep.mubr.f32.mxu0 0.0
  %1679 = vmatmul.mubr.f32.gmra.mrb[0].mxu0 %v1600
  %v1680 = vpop.f32.mrb[0].mxu0
  %v1681 = vadd.f32 0.0, %v1680
  %v1682 = vpop.f32.mrb[0].mxu0
  %v1683 = vadd.f32 0.0, %v1682
  %1684 = vdwg.mxu0
  %1685 = vmatprep.subr.mxu0 %v1612
  %1686 = vmatpush1.msra.mxu0 %v1609
  %1687 = vmatprep.subr.mxu0 0.0
  %1688 = vmatpush1.msra.mxu0 0.0
  %1689 = vmatprep.subr.mxu0 0.0
  %1690 = vmatpush1.msra.mxu0 0.0
  %1691 = vmatprep.subr.mxu0 0.0
  %1692 = vmatpush1.msra.mxu0 0.0
  %1693 = vmatprep.subr.mxu0 0.0
  %1694 = vmatpush1.msra.mxu0 0.0
  %1695 = vmatprep.subr.mxu0 0.0
  %1696 = vmatpush1.msra.mxu0 0.0
  %1697 = vmatprep.subr.mxu0 0.0
  %1698 = vmatpush1.msra.mxu0 0.0
  %1699 = vmatprep.subr.mxu0 0.0
  %1700 = vmatpush1.msra.mxu0 0.0
  %1701 = vmatprep.subr.mxu0 0.0
  %1702 = vmatpush1.msra.mxu0 0.0
  %1703 = vmatprep.subr.mxu0 0.0
  %1704 = vmatpush1.msra.mxu0 0.0
  %1705 = vmatprep.subr.mxu0 0.0
  %1706 = vmatpush1.msra.mxu0 0.0
  %1707 = vmatprep.subr.mxu0 0.0
  %1708 = vmatpush1.msra.mxu0 0.0
  %1709 = vmatprep.subr.mxu0 0.0
  %1710 = vmatpush1.msra.mxu0 0.0
  %1711 = vmatprep.subr.mxu0 0.0
  %1712 = vmatpush1.msra.mxu0 0.0
  %1713 = vmatprep.subr.mxu0 0.0
  %1714 = vmatpush1.msra.mxu0 0.0
  %1715 = vmatprep.subr.mxu0 0.0
  %1716 = vmatpush1.msra.mxu0 0.0
  %1717 = vmatprep.subr.mxu0 0.0
  %1718 = vmatpush1.msra.mxu0 0.0
  %1719 = vmatprep.subr.mxu0 0.0
  %1720 = vmatpush1.msra.mxu0 0.0
  %1721 = vmatprep.subr.mxu0 0.0
  %1722 = vmatpush1.msra.mxu0 0.0
  %1723 = vmatprep.subr.mxu0 0.0
  %1724 = vmatpush1.msra.mxu0 0.0
  %1725 = vmatprep.subr.mxu0 0.0
  %1726 = vmatpush1.msra.mxu0 0.0
  %1727 = vmatprep.subr.mxu0 0.0
  %1728 = vmatpush1.msra.mxu0 0.0
  %1729 = vmatprep.subr.mxu0 0.0
  %1730 = vmatpush1.msra.mxu0 0.0
  %1731 = vmatprep.subr.mxu0 0.0
  %1732 = vmatpush1.msra.mxu0 0.0
  %1733 = vmatprep.subr.mxu0 0.0
  %1734 = vmatpush1.msra.mxu0 0.0
  %1735 = vmatprep.subr.mxu0 0.0
  %1736 = vmatpush1.msra.mxu0 0.0
  %1737 = vmatprep.subr.mxu0 0.0
  %1738 = vmatpush1.msra.mxu0 0.0
  %1739 = vmatprep.subr.mxu0 0.0
  %1740 = vmatpush1.msra.mxu0 0.0
  %1741 = vmatprep.subr.mxu0 0.0
  %1742 = vmatpush1.msra.mxu0 0.0
  %1743 = vmatprep.subr.mxu0 0.0
  %1744 = vmatpush1.msra.mxu0 0.0
  %1745 = vmatprep.subr.mxu0 0.0
  %1746 = vmatpush1.msra.mxu0 0.0
  %1747 = vmatprep.subr.mxu0 0.0
  %1748 = vmatpush1.msra.mxu0 0.0
  %1749 = vmatprep.mubr.f32.mxu0 0.0
  %1750 = vmatmul.mubr.f32.gmra.mrb[0].mxu0 %v1600
  %v1751 = vpop.f32.mrb[0].mxu0
  %v1752 = vadd.f32 0.0, %v1751
  %v1753 = vpop.f32.mrb[0].mxu0
  %v1754 = vadd.f32 0.0, %v1753
  %1755 = vdwg.mxu0
  %v1756 = vsel %vm1599, %v1055, 0
  %v1759 = vsel %vm1203, %v1488, 0
  %v1762 = vsel %vm1203, %v1489, 0
  %v1765 = vsel %vm1203, %v1490, 0
  %v1768 = vsel %vm1203, %v1491, 0
  %1770 = vmatprep.subr.mxu0 %v1762
  %1771 = vmatpush1.msra.mxu0 %v1759
  %1772 = vmatprep.subr.mxu0 0.0
  %1773 = vmatpush1.msra.mxu0 0.0
  %1774 = vmatprep.subr.mxu0 0.0
  %1775 = vmatpush1.msra.mxu0 0.0
  %1776 = vmatprep.subr.mxu0 0.0
  %1777 = vmatpush1.msra.mxu0 0.0
  %1778 = vmatprep.subr.mxu0 0.0
  %1779 = vmatpush1.msra.mxu0 0.0
  %1780 = vmatprep.subr.mxu0 0.0
  %1781 = vmatpush1.msra.mxu0 0.0
  %1782 = vmatprep.subr.mxu0 0.0
  %1783 = vmatpush1.msra.mxu0 0.0
  %1784 = vmatprep.subr.mxu0 0.0
  %1785 = vmatpush1.msra.mxu0 0.0
  %1786 = vmatprep.subr.mxu0 0.0
  %1787 = vmatpush1.msra.mxu0 0.0
  %1788 = vmatprep.subr.mxu0 0.0
  %1789 = vmatpush1.msra.mxu0 0.0
  %1790 = vmatprep.subr.mxu0 0.0
  %1791 = vmatpush1.msra.mxu0 0.0
  %1792 = vmatprep.subr.mxu0 0.0
  %1793 = vmatpush1.msra.mxu0 0.0
  %1794 = vmatprep.subr.mxu0 0.0
  %1795 = vmatpush1.msra.mxu0 0.0
  %1796 = vmatprep.subr.mxu0 0.0
  %1797 = vmatpush1.msra.mxu0 0.0
  %1798 = vmatprep.subr.mxu0 0.0
  %1799 = vmatpush1.msra.mxu0 0.0
  %1800 = vmatprep.subr.mxu0 0.0
  %1801 = vmatpush1.msra.mxu0 0.0
  %1802 = vmatprep.subr.mxu0 0.0
  %1803 = vmatpush1.msra.mxu0 0.0
  %1804 = vmatprep.subr.mxu0 0.0
  %1805 = vmatpush1.msra.mxu0 0.0
  %1806 = vmatprep.subr.mxu0 0.0
  %1807 = vmatpush1.msra.mxu0 0.0
  %1808 = vmatprep.subr.mxu0 0.0
  %1809 = vmatpush1.msra.mxu0 0.0
  %1810 = vmatprep.subr.mxu0 0.0
  %1811 = vmatpush1.msra.mxu0 0.0
  %1812 = vmatprep.subr.mxu0 0.0
  %1813 = vmatpush1.msra.mxu0 0.0
  %1814 = vmatprep.subr.mxu0 0.0
  %1815 = vmatpush1.msra.mxu0 0.0
  %1816 = vmatprep.subr.mxu0 0.0
  %1817 = vmatpush1.msra.mxu0 0.0
  %1818 = vmatprep.subr.mxu0 0.0
  %1819 = vmatpush1.msra.mxu0 0.0
  %1820 = vmatprep.subr.mxu0 0.0
  %1821 = vmatpush1.msra.mxu0 0.0
  %1822 = vmatprep.subr.mxu0 0.0
  %1823 = vmatpush1.msra.mxu0 0.0
  %1824 = vmatprep.subr.mxu0 0.0
  %1825 = vmatpush1.msra.mxu0 0.0
  %1826 = vmatprep.subr.mxu0 0.0
  %1827 = vmatpush1.msra.mxu0 0.0
  %1828 = vmatprep.subr.mxu0 0.0
  %1829 = vmatpush1.msra.mxu0 0.0
  %1830 = vmatprep.subr.mxu0 0.0
  %1831 = vmatpush1.msra.mxu0 0.0
  %1832 = vmatprep.subr.mxu0 0.0
  %1833 = vmatpush1.msra.mxu0 0.0
  %1834 = vmatprep.mubr.f32.mxu0 0.0
  %1835 = vmatmul.mubr.f32.gmra.mrb[0].mxu0 %v1756
  %v1836 = vpop.f32.mrb[0].mxu0
  %v1837 = vadd.f32 %v1681, %v1836
  %v1838 = vpop.f32.mrb[0].mxu0
  %v1839 = vadd.f32 %v1683, %v1838
  %1840 = vdwg.mxu0
  %1841 = vmatprep.subr.mxu0 %v1768
  %1842 = vmatpush1.msra.mxu0 %v1765
  %1843 = vmatprep.subr.mxu0 0.0
  %1844 = vmatpush1.msra.mxu0 0.0
  %1845 = vmatprep.subr.mxu0 0.0
  %1846 = vmatpush1.msra.mxu0 0.0
  %1847 = vmatprep.subr.mxu0 0.0
  %1848 = vmatpush1.msra.mxu0 0.0
  %1849 = vmatprep.subr.mxu0 0.0
  %1850 = vmatpush1.msra.mxu0 0.0
  %1851 = vmatprep.subr.mxu0 0.0
  %1852 = vmatpush1.msra.mxu0 0.0
  %1853 = vmatprep.subr.mxu0 0.0
  %1854 = vmatpush1.msra.mxu0 0.0
  %1855 = vmatprep.subr.mxu0 0.0
  %1856 = vmatpush1.msra.mxu0 0.0
  %1857 = vmatprep.subr.mxu0 0.0
  %1858 = vmatpush1.msra.mxu0 0.0
  %1859 = vmatprep.subr.mxu0 0.0
  %1860 = vmatpush1.msra.mxu0 0.0
  %1861 = vmatprep.subr.mxu0 0.0
  %1862 = vmatpush1.msra.mxu0 0.0
  %1863 = vmatprep.subr.mxu0 0.0
  %1864 = vmatpush1.msra.mxu0 0.0
  %1865 = vmatprep.subr.mxu0 0.0
  %1866 = vmatpush1.msra.mxu0 0.0
  %1867 = vmatprep.subr.mxu0 0.0
  %1868 = vmatpush1.msra.mxu0 0.0
  %1869 = vmatprep.subr.mxu0 0.0
  %1870 = vmatpush1.msra.mxu0 0.0
  %1871 = vmatprep.subr.mxu0 0.0
  %1872 = vmatpush1.msra.mxu0 0.0
  %1873 = vmatprep.subr.mxu0 0.0
  %1874 = vmatpush1.msra.mxu0 0.0
  %1875 = vmatprep.subr.mxu0 0.0
  %1876 = vmatpush1.msra.mxu0 0.0
  %1877 = vmatprep.subr.mxu0 0.0
  %1878 = vmatpush1.msra.mxu0 0.0
  %1879 = vmatprep.subr.mxu0 0.0
  %1880 = vmatpush1.msra.mxu0 0.0
  %1881 = vmatprep.subr.mxu0 0.0
  %1882 = vmatpush1.msra.mxu0 0.0
  %1883 = vmatprep.subr.mxu0 0.0
  %1884 = vmatpush1.msra.mxu0 0.0
  %1885 = vmatprep.subr.mxu0 0.0
  %1886 = vmatpush1.msra.mxu0 0.0
  %1887 = vmatprep.subr.mxu0 0.0
  %1888 = vmatpush1.msra.mxu0 0.0
  %1889 = vmatprep.subr.mxu0 0.0
  %1890 = vmatpush1.msra.mxu0 0.0
  %1891 = vmatprep.subr.mxu0 0.0
  %1892 = vmatpush1.msra.mxu0 0.0
  %1893 = vmatprep.subr.mxu0 0.0
  %1894 = vmatpush1.msra.mxu0 0.0
  %1895 = vmatprep.subr.mxu0 0.0
  %1896 = vmatpush1.msra.mxu0 0.0
  %1897 = vmatprep.subr.mxu0 0.0
  %1898 = vmatpush1.msra.mxu0 0.0
  %1899 = vmatprep.subr.mxu0 0.0
  %1900 = vmatpush1.msra.mxu0 0.0
  %1901 = vmatprep.subr.mxu0 0.0
  %1902 = vmatpush1.msra.mxu0 0.0
  %1903 = vmatprep.subr.mxu0 0.0
  %1904 = vmatpush1.msra.mxu0 0.0
  %1905 = vmatprep.mubr.f32.mxu0 0.0
  %1906 = vmatmul.mubr.f32.gmra.mrb[0].mxu0 %v1756
  %v1907 = vpop.f32.mrb[0].mxu0
  %v1908 = vadd.f32 %v1752, %v1907
  %v1909 = vpop.f32.mrb[0].mxu0
  %v1910 = vadd.f32 %v1754, %v1909
  %1911 = vdwg.mxu0
  %v1913 = vsel %vm1599, %v1056, 0
  %v1916 = vsel %vm1203, %v1255, 0
  %v1919 = vsel %vm1203, %v1256, 0
  %v1922 = vsel %vm1203, %v1257, 0
  %v1925 = vsel %vm1203, %v1258, 0
  %1927 = vmatprep.subr.mxu0 %v1919
  %1928 = vmatpush1.msra.mxu0 %v1916
  %1929 = vmatprep.subr.mxu0 0.0
  %1930 = vmatpush1.msra.mxu0 0.0
  %1931 = vmatprep.subr.mxu0 0.0
  %1932 = vmatpush1.msra.mxu0 0.0
  %1933 = vmatprep.subr.mxu0 0.0
  %1934 = vmatpush1.msra.mxu0 0.0
  %1935 = vmatprep.subr.mxu0 0.0
  %1936 = vmatpush1.msra.mxu0 0.0
  %1937 = vmatprep.subr.mxu0 0.0
  %1938 = vmatpush1.msra.mxu0 0.0
  %1939 = vmatprep.subr.mxu0 0.0
  %1940 = vmatpush1.msra.mxu0 0.0
  %1941 = vmatprep.subr.mxu0 0.0
  %1942 = vmatpush1.msra.mxu0 0.0
  %1943 = vmatprep.subr.mxu0 0.0
  %1944 = vmatpush1.msra.mxu0 0.0
  %1945 = vmatprep.subr.mxu0 0.0
  %1946 = vmatpush1.msra.mxu0 0.0
  %1947 = vmatprep.subr.mxu0 0.0
  %1948 = vmatpush1.msra.mxu0 0.0
  %1949 = vmatprep.subr.mxu0 0.0
  %1950 = vmatpush1.msra.mxu0 0.0
  %1951 = vmatprep.subr.mxu0 0.0
  %1952 = vmatpush1.msra.mxu0 0.0
  %1953 = vmatprep.subr.mxu0 0.0
  %1954 = vmatpush1.msra.mxu0 0.0
  %1955 = vmatprep.subr.mxu0 0.0
  %1956 = vmatpush1.msra.mxu0 0.0
  %1957 = vmatprep.subr.mxu0 0.0
  %1958 = vmatpush1.msra.mxu0 0.0
  %1959 = vmatprep.subr.mxu0 0.0
  %1960 = vmatpush1.msra.mxu0 0.0
  %1961 = vmatprep.subr.mxu0 0.0
  %1962 = vmatpush1.msra.mxu0 0.0
  %1963 = vmatprep.subr.mxu0 0.0
  %1964 = vmatpush1.msra.mxu0 0.0
  %1965 = vmatprep.subr.mxu0 0.0
  %1966 = vmatpush1.msra.mxu0 0.0
  %1967 = vmatprep.subr.mxu0 0.0
  %1968 = vmatpush1.msra.mxu0 0.0
  %1969 = vmatprep.subr.mxu0 0.0
  %1970 = vmatpush1.msra.mxu0 0.0
  %1971 = vmatprep.subr.mxu0 0.0
  %1972 = vmatpush1.msra.mxu0 0.0
  %1973 = vmatprep.subr.mxu0 0.0
  %1974 = vmatpush1.msra.mxu0 0.0
  %1975 = vmatprep.subr.mxu0 0.0
  %1976 = vmatpush1.msra.mxu0 0.0
  %1977 = vmatprep.subr.mxu0 0.0
  %1978 = vmatpush1.msra.mxu0 0.0
  %1979 = vmatprep.subr.mxu0 0.0
  %1980 = vmatpush1.msra.mxu0 0.0
  %1981 = vmatprep.subr.mxu0 0.0
  %1982 = vmatpush1.msra.mxu0 0.0
  %1983 = vmatprep.subr.mxu0 0.0
  %1984 = vmatpush1.msra.mxu0 0.0
  %1985 = vmatprep.subr.mxu0 0.0
  %1986 = vmatpush1.msra.mxu0 0.0
  %1987 = vmatprep.subr.mxu0 0.0
  %1988 = vmatpush1.msra.mxu0 0.0
  %1989 = vmatprep.subr.mxu0 0.0
  %1990 = vmatpush1.msra.mxu0 0.0
  %1991 = vmatprep.mubr.f32.mxu0 0.0
  %1992 = vmatmul.mubr.f32.gmra.mrb[0].mxu0 %v1913
  %v1993 = vpop.f32.mrb[0].mxu0
  %v1994 = vadd.f32 0.0, %v1993
  %v1995 = vpop.f32.mrb[0].mxu0
  %v1996 = vadd.f32 0.0, %v1995
  %1997 = vdwg.mxu0
  %1998 = vmatprep.subr.mxu0 %v1925
  %1999 = vmatpush1.msra.mxu0 %v1922
  %2000 = vmatprep.subr.mxu0 0.0
  %2001 = vmatpush1.msra.mxu0 0.0
  %2002 = vmatprep.subr.mxu0 0.0
  %2003 = vmatpush1.msra.mxu0 0.0
  %2004 = vmatprep.subr.mxu0 0.0
  %2005 = vmatpush1.msra.mxu0 0.0
  %2006 = vmatprep.subr.mxu0 0.0
  %2007 = vmatpush1.msra.mxu0 0.0
  %2008 = vmatprep.subr.mxu0 0.0
  %2009 = vmatpush1.msra.mxu0 0.0
  %2010 = vmatprep.subr.mxu0 0.0
  %2011 = vmatpush1.msra.mxu0 0.0
  %2012 = vmatprep.subr.mxu0 0.0
  %2013 = vmatpush1.msra.mxu0 0.0
  %2014 = vmatprep.subr.mxu0 0.0
  %2015 = vmatpush1.msra.mxu0 0.0
  %2016 = vmatprep.subr.mxu0 0.0
  %2017 = vmatpush1.msra.mxu0 0.0
  %2018 = vmatprep.subr.mxu0 0.0
  %2019 = vmatpush1.msra.mxu0 0.0
  %2020 = vmatprep.subr.mxu0 0.0
  %2021 = vmatpush1.msra.mxu0 0.0
  %2022 = vmatprep.subr.mxu0 0.0
  %2023 = vmatpush1.msra.mxu0 0.0
  %2024 = vmatprep.subr.mxu0 0.0
  %2025 = vmatpush1.msra.mxu0 0.0
  %2026 = vmatprep.subr.mxu0 0.0
  %2027 = vmatpush1.msra.mxu0 0.0
  %2028 = vmatprep.subr.mxu0 0.0
  %2029 = vmatpush1.msra.mxu0 0.0
  %2030 = vmatprep.subr.mxu0 0.0
  %2031 = vmatpush1.msra.mxu0 0.0
  %2032 = vmatprep.subr.mxu0 0.0
  %2033 = vmatpush1.msra.mxu0 0.0
  %2034 = vmatprep.subr.mxu0 0.0
  %2035 = vmatpush1.msra.mxu0 0.0
  %2036 = vmatprep.subr.mxu0 0.0
  %2037 = vmatpush1.msra.mxu0 0.0
  %2038 = vmatprep.subr.mxu0 0.0
  %2039 = vmatpush1.msra.mxu0 0.0
  %2040 = vmatprep.subr.mxu0 0.0
  %2041 = vmatpush1.msra.mxu0 0.0
  %2042 = vmatprep.subr.mxu0 0.0
  %2043 = vmatpush1.msra.mxu0 0.0
  %2044 = vmatprep.subr.mxu0 0.0
  %2045 = vmatpush1.msra.mxu0 0.0
  %2046 = vmatprep.subr.mxu0 0.0
  %2047 = vmatpush1.msra.mxu0 0.0
  %2048 = vmatprep.subr.mxu0 0.0
  %2049 = vmatpush1.msra.mxu0 0.0
  %2050 = vmatprep.subr.mxu0 0.0
  %2051 = vmatpush1.msra.mxu0 0.0
  %2052 = vmatprep.subr.mxu0 0.0
  %2053 = vmatpush1.msra.mxu0 0.0
  %2054 = vmatprep.subr.mxu0 0.0
  %2055 = vmatpush1.msra.mxu0 0.0
  %2056 = vmatprep.subr.mxu0 0.0
  %2057 = vmatpush1.msra.mxu0 0.0
  %2058 = vmatprep.subr.mxu0 0.0
  %2059 = vmatpush1.msra.mxu0 0.0
  %2060 = vmatprep.subr.mxu0 0.0
  %2061 = vmatpush1.msra.mxu0 0.0
  %2062 = vmatprep.mubr.f32.mxu0 0.0
  %2063 = vmatmul.mubr.f32.gmra.mrb[0].mxu0 %v1913
  %v2064 = vpop.f32.mrb[0].mxu0
  %v2065 = vadd.f32 0.0, %v2064
  %v2066 = vpop.f32.mrb[0].mxu0
  %v2067 = vadd.f32 0.0, %v2066
  %2068 = vdwg.mxu0
  %vm2069 = vcmask 1040384
  %v2070 = vsel %vm2069, %v1994, 0.0
  %v2071 = vsel %vm2069, %v1996, 0.0
  %v2072 = vadd.f32 %v2070, %v2071
  %v2073 = vsel %vm2069, %v2065, 0.0
  %v2074 = vadd.f32 %v2072, %v2073
  %v2075 = vsel %vm2069, %v2067, 0.0
  %v2076 = vadd.f32 %v2074, %v2075
  %2077 = vadd.xlane.f32.xlu0 %v2076
  %v2078 = vpop.xlane.xlu0 %2077
  %v2079 = vmul.f32 %v2078, %v222
  %v2080 = vsub.f32 %v1994, %v2079
  %v2081 = vsub.f32 %v1996, %v2079
  %v2082 = vsub.f32 %v2065, %v2079
  %v2083 = vsub.f32 %v2067, %v2079
  %v2084 = vmul.f32 %v2080, %v2080
  %v2085 = vmul.f32 %v2081, %v2081
  %v2086 = vmul.f32 %v2082, %v2082
  %v2087 = vmul.f32 %v2083, %v2083
  %v2088 = vsel %vm2069, %v2084, 0.0
  %v2089 = vsel %vm2069, %v2085, 0.0
  %v2090 = vadd.f32 %v2088, %v2089
  %v2091 = vsel %vm2069, %v2086, 0.0
  %v2092 = vadd.f32 %v2090, %v2091
  %v2093 = vsel %vm2069, %v2087, 0.0
  %v2094 = vadd.f32 %v2092, %v2093
  %2095 = vadd.xlane.f32.xlu0 %v2094
  %v2096 = vpop.xlane.xlu0 %2095
  %v2097 = vmul.f32 %v2096, %v222
  %v2098 = vadd.f32 %v2097, 1e-05
  %v2099 = vrsqrt.pop %v2098
  %v2100 = vmul.f32 %v2080, %v2099
  %v2101 = vmul.f32 %v2081, %v2099
  %v2102 = vmul.f32 %v2082, %v2099
  %v2103 = vmul.f32 %v2083, %v2099
  %2105 = vset.pattern.permute.xlu0 0
  %2106 = vperm.xlu0 %2105, %v1057
  %v2107 = vpop.permute.xlu0 %2106
  %v2109 = vlaneseq
  %v2110 = vshrl.u32 %v2109, 7
  %v2111 = vsub.s32 0, %v2110
  %v2112 = vrot.slane %v2107, %v2111
  %v2113 = vmul.f32 %v2100, %v2112
  %v2114 = vmul.f32 %v2101, %v2112
  %v2115 = vmul.f32 %v2102, %v2112
  %v2116 = vmul.f32 %v2103, %v2112
  %2117 = vset.pattern.permute.xlu0 1
  %2118 = vperm.xlu0 %2117, %v1057
  %v2119 = vpop.permute.xlu0 %2118
  %v2121 = vlaneseq
  %v2122 = vshrl.u32 %v2121, 7
  %v2123 = vsub.s32 0, %v2122
  %v2124 = vrot.slane %v2119, %v2123
  %v2125 = vadd.f32 %v2113, %v2124
  %v2126 = vadd.f32 %v2114, %v2124
  %v2127 = vadd.f32 %v2115, %v2124
  %v2128 = vadd.f32 %v2116, %v2124
  %v2129 = vmax.f32 %v2125, 0.0
  %v2130 = vmax.f32 %v2126, 0.0
  %v2131 = vmax.f32 %v2127, 0.0
  %v2132 = vmax.f32 %v2128, 0.0
  %v2137 = vcombine.low %v1837, %v1839
  %v2138 = vcombine.low %v1908, %v1910
  %2141 = vst [vmem:[%s13] sm:$0xff] %v2137
  %2142 = vst [vmem:[%s13 + $0x8] sm:$0xff] %v2138
  %v2147 = vcombine.low %v2129, %v2130
  %v2148 = vcombine.low %v2131, %v2132
  %v2150 = vunpack.c.l.s4 1966171168
  %v2151 = vunpack.c.0.s8 %v2150
  %v2152 = vlaneseq
  %v2153 = vshrl.u32 %v2152, 7
  %v2154 = vsub.s32 %v2151, %v2153
  %v2155 = vrot.slane %v2147, %v2154
  %v2157 = vunpack.c.l.s4 1966171168
  %v2158 = vunpack.c.0.s8 %v2157
  %v2159 = vlaneseq
  %v2160 = vshrl.u32 %v2159, 7
  %v2161 = vsub.s32 %v2158, %v2160
  %v2162 = vrot.slane %v2148, %v2161
  %v2163 = vcombine.low %v2155, %v2162
  %v2165 = vunpack.c.l.s4 1966171168
  %v2166 = vunpack.c.0.s8 %v2165
  %v2167 = vlaneseq
  %v2168 = vshrl.u32 %v2167, 7
  %v2169 = vsub.s32 %v2166, %v2168
  %v2170 = vrot.slane %v2163, %v2169
  %v2172 = vlaneseq
  %vm2173 = vcmp.ge.s32.totalorder %v2172, 0
  %vm2174 = vcmp.lt.s32.totalorder %v2172, 512
  %vm2175 = vmand %vm2173, %vm2174
  %2176 = vst.msk [vmem:[%s14] sm:$0xf] %vm2175, %v2170
  // Predicated region
  $region50: #{fused_lffc_resnet_block.5} parent=0 // pred_check
    _
  $region51: #{fused_lffc_resnet_block.5} parent=0 // pred_check_branch
    %2178 = sbr.rel (0) target = $region53
  $region52: #{fused_lffc_resnet_block.5} parent=0 // pred_region
    _
  $region53: #{fused_lffc_resnet_block.5} parent=0 // pred_fallthru
    _
  // Predicated region
  $region54: #{fused_lffc_resnet_block.5} parent=0 // pred_check
    _
  $region55: #{fused_lffc_resnet_block.5} parent=0 // pred_check_branch
    %2180 = sbr.rel (0) target = $region57
  $region56: #{fused_lffc_resnet_block.5} parent=0 // pred_region
    _
  $region57: #{fused_lffc_resnet_block.5} parent=0 // pred_fallthru
    _
  // Predicated region
  $region58: #{fused_lffc_resnet_block.5} parent=0 // pred_check
    _
  $region59: #{fused_lffc_resnet_block.5} parent=0 // pred_check_branch
    %2182 = sbr.rel (0) target = $region61
  $region60: #{fused_lffc_resnet_block.5} parent=0 // pred_region
    _
  $region61: #{fused_lffc_resnet_block.5} parent=0 // pred_fallthru
    _
  // Predicated region
  $region62: #{fused_lffc_resnet_block.5} parent=0 // pred_check
    _
  $region63: #{fused_lffc_resnet_block.5} parent=0 // pred_check_branch
    %2184 = sbr.rel (0) target = $region65
  $region64: #{fused_lffc_resnet_block.5} parent=0 // pred_region
    _
  $region65: #{fused_lffc_resnet_block.5} parent=0 // pred_fallthru
    _
  // Predicated region
  $region66: #{fused_lffc_resnet_block.5} parent=0 // pred_check
    _
  $region67: #{fused_lffc_resnet_block.5} parent=0 // pred_check_branch
    %2186 = sbr.rel (0) target = $region69
  $region68: #{fused_lffc_resnet_block.5} parent=0 // pred_region
    _
  $region69: #{fused_lffc_resnet_block.5} parent=0 // pred_fallthru
    _
  // Predicated region
  $region70: #{fused_lffc_resnet_block.5} parent=0 // pred_check
    _
  $region71: #{fused_lffc_resnet_block.5} parent=0 // pred_check_branch
    %2188 = sbr.rel (0) target = $region73
  $region72: #{fused_lffc_resnet_block.5} parent=0 // pred_region
    _
  $region73: #{fused_lffc_resnet_block.5} parent=0 // pred_fallthru
    _

// kernel: fused_lffc_resnet_block.9
$region0: #{fused_lffc_resnet_block.9}
  #allocation0 [shape = 'u32[]', space=smem, size = 0x4, offset = 0x4, fixed_abs, tag = 'smem constant byte address 0x4 - core index']
  #allocation1 [shape = 'u32[144,128]{1,0:T(1,128)}', space=vmem, size = 0x12000, scoped, tag = 'internal scratch']
  %s0 = inlined_call_operand.vmem [shape: f32[4,512], index: 0, kind: input, shape index: {}]
  %s1 = inlined_call_operand.vmem [shape: f32[1,512], index: 1, kind: input, shape index: {}]
  %s2 = inlined_call_operand.vmem [shape: f32[1,512], index: 2, kind: input, shape index: {}]
  %s3 = inlined_call_operand.vmem [shape: f32[16,512], index: 3, kind: input, shape index: {}]
  %s4 = inlined_call_operand.vmem [shape: f32[16,512], index: 4, kind: input, shape index: {}]
  %s5 = inlined_call_operand.vmem [shape: f32[16,5], index: 5, kind: input, shape index: {}]
  %s6 = inlined_call_operand.vmem [shape: f32[16,2], index: 6, kind: input, shape index: {}]
  %s7 = inlined_call_operand.vmem [shape: f32[16,512], index: 7, kind: output, shape index: {}]
  %s8 = sld [smem:[#allocation0]]
  $region38: #{fused_lffc_resnet_block.9} parent=0
    _
  %s10 = ssub.s32 1, %s8
  %s11 = scalar_select 0, %s10, %s8
  // Predicated region
  $region2: #{fused_lffc_resnet_block.9} parent=0 // pred_check
    _
  $region3: #{fused_lffc_resnet_block.9} parent=0 // pred_check_branch
    %13 = sbr.rel (0) target = $region5
  $region4: #{fused_lffc_resnet_block.9} parent=0 // pred_region
    _
  $region5: #{fused_lffc_resnet_block.9} parent=0 // pred_fallthru
    _
  // Predicated region
  $region6: #{fused_lffc_resnet_block.9} parent=0 // pred_check
    _
  $region7: #{fused_lffc_resnet_block.9} parent=0 // pred_check_branch
    %15 = sbr.rel (0) target = $region9
  $region8: #{fused_lffc_resnet_block.9} parent=0 // pred_region
    _
  $region9: #{fused_lffc_resnet_block.9} parent=0 // pred_fallthru
    _
  // Predicated region
  $region10: #{fused_lffc_resnet_block.9} parent=0 // pred_check
    _
  $region11: #{fused_lffc_resnet_block.9} parent=0 // pred_check_branch
    %17 = sbr.rel (0) target = $region13
  $region12: #{fused_lffc_resnet_block.9} parent=0 // pred_region
    _
  $region13: #{fused_lffc_resnet_block.9} parent=0 // pred_fallthru
    _
  // Predicated region
  $region14: #{fused_lffc_resnet_block.9} parent=0 // pred_check
    _
  $region15: #{fused_lffc_resnet_block.9} parent=0 // pred_check_branch
    %19 = sbr.rel (0) target = $region17
  $region16: #{fused_lffc_resnet_block.9} parent=0 // pred_region
    _
  $region17: #{fused_lffc_resnet_block.9} parent=0 // pred_fallthru
    _
  // Predicated region
  $region18: #{fused_lffc_resnet_block.9} parent=0 // pred_check
    _
  $region19: #{fused_lffc_resnet_block.9} parent=0 // pred_check_branch
    %21 = sbr.rel (0) target = $region21
  $region20: #{fused_lffc_resnet_block.9} parent=0 // pred_region
    _
  $region21: #{fused_lffc_resnet_block.9} parent=0 // pred_fallthru
    _
  // Predicated region
  $region22: #{fused_lffc_resnet_block.9} parent=0 // pred_check
    _
  $region23: #{fused_lffc_resnet_block.9} parent=0 // pred_check_branch
    %23 = sbr.rel (0) target = $region25
  $region24: #{fused_lffc_resnet_block.9} parent=0 // pred_region
    _
  $region25: #{fused_lffc_resnet_block.9} parent=0 // pred_fallthru
    _
  // Predicated region
  $region26: #{fused_lffc_resnet_block.9} parent=0 // pred_check
    _
  $region27: #{fused_lffc_resnet_block.9} parent=0 // pred_check_branch
    %25 = sbr.rel (0) target = $region29
  $region28: #{fused_lffc_resnet_block.9} parent=0 // pred_region
    _
  $region29: #{fused_lffc_resnet_block.9} parent=0 // pred_fallthru
    _
  %v26 = vld [vmem:[%s0] sm:$0xff]
  %v27 = vld [vmem:[%s0 + $0x8] sm:$0xff]
  %v28 = vld [vmem:[%s1] sm:$0xf]
  %v29 = vld [vmem:[%s2] sm:$0xf]
  %v30 = vadd.f32 %v28, %v29
  %v31 = vld [vmem:[%s5] sm:$0xff]
  %v32 = vld [vmem:[%s5 + $0x8] sm:$0xff]
  %v33 = vld [vmem:[%s6] sm:$0xff]
  %v34 = vld [vmem:[%s6 + $0x8] sm:$0xff]
  %37 = vrot.lane.b32.xlu0 %v31, 124
  %v38 = vpop.permute.xlu0 %37
  %39 = vrot.lane.b32.xlu0 %v32, 124
  %v40 = vpop.permute.xlu0 %39
  %v42 = vlaneseq
  %v43 = vshrl.u32 %v42, 7
  %v44 = vsub.s32 0, %v43
  %v45 = vrot.slane %v30, %v44
  %v46 = vlaneseq
  %v47 = vshrl.u32 %v46, 7
  %v48 = vsub.s32 1, %v47
  %v49 = vrot.slane %v30, %v48
  %v50 = vlaneseq
  %v51 = vshrl.u32 %v50, 7
  %v52 = vsub.s32 2, %v51
  %v53 = vrot.slane %v30, %v52
  %v54 = vlaneseq
  %v55 = vshrl.u32 %v54, 7
  %v56 = vsub.s32 3, %v55
  %v57 = vrot.slane %v30, %v56
  %vm58 = vcmask 7168
  %v59 = vsel %vm58, %v38, 0
  %v61 = vsel %vm58, %v40, 0
  %vm63 = vcmask 1040384
  %v64 = vsel %vm63, %v45, 0
  %v66 = vsel %vm63, %v49, 0
  %v68 = vsel %vm63, %v53, 0
  %v70 = vsel %vm63, %v57, 0
  %72 = vmatprep.subr.mxu0 %v66
  %73 = vmatpush1.msra.mxu0 %v64
  %74 = vmatprep.subr.mxu0 0.0
  %75 = vmatpush1.msra.mxu0 0.0
  %76 = vmatprep.subr.mxu0 0.0
  %77 = vmatpush1.msra.mxu0 0.0
  %78 = vmatprep.subr.mxu0 0.0
  %79 = vmatpush1.msra.mxu0 0.0
  %80 = vmatprep.subr.mxu0 0.0
  %81 = vmatpush1.msra.mxu0 0.0
  %82 = vmatprep.subr.mxu0 0.0
  %83 = vmatpush1.msra.mxu0 0.0
  %84 = vmatprep.subr.mxu0 0.0
  %85 = vmatpush1.msra.mxu0 0.0
  %86 = vmatprep.subr.mxu0 0.0
  %87 = vmatpush1.msra.mxu0 0.0
  %88 = vmatprep.subr.mxu0 0.0
  %89 = vmatpush1.msra.mxu0 0.0
  %90 = vmatprep.subr.mxu0 0.0
  %91 = vmatpush1.msra.mxu0 0.0
  %92 = vmatprep.subr.mxu0 0.0
  %93 = vmatpush1.msra.mxu0 0.0
  %94 = vmatprep.subr.mxu0 0.0
  %95 = vmatpush1.msra.mxu0 0.0
  %96 = vmatprep.subr.mxu0 0.0
  %97 = vmatpush1.msra.mxu0 0.0
  %98 = vmatprep.subr.mxu0 0.0
  %99 = vmatpush1.msra.mxu0 0.0
  %100 = vmatprep.subr.mxu0 0.0
  %101 = vmatpush1.msra.mxu0 0.0
  %102 = vmatprep.subr.mxu0 0.0
  %103 = vmatpush1.msra.mxu0 0.0
  %104 = vmatprep.subr.mxu0 0.0
  %105 = vmatpush1.msra.mxu0 0.0
  %106 = vmatprep.subr.mxu0 0.0
  %107 = vmatpush1.msra.mxu0 0.0
  %108 = vmatprep.subr.mxu0 0.0
  %109 = vmatpush1.msra.mxu0 0.0
  %110 = vmatprep.subr.mxu0 0.0
  %111 = vmatpush1.msra.mxu0 0.0
  %112 = vmatprep.subr.mxu0 0.0
  %113 = vmatpush1.msra.mxu0 0.0
  %114 = vmatprep.subr.mxu0 0.0
  %115 = vmatpush1.msra.mxu0 0.0
  %116 = vmatprep.subr.mxu0 0.0
  %117 = vmatpush1.msra.mxu0 0.0
  %118 = vmatprep.subr.mxu0 0.0
  %119 = vmatpush1.msra.mxu0 0.0
  %120 = vmatprep.subr.mxu0 0.0
  %121 = vmatpush1.msra.mxu0 0.0
  %122 = vmatprep.subr.mxu0 0.0
  %123 = vmatpush1.msra.mxu0 0.0
  %124 = vmatprep.subr.mxu0 0.0
  %125 = vmatpush1.msra.mxu0 0.0
  %126 = vmatprep.subr.mxu0 0.0
  %127 = vmatpush1.msra.mxu0 0.0
  %128 = vmatprep.subr.mxu0 0.0
  %129 = vmatpush1.msra.mxu0 0.0
  %130 = vmatprep.subr.mxu0 0.0
  %131 = vmatpush1.msra.mxu0 0.0
  %132 = vmatprep.subr.mxu0 0.0
  %133 = vmatpush1.msra.mxu0 0.0
  %134 = vmatprep.subr.mxu0 0.0
  %135 = vmatpush1.msra.mxu0 0.0
  %136 = vmatprep.mubr.f32.mxu0 0.0
  %137 = vmatmul.mubr.f32.gmra.mrb[0].mxu0 %v59
  %v138 = vpop.f32.mrb[0].mxu0
  %v139 = vadd.f32 0.0, %v138
  %v140 = vpop.f32.mrb[0].mxu0
  %v141 = vadd.f32 0.0, %v140
  %142 = vmatprep.mubr.f32.mxu0 0.0
  %143 = vmatmul.mubr.f32.gmra.mrb[0].mxu0 %v61
  %v144 = vpop.f32.mrb[0].mxu0
  %v145 = vadd.f32 0.0, %v144
  %v146 = vpop.f32.mrb[0].mxu0
  %v147 = vadd.f32 0.0, %v146
  %148 = vdwg.mxu0
  %149 = vmatprep.subr.mxu0 %v70
  %150 = vmatpush1.msra.mxu0 %v68
  %151 = vmatprep.subr.mxu0 0.0
  %152 = vmatpush1.msra.mxu0 0.0
  %153 = vmatprep.subr.mxu0 0.0
  %154 = vmatpush1.msra.mxu0 0.0
  %155 = vmatprep.subr.mxu0 0.0
  %156 = vmatpush1.msra.mxu0 0.0
  %157 = vmatprep.subr.mxu0 0.0
  %158 = vmatpush1.msra.mxu0 0.0
  %159 = vmatprep.subr.mxu0 0.0
  %160 = vmatpush1.msra.mxu0 0.0
  %161 = vmatprep.subr.mxu0 0.0
  %162 = vmatpush1.msra.mxu0 0.0
  %163 = vmatprep.subr.mxu0 0.0
  %164 = vmatpush1.msra.mxu0 0.0
  %165 = vmatprep.subr.mxu0 0.0
  %166 = vmatpush1.msra.mxu0 0.0
  %167 = vmatprep.subr.mxu0 0.0
  %168 = vmatpush1.msra.mxu0 0.0
  %169 = vmatprep.subr.mxu0 0.0
  %170 = vmatpush1.msra.mxu0 0.0
  %171 = vmatprep.subr.mxu0 0.0
  %172 = vmatpush1.msra.mxu0 0.0
  %173 = vmatprep.subr.mxu0 0.0
  %174 = vmatpush1.msra.mxu0 0.0
  %175 = vmatprep.subr.mxu0 0.0
  %176 = vmatpush1.msra.mxu0 0.0
  %177 = vmatprep.subr.mxu0 0.0
  %178 = vmatpush1.msra.mxu0 0.0
  %179 = vmatprep.subr.mxu0 0.0
  %180 = vmatpush1.msra.mxu0 0.0
  %181 = vmatprep.subr.mxu0 0.0
  %182 = vmatpush1.msra.mxu0 0.0
  %183 = vmatprep.subr.mxu0 0.0
  %184 = vmatpush1.msra.mxu0 0.0
  %185 = vmatprep.subr.mxu0 0.0
  %186 = vmatpush1.msra.mxu0 0.0
  %187 = vmatprep.subr.mxu0 0.0
  %188 = vmatpush1.msra.mxu0 0.0
  %189 = vmatprep.subr.mxu0 0.0
  %190 = vmatpush1.msra.mxu0 0.0
  %191 = vmatprep.subr.mxu0 0.0
  %192 = vmatpush1.msra.mxu0 0.0
  %193 = vmatprep.subr.mxu0 0.0
  %194 = vmatpush1.msra.mxu0 0.0
  %195 = vmatprep.subr.mxu0 0.0
  %196 = vmatpush1.msra.mxu0 0.0
  %197 = vmatprep.subr.mxu0 0.0
  %198 = vmatpush1.msra.mxu0 0.0
  %199 = vmatprep.subr.mxu0 0.0
  %200 = vmatpush1.msra.mxu0 0.0
  %201 = vmatprep.subr.mxu0 0.0
  %202 = vmatpush1.msra.mxu0 0.0
  %203 = vmatprep.subr.mxu0 0.0
  %204 = vmatpush1.msra.mxu0 0.0
  %205 = vmatprep.subr.mxu0 0.0
  %206 = vmatpush1.msra.mxu0 0.0
  %207 = vmatprep.subr.mxu0 0.0
  %208 = vmatpush1.msra.mxu0 0.0
  %209 = vmatprep.subr.mxu0 0.0
  %210 = vmatpush1.msra.mxu0 0.0
  %211 = vmatprep.subr.mxu0 0.0
  %212 = vmatpush1.msra.mxu0 0.0
  %213 = vmatprep.mubr.f32.mxu0 0.0
  %214 = vmatmul.mubr.f32.gmra.mrb[0].mxu0 %v59
  %v215 = vpop.f32.mrb[0].mxu0
  %v216 = vadd.f32 0.0, %v215
  %v217 = vpop.f32.mrb[0].mxu0
  %v218 = vadd.f32 0.0, %v217
  %219 = vmatprep.mubr.f32.mxu0 0.0
  %220 = vmatmul.mubr.f32.gmra.mrb[0].mxu0 %v61
  %v221 = vpop.f32.mrb[0].mxu0
  %v222 = vadd.f32 0.0, %v221
  %v223 = vpop.f32.mrb[0].mxu0
  %v224 = vadd.f32 0.0, %v223
  %225 = vdwg.mxu0
  %v228 = vcombine.high %v26, %v26
  %v229 = vcombine.high %v27, %v27
  %vm230 = vcmask 31744
  %v231 = vsel %vm230, %v31, 0
  %v233 = vsel %vm230, %v32, 0
  %vm235 = vcmask 1043456
  %v236 = vsel %vm235, %v26, 0
  %v238 = vsel %vm235, %v228, 0
  %v240 = vsel %vm235, %v27, 0
  %v242 = vsel %vm235, %v229, 0
  %244 = vmatprep.subr.mxu0 %v238
  %245 = vmatpush1.msra.mxu0 %v236
  %246 = vmatprep.subr.mxu0 0.0
  %247 = vmatpush1.msra.mxu0 0.0
  %248 = vmatprep.subr.mxu0 0.0
  %249 = vmatpush1.msra.mxu0 0.0
  %250 = vmatprep.subr.mxu0 0.0
  %251 = vmatpush1.msra.mxu0 0.0
  %252 = vmatprep.subr.mxu0 0.0
  %253 = vmatpush1.msra.mxu0 0.0
  %254 = vmatprep.subr.mxu0 0.0
  %255 = vmatpush1.msra.mxu0 0.0
  %256 = vmatprep.subr.mxu0 0.0
  %257 = vmatpush1.msra.mxu0 0.0
  %258 = vmatprep.subr.mxu0 0.0
  %259 = vmatpush1.msra.mxu0 0.0
  %260 = vmatprep.subr.mxu0 0.0
  %261 = vmatpush1.msra.mxu0 0.0
  %262 = vmatprep.subr.mxu0 0.0
  %263 = vmatpush1.msra.mxu0 0.0
  %264 = vmatprep.subr.mxu0 0.0
  %265 = vmatpush1.msra.mxu0 0.0
  %266 = vmatprep.subr.mxu0 0.0
  %267 = vmatpush1.msra.mxu0 0.0
  %268 = vmatprep.subr.mxu0 0.0
  %269 = vmatpush1.msra.mxu0 0.0
  %270 = vmatprep.subr.mxu0 0.0
  %271 = vmatpush1.msra.mxu0 0.0
  %272 = vmatprep.subr.mxu0 0.0
  %273 = vmatpush1.msra.mxu0 0.0
  %274 = vmatprep.subr.mxu0 0.0
  %275 = vmatpush1.msra.mxu0 0.0
  %276 = vmatprep.subr.mxu0 0.0
  %277 = vmatpush1.msra.mxu0 0.0
  %278 = vmatprep.subr.mxu0 0.0
  %279 = vmatpush1.msra.mxu0 0.0
  %280 = vmatprep.subr.mxu0 0.0
  %281 = vmatpush1.msra.mxu0 0.0
  %282 = vmatprep.subr.mxu0 0.0
  %283 = vmatpush1.msra.mxu0 0.0
  %284 = vmatprep.subr.mxu0 0.0
  %285 = vmatpush1.msra.mxu0 0.0
  %286 = vmatprep.subr.mxu0 0.0
  %287 = vmatpush1.msra.mxu0 0.0
  %288 = vmatprep.subr.mxu0 0.0
  %289 = vmatpush1.msra.mxu0 0.0
  %290 = vmatprep.subr.mxu0 0.0
  %291 = vmatpush1.msra.mxu0 0.0
  %292 = vmatprep.subr.mxu0 0.0
  %293 = vmatpush1.msra.mxu0 0.0
  %294 = vmatprep.subr.mxu0 0.0
  %295 = vmatpush1.msra.mxu0 0.0
  %296 = vmatprep.subr.mxu0 0.0
  %297 = vmatpush1.msra.mxu0 0.0
  %298 = vmatprep.subr.mxu0 0.0
  %299 = vmatpush1.msra.mxu0 0.0
  %300 = vmatprep.subr.mxu0 0.0
  %301 = vmatpush1.msra.mxu0 0.0
  %302 = vmatprep.subr.mxu0 0.0
  %303 = vmatpush1.msra.mxu0 0.0
  %304 = vmatprep.subr.mxu0 0.0
  %305 = vmatpush1.msra.mxu0 0.0
  %306 = vmatprep.subr.mxu0 0.0
  %307 = vmatpush1.msra.mxu0 0.0
  %308 = vmatprep.mubr.f32.mxu0 0.0
  %309 = vmatmul.mubr.f32.gmra.mrb[0].mxu0 %v231
  %v310 = vpop.f32.mrb[0].mxu0
  %v311 = vadd.f32 %v139, %v310
  %v312 = vpop.f32.mrb[0].mxu0
  %v313 = vadd.f32 %v141, %v312
  %314 = vmatprep.mubr.f32.mxu0 0.0
  %315 = vmatmul.mubr.f32.gmra.mrb[0].mxu0 %v233
  %v316 = vpop.f32.mrb[0].mxu0
  %v317 = vadd.f32 %v145, %v316
  %v318 = vpop.f32.mrb[0].mxu0
  %v319 = vadd.f32 %v147, %v318
  %320 = vdwg.mxu0
  %321 = vmatprep.subr.mxu0 %v242
  %322 = vmatpush1.msra.mxu0 %v240
  %323 = vmatprep.subr.mxu0 0.0
  %324 = vmatpush1.msra.mxu0 0.0
  %325 = vmatprep.subr.mxu0 0.0
  %326 = vmatpush1.msra.mxu0 0.0
  %327 = vmatprep.subr.mxu0 0.0
  %328 = vmatpush1.msra.mxu0 0.0
  %329 = vmatprep.subr.mxu0 0.0
  %330 = vmatpush1.msra.mxu0 0.0
  %331 = vmatprep.subr.mxu0 0.0
  %332 = vmatpush1.msra.mxu0 0.0
  %333 = vmatprep.subr.mxu0 0.0
  %334 = vmatpush1.msra.mxu0 0.0
  %335 = vmatprep.subr.mxu0 0.0
  %336 = vmatpush1.msra.mxu0 0.0
  %337 = vmatprep.subr.mxu0 0.0
  %338 = vmatpush1.msra.mxu0 0.0
  %339 = vmatprep.subr.mxu0 0.0
  %340 = vmatpush1.msra.mxu0 0.0
  %341 = vmatprep.subr.mxu0 0.0
  %342 = vmatpush1.msra.mxu0 0.0
  %343 = vmatprep.subr.mxu0 0.0
  %344 = vmatpush1.msra.mxu0 0.0
  %345 = vmatprep.subr.mxu0 0.0
  %346 = vmatpush1.msra.mxu0 0.0
  %347 = vmatprep.subr.mxu0 0.0
  %348 = vmatpush1.msra.mxu0 0.0
  %349 = vmatprep.subr.mxu0 0.0
  %350 = vmatpush1.msra.mxu0 0.0
  %351 = vmatprep.subr.mxu0 0.0
  %352 = vmatpush1.msra.mxu0 0.0
  %353 = vmatprep.subr.mxu0 0.0
  %354 = vmatpush1.msra.mxu0 0.0
  %355 = vmatprep.subr.mxu0 0.0
  %356 = vmatpush1.msra.mxu0 0.0
  %357 = vmatprep.subr.mxu0 0.0
  %358 = vmatpush1.msra.mxu0 0.0
  %359 = vmatprep.subr.mxu0 0.0
  %360 = vmatpush1.msra.mxu0 0.0
  %361 = vmatprep.subr.mxu0 0.0
  %362 = vmatpush1.msra.mxu0 0.0
  %363 = vmatprep.subr.mxu0 0.0
  %364 = vmatpush1.msra.mxu0 0.0
  %365 = vmatprep.subr.mxu0 0.0
  %366 = vmatpush1.msra.mxu0 0.0
  %367 = vmatprep.subr.mxu0 0.0
  %368 = vmatpush1.msra.mxu0 0.0
  %369 = vmatprep.subr.mxu0 0.0
  %370 = vmatpush1.msra.mxu0 0.0
  %371 = vmatprep.subr.mxu0 0.0
  %372 = vmatpush1.msra.mxu0 0.0
  %373 = vmatprep.subr.mxu0 0.0
  %374 = vmatpush1.msra.mxu0 0.0
  %375 = vmatprep.subr.mxu0 0.0
  %376 = vmatpush1.msra.mxu0 0.0
  %377 = vmatprep.subr.mxu0 0.0
  %378 = vmatpush1.msra.mxu0 0.0
  %379 = vmatprep.subr.mxu0 0.0
  %380 = vmatpush1.msra.mxu0 0.0
  %381 = vmatprep.subr.mxu0 0.0
  %382 = vmatpush1.msra.mxu0 0.0
  %383 = vmatprep.subr.mxu0 0.0
  %384 = vmatpush1.msra.mxu0 0.0
  %385 = vmatprep.mubr.f32.mxu0 0.0
  %386 = vmatmul.mubr.f32.gmra.mrb[0].mxu0 %v231
  %v387 = vpop.f32.mrb[0].mxu0
  %v388 = vadd.f32 %v216, %v387
  %v389 = vpop.f32.mrb[0].mxu0
  %v390 = vadd.f32 %v218, %v389
  %391 = vmatprep.mubr.f32.mxu0 0.0
  %392 = vmatmul.mubr.f32.gmra.mrb[0].mxu0 %v233
  %v393 = vpop.f32.mrb[0].mxu0
  %v394 = vadd.f32 %v222, %v393
  %v395 = vpop.f32.mrb[0].mxu0
  %v396 = vadd.f32 %v224, %v395
  %397 = vdwg.mxu0
  %v398 = vadd.f32 %v311, %v313
  %v399 = vadd.f32 %v398, %v388
  %v400 = vadd.f32 %v399, %v390
  %401 = vadd.xlane.f32.xlu0 %v400
  %v402 = vpop.xlane.xlu0 %401
  %v403 = vadd.f32 %v317, %v319
  %v404 = vadd.f32 %v403, %v394
  %v405 = vadd.f32 %v404, %v396
  %406 = vadd.xlane.f32.xlu0 %v405
  %v407 = vpop.xlane.xlu0 %406
  %v408 = vrcp.pop 512.0
  %v409 = vmul.f32 %v402, %v408
  %v410 = vmul.f32 %v407, %v408
  %v411 = vsub.f32 %v311, %v409
  %v412 = vsub.f32 %v313, %v409
  %v413 = vsub.f32 %v388, %v409
  %v414 = vsub.f32 %v390, %v409
  %v415 = vsub.f32 %v317, %v410
  %v416 = vsub.f32 %v319, %v410
  %v417 = vsub.f32 %v394, %v410
  %v418 = vsub.f32 %v396, %v410
  %v419 = vmul.f32 %v411, %v411
  %v420 = vmul.f32 %v412, %v412
  %v421 = vmul.f32 %v413, %v413
  %v422 = vmul.f32 %v414, %v414
  %v423 = vmul.f32 %v415, %v415
  %v424 = vmul.f32 %v416, %v416
  %v425 = vmul.f32 %v417, %v417
  %v426 = vmul.f32 %v418, %v418
  %v427 = vadd.f32 %v419, %v420
  %v428 = vadd.f32 %v427, %v421
  %v429 = vadd.f32 %v428, %v422
  %430 = vadd.xlane.f32.xlu0 %v429
  %v431 = vpop.xlane.xlu0 %430
  %v432 = vadd.f32 %v423, %v424
  %v433 = vadd.f32 %v432, %v425
  %v434 = vadd.f32 %v433, %v426
  %435 = vadd.xlane.f32.xlu0 %v434
  %v436 = vpop.xlane.xlu0 %435
  %v437 = vmul.f32 %v431, %v408
  %v438 = vmul.f32 %v436, %v408
  %v439 = vadd.f32 %v437, 1e-05
  %v440 = vadd.f32 %v438, 1e-05
  %v441 = vrsqrt.pop %v439
  %v442 = vrsqrt.pop %v440
  %v443 = vmul.f32 %v411, %v441
  %v444 = vmul.f32 %v412, %v441
  %v445 = vmul.f32 %v413, %v441
  %v446 = vmul.f32 %v414, %v441
  %v447 = vmul.f32 %v415, %v442
  %v448 = vmul.f32 %v416, %v442
  %v449 = vmul.f32 %v417, %v442
  %v450 = vmul.f32 %v418, %v442
  %452 = vset.pattern.permute.xlu0 0
  %453 = vperm.xlu0 %452, %v33
  %v454 = vpop.permute.xlu0 %453
  %457 = vset.pattern.permute.xlu0 0
  %458 = vperm.xlu0 %457, %v34
  %v459 = vpop.permute.xlu0 %458
  %v461 = vmul.f32 %v443, %v454
  %v462 = vmul.f32 %v444, %v454
  %v463 = vmul.f32 %v445, %v454
  %v464 = vmul.f32 %v446, %v454
  %v465 = vmul.f32 %v447, %v459
  %v466 = vmul.f32 %v448, %v459
  %v467 = vmul.f32 %v449, %v459
  %v468 = vmul.f32 %v450, %v459
  %469 = vset.pattern.permute.xlu0 1
  %470 = vperm.xlu0 %469, %v33
  %v471 = vpop.permute.xlu0 %470
  %473 = vset.pattern.permute.xlu0 1
  %474 = vperm.xlu0 %473, %v34
  %v475 = vpop.permute.xlu0 %474
  %v477 = vadd.f32 %v461, %v471
  %v478 = vadd.f32 %v462, %v471
  %v479 = vadd.f32 %v463, %v471
  %v480 = vadd.f32 %v464, %v471
  %v481 = vadd.f32 %v465, %v475
  %v482 = vadd.f32 %v466, %v475
  %v483 = vadd.f32 %v467, %v475
  %v484 = vadd.f32 %v468, %v475
  %v485 = vld [vmem:[%s3] sm:$0xff]
  %v486 = vld [vmem:[%s3 + $0x8] sm:$0xff]
  %v487 = vld [vmem:[%s3 + $0x10] sm:$0xff]
  %v488 = vld [vmem:[%s3 + $0x18] sm:$0xff]
  %v489 = vld [vmem:[%s3 + $0x20] sm:$0xff]
  %v490 = vld [vmem:[%s3 + $0x28] sm:$0xff]
  %v491 = vld [vmem:[%s3 + $0x30] sm:$0xff]
  %v492 = vld [vmem:[%s3 + $0x38] sm:$0xff]
  %v493 = vadd.f32 %v477, %v485
  %v494 = vadd.f32 %v478, %v486
  %v495 = vadd.f32 %v479, %v487
  %v496 = vadd.f32 %v480, %v488
  %v497 = vadd.f32 %v481, %v489
  %v498 = vadd.f32 %v482, %v490
  %v499 = vadd.f32 %v483, %v491
  %v500 = vadd.f32 %v484, %v492
  %v501 = vld [vmem:[%s4] sm:$0xff]
  %v502 = vld [vmem:[%s4 + $0x8] sm:$0xff]
  %v503 = vld [vmem:[%s4 + $0x10] sm:$0xff]
  %v504 = vld [vmem:[%s4 + $0x18] sm:$0xff]
  %v505 = vld [vmem:[%s4 + $0x20] sm:$0xff]
  %v506 = vld [vmem:[%s4 + $0x28] sm:$0xff]
  %v507 = vld [vmem:[%s4 + $0x30] sm:$0xff]
  %v508 = vld [vmem:[%s4 + $0x38] sm:$0xff]
  %v509 = vadd.f32 %v493, %v501
  %v510 = vadd.f32 %v494, %v502
  %v511 = vadd.f32 %v495, %v503
  %v512 = vadd.f32 %v496, %v504
  %v513 = vadd.f32 %v497, %v505
  %v514 = vadd.f32 %v498, %v506
  %v515 = vadd.f32 %v499, %v507
  %v516 = vadd.f32 %v500, %v508
  %517 = vst [vmem:[%s7] sm:$0xff] %v509
  %518 = vst [vmem:[%s7 + $0x8] sm:$0xff] %v510
  %519 = vst [vmem:[%s7 + $0x10] sm:$0xff] %v511
  %520 = vst [vmem:[%s7 + $0x18] sm:$0xff] %v512
  %521 = vst [vmem:[%s7 + $0x20] sm:$0xff] %v513
  %522 = vst [vmem:[%s7 + $0x28] sm:$0xff] %v514
  %523 = vst [vmem:[%s7 + $0x30] sm:$0xff] %v515
  %524 = vst [vmem:[%s7 + $0x38] sm:$0xff] %v516
  // Predicated region
  $region30: #{fused_lffc_resnet_block.9} parent=0 // pred_check
    _
  $region31: #{fused_lffc_resnet_block.9} parent=0 // pred_check_branch
    %526 = sbr.rel (0) target = $region33
  $region32: #{fused_lffc_resnet_block.9} parent=0 // pred_region
    _
  $region33: #{fused_lffc_resnet_block.9} parent=0 // pred_fallthru
    _
  // Predicated region
  $region34: #{fused_lffc_resnet_block.9} parent=0 // pred_check
    _
  $region35: #{fused_lffc_resnet_block.9} parent=0 // pred_check_branch
    %528 = sbr.rel (0) target = $region37
  $region36: #{fused_lffc_resnet_block.9} parent=0 // pred_region
    _
  $region37: #{fused_lffc_resnet_block.9} parent=0 // pred_fallthru
    _

// kernel: fused_lffc_resnet_block.6
$region0: #{fused_lffc_resnet_block.6}
  #allocation0 [shape = 'u32[]', space=smem, size = 0x4, offset = 0x4, fixed_abs, tag = 'smem constant byte address 0x4 - core index']
  #allocation1 [shape = 'u32[144,128]{1,0:T(1,128)}', space=vmem, size = 0x12000, scoped, tag = 'internal scratch']
  %s0 = inlined_call_operand.vmem [shape: f32[4,512], index: 0, kind: input, shape index: {}]
  %s1 = inlined_call_operand.vmem [shape: f32[1,512], index: 1, kind: input, shape index: {}]
  %s2 = inlined_call_operand.vmem [shape: f32[1,512], index: 2, kind: input, shape index: {}]
  %s3 = inlined_call_operand.vmem [shape: f32[16,5], index: 3, kind: input, shape index: {}]
  %s4 = inlined_call_operand.vmem [shape: f32[16,2], index: 4, kind: input, shape index: {}]
  %s5 = inlined_call_operand.vmem [shape: f32[4,16], index: 5, kind: input, shape index: {}]
  %s6 = inlined_call_operand.vmem [shape: f32[4,2], index: 6, kind: input, shape index: {}]
  %s7 = inlined_call_operand.vmem [shape: f32[4,18], index: 7, kind: input, shape index: {}]
  %s8 = inlined_call_operand.vmem [shape: f32[4,8], index: 8, kind: input, shape index: {}]
  %s9 = inlined_call_operand.vmem [shape: f32[1,4], index: 9, kind: input, shape index: {}]
  %s10 = inlined_call_operand.vmem [shape: f32[1,2], index: 10, kind: input, shape index: {}]
  %s11 = inlined_call_operand.vmem [shape: f32[4,512], index: 11, kind: output, shape index: {0}]
  %s12 = inlined_call_operand.vmem [shape: f32[1,512], index: 12, kind: output, shape index: {1}]
  %13 = xla_tuple %s11, %s12
  %s14 = sld [smem:[#allocation0]]
  $region62: #{fused_lffc_resnet_block.6} parent=0
    _
  %s16 = ssub.s32 1, %s14
  %s17 = scalar_select 0, %s16, %s14
  // Predicated region
  $region2: #{fused_lffc_resnet_block.6} parent=0 // pred_check
    _
  $region3: #{fused_lffc_resnet_block.6} parent=0 // pred_check_branch
    %19 = sbr.rel (0) target = $region5
  $region4: #{fused_lffc_resnet_block.6} parent=0 // pred_region
    _
  $region5: #{fused_lffc_resnet_block.6} parent=0 // pred_fallthru
    _
  // Predicated region
  $region6: #{fused_lffc_resnet_block.6} parent=0 // pred_check
    _
  $region7: #{fused_lffc_resnet_block.6} parent=0 // pred_check_branch
    %21 = sbr.rel (0) target = $region9
  $region8: #{fused_lffc_resnet_block.6} parent=0 // pred_region
    _
  $region9: #{fused_lffc_resnet_block.6} parent=0 // pred_fallthru
    _
  // Predicated region
  $region10: #{fused_lffc_resnet_block.6} parent=0 // pred_check
    _
  $region11: #{fused_lffc_resnet_block.6} parent=0 // pred_check_branch
    %23 = sbr.rel (0) target = $region13
  $region12: #{fused_lffc_resnet_block.6} parent=0 // pred_region
    _
  $region13: #{fused_lffc_resnet_block.6} parent=0 // pred_fallthru
    _
  // Predicated region
  $region14: #{fused_lffc_resnet_block.6} parent=0 // pred_check
    _
  $region15: #{fused_lffc_resnet_block.6} parent=0 // pred_check_branch
    %25 = sbr.rel (0) target = $region17
  $region16: #{fused_lffc_resnet_block.6} parent=0 // pred_region
    _
  $region17: #{fused_lffc_resnet_block.6} parent=0 // pred_fallthru
    _
  // Predicated region
  $region18: #{fused_lffc_resnet_block.6} parent=0 // pred_check
    _
  $region19: #{fused_lffc_resnet_block.6} parent=0 // pred_check_branch
    %27 = sbr.rel (0) target = $region21
  $region20: #{fused_lffc_resnet_block.6} parent=0 // pred_region
    _
  $region21: #{fused_lffc_resnet_block.6} parent=0 // pred_fallthru
    _
  // Predicated region
  $region22: #{fused_lffc_resnet_block.6} parent=0 // pred_check
    _
  $region23: #{fused_lffc_resnet_block.6} parent=0 // pred_check_branch
    %29 = sbr.rel (0) target = $region25
  $region24: #{fused_lffc_resnet_block.6} parent=0 // pred_region
    _
  $region25: #{fused_lffc_resnet_block.6} parent=0 // pred_fallthru
    _
  // Predicated region
  $region26: #{fused_lffc_resnet_block.6} parent=0 // pred_check
    _
  $region27: #{fused_lffc_resnet_block.6} parent=0 // pred_check_branch
    %31 = sbr.rel (0) target = $region29
  $region28: #{fused_lffc_resnet_block.6} parent=0 // pred_region
    _
  $region29: #{fused_lffc_resnet_block.6} parent=0 // pred_fallthru
    _
  // Predicated region
  $region30: #{fused_lffc_resnet_block.6} parent=0 // pred_check
    _
  $region31: #{fused_lffc_resnet_block.6} parent=0 // pred_check_branch
    %33 = sbr.rel (0) target = $region33
  $region32: #{fused_lffc_resnet_block.6} parent=0 // pred_region
    _
  $region33: #{fused_lffc_resnet_block.6} parent=0 // pred_fallthru
    _
  // Predicated region
  $region34: #{fused_lffc_resnet_block.6} parent=0 // pred_check
    _
  $region35: #{fused_lffc_resnet_block.6} parent=0 // pred_check_branch
    %35 = sbr.rel (0) target = $region37
  $region36: #{fused_lffc_resnet_block.6} parent=0 // pred_region
    _
  $region37: #{fused_lffc_resnet_block.6} parent=0 // pred_fallthru
    _
  // Predicated region
  $region38: #{fused_lffc_resnet_block.6} parent=0 // pred_check
    _
  $region39: #{fused_lffc_resnet_block.6} parent=0 // pred_check_branch
    %37 = sbr.rel (0) target = $region41
  $region40: #{fused_lffc_resnet_block.6} parent=0 // pred_region
    _
  $region41: #{fused_lffc_resnet_block.6} parent=0 // pred_fallthru
    _
  // Predicated region
  $region42: #{fused_lffc_resnet_block.6} parent=0 // pred_check
    _
  $region43: #{fused_lffc_resnet_block.6} parent=0 // pred_check_branch
    %39 = sbr.rel (0) target = $region45
  $region44: #{fused_lffc_resnet_block.6} parent=0 // pred_region
    _
  $region45: #{fused_lffc_resnet_block.6} parent=0 // pred_fallthru
    _
  %v40 = vlaneseq
  %v41 = vand.u32 %v40, 127
  %v42 = vadd.s32 %v41, 128
  %v43 = vadd.s32 %v41, 256
  %v44 = vadd.s32 %v41, 384
  %v45 = vand.u32 %v41, 15
  %v46 = vand.u32 %v42, 15
  %v47 = vand.u32 %v43, 15
  %v48 = vand.u32 %v44, 15
  %v49 = vshra.s32 %v41, 4
  %v50 = vshra.s32 %v42, 4
  %v51 = vshra.s32 %v43, 4
  %v52 = vshra.s32 %v44, 4
  %v53 = vand.u32 %v49, 15
  %v54 = vand.u32 %v50, 15
  %v55 = vand.u32 %v51, 15
  %v56 = vand.u32 %v52, 15
  %v57 = vld [vmem:[%s0] sm:$0xff]
  %v58 = vld [vmem:[%s0 + $0x8] sm:$0xff]
  %v59 = vld [vmem:[%s1] sm:$0xf]
  %v60 = vld [vmem:[%s2] sm:$0xf]
  %v61 = vadd.f32 %v59, %v60
  %v62 = vld [vmem:[%s3] sm:$0xff]
  %v63 = vld [vmem:[%s3 + $0x8] sm:$0xff]
  %v64 = vld [vmem:[%s4] sm:$0xff]
  %v65 = vld [vmem:[%s4 + $0x8] sm:$0xff]
  %68 = vrot.lane.b32.xlu0 %v62, 124
  %v69 = vpop.permute.xlu0 %68
  %70 = vrot.lane.b32.xlu0 %v63, 124
  %v71 = vpop.permute.xlu0 %70
  %v73 = vlaneseq
  %v74 = vshrl.u32 %v73, 7
  %v75 = vsub.s32 0, %v74
  %v76 = vrot.slane %v61, %v75
  %v77 = vlaneseq
  %v78 = vshrl.u32 %v77, 7
  %v79 = vsub.s32 1, %v78
  %v80 = vrot.slane %v61, %v79
  %v81 = vlaneseq
  %v82 = vshrl.u32 %v81, 7
  %v83 = vsub.s32 2, %v82
  %v84 = vrot.slane %v61, %v83
  %v85 = vlaneseq
  %v86 = vshrl.u32 %v85, 7
  %v87 = vsub.s32 3, %v86
  %v88 = vrot.slane %v61, %v87
  %vm89 = vcmask 7168
  %v90 = vsel %vm89, %v69, 0
  %v92 = vsel %vm89, %v71, 0
  %vm94 = vcmask 1040384
  %v95 = vsel %vm94, %v76, 0
  %v97 = vsel %vm94, %v80, 0
  %v99 = vsel %vm94, %v84, 0
  %v101 = vsel %vm94, %v88, 0
  %103 = vmatprep.subr.mxu0 %v97
  %104 = vmatpush1.msra.mxu0 %v95
  %105 = vmatprep.subr.mxu0 0.0
  %106 = vmatpush1.msra.mxu0 0.0
  %107 = vmatprep.subr.mxu0 0.0
  %108 = vmatpush1.msra.mxu0 0.0
  %109 = vmatprep.subr.mxu0 0.0
  %110 = vmatpush1.msra.mxu0 0.0
  %111 = vmatprep.subr.mxu0 0.0
  %112 = vmatpush1.msra.mxu0 0.0
  %113 = vmatprep.subr.mxu0 0.0
  %114 = vmatpush1.msra.mxu0 0.0
  %115 = vmatprep.subr.mxu0 0.0
  %116 = vmatpush1.msra.mxu0 0.0
  %117 = vmatprep.subr.mxu0 0.0
  %118 = vmatpush1.msra.mxu0 0.0
  %119 = vmatprep.subr.mxu0 0.0
  %120 = vmatpush1.msra.mxu0 0.0
  %121 = vmatprep.subr.mxu0 0.0
  %122 = vmatpush1.msra.mxu0 0.0
  %123 = vmatprep.subr.mxu0 0.0
  %124 = vmatpush1.msra.mxu0 0.0
  %125 = vmatprep.subr.mxu0 0.0
  %126 = vmatpush1.msra.mxu0 0.0
  %127 = vmatprep.subr.mxu0 0.0
  %128 = vmatpush1.msra.mxu0 0.0
  %129 = vmatprep.subr.mxu0 0.0
  %130 = vmatpush1.msra.mxu0 0.0
  %131 = vmatprep.subr.mxu0 0.0
  %132 = vmatpush1.msra.mxu0 0.0
  %133 = vmatprep.subr.mxu0 0.0
  %134 = vmatpush1.msra.mxu0 0.0
  %135 = vmatprep.subr.mxu0 0.0
  %136 = vmatpush1.msra.mxu0 0.0
  %137 = vmatprep.subr.mxu0 0.0
  %138 = vmatpush1.msra.mxu0 0.0
  %139 = vmatprep.subr.mxu0 0.0
  %140 = vmatpush1.msra.mxu0 0.0
  %141 = vmatprep.subr.mxu0 0.0
  %142 = vmatpush1.msra.mxu0 0.0
  %143 = vmatprep.subr.mxu0 0.0
  %144 = vmatpush1.msra.mxu0 0.0
  %145 = vmatprep.subr.mxu0 0.0
  %146 = vmatpush1.msra.mxu0 0.0
  %147 = vmatprep.subr.mxu0 0.0
  %148 = vmatpush1.msra.mxu0 0.0
  %149 = vmatprep.subr.mxu0 0.0
  %150 = vmatpush1.msra.mxu0 0.0
  %151 = vmatprep.subr.mxu0 0.0
  %152 = vmatpush1.msra.mxu0 0.0
  %153 = vmatprep.subr.mxu0 0.0
  %154 = vmatpush1.msra.mxu0 0.0
  %155 = vmatprep.subr.mxu0 0.0
  %156 = vmatpush1.msra.mxu0 0.0
  %157 = vmatprep.subr.mxu0 0.0
  %158 = vmatpush1.msra.mxu0 0.0
  %159 = vmatprep.subr.mxu0 0.0
  %160 = vmatpush1.msra.mxu0 0.0
  %161 = vmatprep.subr.mxu0 0.0
  %162 = vmatpush1.msra.mxu0 0.0
  %163 = vmatprep.subr.mxu0 0.0
  %164 = vmatpush1.msra.mxu0 0.0
  %165 = vmatprep.subr.mxu0 0.0
  %166 = vmatpush1.msra.mxu0 0.0
  %167 = vmatprep.mubr.f32.mxu0 0.0
  %168 = vmatmul.mubr.f32.gmra.mrb[0].mxu0 %v90
  %v169 = vpop.f32.mrb[0].mxu0
  %v170 = vadd.f32 0.0, %v169
  %v171 = vpop.f32.mrb[0].mxu0
  %v172 = vadd.f32 0.0, %v171
  %173 = vmatprep.mubr.f32.mxu0 0.0
  %174 = vmatmul.mubr.f32.gmra.mrb[0].mxu0 %v92
  %v175 = vpop.f32.mrb[0].mxu0
  %v176 = vadd.f32 0.0, %v175
  %v177 = vpop.f32.mrb[0].mxu0
  %v178 = vadd.f32 0.0, %v177
  %179 = vdwg.mxu0
  %180 = vmatprep.subr.mxu0 %v101
  %181 = vmatpush1.msra.mxu0 %v99
  %182 = vmatprep.subr.mxu0 0.0
  %183 = vmatpush1.msra.mxu0 0.0
  %184 = vmatprep.subr.mxu0 0.0
  %185 = vmatpush1.msra.mxu0 0.0
  %186 = vmatprep.subr.mxu0 0.0
  %187 = vmatpush1.msra.mxu0 0.0
  %188 = vmatprep.subr.mxu0 0.0
  %189 = vmatpush1.msra.mxu0 0.0
  %190 = vmatprep.subr.mxu0 0.0
  %191 = vmatpush1.msra.mxu0 0.0
  %192 = vmatprep.subr.mxu0 0.0
  %193 = vmatpush1.msra.mxu0 0.0
  %194 = vmatprep.subr.mxu0 0.0
  %195 = vmatpush1.msra.mxu0 0.0
  %196 = vmatprep.subr.mxu0 0.0
  %197 = vmatpush1.msra.mxu0 0.0
  %198 = vmatprep.subr.mxu0 0.0
  %199 = vmatpush1.msra.mxu0 0.0
  %200 = vmatprep.subr.mxu0 0.0
  %201 = vmatpush1.msra.mxu0 0.0
  %202 = vmatprep.subr.mxu0 0.0
  %203 = vmatpush1.msra.mxu0 0.0
  %204 = vmatprep.subr.mxu0 0.0
  %205 = vmatpush1.msra.mxu0 0.0
  %206 = vmatprep.subr.mxu0 0.0
  %207 = vmatpush1.msra.mxu0 0.0
  %208 = vmatprep.subr.mxu0 0.0
  %209 = vmatpush1.msra.mxu0 0.0
  %210 = vmatprep.subr.mxu0 0.0
  %211 = vmatpush1.msra.mxu0 0.0
  %212 = vmatprep.subr.mxu0 0.0
  %213 = vmatpush1.msra.mxu0 0.0
  %214 = vmatprep.subr.mxu0 0.0
  %215 = vmatpush1.msra.mxu0 0.0
  %216 = vmatprep.subr.mxu0 0.0
  %217 = vmatpush1.msra.mxu0 0.0
  %218 = vmatprep.subr.mxu0 0.0
  %219 = vmatpush1.msra.mxu0 0.0
  %220 = vmatprep.subr.mxu0 0.0
  %221 = vmatpush1.msra.mxu0 0.0
  %222 = vmatprep.subr.mxu0 0.0
  %223 = vmatpush1.msra.mxu0 0.0
  %224 = vmatprep.subr.mxu0 0.0
  %225 = vmatpush1.msra.mxu0 0.0
  %226 = vmatprep.subr.mxu0 0.0
  %227 = vmatpush1.msra.mxu0 0.0
  %228 = vmatprep.subr.mxu0 0.0
  %229 = vmatpush1.msra.mxu0 0.0
  %230 = vmatprep.subr.mxu0 0.0
  %231 = vmatpush1.msra.mxu0 0.0
  %232 = vmatprep.subr.mxu0 0.0
  %233 = vmatpush1.msra.mxu0 0.0
  %234 = vmatprep.subr.mxu0 0.0
  %235 = vmatpush1.msra.mxu0 0.0
  %236 = vmatprep.subr.mxu0 0.0
  %237 = vmatpush1.msra.mxu0 0.0
  %238 = vmatprep.subr.mxu0 0.0
  %239 = vmatpush1.msra.mxu0 0.0
  %240 = vmatprep.subr.mxu0 0.0
  %241 = vmatpush1.msra.mxu0 0.0
  %242 = vmatprep.subr.mxu0 0.0
  %243 = vmatpush1.msra.mxu0 0.0
  %244 = vmatprep.mubr.f32.mxu0 0.0
  %245 = vmatmul.mubr.f32.gmra.mrb[0].mxu0 %v90
  %v246 = vpop.f32.mrb[0].mxu0
  %v247 = vadd.f32 0.0, %v246
  %v248 = vpop.f32.mrb[0].mxu0
  %v249 = vadd.f32 0.0, %v248
  %250 = vmatprep.mubr.f32.mxu0 0.0
  %251 = vmatmul.mubr.f32.gmra.mrb[0].mxu0 %v92
  %v252 = vpop.f32.mrb[0].mxu0
  %v253 = vadd.f32 0.0, %v252
  %v254 = vpop.f32.mrb[0].mxu0
  %v255 = vadd.f32 0.0, %v254
  %256 = vdwg.mxu0
  %v259 = vcombine.high %v57, %v57
  %v260 = vcombine.high %v58, %v58
  %vm261 = vcmask 31744
  %v262 = vsel %vm261, %v62, 0
  %v264 = vsel %vm261, %v63, 0
  %vm266 = vcmask 1043456
  %v267 = vsel %vm266, %v57, 0
  %v269 = vsel %vm266, %v259, 0
  %v271 = vsel %vm266, %v58, 0
  %v273 = vsel %vm266, %v260, 0
  %275 = vmatprep.subr.mxu0 %v269
  %276 = vmatpush1.msra.mxu0 %v267
  %277 = vmatprep.subr.mxu0 0.0
  %278 = vmatpush1.msra.mxu0 0.0
  %279 = vmatprep.subr.mxu0 0.0
  %280 = vmatpush1.msra.mxu0 0.0
  %281 = vmatprep.subr.mxu0 0.0
  %282 = vmatpush1.msra.mxu0 0.0
  %283 = vmatprep.subr.mxu0 0.0
  %284 = vmatpush1.msra.mxu0 0.0
  %285 = vmatprep.subr.mxu0 0.0
  %286 = vmatpush1.msra.mxu0 0.0
  %287 = vmatprep.subr.mxu0 0.0
  %288 = vmatpush1.msra.mxu0 0.0
  %289 = vmatprep.subr.mxu0 0.0
  %290 = vmatpush1.msra.mxu0 0.0
  %291 = vmatprep.subr.mxu0 0.0
  %292 = vmatpush1.msra.mxu0 0.0
  %293 = vmatprep.subr.mxu0 0.0
  %294 = vmatpush1.msra.mxu0 0.0
  %295 = vmatprep.subr.mxu0 0.0
  %296 = vmatpush1.msra.mxu0 0.0
  %297 = vmatprep.subr.mxu0 0.0
  %298 = vmatpush1.msra.mxu0 0.0
  %299 = vmatprep.subr.mxu0 0.0
  %300 = vmatpush1.msra.mxu0 0.0
  %301 = vmatprep.subr.mxu0 0.0
  %302 = vmatpush1.msra.mxu0 0.0
  %303 = vmatprep.subr.mxu0 0.0
  %304 = vmatpush1.msra.mxu0 0.0
  %305 = vmatprep.subr.mxu0 0.0
  %306 = vmatpush1.msra.mxu0 0.0
  %307 = vmatprep.subr.mxu0 0.0
  %308 = vmatpush1.msra.mxu0 0.0
  %309 = vmatprep.subr.mxu0 0.0
  %310 = vmatpush1.msra.mxu0 0.0
  %311 = vmatprep.subr.mxu0 0.0
  %312 = vmatpush1.msra.mxu0 0.0
  %313 = vmatprep.subr.mxu0 0.0
  %314 = vmatpush1.msra.mxu0 0.0
  %315 = vmatprep.subr.mxu0 0.0
  %316 = vmatpush1.msra.mxu0 0.0
  %317 = vmatprep.subr.mxu0 0.0
  %318 = vmatpush1.msra.mxu0 0.0
  %319 = vmatprep.subr.mxu0 0.0
  %320 = vmatpush1.msra.mxu0 0.0
  %321 = vmatprep.subr.mxu0 0.0
  %322 = vmatpush1.msra.mxu0 0.0
  %323 = vmatprep.subr.mxu0 0.0
  %324 = vmatpush1.msra.mxu0 0.0
  %325 = vmatprep.subr.mxu0 0.0
  %326 = vmatpush1.msra.mxu0 0.0
  %327 = vmatprep.subr.mxu0 0.0
  %328 = vmatpush1.msra.mxu0 0.0
  %329 = vmatprep.subr.mxu0 0.0
  %330 = vmatpush1.msra.mxu0 0.0
  %331 = vmatprep.subr.mxu0 0.0
  %332 = vmatpush1.msra.mxu0 0.0
  %333 = vmatprep.subr.mxu0 0.0
  %334 = vmatpush1.msra.mxu0 0.0
  %335 = vmatprep.subr.mxu0 0.0
  %336 = vmatpush1.msra.mxu0 0.0
  %337 = vmatprep.subr.mxu0 0.0
  %338 = vmatpush1.msra.mxu0 0.0
  %339 = vmatprep.mubr.f32.mxu0 0.0
  %340 = vmatmul.mubr.f32.gmra.mrb[0].mxu0 %v262
  %v341 = vpop.f32.mrb[0].mxu0
  %v342 = vadd.f32 %v170, %v341
  %v343 = vpop.f32.mrb[0].mxu0
  %v344 = vadd.f32 %v172, %v343
  %345 = vmatprep.mubr.f32.mxu0 0.0
  %346 = vmatmul.mubr.f32.gmra.mrb[0].mxu0 %v264
  %v347 = vpop.f32.mrb[0].mxu0
  %v348 = vadd.f32 %v176, %v347
  %v349 = vpop.f32.mrb[0].mxu0
  %v350 = vadd.f32 %v178, %v349
  %351 = vdwg.mxu0
  %352 = vmatprep.subr.mxu0 %v273
  %353 = vmatpush1.msra.mxu0 %v271
  %354 = vmatprep.subr.mxu0 0.0
  %355 = vmatpush1.msra.mxu0 0.0
  %356 = vmatprep.subr.mxu0 0.0
  %357 = vmatpush1.msra.mxu0 0.0
  %358 = vmatprep.subr.mxu0 0.0
  %359 = vmatpush1.msra.mxu0 0.0
  %360 = vmatprep.subr.mxu0 0.0
  %361 = vmatpush1.msra.mxu0 0.0
  %362 = vmatprep.subr.mxu0 0.0
  %363 = vmatpush1.msra.mxu0 0.0
  %364 = vmatprep.subr.mxu0 0.0
  %365 = vmatpush1.msra.mxu0 0.0
  %366 = vmatprep.subr.mxu0 0.0
  %367 = vmatpush1.msra.mxu0 0.0
  %368 = vmatprep.subr.mxu0 0.0
  %369 = vmatpush1.msra.mxu0 0.0
  %370 = vmatprep.subr.mxu0 0.0
  %371 = vmatpush1.msra.mxu0 0.0
  %372 = vmatprep.subr.mxu0 0.0
  %373 = vmatpush1.msra.mxu0 0.0
  %374 = vmatprep.subr.mxu0 0.0
  %375 = vmatpush1.msra.mxu0 0.0
  %376 = vmatprep.subr.mxu0 0.0
  %377 = vmatpush1.msra.mxu0 0.0
  %378 = vmatprep.subr.mxu0 0.0
  %379 = vmatpush1.msra.mxu0 0.0
  %380 = vmatprep.subr.mxu0 0.0
  %381 = vmatpush1.msra.mxu0 0.0
  %382 = vmatprep.subr.mxu0 0.0
  %383 = vmatpush1.msra.mxu0 0.0
  %384 = vmatprep.subr.mxu0 0.0
  %385 = vmatpush1.msra.mxu0 0.0
  %386 = vmatprep.subr.mxu0 0.0
  %387 = vmatpush1.msra.mxu0 0.0
  %388 = vmatprep.subr.mxu0 0.0
  %389 = vmatpush1.msra.mxu0 0.0
  %390 = vmatprep.subr.mxu0 0.0
  %391 = vmatpush1.msra.mxu0 0.0
  %392 = vmatprep.subr.mxu0 0.0
  %393 = vmatpush1.msra.mxu0 0.0
  %394 = vmatprep.subr.mxu0 0.0
  %395 = vmatpush1.msra.mxu0 0.0
  %396 = vmatprep.subr.mxu0 0.0
  %397 = vmatpush1.msra.mxu0 0.0
  %398 = vmatprep.subr.mxu0 0.0
  %399 = vmatpush1.msra.mxu0 0.0
  %400 = vmatprep.subr.mxu0 0.0
  %401 = vmatpush1.msra.mxu0 0.0
  %402 = vmatprep.subr.mxu0 0.0
  %403 = vmatpush1.msra.mxu0 0.0
  %404 = vmatprep.subr.mxu0 0.0
  %405 = vmatpush1.msra.mxu0 0.0
  %406 = vmatprep.subr.mxu0 0.0
  %407 = vmatpush1.msra.mxu0 0.0
  %408 = vmatprep.subr.mxu0 0.0
  %409 = vmatpush1.msra.mxu0 0.0
  %410 = vmatprep.subr.mxu0 0.0
  %411 = vmatpush1.msra.mxu0 0.0
  %412 = vmatprep.subr.mxu0 0.0
  %413 = vmatpush1.msra.mxu0 0.0
  %414 = vmatprep.subr.mxu0 0.0
  %415 = vmatpush1.msra.mxu0 0.0
  %416 = vmatprep.mubr.f32.mxu0 0.0
  %417 = vmatmul.mubr.f32.gmra.mrb[0].mxu0 %v262
  %v418 = vpop.f32.mrb[0].mxu0
  %v419 = vadd.f32 %v247, %v418
  %v420 = vpop.f32.mrb[0].mxu0
  %v421 = vadd.f32 %v249, %v420
  %422 = vmatprep.mubr.f32.mxu0 0.0
  %423 = vmatmul.mubr.f32.gmra.mrb[0].mxu0 %v264
  %v424 = vpop.f32.mrb[0].mxu0
  %v425 = vadd.f32 %v253, %v424
  %v426 = vpop.f32.mrb[0].mxu0
  %v427 = vadd.f32 %v255, %v426
  %428 = vdwg.mxu0
  %v429 = vadd.f32 %v342, %v344
  %v430 = vadd.f32 %v429, %v419
  %v431 = vadd.f32 %v430, %v421
  %432 = vadd.xlane.f32.xlu0 %v431
  %v433 = vpop.xlane.xlu0 %432
  %v434 = vadd.f32 %v348, %v350
  %v435 = vadd.f32 %v434, %v425
  %v436 = vadd.f32 %v435, %v427
  %437 = vadd.xlane.f32.xlu0 %v436
  %v438 = vpop.xlane.xlu0 %437
  %v439 = vrcp.pop 512.0
  %v440 = vmul.f32 %v433, %v439
  %v441 = vmul.f32 %v438, %v439
  %v442 = vsub.f32 %v342, %v440
  %v443 = vsub.f32 %v344, %v440
  %v444 = vsub.f32 %v419, %v440
  %v445 = vsub.f32 %v421, %v440
  %v446 = vsub.f32 %v348, %v441
  %v447 = vsub.f32 %v350, %v441
  %v448 = vsub.f32 %v425, %v441
  %v449 = vsub.f32 %v427, %v441
  %v450 = vmul.f32 %v442, %v442
  %v451 = vmul.f32 %v443, %v443
  %v452 = vmul.f32 %v444, %v444
  %v453 = vmul.f32 %v445, %v445
  %v454 = vmul.f32 %v446, %v446
  %v455 = vmul.f32 %v447, %v447
  %v456 = vmul.f32 %v448, %v448
  %v457 = vmul.f32 %v449, %v449
  %v458 = vadd.f32 %v450, %v451
  %v459 = vadd.f32 %v458, %v452
  %v460 = vadd.f32 %v459, %v453
  %461 = vadd.xlane.f32.xlu0 %v460
  %v462 = vpop.xlane.xlu0 %461
  %v463 = vadd.f32 %v454, %v455
  %v464 = vadd.f32 %v463, %v456
  %v465 = vadd.f32 %v464, %v457
  %466 = vadd.xlane.f32.xlu0 %v465
  %v467 = vpop.xlane.xlu0 %466
  %v468 = vmul.f32 %v462, %v439
  %v469 = vmul.f32 %v467, %v439
  %v470 = vadd.f32 %v468, 1e-05
  %v471 = vadd.f32 %v469, 1e-05
  %v472 = vrsqrt.pop %v470
  %v473 = vrsqrt.pop %v471
  %v474 = vmul.f32 %v442, %v472
  %v475 = vmul.f32 %v443, %v472
  %v476 = vmul.f32 %v444, %v472
  %v477 = vmul.f32 %v445, %v472
  %v478 = vmul.f32 %v446, %v473
  %v479 = vmul.f32 %v447, %v473
  %v480 = vmul.f32 %v448, %v473
  %v481 = vmul.f32 %v449, %v473
  %483 = vset.pattern.permute.xlu0 0
  %484 = vperm.xlu0 %483, %v64
  %v485 = vpop.permute.xlu0 %484
  %488 = vset.pattern.permute.xlu0 0
  %489 = vperm.xlu0 %488, %v65
  %v490 = vpop.permute.xlu0 %489
  %v492 = vmul.f32 %v474, %v485
  %v493 = vmul.f32 %v475, %v485
  %v494 = vmul.f32 %v476, %v485
  %v495 = vmul.f32 %v477, %v485
  %v496 = vmul.f32 %v478, %v490
  %v497 = vmul.f32 %v479, %v490
  %v498 = vmul.f32 %v480, %v490
  %v499 = vmul.f32 %v481, %v490
  %500 = vset.pattern.permute.xlu0 1
  %501 = vperm.xlu0 %500, %v64
  %v502 = vpop.permute.xlu0 %501
  %504 = vset.pattern.permute.xlu0 1
  %505 = vperm.xlu0 %504, %v65
  %v506 = vpop.permute.xlu0 %505
  %v508 = vadd.f32 %v492, %v502
  %v509 = vadd.f32 %v493, %v502
  %v510 = vadd.f32 %v494, %v502
  %v511 = vadd.f32 %v495, %v502
  %v512 = vadd.f32 %v496, %v506
  %v513 = vadd.f32 %v497, %v506
  %v514 = vadd.f32 %v498, %v506
  %v515 = vadd.f32 %v499, %v506
  %v516 = vmax.f32 %v508, 0.0
  %v517 = vmax.f32 %v509, 0.0
  %v518 = vmax.f32 %v510, 0.0
  %v519 = vmax.f32 %v511, 0.0
  %v520 = vmax.f32 %v512, 0.0
  %v521 = vmax.f32 %v513, 0.0
  %v522 = vmax.f32 %v514, 0.0
  %v523 = vmax.f32 %v515, 0.0
  %v524 = vld [vmem:[%s5] sm:$0xf]
  %v525 = vld [vmem:[%s6] sm:$0xf]
  %v526 = vld [vmem:[%s7] sm:$0xf]
  %v527 = vld [vmem:[%s8] sm:$0xf]
  %v528 = vld [vmem:[%s9] sm:$0x1]
  %v529 = vld [vmem:[%s10] sm:$0x1]
  %vm530 = vcmask 130048
  %v532 = vsel %vm530, %v524, 0
  %534 = vmatprep.subr.mxu0 %v517
  %535 = vmatpush1.msra.mxu0 %v516
  %536 = vmatprep.subr.mxu0 %v521
  %537 = vmatpush1.msra.mxu0 %v520
  %538 = vmatprep.subr.mxu0 0.0
  %539 = vmatpush1.msra.mxu0 0.0
  %540 = vmatprep.subr.mxu0 0.0
  %541 = vmatpush1.msra.mxu0 0.0
  %542 = vmatprep.subr.mxu0 0.0
  %543 = vmatpush1.msra.mxu0 0.0
  %544 = vmatprep.subr.mxu0 0.0
  %545 = vmatpush1.msra.mxu0 0.0
  %546 = vmatprep.subr.mxu0 0.0
  %547 = vmatpush1.msra.mxu0 0.0
  %548 = vmatprep.subr.mxu0 0.0
  %549 = vmatpush1.msra.mxu0 0.0
  %550 = vmatprep.subr.mxu0 0.0
  %551 = vmatpush1.msra.mxu0 0.0
  %552 = vmatprep.subr.mxu0 0.0
  %553 = vmatpush1.msra.mxu0 0.0
  %554 = vmatprep.subr.mxu0 0.0
  %555 = vmatpush1.msra.mxu0 0.0
  %556 = vmatprep.subr.mxu0 0.0
  %557 = vmatpush1.msra.mxu0 0.0
  %558 = vmatprep.subr.mxu0 0.0
  %559 = vmatpush1.msra.mxu0 0.0
  %560 = vmatprep.subr.mxu0 0.0
  %561 = vmatpush1.msra.mxu0 0.0
  %562 = vmatprep.subr.mxu0 0.0
  %563 = vmatpush1.msra.mxu0 0.0
  %564 = vmatprep.subr.mxu0 0.0
  %565 = vmatpush1.msra.mxu0 0.0
  %566 = vmatprep.subr.mxu0 0.0
  %567 = vmatpush1.msra.mxu0 0.0
  %568 = vmatprep.subr.mxu0 0.0
  %569 = vmatpush1.msra.mxu0 0.0
  %570 = vmatprep.subr.mxu0 0.0
  %571 = vmatpush1.msra.mxu0 0.0
  %572 = vmatprep.subr.mxu0 0.0
  %573 = vmatpush1.msra.mxu0 0.0
  %574 = vmatprep.subr.mxu0 0.0
  %575 = vmatpush1.msra.mxu0 0.0
  %576 = vmatprep.subr.mxu0 0.0
  %577 = vmatpush1.msra.mxu0 0.0
  %578 = vmatprep.subr.mxu0 0.0
  %579 = vmatpush1.msra.mxu0 0.0
  %580 = vmatprep.subr.mxu0 0.0
  %581 = vmatpush1.msra.mxu0 0.0
  %582 = vmatprep.subr.mxu0 0.0
  %583 = vmatpush1.msra.mxu0 0.0
  %584 = vmatprep.subr.mxu0 0.0
  %585 = vmatpush1.msra.mxu0 0.0
  %586 = vmatprep.subr.mxu0 0.0
  %587 = vmatpush1.msra.mxu0 0.0
  %588 = vmatprep.subr.mxu0 0.0
  %589 = vmatpush1.msra.mxu0 0.0
  %590 = vmatprep.subr.mxu0 0.0
  %591 = vmatpush1.msra.mxu0 0.0
  %592 = vmatprep.subr.mxu0 0.0
  %593 = vmatpush1.msra.mxu0 0.0
  %594 = vmatprep.subr.mxu0 0.0
  %595 = vmatpush1.msra.mxu0 0.0
  %596 = vmatprep.subr.mxu0 0.0
  %597 = vmatpush1.msra.mxu0 0.0
  %598 = vmatprep.mubr.f32.mxu0 0.0
  %599 = vmatmul.mubr.f32.gmra.mrb[0].mxu0 %v532
  %v600 = vpop.f32.mrb[0].mxu0
  %v601 = vadd.f32 0.0, %v600
  %v602 = vpop.f32.mrb[0].mxu0
  %v603 = vadd.f32 0.0, %v602
  %604 = vdwg.mxu0
  %605 = vmatprep.subr.mxu0 %v519
  %606 = vmatpush1.msra.mxu0 %v518
  %607 = vmatprep.subr.mxu0 %v523
  %608 = vmatpush1.msra.mxu0 %v522
  %609 = vmatprep.subr.mxu0 0.0
  %610 = vmatpush1.msra.mxu0 0.0
  %611 = vmatprep.subr.mxu0 0.0
  %612 = vmatpush1.msra.mxu0 0.0
  %613 = vmatprep.subr.mxu0 0.0
  %614 = vmatpush1.msra.mxu0 0.0
  %615 = vmatprep.subr.mxu0 0.0
  %616 = vmatpush1.msra.mxu0 0.0
  %617 = vmatprep.subr.mxu0 0.0
  %618 = vmatpush1.msra.mxu0 0.0
  %619 = vmatprep.subr.mxu0 0.0
  %620 = vmatpush1.msra.mxu0 0.0
  %621 = vmatprep.subr.mxu0 0.0
  %622 = vmatpush1.msra.mxu0 0.0
  %623 = vmatprep.subr.mxu0 0.0
  %624 = vmatpush1.msra.mxu0 0.0
  %625 = vmatprep.subr.mxu0 0.0
  %626 = vmatpush1.msra.mxu0 0.0
  %627 = vmatprep.subr.mxu0 0.0
  %628 = vmatpush1.msra.mxu0 0.0
  %629 = vmatprep.subr.mxu0 0.0
  %630 = vmatpush1.msra.mxu0 0.0
  %631 = vmatprep.subr.mxu0 0.0
  %632 = vmatpush1.msra.mxu0 0.0
  %633 = vmatprep.subr.mxu0 0.0
  %634 = vmatpush1.msra.mxu0 0.0
  %635 = vmatprep.subr.mxu0 0.0
  %636 = vmatpush1.msra.mxu0 0.0
  %637 = vmatprep.subr.mxu0 0.0
  %638 = vmatpush1.msra.mxu0 0.0
  %639 = vmatprep.subr.mxu0 0.0
  %640 = vmatpush1.msra.mxu0 0.0
  %641 = vmatprep.subr.mxu0 0.0
  %642 = vmatpush1.msra.mxu0 0.0
  %643 = vmatprep.subr.mxu0 0.0
  %644 = vmatpush1.msra.mxu0 0.0
  %645 = vmatprep.subr.mxu0 0.0
  %646 = vmatpush1.msra.mxu0 0.0
  %647 = vmatprep.subr.mxu0 0.0
  %648 = vmatpush1.msra.mxu0 0.0
  %649 = vmatprep.subr.mxu0 0.0
  %650 = vmatpush1.msra.mxu0 0.0
  %651 = vmatprep.subr.mxu0 0.0
  %652 = vmatpush1.msra.mxu0 0.0
  %653 = vmatprep.subr.mxu0 0.0
  %654 = vmatpush1.msra.mxu0 0.0
  %655 = vmatprep.subr.mxu0 0.0
  %656 = vmatpush1.msra.mxu0 0.0
  %657 = vmatprep.subr.mxu0 0.0
  %658 = vmatpush1.msra.mxu0 0.0
  %659 = vmatprep.subr.mxu0 0.0
  %660 = vmatpush1.msra.mxu0 0.0
  %661 = vmatprep.subr.mxu0 0.0
  %662 = vmatpush1.msra.mxu0 0.0
  %663 = vmatprep.subr.mxu0 0.0
  %664 = vmatpush1.msra.mxu0 0.0
  %665 = vmatprep.subr.mxu0 0.0
  %666 = vmatpush1.msra.mxu0 0.0
  %667 = vmatprep.subr.mxu0 0.0
  %668 = vmatpush1.msra.mxu0 0.0
  %669 = vmatprep.mubr.f32.mxu0 0.0
  %670 = vmatmul.mubr.f32.gmra.mrb[0].mxu0 %v532
  %v671 = vpop.f32.mrb[0].mxu0
  %v672 = vadd.f32 0.0, %v671
  %v673 = vpop.f32.mrb[0].mxu0
  %v674 = vadd.f32 0.0, %v673
  %675 = vdwg.mxu0
  %v676 = vsel %vm266, %v601, 0.0
  %v677 = vsel %vm266, %v603, 0.0
  %v678 = vadd.f32 %v676, %v677
  %v679 = vsel %vm266, %v672, 0.0
  %v680 = vadd.f32 %v678, %v679
  %v681 = vsel %vm266, %v674, 0.0
  %v682 = vadd.f32 %v680, %v681
  %683 = vadd.xlane.f32.xlu0 %v682
  %v684 = vpop.xlane.xlu0 %683
  %v685 = vmul.f32 %v684, %v439
  %v686 = vsub.f32 %v601, %v685
  %v687 = vsub.f32 %v603, %v685
  %v688 = vsub.f32 %v672, %v685
  %v689 = vsub.f32 %v674, %v685
  %v690 = vmul.f32 %v686, %v686
  %v691 = vmul.f32 %v687, %v687
  %v692 = vmul.f32 %v688, %v688
  %v693 = vmul.f32 %v689, %v689
  %v694 = vsel %vm266, %v690, 0.0
  %v695 = vsel %vm266, %v691, 0.0
  %v696 = vadd.f32 %v694, %v695
  %v697 = vsel %vm266, %v692, 0.0
  %v698 = vadd.f32 %v696, %v697
  %v699 = vsel %vm266, %v693, 0.0
  %v700 = vadd.f32 %v698, %v699
  %701 = vadd.xlane.f32.xlu0 %v700
  %v702 = vpop.xlane.xlu0 %701
  %v703 = vmul.f32 %v702, %v439
  %v704 = vadd.f32 %v703, 1e-05
  %v705 = vrsqrt.pop %v704
  %v706 = vmul.f32 %v686, %v705
  %v707 = vmul.f32 %v687, %v705
  %v708 = vmul.f32 %v688, %v705
  %v709 = vmul.f32 %v689, %v705
  %711 = vset.pattern.permute.xlu0 0
  %712 = vperm.xlu0 %711, %v525
  %v713 = vpop.permute.xlu0 %712
  %v715 = vmul.f32 %v706, %v713
  %v716 = vmul.f32 %v707, %v713
  %v717 = vmul.f32 %v708, %v713
  %v718 = vmul.f32 %v709, %v713
  %719 = vset.pattern.permute.xlu0 1
  %720 = vperm.xlu0 %719, %v525
  %v721 = vpop.permute.xlu0 %720
  %v723 = vadd.f32 %v715, %v721
  %v724 = vadd.f32 %v716, %v721
  %v725 = vadd.f32 %v717, %v721
  %v726 = vadd.f32 %v718, %v721
  %v727 = vmax.f32 %v723, 0.0
  %v728 = vmax.f32 %v724, 0.0
  %v729 = vmax.f32 %v725, 0.0
  %v730 = vmax.f32 %v726, 0.0
  %vm731 = vcmp.eq.s32.totalorder %v45, 0
  %vm732 = vcmp.eq.s32.totalorder %v46, 0
  %vm733 = vcmp.eq.s32.totalorder %v47, 0
  %vm734 = vcmp.eq.s32.totalorder %v48, 0
  %vm735 = vcmp.eq.s32.totalorder %v45, 15
  %vm736 = vcmp.eq.s32.totalorder %v46, 15
  %vm737 = vcmp.eq.s32.totalorder %v47, 15
  %vm738 = vcmp.eq.s32.totalorder %v48, 15
  %vm739 = vcmp.eq.s32.totalorder %v53, 0
  %vm740 = vcmp.eq.s32.totalorder %v54, 0
  %vm741 = vcmp.eq.s32.totalorder %v55, 0
  %vm742 = vcmp.eq.s32.totalorder %v56, 0
  %vm743 = vcmp.eq.s32.totalorder %v53, 15
  %vm744 = vcmp.eq.s32.totalorder %v54, 15
  %vm745 = vcmp.eq.s32.totalorder %v55, 15
  %vm746 = vcmp.eq.s32.totalorder %v56, 15
  %747 = vrot.lane.b32.xlu0 %v727, 16
  %v748 = vpop.permute.xlu0 %747
  %749 = vrot.lane.b32.xlu0 %v728, 16
  %v750 = vpop.permute.xlu0 %749
  %751 = vrot.lane.b32.xlu0 %v729, 16
  %v752 = vpop.permute.xlu0 %751
  %753 = vrot.lane.b32.xlu0 %v730, 16
  %v754 = vpop.permute.xlu0 %753
  %vm755 = vcmp.lt.s32.totalorder %v41, 16
  %v756 = vsel %vm755, %v752, %v754
  %v757 = vsel %vm755, %v750, %v752
  %v758 = vsel %vm755, %v748, %v750
  %v759 = vsel %vm755, %v754, %v748
  %760 = vrot.lane.b32.xlu0 %v727, 112
  %v761 = vpop.permute.xlu0 %760
  %762 = vrot.lane.b32.xlu0 %v728, 112
  %v763 = vpop.permute.xlu0 %762
  %764 = vrot.lane.b32.xlu0 %v729, 112
  %v765 = vpop.permute.xlu0 %764
  %766 = vrot.lane.b32.xlu0 %v730, 112
  %v767 = vpop.permute.xlu0 %766
  %vm768 = vcmp.lt.s32.totalorder %v41, 112
  %v769 = vsel %vm768, %v765, %v767
  %v770 = vsel %vm768, %v763, %v765
  %v771 = vsel %vm768, %v761, %v763
  %v772 = vsel %vm768, %v767, %v761
  %v773 = vsel %vm739, %v771, %v759
  %v774 = vsel %vm740, %v770, %v758
  %v775 = vsel %vm741, %v769, %v757
  %v776 = vsel %vm742, %v772, %v756
  %v777 = vsel %vm743, %v759, %v771
  %v778 = vsel %vm744, %v758, %v770
  %v779 = vsel %vm745, %v757, %v769
  %v780 = vsel %vm746, %v756, %v772
  %781 = vrot.lane.b32.xlu0 %v773, 1
  %v782 = vpop.permute.xlu0 %781
  %783 = vrot.lane.b32.xlu0 %v774, 1
  %v784 = vpop.permute.xlu0 %783
  %785 = vrot.lane.b32.xlu0 %v775, 1
  %v786 = vpop.permute.xlu0 %785
  %787 = vrot.lane.b32.xlu0 %v776, 1
  %v788 = vpop.permute.xlu0 %787
  %vm789 = vcmp.lt.s32.totalorder %v41, 1
  %v790 = vsel %vm789, %v786, %v788
  %v791 = vsel %vm789, %v784, %v786
  %v792 = vsel %vm789, %v782, %v784
  %v793 = vsel %vm789, %v788, %v782
  %794 = vrot.lane.b32.xlu0 %v773, 127
  %v795 = vpop.permute.xlu0 %794
  %796 = vrot.lane.b32.xlu0 %v774, 127
  %v797 = vpop.permute.xlu0 %796
  %798 = vrot.lane.b32.xlu0 %v775, 127
  %v799 = vpop.permute.xlu0 %798
  %800 = vrot.lane.b32.xlu0 %v776, 127
  %v801 = vpop.permute.xlu0 %800
  %vm802 = vcmp.lt.s32.totalorder %v41, 127
  %v803 = vsel %vm802, %v799, %v801
  %v804 = vsel %vm802, %v797, %v799
  %v805 = vsel %vm802, %v795, %v797
  %v806 = vsel %vm802, %v801, %v795
  %v807 = vsel %vm731, %v805, %v793
  %v808 = vsel %vm732, %v804, %v792
  %v809 = vsel %vm733, %v803, %v791
  %v810 = vsel %vm734, %v806, %v790
  %v811 = vsel %vm735, %v793, %v805
  %v812 = vsel %vm736, %v792, %v804
  %v813 = vsel %vm737, %v791, %v803
  %v814 = vsel %vm738, %v790, %v806
  %815 = vrot.lane.b32.xlu0 %v727, 1
  %v816 = vpop.permute.xlu0 %815
  %817 = vrot.lane.b32.xlu0 %v728, 1
  %v818 = vpop.permute.xlu0 %817
  %819 = vrot.lane.b32.xlu0 %v729, 1
  %v820 = vpop.permute.xlu0 %819
  %821 = vrot.lane.b32.xlu0 %v730, 1
  %v822 = vpop.permute.xlu0 %821
  %v823 = vsel %vm789, %v820, %v822
  %v824 = vsel %vm789, %v818, %v820
  %v825 = vsel %vm789, %v816, %v818
  %v826 = vsel %vm789, %v822, %v816
  %827 = vrot.lane.b32.xlu0 %v727, 127
  %v828 = vpop.permute.xlu0 %827
  %829 = vrot.lane.b32.xlu0 %v728, 127
  %v830 = vpop.permute.xlu0 %829
  %831 = vrot.lane.b32.xlu0 %v729, 127
  %v832 = vpop.permute.xlu0 %831
  %833 = vrot.lane.b32.xlu0 %v730, 127
  %v834 = vpop.permute.xlu0 %833
  %v835 = vsel %vm802, %v832, %v834
  %v836 = vsel %vm802, %v830, %v832
  %v837 = vsel %vm802, %v828, %v830
  %v838 = vsel %vm802, %v834, %v828
  %v839 = vsel %vm731, %v837, %v826
  %v840 = vsel %vm732, %v836, %v825
  %v841 = vsel %vm733, %v835, %v824
  %v842 = vsel %vm734, %v838, %v823
  %v843 = vsel %vm735, %v826, %v837
  %v844 = vsel %vm736, %v825, %v836
  %v845 = vsel %vm737, %v824, %v835
  %v846 = vsel %vm738, %v823, %v838
  %847 = vrot.lane.b32.xlu0 %v777, 1
  %v848 = vpop.permute.xlu0 %847
  %849 = vrot.lane.b32.xlu0 %v778, 1
  %v850 = vpop.permute.xlu0 %849
  %851 = vrot.lane.b32.xlu0 %v779, 1
  %v852 = vpop.permute.xlu0 %851
  %853 = vrot.lane.b32.xlu0 %v780, 1
  %v854 = vpop.permute.xlu0 %853
  %v855 = vsel %vm789, %v852, %v854
  %v856 = vsel %vm789, %v850, %v852
  %v857 = vsel %vm789, %v848, %v850
  %v858 = vsel %vm789, %v854, %v848
  %859 = vrot.lane.b32.xlu0 %v777, 127
  %v860 = vpop.permute.xlu0 %859
  %861 = vrot.lane.b32.xlu0 %v778, 127
  %v862 = vpop.permute.xlu0 %861
  %863 = vrot.lane.b32.xlu0 %v779, 127
  %v864 = vpop.permute.xlu0 %863
  %865 = vrot.lane.b32.xlu0 %v780, 127
  %v866 = vpop.permute.xlu0 %865
  %v867 = vsel %vm802, %v864, %v866
  %v868 = vsel %vm802, %v862, %v864
  %v869 = vsel %vm802, %v860, %v862
  %v870 = vsel %vm802, %v866, %v860
  %v871 = vsel %vm731, %v869, %v858
  %v872 = vsel %vm732, %v868, %v857
  %v873 = vsel %vm733, %v867, %v856
  %v874 = vsel %vm734, %v870, %v855
  %v875 = vsel %vm735, %v858, %v869
  %v876 = vsel %vm736, %v857, %v868
  %v877 = vsel %vm737, %v856, %v867
  %v878 = vsel %vm738, %v855, %v870
  %880 = vset.pattern.permute.xlu0 0
  %881 = vperm.xlu0 %880, %v526
  %v882 = vpop.permute.xlu0 %881
  %v884 = vmul.f32 %v807, %v882
  %v885 = vmul.f32 %v808, %v882
  %v886 = vmul.f32 %v809, %v882
  %v887 = vmul.f32 %v810, %v882
  %888 = vset.pattern.permute.xlu0 1
  %889 = vperm.xlu0 %888, %v526
  %v890 = vpop.permute.xlu0 %889
  %v892 = vmul.f32 %v773, %v890
  %v893 = vmul.f32 %v774, %v890
  %v894 = vmul.f32 %v775, %v890
  %v895 = vmul.f32 %v776, %v890
  %v896 = vadd.f32 %v884, %v892
  %v897 = vadd.f32 %v885, %v893
  %v898 = vadd.f32 %v886, %v894
  %v899 = vadd.f32 %v887, %v895
  %900 = vset.pattern.permute.xlu0 2
  %901 = vperm.xlu0 %900, %v526
  %v902 = vpop.permute.xlu0 %901
  %v904 = vmul.f32 %v811, %v902
  %v905 = vmul.f32 %v812, %v902
  %v906 = vmul.f32 %v813, %v902
  %v907 = vmul.f32 %v814, %v902
  %v908 = vadd.f32 %v896, %v904
  %v909 = vadd.f32 %v897, %v905
  %v910 = vadd.f32 %v898, %v906
  %v911 = vadd.f32 %v899, %v907
  %912 = vset.pattern.permute.xlu0 3
  %913 = vperm.xlu0 %912, %v526
  %v914 = vpop.permute.xlu0 %913
  %v916 = vmul.f32 %v839, %v914
  %v917 = vmul.f32 %v840, %v914
  %v918 = vmul.f32 %v841, %v914
  %v919 = vmul.f32 %v842, %v914
  %v920 = vadd.f32 %v908, %v916
  %v921 = vadd.f32 %v909, %v917
  %v922 = vadd.f32 %v910, %v918
  %v923 = vadd.f32 %v911, %v919
  %924 = vset.pattern.permute.xlu0 4
  %925 = vperm.xlu0 %924, %v526
  %v926 = vpop.permute.xlu0 %925
  %v928 = vmul.f32 %v727, %v926
  %v929 = vmul.f32 %v728, %v926
  %v930 = vmul.f32 %v729, %v926
  %v931 = vmul.f32 %v730, %v926
  %v932 = vadd.f32 %v920, %v928
  %v933 = vadd.f32 %v921, %v929
  %v934 = vadd.f32 %v922, %v930
  %v935 = vadd.f32 %v923, %v931
  %936 = vset.pattern.permute.xlu0 5
  %937 = vperm.xlu0 %936, %v526
  %v938 = vpop.permute.xlu0 %937
  %v940 = vmul.f32 %v843, %v938
  %v941 = vmul.f32 %v844, %v938
  %v942 = vmul.f32 %v845, %v938
  %v943 = vmul.f32 %v846, %v938
  %v944 = vadd.f32 %v932, %v940
  %v945 = vadd.f32 %v933, %v941
  %v946 = vadd.f32 %v934, %v942
  %v947 = vadd.f32 %v935, %v943
  %948 = vset.pattern.permute.xlu0 6
  %949 = vperm.xlu0 %948, %v526
  %v950 = vpop.permute.xlu0 %949
  %v952 = vmul.f32 %v871, %v950
  %v953 = vmul.f32 %v872, %v950
  %v954 = vmul.f32 %v873, %v950
  %v955 = vmul.f32 %v874, %v950
  %v956 = vadd.f32 %v944, %v952
  %v957 = vadd.f32 %v945, %v953
  %v958 = vadd.f32 %v946, %v954
  %v959 = vadd.f32 %v947, %v955
  %960 = vset.pattern.permute.xlu0 7
  %961 = vperm.xlu0 %960, %v526
  %v962 = vpop.permute.xlu0 %961
  %v964 = vmul.f32 %v777, %v962
  %v965 = vmul.f32 %v778, %v962
  %v966 = vmul.f32 %v779, %v962
  %v967 = vmul.f32 %v780, %v962
  %v968 = vadd.f32 %v956, %v964
  %v969 = vadd.f32 %v957, %v965
  %v970 = vadd.f32 %v958, %v966
  %v971 = vadd.f32 %v959, %v967
  %972 = vset.pattern.permute.xlu0 8
  %973 = vperm.xlu0 %972, %v526
  %v974 = vpop.permute.xlu0 %973
  %v976 = vmul.f32 %v875, %v974
  %v977 = vmul.f32 %v876, %v974
  %v978 = vmul.f32 %v877, %v974
  %v979 = vmul.f32 %v878, %v974
  %v980 = vadd.f32 %v968, %v976
  %v981 = vadd.f32 %v969, %v977
  %v982 = vadd.f32 %v970, %v978
  %v983 = vadd.f32 %v971, %v979
  %984 = vset.pattern.permute.xlu0 9
  %985 = vperm.xlu0 %984, %v526
  %v986 = vpop.permute.xlu0 %985
  %v988 = vmul.f32 %v807, %v986
  %v989 = vmul.f32 %v808, %v986
  %v990 = vmul.f32 %v809, %v986
  %v991 = vmul.f32 %v810, %v986
  %992 = vset.pattern.permute.xlu0 10
  %993 = vperm.xlu0 %992, %v526
  %v994 = vpop.permute.xlu0 %993
  %v996 = vmul.f32 %v773, %v994
  %v997 = vmul.f32 %v774, %v994
  %v998 = vmul.f32 %v775, %v994
  %v999 = vmul.f32 %v776, %v994
  %v1000 = vadd.f32 %v988, %v996
  %v1001 = vadd.f32 %v989, %v997
  %v1002 = vadd.f32 %v990, %v998
  %v1003 = vadd.f32 %v991, %v999
  %1004 = vset.pattern.permute.xlu0 11
  %1005 = vperm.xlu0 %1004, %v526
  %v1006 = vpop.permute.xlu0 %1005
  %v1008 = vmul.f32 %v811, %v1006
  %v1009 = vmul.f32 %v812, %v1006
  %v1010 = vmul.f32 %v813, %v1006
  %v1011 = vmul.f32 %v814, %v1006
  %v1012 = vadd.f32 %v1000, %v1008
  %v1013 = vadd.f32 %v1001, %v1009
  %v1014 = vadd.f32 %v1002, %v1010
  %v1015 = vadd.f32 %v1003, %v1011
  %1016 = vset.pattern.permute.xlu0 12
  %1017 = vperm.xlu0 %1016, %v526
  %v1018 = vpop.permute.xlu0 %1017
  %v1020 = vmul.f32 %v839, %v1018
  %v1021 = vmul.f32 %v840, %v1018
  %v1022 = vmul.f32 %v841, %v1018
  %v1023 = vmul.f32 %v842, %v1018
  %v1024 = vadd.f32 %v1012, %v1020
  %v1025 = vadd.f32 %v1013, %v1021
  %v1026 = vadd.f32 %v1014, %v1022
  %v1027 = vadd.f32 %v1015, %v1023
  %1028 = vset.pattern.permute.xlu0 13
  %1029 = vperm.xlu0 %1028, %v526
  %v1030 = vpop.permute.xlu0 %1029
  %v1032 = vmul.f32 %v727, %v1030
  %v1033 = vmul.f32 %v728, %v1030
  %v1034 = vmul.f32 %v729, %v1030
  %v1035 = vmul.f32 %v730, %v1030
  %v1036 = vadd.f32 %v1024, %v1032
  %v1037 = vadd.f32 %v1025, %v1033
  %v1038 = vadd.f32 %v1026, %v1034
  %v1039 = vadd.f32 %v1027, %v1035
  %1040 = vset.pattern.permute.xlu0 14
  %1041 = vperm.xlu0 %1040, %v526
  %v1042 = vpop.permute.xlu0 %1041
  %v1044 = vmul.f32 %v843, %v1042
  %v1045 = vmul.f32 %v844, %v1042
  %v1046 = vmul.f32 %v845, %v1042
  %v1047 = vmul.f32 %v846, %v1042
  %v1048 = vadd.f32 %v1036, %v1044
  %v1049 = vadd.f32 %v1037, %v1045
  %v1050 = vadd.f32 %v1038, %v1046
  %v1051 = vadd.f32 %v1039, %v1047
  %1052 = vset.pattern.permute.xlu0 15
  %1053 = vperm.xlu0 %1052, %v526
  %v1054 = vpop.permute.xlu0 %1053
  %v1056 = vmul.f32 %v871, %v1054
  %v1057 = vmul.f32 %v872, %v1054
  %v1058 = vmul.f32 %v873, %v1054
  %v1059 = vmul.f32 %v874, %v1054
  %v1060 = vadd.f32 %v1048, %v1056
  %v1061 = vadd.f32 %v1049, %v1057
  %v1062 = vadd.f32 %v1050, %v1058
  %v1063 = vadd.f32 %v1051, %v1059
  %1064 = vset.pattern.permute.xlu0 16
  %1065 = vperm.xlu0 %1064, %v526
  %v1066 = vpop.permute.xlu0 %1065
  %v1068 = vmul.f32 %v777, %v1066
  %v1069 = vmul.f32 %v778, %v1066
  %v1070 = vmul.f32 %v779, %v1066
  %v1071 = vmul.f32 %v780, %v1066
  %v1072 = vadd.f32 %v1060, %v1068
  %v1073 = vadd.f32 %v1061, %v1069
  %v1074 = vadd.f32 %v1062, %v1070
  %v1075 = vadd.f32 %v1063, %v1071
  %1076 = vset.pattern.permute.xlu0 17
  %1077 = vperm.xlu0 %1076, %v526
  %v1078 = vpop.permute.xlu0 %1077
  %v1080 = vmul.f32 %v875, %v1078
  %v1081 = vmul.f32 %v876, %v1078
  %v1082 = vmul.f32 %v877, %v1078
  %v1083 = vmul.f32 %v878, %v1078
  %v1084 = vadd.f32 %v1072, %v1080
  %v1085 = vadd.f32 %v1073, %v1081
  %v1086 = vadd.f32 %v1074, %v1082
  %v1087 = vadd.f32 %v1075, %v1083
  %1089 = vrot.lane.b32.xlu0 %v527, 124
  %v1090 = vpop.permute.xlu0 %1089
  %v1091 = vsel %vm261, %v1090, 0
  %v1094 = vsel %vm266, %v1084, 0
  %v1097 = vsel %vm266, %v1085, 0
  %v1100 = vsel %vm266, %v1086, 0
  %v1103 = vsel %vm266, %v1087, 0
  %1105 = vmatprep.subr.mxu0 %v1097
  %1106 = vmatpush1.msra.mxu0 %v1094
  %1107 = vmatprep.subr.mxu0 0.0
  %1108 = vmatpush1.msra.mxu0 0.0
  %1109 = vmatprep.subr.mxu0 0.0
  %1110 = vmatpush1.msra.mxu0 0.0
  %1111 = vmatprep.subr.mxu0 0.0
  %1112 = vmatpush1.msra.mxu0 0.0
  %1113 = vmatprep.subr.mxu0 0.0
  %1114 = vmatpush1.msra.mxu0 0.0
  %1115 = vmatprep.subr.mxu0 0.0
  %1116 = vmatpush1.msra.mxu0 0.0
  %1117 = vmatprep.subr.mxu0 0.0
  %1118 = vmatpush1.msra.mxu0 0.0
  %1119 = vmatprep.subr.mxu0 0.0
  %1120 = vmatpush1.msra.mxu0 0.0
  %1121 = vmatprep.subr.mxu0 0.0
  %1122 = vmatpush1.msra.mxu0 0.0
  %1123 = vmatprep.subr.mxu0 0.0
  %1124 = vmatpush1.msra.mxu0 0.0
  %1125 = vmatprep.subr.mxu0 0.0
  %1126 = vmatpush1.msra.mxu0 0.0
  %1127 = vmatprep.subr.mxu0 0.0
  %1128 = vmatpush1.msra.mxu0 0.0
  %1129 = vmatprep.subr.mxu0 0.0
  %1130 = vmatpush1.msra.mxu0 0.0
  %1131 = vmatprep.subr.mxu0 0.0
  %1132 = vmatpush1.msra.mxu0 0.0
  %1133 = vmatprep.subr.mxu0 0.0
  %1134 = vmatpush1.msra.mxu0 0.0
  %1135 = vmatprep.subr.mxu0 0.0
  %1136 = vmatpush1.msra.mxu0 0.0
  %1137 = vmatprep.subr.mxu0 0.0
  %1138 = vmatpush1.msra.mxu0 0.0
  %1139 = vmatprep.subr.mxu0 0.0
  %1140 = vmatpush1.msra.mxu0 0.0
  %1141 = vmatprep.subr.mxu0 0.0
  %1142 = vmatpush1.msra.mxu0 0.0
  %1143 = vmatprep.subr.mxu0 0.0
  %1144 = vmatpush1.msra.mxu0 0.0
  %1145 = vmatprep.subr.mxu0 0.0
  %1146 = vmatpush1.msra.mxu0 0.0
  %1147 = vmatprep.subr.mxu0 0.0
  %1148 = vmatpush1.msra.mxu0 0.0
  %1149 = vmatprep.subr.mxu0 0.0
  %1150 = vmatpush1.msra.mxu0 0.0
  %1151 = vmatprep.subr.mxu0 0.0
  %1152 = vmatpush1.msra.mxu0 0.0
  %1153 = vmatprep.subr.mxu0 0.0
  %1154 = vmatpush1.msra.mxu0 0.0
  %1155 = vmatprep.subr.mxu0 0.0
  %1156 = vmatpush1.msra.mxu0 0.0
  %1157 = vmatprep.subr.mxu0 0.0
  %1158 = vmatpush1.msra.mxu0 0.0
  %1159 = vmatprep.subr.mxu0 0.0
  %1160 = vmatpush1.msra.mxu0 0.0
  %1161 = vmatprep.subr.mxu0 0.0
  %1162 = vmatpush1.msra.mxu0 0.0
  %1163 = vmatprep.subr.mxu0 0.0
  %1164 = vmatpush1.msra.mxu0 0.0
  %1165 = vmatprep.subr.mxu0 0.0
  %1166 = vmatpush1.msra.mxu0 0.0
  %1167 = vmatprep.subr.mxu0 0.0
  %1168 = vmatpush1.msra.mxu0 0.0
  %1169 = vmatprep.mubr.f32.mxu0 0.0
  %1170 = vmatmul.mubr.f32.gmra.mrb[0].mxu0 %v1091
  %v1171 = vpop.f32.mrb[0].mxu0
  %v1172 = vadd.f32 0.0, %v1171
  %v1173 = vpop.f32.mrb[0].mxu0
  %v1174 = vadd.f32 0.0, %v1173
  %1175 = vdwg.mxu0
  %1176 = vmatprep.subr.mxu0 %v1103
  %1177 = vmatpush1.msra.mxu0 %v1100
  %1178 = vmatprep.subr.mxu0 0.0
  %1179 = vmatpush1.msra.mxu0 0.0
  %1180 = vmatprep.subr.mxu0 0.0
  %1181 = vmatpush1.msra.mxu0 0.0
  %1182 = vmatprep.subr.mxu0 0.0
  %1183 = vmatpush1.msra.mxu0 0.0
  %1184 = vmatprep.subr.mxu0 0.0
  %1185 = vmatpush1.msra.mxu0 0.0
  %1186 = vmatprep.subr.mxu0 0.0
  %1187 = vmatpush1.msra.mxu0 0.0
  %1188 = vmatprep.subr.mxu0 0.0
  %1189 = vmatpush1.msra.mxu0 0.0
  %1190 = vmatprep.subr.mxu0 0.0
  %1191 = vmatpush1.msra.mxu0 0.0
  %1192 = vmatprep.subr.mxu0 0.0
  %1193 = vmatpush1.msra.mxu0 0.0
  %1194 = vmatprep.subr.mxu0 0.0
  %1195 = vmatpush1.msra.mxu0 0.0
  %1196 = vmatprep.subr.mxu0 0.0
  %1197 = vmatpush1.msra.mxu0 0.0
  %1198 = vmatprep.subr.mxu0 0.0
  %1199 = vmatpush1.msra.mxu0 0.0
  %1200 = vmatprep.subr.mxu0 0.0
  %1201 = vmatpush1.msra.mxu0 0.0
  %1202 = vmatprep.subr.mxu0 0.0
  %1203 = vmatpush1.msra.mxu0 0.0
  %1204 = vmatprep.subr.mxu0 0.0
  %1205 = vmatpush1.msra.mxu0 0.0
  %1206 = vmatprep.subr.mxu0 0.0
  %1207 = vmatpush1.msra.mxu0 0.0
  %1208 = vmatprep.subr.mxu0 0.0
  %1209 = vmatpush1.msra.mxu0 0.0
  %1210 = vmatprep.subr.mxu0 0.0
  %1211 = vmatpush1.msra.mxu0 0.0
  %1212 = vmatprep.subr.mxu0 0.0
  %1213 = vmatpush1.msra.mxu0 0.0
  %1214 = vmatprep.subr.mxu0 0.0
  %1215 = vmatpush1.msra.mxu0 0.0
  %1216 = vmatprep.subr.mxu0 0.0
  %1217 = vmatpush1.msra.mxu0 0.0
  %1218 = vmatprep.subr.mxu0 0.0
  %1219 = vmatpush1.msra.mxu0 0.0
  %1220 = vmatprep.subr.mxu0 0.0
  %1221 = vmatpush1.msra.mxu0 0.0
  %1222 = vmatprep.subr.mxu0 0.0
  %1223 = vmatpush1.msra.mxu0 0.0
  %1224 = vmatprep.subr.mxu0 0.0
  %1225 = vmatpush1.msra.mxu0 0.0
  %1226 = vmatprep.subr.mxu0 0.0
  %1227 = vmatpush1.msra.mxu0 0.0
  %1228 = vmatprep.subr.mxu0 0.0
  %1229 = vmatpush1.msra.mxu0 0.0
  %1230 = vmatprep.subr.mxu0 0.0
  %1231 = vmatpush1.msra.mxu0 0.0
  %1232 = vmatprep.subr.mxu0 0.0
  %1233 = vmatpush1.msra.mxu0 0.0
  %1234 = vmatprep.subr.mxu0 0.0
  %1235 = vmatpush1.msra.mxu0 0.0
  %1236 = vmatprep.subr.mxu0 0.0
  %1237 = vmatpush1.msra.mxu0 0.0
  %1238 = vmatprep.subr.mxu0 0.0
  %1239 = vmatpush1.msra.mxu0 0.0
  %1240 = vmatprep.mubr.f32.mxu0 0.0
  %1241 = vmatmul.mubr.f32.gmra.mrb[0].mxu0 %v1091
  %v1242 = vpop.f32.mrb[0].mxu0
  %v1243 = vadd.f32 0.0, %v1242
  %v1244 = vpop.f32.mrb[0].mxu0
  %v1245 = vadd.f32 0.0, %v1244
  %1246 = vdwg.mxu0
  %v1247 = vsel %vm261, %v527, 0
  %v1250 = vsel %vm266, %v980, 0
  %v1253 = vsel %vm266, %v981, 0
  %v1256 = vsel %vm266, %v982, 0
  %v1259 = vsel %vm266, %v983, 0
  %1261 = vmatprep.subr.mxu0 %v1253
  %1262 = vmatpush1.msra.mxu0 %v1250
  %1263 = vmatprep.subr.mxu0 0.0
  %1264 = vmatpush1.msra.mxu0 0.0
  %1265 = vmatprep.subr.mxu0 0.0
  %1266 = vmatpush1.msra.mxu0 0.0
  %1267 = vmatprep.subr.mxu0 0.0
  %1268 = vmatpush1.msra.mxu0 0.0
  %1269 = vmatprep.subr.mxu0 0.0
  %1270 = vmatpush1.msra.mxu0 0.0
  %1271 = vmatprep.subr.mxu0 0.0
  %1272 = vmatpush1.msra.mxu0 0.0
  %1273 = vmatprep.subr.mxu0 0.0
  %1274 = vmatpush1.msra.mxu0 0.0
  %1275 = vmatprep.subr.mxu0 0.0
  %1276 = vmatpush1.msra.mxu0 0.0
  %1277 = vmatprep.subr.mxu0 0.0
  %1278 = vmatpush1.msra.mxu0 0.0
  %1279 = vmatprep.subr.mxu0 0.0
  %1280 = vmatpush1.msra.mxu0 0.0
  %1281 = vmatprep.subr.mxu0 0.0
  %1282 = vmatpush1.msra.mxu0 0.0
  %1283 = vmatprep.subr.mxu0 0.0
  %1284 = vmatpush1.msra.mxu0 0.0
  %1285 = vmatprep.subr.mxu0 0.0
  %1286 = vmatpush1.msra.mxu0 0.0
  %1287 = vmatprep.subr.mxu0 0.0
  %1288 = vmatpush1.msra.mxu0 0.0
  %1289 = vmatprep.subr.mxu0 0.0
  %1290 = vmatpush1.msra.mxu0 0.0
  %1291 = vmatprep.subr.mxu0 0.0
  %1292 = vmatpush1.msra.mxu0 0.0
  %1293 = vmatprep.subr.mxu0 0.0
  %1294 = vmatpush1.msra.mxu0 0.0
  %1295 = vmatprep.subr.mxu0 0.0
  %1296 = vmatpush1.msra.mxu0 0.0
  %1297 = vmatprep.subr.mxu0 0.0
  %1298 = vmatpush1.msra.mxu0 0.0
  %1299 = vmatprep.subr.mxu0 0.0
  %1300 = vmatpush1.msra.mxu0 0.0
  %1301 = vmatprep.subr.mxu0 0.0
  %1302 = vmatpush1.msra.mxu0 0.0
  %1303 = vmatprep.subr.mxu0 0.0
  %1304 = vmatpush1.msra.mxu0 0.0
  %1305 = vmatprep.subr.mxu0 0.0
  %1306 = vmatpush1.msra.mxu0 0.0
  %1307 = vmatprep.subr.mxu0 0.0
  %1308 = vmatpush1.msra.mxu0 0.0
  %1309 = vmatprep.subr.mxu0 0.0
  %1310 = vmatpush1.msra.mxu0 0.0
  %1311 = vmatprep.subr.mxu0 0.0
  %1312 = vmatpush1.msra.mxu0 0.0
  %1313 = vmatprep.subr.mxu0 0.0
  %1314 = vmatpush1.msra.mxu0 0.0
  %1315 = vmatprep.subr.mxu0 0.0
  %1316 = vmatpush1.msra.mxu0 0.0
  %1317 = vmatprep.subr.mxu0 0.0
  %1318 = vmatpush1.msra.mxu0 0.0
  %1319 = vmatprep.subr.mxu0 0.0
  %1320 = vmatpush1.msra.mxu0 0.0
  %1321 = vmatprep.subr.mxu0 0.0
  %1322 = vmatpush1.msra.mxu0 0.0
  %1323 = vmatprep.subr.mxu0 0.0
  %1324 = vmatpush1.msra.mxu0 0.0
  %1325 = vmatprep.mubr.f32.mxu0 0.0
  %1326 = vmatmul.mubr.f32.gmra.mrb[0].mxu0 %v1247
  %v1327 = vpop.f32.mrb[0].mxu0
  %v1328 = vadd.f32 %v1172, %v1327
  %v1329 = vpop.f32.mrb[0].mxu0
  %v1330 = vadd.f32 %v1174, %v1329
  %1331 = vdwg.mxu0
  %1332 = vmatprep.subr.mxu0 %v1259
  %1333 = vmatpush1.msra.mxu0 %v1256
  %1334 = vmatprep.subr.mxu0 0.0
  %1335 = vmatpush1.msra.mxu0 0.0
  %1336 = vmatprep.subr.mxu0 0.0
  %1337 = vmatpush1.msra.mxu0 0.0
  %1338 = vmatprep.subr.mxu0 0.0
  %1339 = vmatpush1.msra.mxu0 0.0
  %1340 = vmatprep.subr.mxu0 0.0
  %1341 = vmatpush1.msra.mxu0 0.0
  %1342 = vmatprep.subr.mxu0 0.0
  %1343 = vmatpush1.msra.mxu0 0.0
  %1344 = vmatprep.subr.mxu0 0.0
  %1345 = vmatpush1.msra.mxu0 0.0
  %1346 = vmatprep.subr.mxu0 0.0
  %1347 = vmatpush1.msra.mxu0 0.0
  %1348 = vmatprep.subr.mxu0 0.0
  %1349 = vmatpush1.msra.mxu0 0.0
  %1350 = vmatprep.subr.mxu0 0.0
  %1351 = vmatpush1.msra.mxu0 0.0
  %1352 = vmatprep.subr.mxu0 0.0
  %1353 = vmatpush1.msra.mxu0 0.0
  %1354 = vmatprep.subr.mxu0 0.0
  %1355 = vmatpush1.msra.mxu0 0.0
  %1356 = vmatprep.subr.mxu0 0.0
  %1357 = vmatpush1.msra.mxu0 0.0
  %1358 = vmatprep.subr.mxu0 0.0
  %1359 = vmatpush1.msra.mxu0 0.0
  %1360 = vmatprep.subr.mxu0 0.0
  %1361 = vmatpush1.msra.mxu0 0.0
  %1362 = vmatprep.subr.mxu0 0.0
  %1363 = vmatpush1.msra.mxu0 0.0
  %1364 = vmatprep.subr.mxu0 0.0
  %1365 = vmatpush1.msra.mxu0 0.0
  %1366 = vmatprep.subr.mxu0 0.0
  %1367 = vmatpush1.msra.mxu0 0.0
  %1368 = vmatprep.subr.mxu0 0.0
  %1369 = vmatpush1.msra.mxu0 0.0
  %1370 = vmatprep.subr.mxu0 0.0
  %1371 = vmatpush1.msra.mxu0 0.0
  %1372 = vmatprep.subr.mxu0 0.0
  %1373 = vmatpush1.msra.mxu0 0.0
  %1374 = vmatprep.subr.mxu0 0.0
  %1375 = vmatpush1.msra.mxu0 0.0
  %1376 = vmatprep.subr.mxu0 0.0
  %1377 = vmatpush1.msra.mxu0 0.0
  %1378 = vmatprep.subr.mxu0 0.0
  %1379 = vmatpush1.msra.mxu0 0.0
  %1380 = vmatprep.subr.mxu0 0.0
  %1381 = vmatpush1.msra.mxu0 0.0
  %1382 = vmatprep.subr.mxu0 0.0
  %1383 = vmatpush1.msra.mxu0 0.0
  %1384 = vmatprep.subr.mxu0 0.0
  %1385 = vmatpush1.msra.mxu0 0.0
  %1386 = vmatprep.subr.mxu0 0.0
  %1387 = vmatpush1.msra.mxu0 0.0
  %1388 = vmatprep.subr.mxu0 0.0
  %1389 = vmatpush1.msra.mxu0 0.0
  %1390 = vmatprep.subr.mxu0 0.0
  %1391 = vmatpush1.msra.mxu0 0.0
  %1392 = vmatprep.subr.mxu0 0.0
  %1393 = vmatpush1.msra.mxu0 0.0
  %1394 = vmatprep.subr.mxu0 0.0
  %1395 = vmatpush1.msra.mxu0 0.0
  %1396 = vmatprep.mubr.f32.mxu0 0.0
  %1397 = vmatmul.mubr.f32.gmra.mrb[0].mxu0 %v1247
  %v1398 = vpop.f32.mrb[0].mxu0
  %v1399 = vadd.f32 %v1243, %v1398
  %v1400 = vpop.f32.mrb[0].mxu0
  %v1401 = vadd.f32 %v1245, %v1400
  %1402 = vdwg.mxu0
  %v1404 = vsel %vm261, %v528, 0
  %v1407 = vsel %vm266, %v727, 0
  %v1410 = vsel %vm266, %v728, 0
  %v1413 = vsel %vm266, %v729, 0
  %v1416 = vsel %vm266, %v730, 0
  %1418 = vmatprep.subr.mxu0 %v1410
  %1419 = vmatpush1.msra.mxu0 %v1407
  %1420 = vmatprep.subr.mxu0 0.0
  %1421 = vmatpush1.msra.mxu0 0.0
  %1422 = vmatprep.subr.mxu0 0.0
  %1423 = vmatpush1.msra.mxu0 0.0
  %1424 = vmatprep.subr.mxu0 0.0
  %1425 = vmatpush1.msra.mxu0 0.0
  %1426 = vmatprep.subr.mxu0 0.0
  %1427 = vmatpush1.msra.mxu0 0.0
  %1428 = vmatprep.subr.mxu0 0.0
  %1429 = vmatpush1.msra.mxu0 0.0
  %1430 = vmatprep.subr.mxu0 0.0
  %1431 = vmatpush1.msra.mxu0 0.0
  %1432 = vmatprep.subr.mxu0 0.0
  %1433 = vmatpush1.msra.mxu0 0.0
  %1434 = vmatprep.subr.mxu0 0.0
  %1435 = vmatpush1.msra.mxu0 0.0
  %1436 = vmatprep.subr.mxu0 0.0
  %1437 = vmatpush1.msra.mxu0 0.0
  %1438 = vmatprep.subr.mxu0 0.0
  %1439 = vmatpush1.msra.mxu0 0.0
  %1440 = vmatprep.subr.mxu0 0.0
  %1441 = vmatpush1.msra.mxu0 0.0
  %1442 = vmatprep.subr.mxu0 0.0
  %1443 = vmatpush1.msra.mxu0 0.0
  %1444 = vmatprep.subr.mxu0 0.0
  %1445 = vmatpush1.msra.mxu0 0.0
  %1446 = vmatprep.subr.mxu0 0.0
  %1447 = vmatpush1.msra.mxu0 0.0
  %1448 = vmatprep.subr.mxu0 0.0
  %1449 = vmatpush1.msra.mxu0 0.0
  %1450 = vmatprep.subr.mxu0 0.0
  %1451 = vmatpush1.msra.mxu0 0.0
  %1452 = vmatprep.subr.mxu0 0.0
  %1453 = vmatpush1.msra.mxu0 0.0
  %1454 = vmatprep.subr.mxu0 0.0
  %1455 = vmatpush1.msra.mxu0 0.0
  %1456 = vmatprep.subr.mxu0 0.0
  %1457 = vmatpush1.msra.mxu0 0.0
  %1458 = vmatprep.subr.mxu0 0.0
  %1459 = vmatpush1.msra.mxu0 0.0
  %1460 = vmatprep.subr.mxu0 0.0
  %1461 = vmatpush1.msra.mxu0 0.0
  %1462 = vmatprep.subr.mxu0 0.0
  %1463 = vmatpush1.msra.mxu0 0.0
  %1464 = vmatprep.subr.mxu0 0.0
  %1465 = vmatpush1.msra.mxu0 0.0
  %1466 = vmatprep.subr.mxu0 0.0
  %1467 = vmatpush1.msra.mxu0 0.0
  %1468 = vmatprep.subr.mxu0 0.0
  %1469 = vmatpush1.msra.mxu0 0.0
  %1470 = vmatprep.subr.mxu0 0.0
  %1471 = vmatpush1.msra.mxu0 0.0
  %1472 = vmatprep.subr.mxu0 0.0
  %1473 = vmatpush1.msra.mxu0 0.0
  %1474 = vmatprep.subr.mxu0 0.0
  %1475 = vmatpush1.msra.mxu0 0.0
  %1476 = vmatprep.subr.mxu0 0.0
  %1477 = vmatpush1.msra.mxu0 0.0
  %1478 = vmatprep.subr.mxu0 0.0
  %1479 = vmatpush1.msra.mxu0 0.0
  %1480 = vmatprep.subr.mxu0 0.0
  %1481 = vmatpush1.msra.mxu0 0.0
  %1482 = vmatprep.mubr.f32.mxu0 0.0
  %1483 = vmatmul.mubr.f32.gmra.mrb[0].mxu0 %v1404
  %v1484 = vpop.f32.mrb[0].mxu0
  %v1485 = vadd.f32 0.0, %v1484
  %v1486 = vpop.f32.mrb[0].mxu0
  %v1487 = vadd.f32 0.0, %v1486
  %1488 = vdwg.mxu0
  %1489 = vmatprep.subr.mxu0 %v1416
  %1490 = vmatpush1.msra.mxu0 %v1413
  %1491 = vmatprep.subr.mxu0 0.0
  %1492 = vmatpush1.msra.mxu0 0.0
  %1493 = vmatprep.subr.mxu0 0.0
  %1494 = vmatpush1.msra.mxu0 0.0
  %1495 = vmatprep.subr.mxu0 0.0
  %1496 = vmatpush1.msra.mxu0 0.0
  %1497 = vmatprep.subr.mxu0 0.0
  %1498 = vmatpush1.msra.mxu0 0.0
  %1499 = vmatprep.subr.mxu0 0.0
  %1500 = vmatpush1.msra.mxu0 0.0
  %1501 = vmatprep.subr.mxu0 0.0
  %1502 = vmatpush1.msra.mxu0 0.0
  %1503 = vmatprep.subr.mxu0 0.0
  %1504 = vmatpush1.msra.mxu0 0.0
  %1505 = vmatprep.subr.mxu0 0.0
  %1506 = vmatpush1.msra.mxu0 0.0
  %1507 = vmatprep.subr.mxu0 0.0
  %1508 = vmatpush1.msra.mxu0 0.0
  %1509 = vmatprep.subr.mxu0 0.0
  %1510 = vmatpush1.msra.mxu0 0.0
  %1511 = vmatprep.subr.mxu0 0.0
  %1512 = vmatpush1.msra.mxu0 0.0
  %1513 = vmatprep.subr.mxu0 0.0
  %1514 = vmatpush1.msra.mxu0 0.0
  %1515 = vmatprep.subr.mxu0 0.0
  %1516 = vmatpush1.msra.mxu0 0.0
  %1517 = vmatprep.subr.mxu0 0.0
  %1518 = vmatpush1.msra.mxu0 0.0
  %1519 = vmatprep.subr.mxu0 0.0
  %1520 = vmatpush1.msra.mxu0 0.0
  %1521 = vmatprep.subr.mxu0 0.0
  %1522 = vmatpush1.msra.mxu0 0.0
  %1523 = vmatprep.subr.mxu0 0.0
  %1524 = vmatpush1.msra.mxu0 0.0
  %1525 = vmatprep.subr.mxu0 0.0
  %1526 = vmatpush1.msra.mxu0 0.0
  %1527 = vmatprep.subr.mxu0 0.0
  %1528 = vmatpush1.msra.mxu0 0.0
  %1529 = vmatprep.subr.mxu0 0.0
  %1530 = vmatpush1.msra.mxu0 0.0
  %1531 = vmatprep.subr.mxu0 0.0
  %1532 = vmatpush1.msra.mxu0 0.0
  %1533 = vmatprep.subr.mxu0 0.0
  %1534 = vmatpush1.msra.mxu0 0.0
  %1535 = vmatprep.subr.mxu0 0.0
  %1536 = vmatpush1.msra.mxu0 0.0
  %1537 = vmatprep.subr.mxu0 0.0
  %1538 = vmatpush1.msra.mxu0 0.0
  %1539 = vmatprep.subr.mxu0 0.0
  %1540 = vmatpush1.msra.mxu0 0.0
  %1541 = vmatprep.subr.mxu0 0.0
  %1542 = vmatpush1.msra.mxu0 0.0
  %1543 = vmatprep.subr.mxu0 0.0
  %1544 = vmatpush1.msra.mxu0 0.0
  %1545 = vmatprep.subr.mxu0 0.0
  %1546 = vmatpush1.msra.mxu0 0.0
  %1547 = vmatprep.subr.mxu0 0.0
  %1548 = vmatpush1.msra.mxu0 0.0
  %1549 = vmatprep.subr.mxu0 0.0
  %1550 = vmatpush1.msra.mxu0 0.0
  %1551 = vmatprep.subr.mxu0 0.0
  %1552 = vmatpush1.msra.mxu0 0.0
  %1553 = vmatprep.mubr.f32.mxu0 0.0
  %1554 = vmatmul.mubr.f32.gmra.mrb[0].mxu0 %v1404
  %v1555 = vpop.f32.mrb[0].mxu0
  %v1556 = vadd.f32 0.0, %v1555
  %v1557 = vpop.f32.mrb[0].mxu0
  %v1558 = vadd.f32 0.0, %v1557
  %1559 = vdwg.mxu0
  %v1560 = vsel %vm94, %v1485, 0.0
  %v1561 = vsel %vm94, %v1487, 0.0
  %v1562 = vadd.f32 %v1560, %v1561
  %v1563 = vsel %vm94, %v1556, 0.0
  %v1564 = vadd.f32 %v1562, %v1563
  %v1565 = vsel %vm94, %v1558, 0.0
  %v1566 = vadd.f32 %v1564, %v1565
  %1567 = vadd.xlane.f32.xlu0 %v1566
  %v1568 = vpop.xlane.xlu0 %1567
  %v1569 = vmul.f32 %v1568, %v439
  %v1570 = vsub.f32 %v1485, %v1569
  %v1571 = vsub.f32 %v1487, %v1569
  %v1572 = vsub.f32 %v1556, %v1569
  %v1573 = vsub.f32 %v1558, %v1569
  %v1574 = vmul.f32 %v1570, %v1570
  %v1575 = vmul.f32 %v1571, %v1571
  %v1576 = vmul.f32 %v1572, %v1572
  %v1577 = vmul.f32 %v1573, %v1573
  %v1578 = vsel %vm94, %v1574, 0.0
  %v1579 = vsel %vm94, %v1575, 0.0
  %v1580 = vadd.f32 %v1578, %v1579
  %v1581 = vsel %vm94, %v1576, 0.0
  %v1582 = vadd.f32 %v1580, %v1581
  %v1583 = vsel %vm94, %v1577, 0.0
  %v1584 = vadd.f32 %v1582, %v1583
  %1585 = vadd.xlane.f32.xlu0 %v1584
  %v1586 = vpop.xlane.xlu0 %1585
  %v1587 = vmul.f32 %v1586, %v439
  %v1588 = vadd.f32 %v1587, 1e-05
  %v1589 = vrsqrt.pop %v1588
  %v1590 = vmul.f32 %v1570, %v1589
  %v1591 = vmul.f32 %v1571, %v1589
  %v1592 = vmul.f32 %v1572, %v1589
  %v1593 = vmul.f32 %v1573, %v1589
  %1595 = vset.pattern.permute.xlu0 0
  %1596 = vperm.xlu0 %1595, %v529
  %v1597 = vpop.permute.xlu0 %1596
  %v1599 = vlaneseq
  %v1600 = vshrl.u32 %v1599, 7
  %v1601 = vsub.s32 0, %v1600
  %v1602 = vrot.slane %v1597, %v1601
  %v1603 = vmul.f32 %v1590, %v1602
  %v1604 = vmul.f32 %v1591, %v1602
  %v1605 = vmul.f32 %v1592, %v1602
  %v1606 = vmul.f32 %v1593, %v1602
  %1607 = vset.pattern.permute.xlu0 1
  %1608 = vperm.xlu0 %1607, %v529
  %v1609 = vpop.permute.xlu0 %1608
  %v1611 = vlaneseq
  %v1612 = vshrl.u32 %v1611, 7
  %v1613 = vsub.s32 0, %v1612
  %v1614 = vrot.slane %v1609, %v1613
  %v1615 = vadd.f32 %v1603, %v1614
  %v1616 = vadd.f32 %v1604, %v1614
  %v1617 = vadd.f32 %v1605, %v1614
  %v1618 = vadd.f32 %v1606, %v1614
  %v1619 = vmax.f32 %v1615, 0.0
  %v1620 = vmax.f32 %v1616, 0.0
  %v1621 = vmax.f32 %v1617, 0.0
  %v1622 = vmax.f32 %v1618, 0.0
  %v1627 = vcombine.low %v1328, %v1330
  %v1628 = vcombine.low %v1399, %v1401
  %1631 = vst [vmem:[%s11] sm:$0xff] %v1627
  %1632 = vst [vmem:[%s11 + $0x8] sm:$0xff] %v1628
  %v1637 = vcombine.low %v1619, %v1620
  %v1638 = vcombine.low %v1621, %v1622
  %v1640 = vunpack.c.l.s4 1966171168
  %v1641 = vunpack.c.0.s8 %v1640
  %v1642 = vlaneseq
  %v1643 = vshrl.u32 %v1642, 7
  %v1644 = vsub.s32 %v1641, %v1643
  %v1645 = vrot.slane %v1637, %v1644
  %v1647 = vunpack.c.l.s4 1966171168
  %v1648 = vunpack.c.0.s8 %v1647
  %v1649 = vlaneseq
  %v1650 = vshrl.u32 %v1649, 7
  %v1651 = vsub.s32 %v1648, %v1650
  %v1652 = vrot.slane %v1638, %v1651
  %v1653 = vcombine.low %v1645, %v1652
  %v1655 = vunpack.c.l.s4 1966171168
  %v1656 = vunpack.c.0.s8 %v1655
  %v1657 = vlaneseq
  %v1658 = vshrl.u32 %v1657, 7
  %v1659 = vsub.s32 %v1656, %v1658
  %v1660 = vrot.slane %v1653, %v1659
  %v1662 = vlaneseq
  %vm1663 = vcmp.ge.s32.totalorder %v1662, 0
  %vm1664 = vcmp.lt.s32.totalorder %v1662, 512
  %vm1665 = vmand %vm1663, %vm1664
  %1666 = vst.msk [vmem:[%s12] sm:$0xf] %vm1665, %v1660
  // Predicated region
  $region46: #{fused_lffc_resnet_block.6} parent=0 // pred_check
    _
  $region47: #{fused_lffc_resnet_block.6} parent=0 // pred_check_branch
    %1668 = sbr.rel (0) target = $region49
  $region48: #{fused_lffc_resnet_block.6} parent=0 // pred_region
    _
  $region49: #{fused_lffc_resnet_block.6} parent=0 // pred_fallthru
    _
  // Predicated region
  $region50: #{fused_lffc_resnet_block.6} parent=0 // pred_check
    _
  $region51: #{fused_lffc_resnet_block.6} parent=0 // pred_check_branch
    %1670 = sbr.rel (0) target = $region53
  $region52: #{fused_lffc_resnet_block.6} parent=0 // pred_region
    _
  $region53: #{fused_lffc_resnet_block.6} parent=0 // pred_fallthru
    _
  // Predicated region
  $region54: #{fused_lffc_resnet_block.6} parent=0 // pred_check
    _
  $region55: #{fused_lffc_resnet_block.6} parent=0 // pred_check_branch
    %1672 = sbr.rel (0) target = $region57
  $region56: #{fused_lffc_resnet_block.6} parent=0 // pred_region
    _
  $region57: #{fused_lffc_resnet_block.6} parent=0 // pred_fallthru
    _
  // Predicated region
  $region58: #{fused_lffc_resnet_block.6} parent=0 // pred_check
    _
  $region59: #{fused_lffc_resnet_block.6} parent=0 // pred_check_branch
    %1674 = sbr.rel (0) target = $region61
  $region60: #{fused_lffc_resnet_block.6} parent=0 // pred_region
    _
  $region61: #{fused_lffc_resnet_block.6} parent=0 // pred_fallthru
    _

// kernel: fused_lffc_resnet_block.7
$region0: #{fused_lffc_resnet_block.7}
  #allocation0 [shape = 'u32[]', space=smem, size = 0x4, offset = 0x4, fixed_abs, tag = 'smem constant byte address 0x4 - core index']
  #allocation1 [shape = 'u32[144,128]{1,0:T(1,128)}', space=vmem, size = 0x12000, scoped, tag = 'internal scratch']
  %s0 = inlined_call_operand.vmem [shape: f32[4,512], index: 0, kind: input, shape index: {}]
  %s1 = inlined_call_operand.vmem [shape: f32[1,512], index: 1, kind: input, shape index: {}]
  %s2 = inlined_call_operand.vmem [shape: f32[1,512], index: 2, kind: input, shape index: {}]
  %s3 = inlined_call_operand.vmem [shape: f32[16,512], index: 3, kind: input, shape index: {}]
  %s4 = inlined_call_operand.vmem [shape: f32[16,5], index: 4, kind: input, shape index: {}]
  %s5 = inlined_call_operand.vmem [shape: f32[16,2], index: 5, kind: input, shape index: {}]
  %s6 = inlined_call_operand.vmem [shape: f32[4,16], index: 6, kind: input, shape index: {}]
  %s7 = inlined_call_operand.vmem [shape: f32[4,2], index: 7, kind: input, shape index: {}]
  %s8 = inlined_call_operand.vmem [shape: f32[4,18], index: 8, kind: input, shape index: {}]
  %s9 = inlined_call_operand.vmem [shape: f32[4,8], index: 9, kind: input, shape index: {}]
  %s10 = inlined_call_operand.vmem [shape: f32[1,4], index: 10, kind: input, shape index: {}]
  %s11 = inlined_call_operand.vmem [shape: f32[1,2], index: 11, kind: input, shape index: {}]
  %s12 = inlined_call_operand.vmem [shape: f32[16,512], index: 12, kind: output, shape index: {0}]
  %s13 = inlined_call_operand.vmem [shape: f32[4,512], index: 13, kind: output, shape index: {1}]
  %s14 = inlined_call_operand.vmem [shape: f32[1,512], index: 14, kind: output, shape index: {2}]
  %15 = xla_tuple %s12, %s13, %s14
  %s16 = sld [smem:[#allocation0]]
  $region74: #{fused_lffc_resnet_block.7} parent=0
    _
  %s18 = ssub.s32 1, %s16
  %s19 = scalar_select 0, %s18, %s16
  // Predicated region
  $region2: #{fused_lffc_resnet_block.7} parent=0 // pred_check
    _
  $region3: #{fused_lffc_resnet_block.7} parent=0 // pred_check_branch
    %21 = sbr.rel (0) target = $region5
  $region4: #{fused_lffc_resnet_block.7} parent=0 // pred_region
    _
  $region5: #{fused_lffc_resnet_block.7} parent=0 // pred_fallthru
    _
  // Predicated region
  $region6: #{fused_lffc_resnet_block.7} parent=0 // pred_check
    _
  $region7: #{fused_lffc_resnet_block.7} parent=0 // pred_check_branch
    %23 = sbr.rel (0) target = $region9
  $region8: #{fused_lffc_resnet_block.7} parent=0 // pred_region
    _
  $region9: #{fused_lffc_resnet_block.7} parent=0 // pred_fallthru
    _
  // Predicated region
  $region10: #{fused_lffc_resnet_block.7} parent=0 // pred_check
    _
  $region11: #{fused_lffc_resnet_block.7} parent=0 // pred_check_branch
    %25 = sbr.rel (0) target = $region13
  $region12: #{fused_lffc_resnet_block.7} parent=0 // pred_region
    _
  $region13: #{fused_lffc_resnet_block.7} parent=0 // pred_fallthru
    _
  // Predicated region
  $region14: #{fused_lffc_resnet_block.7} parent=0 // pred_check
    _
  $region15: #{fused_lffc_resnet_block.7} parent=0 // pred_check_branch
    %27 = sbr.rel (0) target = $region17
  $region16: #{fused_lffc_resnet_block.7} parent=0 // pred_region
    _
  $region17: #{fused_lffc_resnet_block.7} parent=0 // pred_fallthru
    _
  // Predicated region
  $region18: #{fused_lffc_resnet_block.7} parent=0 // pred_check
    _
  $region19: #{fused_lffc_resnet_block.7} parent=0 // pred_check_branch
    %29 = sbr.rel (0) target = $region21
  $region20: #{fused_lffc_resnet_block.7} parent=0 // pred_region
    _
  $region21: #{fused_lffc_resnet_block.7} parent=0 // pred_fallthru
    _
  // Predicated region
  $region22: #{fused_lffc_resnet_block.7} parent=0 // pred_check
    _
  $region23: #{fused_lffc_resnet_block.7} parent=0 // pred_check_branch
    %31 = sbr.rel (0) target = $region25
  $region24: #{fused_lffc_resnet_block.7} parent=0 // pred_region
    _
  $region25: #{fused_lffc_resnet_block.7} parent=0 // pred_fallthru
    _
  // Predicated region
  $region26: #{fused_lffc_resnet_block.7} parent=0 // pred_check
    _
  $region27: #{fused_lffc_resnet_block.7} parent=0 // pred_check_branch
    %33 = sbr.rel (0) target = $region29
  $region28: #{fused_lffc_resnet_block.7} parent=0 // pred_region
    _
  $region29: #{fused_lffc_resnet_block.7} parent=0 // pred_fallthru
    _
  // Predicated region
  $region30: #{fused_lffc_resnet_block.7} parent=0 // pred_check
    _
  $region31: #{fused_lffc_resnet_block.7} parent=0 // pred_check_branch
    %35 = sbr.rel (0) target = $region33
  $region32: #{fused_lffc_resnet_block.7} parent=0 // pred_region
    _
  $region33: #{fused_lffc_resnet_block.7} parent=0 // pred_fallthru
    _
  // Predicated region
  $region34: #{fused_lffc_resnet_block.7} parent=0 // pred_check
    _
  $region35: #{fused_lffc_resnet_block.7} parent=0 // pred_check_branch
    %37 = sbr.rel (0) target = $region37
  $region36: #{fused_lffc_resnet_block.7} parent=0 // pred_region
    _
  $region37: #{fused_lffc_resnet_block.7} parent=0 // pred_fallthru
    _
  // Predicated region
  $region38: #{fused_lffc_resnet_block.7} parent=0 // pred_check
    _
  $region39: #{fused_lffc_resnet_block.7} parent=0 // pred_check_branch
    %39 = sbr.rel (0) target = $region41
  $region40: #{fused_lffc_resnet_block.7} parent=0 // pred_region
    _
  $region41: #{fused_lffc_resnet_block.7} parent=0 // pred_fallthru
    _
  // Predicated region
  $region42: #{fused_lffc_resnet_block.7} parent=0 // pred_check
    _
  $region43: #{fused_lffc_resnet_block.7} parent=0 // pred_check_branch
    %41 = sbr.rel (0) target = $region45
  $region44: #{fused_lffc_resnet_block.7} parent=0 // pred_region
    _
  $region45: #{fused_lffc_resnet_block.7} parent=0 // pred_fallthru
    _
  // Predicated region
  $region46: #{fused_lffc_resnet_block.7} parent=0 // pred_check
    _
  $region47: #{fused_lffc_resnet_block.7} parent=0 // pred_check_branch
    %43 = sbr.rel (0) target = $region49
  $region48: #{fused_lffc_resnet_block.7} parent=0 // pred_region
    _
  $region49: #{fused_lffc_resnet_block.7} parent=0 // pred_fallthru
    _
  %v44 = vlaneseq
  %v45 = vand.u32 %v44, 127
  %v46 = vadd.s32 %v45, 128
  %v47 = vadd.s32 %v45, 256
  %v48 = vadd.s32 %v45, 384
  %v49 = vand.u32 %v45, 15
  %v50 = vand.u32 %v46, 15
  %v51 = vand.u32 %v47, 15
  %v52 = vand.u32 %v48, 15
  %v53 = vshra.s32 %v45, 4
  %v54 = vshra.s32 %v46, 4
  %v55 = vshra.s32 %v47, 4
  %v56 = vshra.s32 %v48, 4
  %v57 = vand.u32 %v53, 15
  %v58 = vand.u32 %v54, 15
  %v59 = vand.u32 %v55, 15
  %v60 = vand.u32 %v56, 15
  %v61 = vld [vmem:[%s0] sm:$0xff]
  %v62 = vld [vmem:[%s0 + $0x8] sm:$0xff]
  %v63 = vld [vmem:[%s1] sm:$0xf]
  %v64 = vld [vmem:[%s2] sm:$0xf]
  %v65 = vadd.f32 %v63, %v64
  %v66 = vld [vmem:[%s4] sm:$0xff]
  %v67 = vld [vmem:[%s4 + $0x8] sm:$0xff]
  %v68 = vld [vmem:[%s5] sm:$0xff]
  %v69 = vld [vmem:[%s5 + $0x8] sm:$0xff]
  %72 = vrot.lane.b32.xlu0 %v66, 124
  %v73 = vpop.permute.xlu0 %72
  %74 = vrot.lane.b32.xlu0 %v67, 124
  %v75 = vpop.permute.xlu0 %74
  %v77 = vlaneseq
  %v78 = vshrl.u32 %v77, 7
  %v79 = vsub.s32 0, %v78
  %v80 = vrot.slane %v65, %v79
  %v81 = vlaneseq
  %v82 = vshrl.u32 %v81, 7
  %v83 = vsub.s32 1, %v82
  %v84 = vrot.slane %v65, %v83
  %v85 = vlaneseq
  %v86 = vshrl.u32 %v85, 7
  %v87 = vsub.s32 2, %v86
  %v88 = vrot.slane %v65, %v87
  %v89 = vlaneseq
  %v90 = vshrl.u32 %v89, 7
  %v91 = vsub.s32 3, %v90
  %v92 = vrot.slane %v65, %v91
  %vm93 = vcmask 7168
  %v94 = vsel %vm93, %v73, 0
  %v96 = vsel %vm93, %v75, 0
  %vm98 = vcmask 1040384
  %v99 = vsel %vm98, %v80, 0
  %v101 = vsel %vm98, %v84, 0
  %v103 = vsel %vm98, %v88, 0
  %v105 = vsel %vm98, %v92, 0
  %107 = vmatprep.subr.mxu0 %v101
  %108 = vmatpush1.msra.mxu0 %v99
  %109 = vmatprep.subr.mxu0 0.0
  %110 = vmatpush1.msra.mxu0 0.0
  %111 = vmatprep.subr.mxu0 0.0
  %112 = vmatpush1.msra.mxu0 0.0
  %113 = vmatprep.subr.mxu0 0.0
  %114 = vmatpush1.msra.mxu0 0.0
  %115 = vmatprep.subr.mxu0 0.0
  %116 = vmatpush1.msra.mxu0 0.0
  %117 = vmatprep.subr.mxu0 0.0
  %118 = vmatpush1.msra.mxu0 0.0
  %119 = vmatprep.subr.mxu0 0.0
  %120 = vmatpush1.msra.mxu0 0.0
  %121 = vmatprep.subr.mxu0 0.0
  %122 = vmatpush1.msra.mxu0 0.0
  %123 = vmatprep.subr.mxu0 0.0
  %124 = vmatpush1.msra.mxu0 0.0
  %125 = vmatprep.subr.mxu0 0.0
  %126 = vmatpush1.msra.mxu0 0.0
  %127 = vmatprep.subr.mxu0 0.0
  %128 = vmatpush1.msra.mxu0 0.0
  %129 = vmatprep.subr.mxu0 0.0
  %130 = vmatpush1.msra.mxu0 0.0
  %131 = vmatprep.subr.mxu0 0.0
  %132 = vmatpush1.msra.mxu0 0.0
  %133 = vmatprep.subr.mxu0 0.0
  %134 = vmatpush1.msra.mxu0 0.0
  %135 = vmatprep.subr.mxu0 0.0
  %136 = vmatpush1.msra.mxu0 0.0
  %137 = vmatprep.subr.mxu0 0.0
  %138 = vmatpush1.msra.mxu0 0.0
  %139 = vmatprep.subr.mxu0 0.0
  %140 = vmatpush1.msra.mxu0 0.0
  %141 = vmatprep.subr.mxu0 0.0
  %142 = vmatpush1.msra.mxu0 0.0
  %143 = vmatprep.subr.mxu0 0.0
  %144 = vmatpush1.msra.mxu0 0.0
  %145 = vmatprep.subr.mxu0 0.0
  %146 = vmatpush1.msra.mxu0 0.0
  %147 = vmatprep.subr.mxu0 0.0
  %148 = vmatpush1.msra.mxu0 0.0
  %149 = vmatprep.subr.mxu0 0.0
  %150 = vmatpush1.msra.mxu0 0.0
  %151 = vmatprep.subr.mxu0 0.0
  %152 = vmatpush1.msra.mxu0 0.0
  %153 = vmatprep.subr.mxu0 0.0
  %154 = vmatpush1.msra.mxu0 0.0
  %155 = vmatprep.subr.mxu0 0.0
  %156 = vmatpush1.msra.mxu0 0.0
  %157 = vmatprep.subr.mxu0 0.0
  %158 = vmatpush1.msra.mxu0 0.0
  %159 = vmatprep.subr.mxu0 0.0
  %160 = vmatpush1.msra.mxu0 0.0
  %161 = vmatprep.subr.mxu0 0.0
  %162 = vmatpush1.msra.mxu0 0.0
  %163 = vmatprep.subr.mxu0 0.0
  %164 = vmatpush1.msra.mxu0 0.0
  %165 = vmatprep.subr.mxu0 0.0
  %166 = vmatpush1.msra.mxu0 0.0
  %167 = vmatprep.subr.mxu0 0.0
  %168 = vmatpush1.msra.mxu0 0.0
  %169 = vmatprep.subr.mxu0 0.0
  %170 = vmatpush1.msra.mxu0 0.0
  %171 = vmatprep.mubr.f32.mxu0 0.0
  %172 = vmatmul.mubr.f32.gmra.mrb[0].mxu0 %v94
  %v173 = vpop.f32.mrb[0].mxu0
  %v174 = vadd.f32 0.0, %v173
  %v175 = vpop.f32.mrb[0].mxu0
  %v176 = vadd.f32 0.0, %v175
  %177 = vmatprep.mubr.f32.mxu0 0.0
  %178 = vmatmul.mubr.f32.gmra.mrb[0].mxu0 %v96
  %v179 = vpop.f32.mrb[0].mxu0
  %v180 = vadd.f32 0.0, %v179
  %v181 = vpop.f32.mrb[0].mxu0
  %v182 = vadd.f32 0.0, %v181
  %183 = vdwg.mxu0
  %184 = vmatprep.subr.mxu0 %v105
  %185 = vmatpush1.msra.mxu0 %v103
  %186 = vmatprep.subr.mxu0 0.0
  %187 = vmatpush1.msra.mxu0 0.0
  %188 = vmatprep.subr.mxu0 0.0
  %189 = vmatpush1.msra.mxu0 0.0
  %190 = vmatprep.subr.mxu0 0.0
  %191 = vmatpush1.msra.mxu0 0.0
  %192 = vmatprep.subr.mxu0 0.0
  %193 = vmatpush1.msra.mxu0 0.0
  %194 = vmatprep.subr.mxu0 0.0
  %195 = vmatpush1.msra.mxu0 0.0
  %196 = vmatprep.subr.mxu0 0.0
  %197 = vmatpush1.msra.mxu0 0.0
  %198 = vmatprep.subr.mxu0 0.0
  %199 = vmatpush1.msra.mxu0 0.0
  %200 = vmatprep.subr.mxu0 0.0
  %201 = vmatpush1.msra.mxu0 0.0
  %202 = vmatprep.subr.mxu0 0.0
  %203 = vmatpush1.msra.mxu0 0.0
  %204 = vmatprep.subr.mxu0 0.0
  %205 = vmatpush1.msra.mxu0 0.0
  %206 = vmatprep.subr.mxu0 0.0
  %207 = vmatpush1.msra.mxu0 0.0
  %208 = vmatprep.subr.mxu0 0.0
  %209 = vmatpush1.msra.mxu0 0.0
  %210 = vmatprep.subr.mxu0 0.0
  %211 = vmatpush1.msra.mxu0 0.0
  %212 = vmatprep.subr.mxu0 0.0
  %213 = vmatpush1.msra.mxu0 0.0
  %214 = vmatprep.subr.mxu0 0.0
  %215 = vmatpush1.msra.mxu0 0.0
  %216 = vmatprep.subr.mxu0 0.0
  %217 = vmatpush1.msra.mxu0 0.0
  %218 = vmatprep.subr.mxu0 0.0
  %219 = vmatpush1.msra.mxu0 0.0
  %220 = vmatprep.subr.mxu0 0.0
  %221 = vmatpush1.msra.mxu0 0.0
  %222 = vmatprep.subr.mxu0 0.0
  %223 = vmatpush1.msra.mxu0 0.0
  %224 = vmatprep.subr.mxu0 0.0
  %225 = vmatpush1.msra.mxu0 0.0
  %226 = vmatprep.subr.mxu0 0.0
  %227 = vmatpush1.msra.mxu0 0.0
  %228 = vmatprep.subr.mxu0 0.0
  %229 = vmatpush1.msra.mxu0 0.0
  %230 = vmatprep.subr.mxu0 0.0
  %231 = vmatpush1.msra.mxu0 0.0
  %232 = vmatprep.subr.mxu0 0.0
  %233 = vmatpush1.msra.mxu0 0.0
  %234 = vmatprep.subr.mxu0 0.0
  %235 = vmatpush1.msra.mxu0 0.0
  %236 = vmatprep.subr.mxu0 0.0
  %237 = vmatpush1.msra.mxu0 0.0
  %238 = vmatprep.subr.mxu0 0.0
  %239 = vmatpush1.msra.mxu0 0.0
  %240 = vmatprep.subr.mxu0 0.0
  %241 = vmatpush1.msra.mxu0 0.0
  %242 = vmatprep.subr.mxu0 0.0
  %243 = vmatpush1.msra.mxu0 0.0
  %244 = vmatprep.subr.mxu0 0.0
  %245 = vmatpush1.msra.mxu0 0.0
  %246 = vmatprep.subr.mxu0 0.0
  %247 = vmatpush1.msra.mxu0 0.0
  %248 = vmatprep.mubr.f32.mxu0 0.0
  %249 = vmatmul.mubr.f32.gmra.mrb[0].mxu0 %v94
  %v250 = vpop.f32.mrb[0].mxu0
  %v251 = vadd.f32 0.0, %v250
  %v252 = vpop.f32.mrb[0].mxu0
  %v253 = vadd.f32 0.0, %v252
  %254 = vmatprep.mubr.f32.mxu0 0.0
  %255 = vmatmul.mubr.f32.gmra.mrb[0].mxu0 %v96
  %v256 = vpop.f32.mrb[0].mxu0
  %v257 = vadd.f32 0.0, %v256
  %v258 = vpop.f32.mrb[0].mxu0
  %v259 = vadd.f32 0.0, %v258
  %260 = vdwg.mxu0
  %v263 = vcombine.high %v61, %v61
  %v264 = vcombine.high %v62, %v62
  %vm265 = vcmask 31744
  %v266 = vsel %vm265, %v66, 0
  %v268 = vsel %vm265, %v67, 0
  %vm270 = vcmask 1043456
  %v271 = vsel %vm270, %v61, 0
  %v273 = vsel %vm270, %v263, 0
  %v275 = vsel %vm270, %v62, 0
  %v277 = vsel %vm270, %v264, 0
  %279 = vmatprep.subr.mxu0 %v273
  %280 = vmatpush1.msra.mxu0 %v271
  %281 = vmatprep.subr.mxu0 0.0
  %282 = vmatpush1.msra.mxu0 0.0
  %283 = vmatprep.subr.mxu0 0.0
  %284 = vmatpush1.msra.mxu0 0.0
  %285 = vmatprep.subr.mxu0 0.0
  %286 = vmatpush1.msra.mxu0 0.0
  %287 = vmatprep.subr.mxu0 0.0
  %288 = vmatpush1.msra.mxu0 0.0
  %289 = vmatprep.subr.mxu0 0.0
  %290 = vmatpush1.msra.mxu0 0.0
  %291 = vmatprep.subr.mxu0 0.0
  %292 = vmatpush1.msra.mxu0 0.0
  %293 = vmatprep.subr.mxu0 0.0
  %294 = vmatpush1.msra.mxu0 0.0
  %295 = vmatprep.subr.mxu0 0.0
  %296 = vmatpush1.msra.mxu0 0.0
  %297 = vmatprep.subr.mxu0 0.0
  %298 = vmatpush1.msra.mxu0 0.0
  %299 = vmatprep.subr.mxu0 0.0
  %300 = vmatpush1.msra.mxu0 0.0
  %301 = vmatprep.subr.mxu0 0.0
  %302 = vmatpush1.msra.mxu0 0.0
  %303 = vmatprep.subr.mxu0 0.0
  %304 = vmatpush1.msra.mxu0 0.0
  %305 = vmatprep.subr.mxu0 0.0
  %306 = vmatpush1.msra.mxu0 0.0
  %307 = vmatprep.subr.mxu0 0.0
  %308 = vmatpush1.msra.mxu0 0.0
  %309 = vmatprep.subr.mxu0 0.0
  %310 = vmatpush1.msra.mxu0 0.0
  %311 = vmatprep.subr.mxu0 0.0
  %312 = vmatpush1.msra.mxu0 0.0
  %313 = vmatprep.subr.mxu0 0.0
  %314 = vmatpush1.msra.mxu0 0.0
  %315 = vmatprep.subr.mxu0 0.0
  %316 = vmatpush1.msra.mxu0 0.0
  %317 = vmatprep.subr.mxu0 0.0
  %318 = vmatpush1.msra.mxu0 0.0
  %319 = vmatprep.subr.mxu0 0.0
  %320 = vmatpush1.msra.mxu0 0.0
  %321 = vmatprep.subr.mxu0 0.0
  %322 = vmatpush1.msra.mxu0 0.0
  %323 = vmatprep.subr.mxu0 0.0
  %324 = vmatpush1.msra.mxu0 0.0
  %325 = vmatprep.subr.mxu0 0.0
  %326 = vmatpush1.msra.mxu0 0.0
  %327 = vmatprep.subr.mxu0 0.0
  %328 = vmatpush1.msra.mxu0 0.0
  %329 = vmatprep.subr.mxu0 0.0
  %330 = vmatpush1.msra.mxu0 0.0
  %331 = vmatprep.subr.mxu0 0.0
  %332 = vmatpush1.msra.mxu0 0.0
  %333 = vmatprep.subr.mxu0 0.0
  %334 = vmatpush1.msra.mxu0 0.0
  %335 = vmatprep.subr.mxu0 0.0
  %336 = vmatpush1.msra.mxu0 0.0
  %337 = vmatprep.subr.mxu0 0.0
  %338 = vmatpush1.msra.mxu0 0.0
  %339 = vmatprep.subr.mxu0 0.0
  %340 = vmatpush1.msra.mxu0 0.0
  %341 = vmatprep.subr.mxu0 0.0
  %342 = vmatpush1.msra.mxu0 0.0
  %343 = vmatprep.mubr.f32.mxu0 0.0
  %344 = vmatmul.mubr.f32.gmra.mrb[0].mxu0 %v266
  %v345 = vpop.f32.mrb[0].mxu0
  %v346 = vadd.f32 %v174, %v345
  %v347 = vpop.f32.mrb[0].mxu0
  %v348 = vadd.f32 %v176, %v347
  %349 = vmatprep.mubr.f32.mxu0 0.0
  %350 = vmatmul.mubr.f32.gmra.mrb[0].mxu0 %v268
  %v351 = vpop.f32.mrb[0].mxu0
  %v352 = vadd.f32 %v180, %v351
  %v353 = vpop.f32.mrb[0].mxu0
  %v354 = vadd.f32 %v182, %v353
  %355 = vdwg.mxu0
  %356 = vmatprep.subr.mxu0 %v277
  %357 = vmatpush1.msra.mxu0 %v275
  %358 = vmatprep.subr.mxu0 0.0
  %359 = vmatpush1.msra.mxu0 0.0
  %360 = vmatprep.subr.mxu0 0.0
  %361 = vmatpush1.msra.mxu0 0.0
  %362 = vmatprep.subr.mxu0 0.0
  %363 = vmatpush1.msra.mxu0 0.0
  %364 = vmatprep.subr.mxu0 0.0
  %365 = vmatpush1.msra.mxu0 0.0
  %366 = vmatprep.subr.mxu0 0.0
  %367 = vmatpush1.msra.mxu0 0.0
  %368 = vmatprep.subr.mxu0 0.0
  %369 = vmatpush1.msra.mxu0 0.0
  %370 = vmatprep.subr.mxu0 0.0
  %371 = vmatpush1.msra.mxu0 0.0
  %372 = vmatprep.subr.mxu0 0.0
  %373 = vmatpush1.msra.mxu0 0.0
  %374 = vmatprep.subr.mxu0 0.0
  %375 = vmatpush1.msra.mxu0 0.0
  %376 = vmatprep.subr.mxu0 0.0
  %377 = vmatpush1.msra.mxu0 0.0
  %378 = vmatprep.subr.mxu0 0.0
  %379 = vmatpush1.msra.mxu0 0.0
  %380 = vmatprep.subr.mxu0 0.0
  %381 = vmatpush1.msra.mxu0 0.0
  %382 = vmatprep.subr.mxu0 0.0
  %383 = vmatpush1.msra.mxu0 0.0
  %384 = vmatprep.subr.mxu0 0.0
  %385 = vmatpush1.msra.mxu0 0.0
  %386 = vmatprep.subr.mxu0 0.0
  %387 = vmatpush1.msra.mxu0 0.0
  %388 = vmatprep.subr.mxu0 0.0
  %389 = vmatpush1.msra.mxu0 0.0
  %390 = vmatprep.subr.mxu0 0.0
  %391 = vmatpush1.msra.mxu0 0.0
  %392 = vmatprep.subr.mxu0 0.0
  %393 = vmatpush1.msra.mxu0 0.0
  %394 = vmatprep.subr.mxu0 0.0
  %395 = vmatpush1.msra.mxu0 0.0
  %396 = vmatprep.subr.mxu0 0.0
  %397 = vmatpush1.msra.mxu0 0.0
  %398 = vmatprep.subr.mxu0 0.0
  %399 = vmatpush1.msra.mxu0 0.0
  %400 = vmatprep.subr.mxu0 0.0
  %401 = vmatpush1.msra.mxu0 0.0
  %402 = vmatprep.subr.mxu0 0.0
  %403 = vmatpush1.msra.mxu0 0.0
  %404 = vmatprep.subr.mxu0 0.0
  %405 = vmatpush1.msra.mxu0 0.0
  %406 = vmatprep.subr.mxu0 0.0
  %407 = vmatpush1.msra.mxu0 0.0
  %408 = vmatprep.subr.mxu0 0.0
  %409 = vmatpush1.msra.mxu0 0.0
  %410 = vmatprep.subr.mxu0 0.0
  %411 = vmatpush1.msra.mxu0 0.0
  %412 = vmatprep.subr.mxu0 0.0
  %413 = vmatpush1.msra.mxu0 0.0
  %414 = vmatprep.subr.mxu0 0.0
  %415 = vmatpush1.msra.mxu0 0.0
  %416 = vmatprep.subr.mxu0 0.0
  %417 = vmatpush1.msra.mxu0 0.0
  %418 = vmatprep.subr.mxu0 0.0
  %419 = vmatpush1.msra.mxu0 0.0
  %420 = vmatprep.mubr.f32.mxu0 0.0
  %421 = vmatmul.mubr.f32.gmra.mrb[0].mxu0 %v266
  %v422 = vpop.f32.mrb[0].mxu0
  %v423 = vadd.f32 %v251, %v422
  %v424 = vpop.f32.mrb[0].mxu0
  %v425 = vadd.f32 %v253, %v424
  %426 = vmatprep.mubr.f32.mxu0 0.0
  %427 = vmatmul.mubr.f32.gmra.mrb[0].mxu0 %v268
  %v428 = vpop.f32.mrb[0].mxu0
  %v429 = vadd.f32 %v257, %v428
  %v430 = vpop.f32.mrb[0].mxu0
  %v431 = vadd.f32 %v259, %v430
  %432 = vdwg.mxu0
  %v433 = vadd.f32 %v346, %v348
  %v434 = vadd.f32 %v433, %v423
  %v435 = vadd.f32 %v434, %v425
  %436 = vadd.xlane.f32.xlu0 %v435
  %v437 = vpop.xlane.xlu0 %436
  %v438 = vadd.f32 %v352, %v354
  %v439 = vadd.f32 %v438, %v429
  %v440 = vadd.f32 %v439, %v431
  %441 = vadd.xlane.f32.xlu0 %v440
  %v442 = vpop.xlane.xlu0 %441
  %v443 = vrcp.pop 512.0
  %v444 = vmul.f32 %v437, %v443
  %v445 = vmul.f32 %v442, %v443
  %v446 = vsub.f32 %v346, %v444
  %v447 = vsub.f32 %v348, %v444
  %v448 = vsub.f32 %v423, %v444
  %v449 = vsub.f32 %v425, %v444
  %v450 = vsub.f32 %v352, %v445
  %v451 = vsub.f32 %v354, %v445
  %v452 = vsub.f32 %v429, %v445
  %v453 = vsub.f32 %v431, %v445
  %v454 = vmul.f32 %v446, %v446
  %v455 = vmul.f32 %v447, %v447
  %v456 = vmul.f32 %v448, %v448
  %v457 = vmul.f32 %v449, %v449
  %v458 = vmul.f32 %v450, %v450
  %v459 = vmul.f32 %v451, %v451
  %v460 = vmul.f32 %v452, %v452
  %v461 = vmul.f32 %v453, %v453
  %v462 = vadd.f32 %v454, %v455
  %v463 = vadd.f32 %v462, %v456
  %v464 = vadd.f32 %v463, %v457
  %465 = vadd.xlane.f32.xlu0 %v464
  %v466 = vpop.xlane.xlu0 %465
  %v467 = vadd.f32 %v458, %v459
  %v468 = vadd.f32 %v467, %v460
  %v469 = vadd.f32 %v468, %v461
  %470 = vadd.xlane.f32.xlu0 %v469
  %v471 = vpop.xlane.xlu0 %470
  %v472 = vmul.f32 %v466, %v443
  %v473 = vmul.f32 %v471, %v443
  %v474 = vadd.f32 %v472, 1e-05
  %v475 = vadd.f32 %v473, 1e-05
  %v476 = vrsqrt.pop %v474
  %v477 = vrsqrt.pop %v475
  %v478 = vmul.f32 %v446, %v476
  %v479 = vmul.f32 %v447, %v476
  %v480 = vmul.f32 %v448, %v476
  %v481 = vmul.f32 %v449, %v476
  %v482 = vmul.f32 %v450, %v477
  %v483 = vmul.f32 %v451, %v477
  %v484 = vmul.f32 %v452, %v477
  %v485 = vmul.f32 %v453, %v477
  %487 = vset.pattern.permute.xlu0 0
  %488 = vperm.xlu0 %487, %v68
  %v489 = vpop.permute.xlu0 %488
  %492 = vset.pattern.permute.xlu0 0
  %493 = vperm.xlu0 %492, %v69
  %v494 = vpop.permute.xlu0 %493
  %v496 = vmul.f32 %v478, %v489
  %v497 = vmul.f32 %v479, %v489
  %v498 = vmul.f32 %v480, %v489
  %v499 = vmul.f32 %v481, %v489
  %v500 = vmul.f32 %v482, %v494
  %v501 = vmul.f32 %v483, %v494
  %v502 = vmul.f32 %v484, %v494
  %v503 = vmul.f32 %v485, %v494
  %504 = vset.pattern.permute.xlu0 1
  %505 = vperm.xlu0 %504, %v68
  %v506 = vpop.permute.xlu0 %505
  %508 = vset.pattern.permute.xlu0 1
  %509 = vperm.xlu0 %508, %v69
  %v510 = vpop.permute.xlu0 %509
  %v512 = vadd.f32 %v496, %v506
  %v513 = vadd.f32 %v497, %v506
  %v514 = vadd.f32 %v498, %v506
  %v515 = vadd.f32 %v499, %v506
  %v516 = vadd.f32 %v500, %v510
  %v517 = vadd.f32 %v501, %v510
  %v518 = vadd.f32 %v502, %v510
  %v519 = vadd.f32 %v503, %v510
  %v520 = vld [vmem:[%s3] sm:$0xff]
  %v521 = vld [vmem:[%s3 + $0x8] sm:$0xff]
  %v522 = vld [vmem:[%s3 + $0x10] sm:$0xff]
  %v523 = vld [vmem:[%s3 + $0x18] sm:$0xff]
  %v524 = vld [vmem:[%s3 + $0x20] sm:$0xff]
  %v525 = vld [vmem:[%s3 + $0x28] sm:$0xff]
  %v526 = vld [vmem:[%s3 + $0x30] sm:$0xff]
  %v527 = vld [vmem:[%s3 + $0x38] sm:$0xff]
  %v528 = vadd.f32 %v512, %v520
  %v529 = vadd.f32 %v513, %v521
  %v530 = vadd.f32 %v514, %v522
  %v531 = vadd.f32 %v515, %v523
  %v532 = vadd.f32 %v516, %v524
  %v533 = vadd.f32 %v517, %v525
  %v534 = vadd.f32 %v518, %v526
  %v535 = vadd.f32 %v519, %v527
  %536 = vst [vmem:[%s12] sm:$0xff] %v528
  %537 = vst [vmem:[%s12 + $0x8] sm:$0xff] %v529
  %538 = vst [vmem:[%s12 + $0x10] sm:$0xff] %v530
  %539 = vst [vmem:[%s12 + $0x18] sm:$0xff] %v531
  %540 = vst [vmem:[%s12 + $0x20] sm:$0xff] %v532
  %541 = vst [vmem:[%s12 + $0x28] sm:$0xff] %v533
  %542 = vst [vmem:[%s12 + $0x30] sm:$0xff] %v534
  %543 = vst [vmem:[%s12 + $0x38] sm:$0xff] %v535
  %v544 = vld [vmem:[%s6] sm:$0xf]
  %v545 = vld [vmem:[%s7] sm:$0xf]
  %v546 = vld [vmem:[%s8] sm:$0xf]
  %v547 = vld [vmem:[%s9] sm:$0xf]
  %v548 = vld [vmem:[%s10] sm:$0x1]
  %v549 = vld [vmem:[%s11] sm:$0x1]
  %vm550 = vcmask 130048
  %v552 = vsel %vm550, %v544, 0
  %554 = vmatprep.subr.mxu0 %v529
  %555 = vmatpush1.msra.mxu0 %v528
  %556 = vmatprep.subr.mxu0 %v533
  %557 = vmatpush1.msra.mxu0 %v532
  %558 = vmatprep.subr.mxu0 0.0
  %559 = vmatpush1.msra.mxu0 0.0
  %560 = vmatprep.subr.mxu0 0.0
  %561 = vmatpush1.msra.mxu0 0.0
  %562 = vmatprep.subr.mxu0 0.0
  %563 = vmatpush1.msra.mxu0 0.0
  %564 = vmatprep.subr.mxu0 0.0
  %565 = vmatpush1.msra.mxu0 0.0
  %566 = vmatprep.subr.mxu0 0.0
  %567 = vmatpush1.msra.mxu0 0.0
  %568 = vmatprep.subr.mxu0 0.0
  %569 = vmatpush1.msra.mxu0 0.0
  %570 = vmatprep.subr.mxu0 0.0
  %571 = vmatpush1.msra.mxu0 0.0
  %572 = vmatprep.subr.mxu0 0.0
  %573 = vmatpush1.msra.mxu0 0.0
  %574 = vmatprep.subr.mxu0 0.0
  %575 = vmatpush1.msra.mxu0 0.0
  %576 = vmatprep.subr.mxu0 0.0
  %577 = vmatpush1.msra.mxu0 0.0
  %578 = vmatprep.subr.mxu0 0.0
  %579 = vmatpush1.msra.mxu0 0.0
  %580 = vmatprep.subr.mxu0 0.0
  %581 = vmatpush1.msra.mxu0 0.0
  %582 = vmatprep.subr.mxu0 0.0
  %583 = vmatpush1.msra.mxu0 0.0
  %584 = vmatprep.subr.mxu0 0.0
  %585 = vmatpush1.msra.mxu0 0.0
  %586 = vmatprep.subr.mxu0 0.0
  %587 = vmatpush1.msra.mxu0 0.0
  %588 = vmatprep.subr.mxu0 0.0
  %589 = vmatpush1.msra.mxu0 0.0
  %590 = vmatprep.subr.mxu0 0.0
  %591 = vmatpush1.msra.mxu0 0.0
  %592 = vmatprep.subr.mxu0 0.0
  %593 = vmatpush1.msra.mxu0 0.0
  %594 = vmatprep.subr.mxu0 0.0
  %595 = vmatpush1.msra.mxu0 0.0
  %596 = vmatprep.subr.mxu0 0.0
  %597 = vmatpush1.msra.mxu0 0.0
  %598 = vmatprep.subr.mxu0 0.0
  %599 = vmatpush1.msra.mxu0 0.0
  %600 = vmatprep.subr.mxu0 0.0
  %601 = vmatpush1.msra.mxu0 0.0
  %602 = vmatprep.subr.mxu0 0.0
  %603 = vmatpush1.msra.mxu0 0.0
  %604 = vmatprep.subr.mxu0 0.0
  %605 = vmatpush1.msra.mxu0 0.0
  %606 = vmatprep.subr.mxu0 0.0
  %607 = vmatpush1.msra.mxu0 0.0
  %608 = vmatprep.subr.mxu0 0.0
  %609 = vmatpush1.msra.mxu0 0.0
  %610 = vmatprep.subr.mxu0 0.0
  %611 = vmatpush1.msra.mxu0 0.0
  %612 = vmatprep.subr.mxu0 0.0
  %613 = vmatpush1.msra.mxu0 0.0
  %614 = vmatprep.subr.mxu0 0.0
  %615 = vmatpush1.msra.mxu0 0.0
  %616 = vmatprep.subr.mxu0 0.0
  %617 = vmatpush1.msra.mxu0 0.0
  %618 = vmatprep.mubr.f32.mxu0 0.0
  %619 = vmatmul.mubr.f32.gmra.mrb[0].mxu0 %v552
  %v620 = vpop.f32.mrb[0].mxu0
  %v621 = vadd.f32 0.0, %v620
  %v622 = vpop.f32.mrb[0].mxu0
  %v623 = vadd.f32 0.0, %v622
  %624 = vdwg.mxu0
  %625 = vmatprep.subr.mxu0 %v531
  %626 = vmatpush1.msra.mxu0 %v530
  %627 = vmatprep.subr.mxu0 %v535
  %628 = vmatpush1.msra.mxu0 %v534
  %629 = vmatprep.subr.mxu0 0.0
  %630 = vmatpush1.msra.mxu0 0.0
  %631 = vmatprep.subr.mxu0 0.0
  %632 = vmatpush1.msra.mxu0 0.0
  %633 = vmatprep.subr.mxu0 0.0
  %634 = vmatpush1.msra.mxu0 0.0
  %635 = vmatprep.subr.mxu0 0.0
  %636 = vmatpush1.msra.mxu0 0.0
  %637 = vmatprep.subr.mxu0 0.0
  %638 = vmatpush1.msra.mxu0 0.0
  %639 = vmatprep.subr.mxu0 0.0
  %640 = vmatpush1.msra.mxu0 0.0
  %641 = vmatprep.subr.mxu0 0.0
  %642 = vmatpush1.msra.mxu0 0.0
  %643 = vmatprep.subr.mxu0 0.0
  %644 = vmatpush1.msra.mxu0 0.0
  %645 = vmatprep.subr.mxu0 0.0
  %646 = vmatpush1.msra.mxu0 0.0
  %647 = vmatprep.subr.mxu0 0.0
  %648 = vmatpush1.msra.mxu0 0.0
  %649 = vmatprep.subr.mxu0 0.0
  %650 = vmatpush1.msra.mxu0 0.0
  %651 = vmatprep.subr.mxu0 0.0
  %652 = vmatpush1.msra.mxu0 0.0
  %653 = vmatprep.subr.mxu0 0.0
  %654 = vmatpush1.msra.mxu0 0.0
  %655 = vmatprep.subr.mxu0 0.0
  %656 = vmatpush1.msra.mxu0 0.0
  %657 = vmatprep.subr.mxu0 0.0
  %658 = vmatpush1.msra.mxu0 0.0
  %659 = vmatprep.subr.mxu0 0.0
  %660 = vmatpush1.msra.mxu0 0.0
  %661 = vmatprep.subr.mxu0 0.0
  %662 = vmatpush1.msra.mxu0 0.0
  %663 = vmatprep.subr.mxu0 0.0
  %664 = vmatpush1.msra.mxu0 0.0
  %665 = vmatprep.subr.mxu0 0.0
  %666 = vmatpush1.msra.mxu0 0.0
  %667 = vmatprep.subr.mxu0 0.0
  %668 = vmatpush1.msra.mxu0 0.0
  %669 = vmatprep.subr.mxu0 0.0
  %670 = vmatpush1.msra.mxu0 0.0
  %671 = vmatprep.subr.mxu0 0.0
  %672 = vmatpush1.msra.mxu0 0.0
  %673 = vmatprep.subr.mxu0 0.0
  %674 = vmatpush1.msra.mxu0 0.0
  %675 = vmatprep.subr.mxu0 0.0
  %676 = vmatpush1.msra.mxu0 0.0
  %677 = vmatprep.subr.mxu0 0.0
  %678 = vmatpush1.msra.mxu0 0.0
  %679 = vmatprep.subr.mxu0 0.0
  %680 = vmatpush1.msra.mxu0 0.0
  %681 = vmatprep.subr.mxu0 0.0
  %682 = vmatpush1.msra.mxu0 0.0
  %683 = vmatprep.subr.mxu0 0.0
  %684 = vmatpush1.msra.mxu0 0.0
  %685 = vmatprep.subr.mxu0 0.0
  %686 = vmatpush1.msra.mxu0 0.0
  %687 = vmatprep.subr.mxu0 0.0
  %688 = vmatpush1.msra.mxu0 0.0
  %689 = vmatprep.mubr.f32.mxu0 0.0
  %690 = vmatmul.mubr.f32.gmra.mrb[0].mxu0 %v552
  %v691 = vpop.f32.mrb[0].mxu0
  %v692 = vadd.f32 0.0, %v691
  %v693 = vpop.f32.mrb[0].mxu0
  %v694 = vadd.f32 0.0, %v693
  %695 = vdwg.mxu0
  %v696 = vsel %vm270, %v621, 0.0
  %v697 = vsel %vm270, %v623, 0.0
  %v698 = vadd.f32 %v696, %v697
  %v699 = vsel %vm270, %v692, 0.0
  %v700 = vadd.f32 %v698, %v699
  %v701 = vsel %vm270, %v694, 0.0
  %v702 = vadd.f32 %v700, %v701
  %703 = vadd.xlane.f32.xlu0 %v702
  %v704 = vpop.xlane.xlu0 %703
  %v705 = vmul.f32 %v704, %v443
  %v706 = vsub.f32 %v621, %v705
  %v707 = vsub.f32 %v623, %v705
  %v708 = vsub.f32 %v692, %v705
  %v709 = vsub.f32 %v694, %v705
  %v710 = vmul.f32 %v706, %v706
  %v711 = vmul.f32 %v707, %v707
  %v712 = vmul.f32 %v708, %v708
  %v713 = vmul.f32 %v709, %v709
  %v714 = vsel %vm270, %v710, 0.0
  %v715 = vsel %vm270, %v711, 0.0
  %v716 = vadd.f32 %v714, %v715
  %v717 = vsel %vm270, %v712, 0.0
  %v718 = vadd.f32 %v716, %v717
  %v719 = vsel %vm270, %v713, 0.0
  %v720 = vadd.f32 %v718, %v719
  %721 = vadd.xlane.f32.xlu0 %v720
  %v722 = vpop.xlane.xlu0 %721
  %v723 = vmul.f32 %v722, %v443
  %v724 = vadd.f32 %v723, 1e-05
  %v725 = vrsqrt.pop %v724
  %v726 = vmul.f32 %v706, %v725
  %v727 = vmul.f32 %v707, %v725
  %v728 = vmul.f32 %v708, %v725
  %v729 = vmul.f32 %v709, %v725
  %731 = vset.pattern.permute.xlu0 0
  %732 = vperm.xlu0 %731, %v545
  %v733 = vpop.permute.xlu0 %732
  %v735 = vmul.f32 %v726, %v733
  %v736 = vmul.f32 %v727, %v733
  %v737 = vmul.f32 %v728, %v733
  %v738 = vmul.f32 %v729, %v733
  %739 = vset.pattern.permute.xlu0 1
  %740 = vperm.xlu0 %739, %v545
  %v741 = vpop.permute.xlu0 %740
  %v743 = vadd.f32 %v735, %v741
  %v744 = vadd.f32 %v736, %v741
  %v745 = vadd.f32 %v737, %v741
  %v746 = vadd.f32 %v738, %v741
  %v747 = vmax.f32 %v743, 0.0
  %v748 = vmax.f32 %v744, 0.0
  %v749 = vmax.f32 %v745, 0.0
  %v750 = vmax.f32 %v746, 0.0
  %vm751 = vcmp.eq.s32.totalorder %v49, 0
  %vm752 = vcmp.eq.s32.totalorder %v50, 0
  %vm753 = vcmp.eq.s32.totalorder %v51, 0
  %vm754 = vcmp.eq.s32.totalorder %v52, 0
  %vm755 = vcmp.eq.s32.totalorder %v49, 15
  %vm756 = vcmp.eq.s32.totalorder %v50, 15
  %vm757 = vcmp.eq.s32.totalorder %v51, 15
  %vm758 = vcmp.eq.s32.totalorder %v52, 15
  %vm759 = vcmp.eq.s32.totalorder %v57, 0
  %vm760 = vcmp.eq.s32.totalorder %v58, 0
  %vm761 = vcmp.eq.s32.totalorder %v59, 0
  %vm762 = vcmp.eq.s32.totalorder %v60, 0
  %vm763 = vcmp.eq.s32.totalorder %v57, 15
  %vm764 = vcmp.eq.s32.totalorder %v58, 15
  %vm765 = vcmp.eq.s32.totalorder %v59, 15
  %vm766 = vcmp.eq.s32.totalorder %v60, 15
  %767 = vrot.lane.b32.xlu0 %v747, 16
  %v768 = vpop.permute.xlu0 %767
  %769 = vrot.lane.b32.xlu0 %v748, 16
  %v770 = vpop.permute.xlu0 %769
  %771 = vrot.lane.b32.xlu0 %v749, 16
  %v772 = vpop.permute.xlu0 %771
  %773 = vrot.lane.b32.xlu0 %v750, 16
  %v774 = vpop.permute.xlu0 %773
  %vm775 = vcmp.lt.s32.totalorder %v45, 16
  %v776 = vsel %vm775, %v772, %v774
  %v777 = vsel %vm775, %v770, %v772
  %v778 = vsel %vm775, %v768, %v770
  %v779 = vsel %vm775, %v774, %v768
  %780 = vrot.lane.b32.xlu0 %v747, 112
  %v781 = vpop.permute.xlu0 %780
  %782 = vrot.lane.b32.xlu0 %v748, 112
  %v783 = vpop.permute.xlu0 %782
  %784 = vrot.lane.b32.xlu0 %v749, 112
  %v785 = vpop.permute.xlu0 %784
  %786 = vrot.lane.b32.xlu0 %v750, 112
  %v787 = vpop.permute.xlu0 %786
  %vm788 = vcmp.lt.s32.totalorder %v45, 112
  %v789 = vsel %vm788, %v785, %v787
  %v790 = vsel %vm788, %v783, %v785
  %v791 = vsel %vm788, %v781, %v783
  %v792 = vsel %vm788, %v787, %v781
  %v793 = vsel %vm759, %v791, %v779
  %v794 = vsel %vm760, %v790, %v778
  %v795 = vsel %vm761, %v789, %v777
  %v796 = vsel %vm762, %v792, %v776
  %v797 = vsel %vm763, %v779, %v791
  %v798 = vsel %vm764, %v778, %v790
  %v799 = vsel %vm765, %v777, %v789
  %v800 = vsel %vm766, %v776, %v792
  %801 = vrot.lane.b32.xlu0 %v793, 1
  %v802 = vpop.permute.xlu0 %801
  %803 = vrot.lane.b32.xlu0 %v794, 1
  %v804 = vpop.permute.xlu0 %803
  %805 = vrot.lane.b32.xlu0 %v795, 1
  %v806 = vpop.permute.xlu0 %805
  %807 = vrot.lane.b32.xlu0 %v796, 1
  %v808 = vpop.permute.xlu0 %807
  %vm809 = vcmp.lt.s32.totalorder %v45, 1
  %v810 = vsel %vm809, %v806, %v808
  %v811 = vsel %vm809, %v804, %v806
  %v812 = vsel %vm809, %v802, %v804
  %v813 = vsel %vm809, %v808, %v802
  %814 = vrot.lane.b32.xlu0 %v793, 127
  %v815 = vpop.permute.xlu0 %814
  %816 = vrot.lane.b32.xlu0 %v794, 127
  %v817 = vpop.permute.xlu0 %816
  %818 = vrot.lane.b32.xlu0 %v795, 127
  %v819 = vpop.permute.xlu0 %818
  %820 = vrot.lane.b32.xlu0 %v796, 127
  %v821 = vpop.permute.xlu0 %820
  %vm822 = vcmp.lt.s32.totalorder %v45, 127
  %v823 = vsel %vm822, %v819, %v821
  %v824 = vsel %vm822, %v817, %v819
  %v825 = vsel %vm822, %v815, %v817
  %v826 = vsel %vm822, %v821, %v815
  %v827 = vsel %vm751, %v825, %v813
  %v828 = vsel %vm752, %v824, %v812
  %v829 = vsel %vm753, %v823, %v811
  %v830 = vsel %vm754, %v826, %v810
  %v831 = vsel %vm755, %v813, %v825
  %v832 = vsel %vm756, %v812, %v824
  %v833 = vsel %vm757, %v811, %v823
  %v834 = vsel %vm758, %v810, %v826
  %835 = vrot.lane.b32.xlu0 %v747, 1
  %v836 = vpop.permute.xlu0 %835
  %837 = vrot.lane.b32.xlu0 %v748, 1
  %v838 = vpop.permute.xlu0 %837
  %839 = vrot.lane.b32.xlu0 %v749, 1
  %v840 = vpop.permute.xlu0 %839
  %841 = vrot.lane.b32.xlu0 %v750, 1
  %v842 = vpop.permute.xlu0 %841
  %v843 = vsel %vm809, %v840, %v842
  %v844 = vsel %vm809, %v838, %v840
  %v845 = vsel %vm809, %v836, %v838
  %v846 = vsel %vm809, %v842, %v836
  %847 = vrot.lane.b32.xlu0 %v747, 127
  %v848 = vpop.permute.xlu0 %847
  %849 = vrot.lane.b32.xlu0 %v748, 127
  %v850 = vpop.permute.xlu0 %849
  %851 = vrot.lane.b32.xlu0 %v749, 127
  %v852 = vpop.permute.xlu0 %851
  %853 = vrot.lane.b32.xlu0 %v750, 127
  %v854 = vpop.permute.xlu0 %853
  %v855 = vsel %vm822, %v852, %v854
  %v856 = vsel %vm822, %v850, %v852
  %v857 = vsel %vm822, %v848, %v850
  %v858 = vsel %vm822, %v854, %v848
  %v859 = vsel %vm751, %v857, %v846
  %v860 = vsel %vm752, %v856, %v845
  %v861 = vsel %vm753, %v855, %v844
  %v862 = vsel %vm754, %v858, %v843
  %v863 = vsel %vm755, %v846, %v857
  %v864 = vsel %vm756, %v845, %v856
  %v865 = vsel %vm757, %v844, %v855
  %v866 = vsel %vm758, %v843, %v858
  %867 = vrot.lane.b32.xlu0 %v797, 1
  %v868 = vpop.permute.xlu0 %867
  %869 = vrot.lane.b32.xlu0 %v798, 1
  %v870 = vpop.permute.xlu0 %869
  %871 = vrot.lane.b32.xlu0 %v799, 1
  %v872 = vpop.permute.xlu0 %871
  %873 = vrot.lane.b32.xlu0 %v800, 1
  %v874 = vpop.permute.xlu0 %873
  %v875 = vsel %vm809, %v872, %v874
  %v876 = vsel %vm809, %v870, %v872
  %v877 = vsel %vm809, %v868, %v870
  %v878 = vsel %vm809, %v874, %v868
  %879 = vrot.lane.b32.xlu0 %v797, 127
  %v880 = vpop.permute.xlu0 %879
  %881 = vrot.lane.b32.xlu0 %v798, 127
  %v882 = vpop.permute.xlu0 %881
  %883 = vrot.lane.b32.xlu0 %v799, 127
  %v884 = vpop.permute.xlu0 %883
  %885 = vrot.lane.b32.xlu0 %v800, 127
  %v886 = vpop.permute.xlu0 %885
  %v887 = vsel %vm822, %v884, %v886
  %v888 = vsel %vm822, %v882, %v884
  %v889 = vsel %vm822, %v880, %v882
  %v890 = vsel %vm822, %v886, %v880
  %v891 = vsel %vm751, %v889, %v878
  %v892 = vsel %vm752, %v888, %v877
  %v893 = vsel %vm753, %v887, %v876
  %v894 = vsel %vm754, %v890, %v875
  %v895 = vsel %vm755, %v878, %v889
  %v896 = vsel %vm756, %v877, %v888
  %v897 = vsel %vm757, %v876, %v887
  %v898 = vsel %vm758, %v875, %v890
  %900 = vset.pattern.permute.xlu0 0
  %901 = vperm.xlu0 %900, %v546
  %v902 = vpop.permute.xlu0 %901
  %v904 = vmul.f32 %v827, %v902
  %v905 = vmul.f32 %v828, %v902
  %v906 = vmul.f32 %v829, %v902
  %v907 = vmul.f32 %v830, %v902
  %908 = vset.pattern.permute.xlu0 1
  %909 = vperm.xlu0 %908, %v546
  %v910 = vpop.permute.xlu0 %909
  %v912 = vmul.f32 %v793, %v910
  %v913 = vmul.f32 %v794, %v910
  %v914 = vmul.f32 %v795, %v910
  %v915 = vmul.f32 %v796, %v910
  %v916 = vadd.f32 %v904, %v912
  %v917 = vadd.f32 %v905, %v913
  %v918 = vadd.f32 %v906, %v914
  %v919 = vadd.f32 %v907, %v915
  %920 = vset.pattern.permute.xlu0 2
  %921 = vperm.xlu0 %920, %v546
  %v922 = vpop.permute.xlu0 %921
  %v924 = vmul.f32 %v831, %v922
  %v925 = vmul.f32 %v832, %v922
  %v926 = vmul.f32 %v833, %v922
  %v927 = vmul.f32 %v834, %v922
  %v928 = vadd.f32 %v916, %v924
  %v929 = vadd.f32 %v917, %v925
  %v930 = vadd.f32 %v918, %v926
  %v931 = vadd.f32 %v919, %v927
  %932 = vset.pattern.permute.xlu0 3
  %933 = vperm.xlu0 %932, %v546
  %v934 = vpop.permute.xlu0 %933
  %v936 = vmul.f32 %v859, %v934
  %v937 = vmul.f32 %v860, %v934
  %v938 = vmul.f32 %v861, %v934
  %v939 = vmul.f32 %v862, %v934
  %v940 = vadd.f32 %v928, %v936
  %v941 = vadd.f32 %v929, %v937
  %v942 = vadd.f32 %v930, %v938
  %v943 = vadd.f32 %v931, %v939
  %944 = vset.pattern.permute.xlu0 4
  %945 = vperm.xlu0 %944, %v546
  %v946 = vpop.permute.xlu0 %945
  %v948 = vmul.f32 %v747, %v946
  %v949 = vmul.f32 %v748, %v946
  %v950 = vmul.f32 %v749, %v946
  %v951 = vmul.f32 %v750, %v946
  %v952 = vadd.f32 %v940, %v948
  %v953 = vadd.f32 %v941, %v949
  %v954 = vadd.f32 %v942, %v950
  %v955 = vadd.f32 %v943, %v951
  %956 = vset.pattern.permute.xlu0 5
  %957 = vperm.xlu0 %956, %v546
  %v958 = vpop.permute.xlu0 %957
  %v960 = vmul.f32 %v863, %v958
  %v961 = vmul.f32 %v864, %v958
  %v962 = vmul.f32 %v865, %v958
  %v963 = vmul.f32 %v866, %v958
  %v964 = vadd.f32 %v952, %v960
  %v965 = vadd.f32 %v953, %v961
  %v966 = vadd.f32 %v954, %v962
  %v967 = vadd.f32 %v955, %v963
  %968 = vset.pattern.permute.xlu0 6
  %969 = vperm.xlu0 %968, %v546
  %v970 = vpop.permute.xlu0 %969
  %v972 = vmul.f32 %v891, %v970
  %v973 = vmul.f32 %v892, %v970
  %v974 = vmul.f32 %v893, %v970
  %v975 = vmul.f32 %v894, %v970
  %v976 = vadd.f32 %v964, %v972
  %v977 = vadd.f32 %v965, %v973
  %v978 = vadd.f32 %v966, %v974
  %v979 = vadd.f32 %v967, %v975
  %980 = vset.pattern.permute.xlu0 7
  %981 = vperm.xlu0 %980, %v546
  %v982 = vpop.permute.xlu0 %981
  %v984 = vmul.f32 %v797, %v982
  %v985 = vmul.f32 %v798, %v982
  %v986 = vmul.f32 %v799, %v982
  %v987 = vmul.f32 %v800, %v982
  %v988 = vadd.f32 %v976, %v984
  %v989 = vadd.f32 %v977, %v985
  %v990 = vadd.f32 %v978, %v986
  %v991 = vadd.f32 %v979, %v987
  %992 = vset.pattern.permute.xlu0 8
  %993 = vperm.xlu0 %992, %v546
  %v994 = vpop.permute.xlu0 %993
  %v996 = vmul.f32 %v895, %v994
  %v997 = vmul.f32 %v896, %v994
  %v998 = vmul.f32 %v897, %v994
  %v999 = vmul.f32 %v898, %v994
  %v1000 = vadd.f32 %v988, %v996
  %v1001 = vadd.f32 %v989, %v997
  %v1002 = vadd.f32 %v990, %v998
  %v1003 = vadd.f32 %v991, %v999
  %1004 = vset.pattern.permute.xlu0 9
  %1005 = vperm.xlu0 %1004, %v546
  %v1006 = vpop.permute.xlu0 %1005
  %v1008 = vmul.f32 %v827, %v1006
  %v1009 = vmul.f32 %v828, %v1006
  %v1010 = vmul.f32 %v829, %v1006
  %v1011 = vmul.f32 %v830, %v1006
  %1012 = vset.pattern.permute.xlu0 10
  %1013 = vperm.xlu0 %1012, %v546
  %v1014 = vpop.permute.xlu0 %1013
  %v1016 = vmul.f32 %v793, %v1014
  %v1017 = vmul.f32 %v794, %v1014
  %v1018 = vmul.f32 %v795, %v1014
  %v1019 = vmul.f32 %v796, %v1014
  %v1020 = vadd.f32 %v1008, %v1016
  %v1021 = vadd.f32 %v1009, %v1017
  %v1022 = vadd.f32 %v1010, %v1018
  %v1023 = vadd.f32 %v1011, %v1019
  %1024 = vset.pattern.permute.xlu0 11
  %1025 = vperm.xlu0 %1024, %v546
  %v1026 = vpop.permute.xlu0 %1025
  %v1028 = vmul.f32 %v831, %v1026
  %v1029 = vmul.f32 %v832, %v1026
  %v1030 = vmul.f32 %v833, %v1026
  %v1031 = vmul.f32 %v834, %v1026
  %v1032 = vadd.f32 %v1020, %v1028
  %v1033 = vadd.f32 %v1021, %v1029
  %v1034 = vadd.f32 %v1022, %v1030
  %v1035 = vadd.f32 %v1023, %v1031
  %1036 = vset.pattern.permute.xlu0 12
  %1037 = vperm.xlu0 %1036, %v546
  %v1038 = vpop.permute.xlu0 %1037
  %v1040 = vmul.f32 %v859, %v1038
  %v1041 = vmul.f32 %v860, %v1038
  %v1042 = vmul.f32 %v861, %v1038
  %v1043 = vmul.f32 %v862, %v1038
  %v1044 = vadd.f32 %v1032, %v1040
  %v1045 = vadd.f32 %v1033, %v1041
  %v1046 = vadd.f32 %v1034, %v1042
  %v1047 = vadd.f32 %v1035, %v1043
  %1048 = vset.pattern.permute.xlu0 13
  %1049 = vperm.xlu0 %1048, %v546
  %v1050 = vpop.permute.xlu0 %1049
  %v1052 = vmul.f32 %v747, %v1050
  %v1053 = vmul.f32 %v748, %v1050
  %v1054 = vmul.f32 %v749, %v1050
  %v1055 = vmul.f32 %v750, %v1050
  %v1056 = vadd.f32 %v1044, %v1052
  %v1057 = vadd.f32 %v1045, %v1053
  %v1058 = vadd.f32 %v1046, %v1054
  %v1059 = vadd.f32 %v1047, %v1055
  %1060 = vset.pattern.permute.xlu0 14
  %1061 = vperm.xlu0 %1060, %v546
  %v1062 = vpop.permute.xlu0 %1061
  %v1064 = vmul.f32 %v863, %v1062
  %v1065 = vmul.f32 %v864, %v1062
  %v1066 = vmul.f32 %v865, %v1062
  %v1067 = vmul.f32 %v866, %v1062
  %v1068 = vadd.f32 %v1056, %v1064
  %v1069 = vadd.f32 %v1057, %v1065
  %v1070 = vadd.f32 %v1058, %v1066
  %v1071 = vadd.f32 %v1059, %v1067
  %1072 = vset.pattern.permute.xlu0 15
  %1073 = vperm.xlu0 %1072, %v546
  %v1074 = vpop.permute.xlu0 %1073
  %v1076 = vmul.f32 %v891, %v1074
  %v1077 = vmul.f32 %v892, %v1074
  %v1078 = vmul.f32 %v893, %v1074
  %v1079 = vmul.f32 %v894, %v1074
  %v1080 = vadd.f32 %v1068, %v1076
  %v1081 = vadd.f32 %v1069, %v1077
  %v1082 = vadd.f32 %v1070, %v1078
  %v1083 = vadd.f32 %v1071, %v1079
  %1084 = vset.pattern.permute.xlu0 16
  %1085 = vperm.xlu0 %1084, %v546
  %v1086 = vpop.permute.xlu0 %1085
  %v1088 = vmul.f32 %v797, %v1086
  %v1089 = vmul.f32 %v798, %v1086
  %v1090 = vmul.f32 %v799, %v1086
  %v1091 = vmul.f32 %v800, %v1086
  %v1092 = vadd.f32 %v1080, %v1088
  %v1093 = vadd.f32 %v1081, %v1089
  %v1094 = vadd.f32 %v1082, %v1090
  %v1095 = vadd.f32 %v1083, %v1091
  %1096 = vset.pattern.permute.xlu0 17
  %1097 = vperm.xlu0 %1096, %v546
  %v1098 = vpop.permute.xlu0 %1097
  %v1100 = vmul.f32 %v895, %v1098
  %v1101 = vmul.f32 %v896, %v1098
  %v1102 = vmul.f32 %v897, %v1098
  %v1103 = vmul.f32 %v898, %v1098
  %v1104 = vadd.f32 %v1092, %v1100
  %v1105 = vadd.f32 %v1093, %v1101
  %v1106 = vadd.f32 %v1094, %v1102
  %v1107 = vadd.f32 %v1095, %v1103
  %1109 = vrot.lane.b32.xlu0 %v547, 124
  %v1110 = vpop.permute.xlu0 %1109
  %v1111 = vsel %vm265, %v1110, 0
  %v1114 = vsel %vm270, %v1104, 0
  %v1117 = vsel %vm270, %v1105, 0
  %v1120 = vsel %vm270, %v1106, 0
  %v1123 = vsel %vm270, %v1107, 0
  %1125 = vmatprep.subr.mxu0 %v1117
  %1126 = vmatpush1.msra.mxu0 %v1114
  %1127 = vmatprep.subr.mxu0 0.0
  %1128 = vmatpush1.msra.mxu0 0.0
  %1129 = vmatprep.subr.mxu0 0.0
  %1130 = vmatpush1.msra.mxu0 0.0
  %1131 = vmatprep.subr.mxu0 0.0
  %1132 = vmatpush1.msra.mxu0 0.0
  %1133 = vmatprep.subr.mxu0 0.0
  %1134 = vmatpush1.msra.mxu0 0.0
  %1135 = vmatprep.subr.mxu0 0.0
  %1136 = vmatpush1.msra.mxu0 0.0
  %1137 = vmatprep.subr.mxu0 0.0
  %1138 = vmatpush1.msra.mxu0 0.0
  %1139 = vmatprep.subr.mxu0 0.0
  %1140 = vmatpush1.msra.mxu0 0.0
  %1141 = vmatprep.subr.mxu0 0.0
  %1142 = vmatpush1.msra.mxu0 0.0
  %1143 = vmatprep.subr.mxu0 0.0
  %1144 = vmatpush1.msra.mxu0 0.0
  %1145 = vmatprep.subr.mxu0 0.0
  %1146 = vmatpush1.msra.mxu0 0.0
  %1147 = vmatprep.subr.mxu0 0.0
  %1148 = vmatpush1.msra.mxu0 0.0
  %1149 = vmatprep.subr.mxu0 0.0
  %1150 = vmatpush1.msra.mxu0 0.0
  %1151 = vmatprep.subr.mxu0 0.0
  %1152 = vmatpush1.msra.mxu0 0.0
  %1153 = vmatprep.subr.mxu0 0.0
  %1154 = vmatpush1.msra.mxu0 0.0
  %1155 = vmatprep.subr.mxu0 0.0
  %1156 = vmatpush1.msra.mxu0 0.0
  %1157 = vmatprep.subr.mxu0 0.0
  %1158 = vmatpush1.msra.mxu0 0.0
  %1159 = vmatprep.subr.mxu0 0.0
  %1160 = vmatpush1.msra.mxu0 0.0
  %1161 = vmatprep.subr.mxu0 0.0
  %1162 = vmatpush1.msra.mxu0 0.0
  %1163 = vmatprep.subr.mxu0 0.0
  %1164 = vmatpush1.msra.mxu0 0.0
  %1165 = vmatprep.subr.mxu0 0.0
  %1166 = vmatpush1.msra.mxu0 0.0
  %1167 = vmatprep.subr.mxu0 0.0
  %1168 = vmatpush1.msra.mxu0 0.0
  %1169 = vmatprep.subr.mxu0 0.0
  %1170 = vmatpush1.msra.mxu0 0.0
  %1171 = vmatprep.subr.mxu0 0.0
  %1172 = vmatpush1.msra.mxu0 0.0
  %1173 = vmatprep.subr.mxu0 0.0
  %1174 = vmatpush1.msra.mxu0 0.0
  %1175 = vmatprep.subr.mxu0 0.0
  %1176 = vmatpush1.msra.mxu0 0.0
  %1177 = vmatprep.subr.mxu0 0.0
  %1178 = vmatpush1.msra.mxu0 0.0
  %1179 = vmatprep.subr.mxu0 0.0
  %1180 = vmatpush1.msra.mxu0 0.0
  %1181 = vmatprep.subr.mxu0 0.0
  %1182 = vmatpush1.msra.mxu0 0.0
  %1183 = vmatprep.subr.mxu0 0.0
  %1184 = vmatpush1.msra.mxu0 0.0
  %1185 = vmatprep.subr.mxu0 0.0
  %1186 = vmatpush1.msra.mxu0 0.0
  %1187 = vmatprep.subr.mxu0 0.0
  %1188 = vmatpush1.msra.mxu0 0.0
  %1189 = vmatprep.mubr.f32.mxu0 0.0
  %1190 = vmatmul.mubr.f32.gmra.mrb[0].mxu0 %v1111
  %v1191 = vpop.f32.mrb[0].mxu0
  %v1192 = vadd.f32 0.0, %v1191
  %v1193 = vpop.f32.mrb[0].mxu0
  %v1194 = vadd.f32 0.0, %v1193
  %1195 = vdwg.mxu0
  %1196 = vmatprep.subr.mxu0 %v1123
  %1197 = vmatpush1.msra.mxu0 %v1120
  %1198 = vmatprep.subr.mxu0 0.0
  %1199 = vmatpush1.msra.mxu0 0.0
  %1200 = vmatprep.subr.mxu0 0.0
  %1201 = vmatpush1.msra.mxu0 0.0
  %1202 = vmatprep.subr.mxu0 0.0
  %1203 = vmatpush1.msra.mxu0 0.0
  %1204 = vmatprep.subr.mxu0 0.0
  %1205 = vmatpush1.msra.mxu0 0.0
  %1206 = vmatprep.subr.mxu0 0.0
  %1207 = vmatpush1.msra.mxu0 0.0
  %1208 = vmatprep.subr.mxu0 0.0
  %1209 = vmatpush1.msra.mxu0 0.0
  %1210 = vmatprep.subr.mxu0 0.0
  %1211 = vmatpush1.msra.mxu0 0.0
  %1212 = vmatprep.subr.mxu0 0.0
  %1213 = vmatpush1.msra.mxu0 0.0
  %1214 = vmatprep.subr.mxu0 0.0
  %1215 = vmatpush1.msra.mxu0 0.0
  %1216 = vmatprep.subr.mxu0 0.0
  %1217 = vmatpush1.msra.mxu0 0.0
  %1218 = vmatprep.subr.mxu0 0.0
  %1219 = vmatpush1.msra.mxu0 0.0
  %1220 = vmatprep.subr.mxu0 0.0
  %1221 = vmatpush1.msra.mxu0 0.0
  %1222 = vmatprep.subr.mxu0 0.0
  %1223 = vmatpush1.msra.mxu0 0.0
  %1224 = vmatprep.subr.mxu0 0.0
  %1225 = vmatpush1.msra.mxu0 0.0
  %1226 = vmatprep.subr.mxu0 0.0
  %1227 = vmatpush1.msra.mxu0 0.0
  %1228 = vmatprep.subr.mxu0 0.0
  %1229 = vmatpush1.msra.mxu0 0.0
  %1230 = vmatprep.subr.mxu0 0.0
  %1231 = vmatpush1.msra.mxu0 0.0
  %1232 = vmatprep.subr.mxu0 0.0
  %1233 = vmatpush1.msra.mxu0 0.0
  %1234 = vmatprep.subr.mxu0 0.0
  %1235 = vmatpush1.msra.mxu0 0.0
  %1236 = vmatprep.subr.mxu0 0.0
  %1237 = vmatpush1.msra.mxu0 0.0
  %1238 = vmatprep.subr.mxu0 0.0
  %1239 = vmatpush1.msra.mxu0 0.0
  %1240 = vmatprep.subr.mxu0 0.0
  %1241 = vmatpush1.msra.mxu0 0.0
  %1242 = vmatprep.subr.mxu0 0.0
  %1243 = vmatpush1.msra.mxu0 0.0
  %1244 = vmatprep.subr.mxu0 0.0
  %1245 = vmatpush1.msra.mxu0 0.0
  %1246 = vmatprep.subr.mxu0 0.0
  %1247 = vmatpush1.msra.mxu0 0.0
  %1248 = vmatprep.subr.mxu0 0.0
  %1249 = vmatpush1.msra.mxu0 0.0
  %1250 = vmatprep.subr.mxu0 0.0
  %1251 = vmatpush1.msra.mxu0 0.0
  %1252 = vmatprep.subr.mxu0 0.0
  %1253 = vmatpush1.msra.mxu0 0.0
  %1254 = vmatprep.subr.mxu0 0.0
  %1255 = vmatpush1.msra.mxu0 0.0
  %1256 = vmatprep.subr.mxu0 0.0
  %1257 = vmatpush1.msra.mxu0 0.0
  %1258 = vmatprep.subr.mxu0 0.0
  %1259 = vmatpush1.msra.mxu0 0.0
  %1260 = vmatprep.mubr.f32.mxu0 0.0
  %1261 = vmatmul.mubr.f32.gmra.mrb[0].mxu0 %v1111
  %v1262 = vpop.f32.mrb[0].mxu0
  %v1263 = vadd.f32 0.0, %v1262
  %v1264 = vpop.f32.mrb[0].mxu0
  %v1265 = vadd.f32 0.0, %v1264
  %1266 = vdwg.mxu0
  %v1267 = vsel %vm265, %v547, 0
  %v1270 = vsel %vm270, %v1000, 0
  %v1273 = vsel %vm270, %v1001, 0
  %v1276 = vsel %vm270, %v1002, 0
  %v1279 = vsel %vm270, %v1003, 0
  %1281 = vmatprep.subr.mxu0 %v1273
  %1282 = vmatpush1.msra.mxu0 %v1270
  %1283 = vmatprep.subr.mxu0 0.0
  %1284 = vmatpush1.msra.mxu0 0.0
  %1285 = vmatprep.subr.mxu0 0.0
  %1286 = vmatpush1.msra.mxu0 0.0
  %1287 = vmatprep.subr.mxu0 0.0
  %1288 = vmatpush1.msra.mxu0 0.0
  %1289 = vmatprep.subr.mxu0 0.0
  %1290 = vmatpush1.msra.mxu0 0.0
  %1291 = vmatprep.subr.mxu0 0.0
  %1292 = vmatpush1.msra.mxu0 0.0
  %1293 = vmatprep.subr.mxu0 0.0
  %1294 = vmatpush1.msra.mxu0 0.0
  %1295 = vmatprep.subr.mxu0 0.0
  %1296 = vmatpush1.msra.mxu0 0.0
  %1297 = vmatprep.subr.mxu0 0.0
  %1298 = vmatpush1.msra.mxu0 0.0
  %1299 = vmatprep.subr.mxu0 0.0
  %1300 = vmatpush1.msra.mxu0 0.0
  %1301 = vmatprep.subr.mxu0 0.0
  %1302 = vmatpush1.msra.mxu0 0.0
  %1303 = vmatprep.subr.mxu0 0.0
  %1304 = vmatpush1.msra.mxu0 0.0
  %1305 = vmatprep.subr.mxu0 0.0
  %1306 = vmatpush1.msra.mxu0 0.0
  %1307 = vmatprep.subr.mxu0 0.0
  %1308 = vmatpush1.msra.mxu0 0.0
  %1309 = vmatprep.subr.mxu0 0.0
  %1310 = vmatpush1.msra.mxu0 0.0
  %1311 = vmatprep.subr.mxu0 0.0
  %1312 = vmatpush1.msra.mxu0 0.0
  %1313 = vmatprep.subr.mxu0 0.0
  %1314 = vmatpush1.msra.mxu0 0.0
  %1315 = vmatprep.subr.mxu0 0.0
  %1316 = vmatpush1.msra.mxu0 0.0
  %1317 = vmatprep.subr.mxu0 0.0
  %1318 = vmatpush1.msra.mxu0 0.0
  %1319 = vmatprep.subr.mxu0 0.0
  %1320 = vmatpush1.msra.mxu0 0.0
  %1321 = vmatprep.subr.mxu0 0.0
  %1322 = vmatpush1.msra.mxu0 0.0
  %1323 = vmatprep.subr.mxu0 0.0
  %1324 = vmatpush1.msra.mxu0 0.0
  %1325 = vmatprep.subr.mxu0 0.0
  %1326 = vmatpush1.msra.mxu0 0.0
  %1327 = vmatprep.subr.mxu0 0.0
  %1328 = vmatpush1.msra.mxu0 0.0
  %1329 = vmatprep.subr.mxu0 0.0
  %1330 = vmatpush1.msra.mxu0 0.0
  %1331 = vmatprep.subr.mxu0 0.0
  %1332 = vmatpush1.msra.mxu0 0.0
  %1333 = vmatprep.subr.mxu0 0.0
  %1334 = vmatpush1.msra.mxu0 0.0
  %1335 = vmatprep.subr.mxu0 0.0
  %1336 = vmatpush1.msra.mxu0 0.0
  %1337 = vmatprep.subr.mxu0 0.0
  %1338 = vmatpush1.msra.mxu0 0.0
  %1339 = vmatprep.subr.mxu0 0.0
  %1340 = vmatpush1.msra.mxu0 0.0
  %1341 = vmatprep.subr.mxu0 0.0
  %1342 = vmatpush1.msra.mxu0 0.0
  %1343 = vmatprep.subr.mxu0 0.0
  %1344 = vmatpush1.msra.mxu0 0.0
  %1345 = vmatprep.mubr.f32.mxu0 0.0
  %1346 = vmatmul.mubr.f32.gmra.mrb[0].mxu0 %v1267
  %v1347 = vpop.f32.mrb[0].mxu0
  %v1348 = vadd.f32 %v1192, %v1347
  %v1349 = vpop.f32.mrb[0].mxu0
  %v1350 = vadd.f32 %v1194, %v1349
  %1351 = vdwg.mxu0
  %1352 = vmatprep.subr.mxu0 %v1279
  %1353 = vmatpush1.msra.mxu0 %v1276
  %1354 = vmatprep.subr.mxu0 0.0
  %1355 = vmatpush1.msra.mxu0 0.0
  %1356 = vmatprep.subr.mxu0 0.0
  %1357 = vmatpush1.msra.mxu0 0.0
  %1358 = vmatprep.subr.mxu0 0.0
  %1359 = vmatpush1.msra.mxu0 0.0
  %1360 = vmatprep.subr.mxu0 0.0
  %1361 = vmatpush1.msra.mxu0 0.0
  %1362 = vmatprep.subr.mxu0 0.0
  %1363 = vmatpush1.msra.mxu0 0.0
  %1364 = vmatprep.subr.mxu0 0.0
  %1365 = vmatpush1.msra.mxu0 0.0
  %1366 = vmatprep.subr.mxu0 0.0
  %1367 = vmatpush1.msra.mxu0 0.0
  %1368 = vmatprep.subr.mxu0 0.0
  %1369 = vmatpush1.msra.mxu0 0.0
  %1370 = vmatprep.subr.mxu0 0.0
  %1371 = vmatpush1.msra.mxu0 0.0
  %1372 = vmatprep.subr.mxu0 0.0
  %1373 = vmatpush1.msra.mxu0 0.0
  %1374 = vmatprep.subr.mxu0 0.0
  %1375 = vmatpush1.msra.mxu0 0.0
  %1376 = vmatprep.subr.mxu0 0.0
  %1377 = vmatpush1.msra.mxu0 0.0
  %1378 = vmatprep.subr.mxu0 0.0
  %1379 = vmatpush1.msra.mxu0 0.0
  %1380 = vmatprep.subr.mxu0 0.0
  %1381 = vmatpush1.msra.mxu0 0.0
  %1382 = vmatprep.subr.mxu0 0.0
  %1383 = vmatpush1.msra.mxu0 0.0
  %1384 = vmatprep.subr.mxu0 0.0
  %1385 = vmatpush1.msra.mxu0 0.0
  %1386 = vmatprep.subr.mxu0 0.0
  %1387 = vmatpush1.msra.mxu0 0.0
  %1388 = vmatprep.subr.mxu0 0.0
  %1389 = vmatpush1.msra.mxu0 0.0
  %1390 = vmatprep.subr.mxu0 0.0
  %1391 = vmatpush1.msra.mxu0 0.0
  %1392 = vmatprep.subr.mxu0 0.0
  %1393 = vmatpush1.msra.mxu0 0.0
  %1394 = vmatprep.subr.mxu0 0.0
  %1395 = vmatpush1.msra.mxu0 0.0
  %1396 = vmatprep.subr.mxu0 0.0
  %1397 = vmatpush1.msra.mxu0 0.0
  %1398 = vmatprep.subr.mxu0 0.0
  %1399 = vmatpush1.msra.mxu0 0.0
  %1400 = vmatprep.subr.mxu0 0.0
  %1401 = vmatpush1.msra.mxu0 0.0
  %1402 = vmatprep.subr.mxu0 0.0
  %1403 = vmatpush1.msra.mxu0 0.0
  %1404 = vmatprep.subr.mxu0 0.0
  %1405 = vmatpush1.msra.mxu0 0.0
  %1406 = vmatprep.subr.mxu0 0.0
  %1407 = vmatpush1.msra.mxu0 0.0
  %1408 = vmatprep.subr.mxu0 0.0
  %1409 = vmatpush1.msra.mxu0 0.0
  %1410 = vmatprep.subr.mxu0 0.0
  %1411 = vmatpush1.msra.mxu0 0.0
  %1412 = vmatprep.subr.mxu0 0.0
  %1413 = vmatpush1.msra.mxu0 0.0
  %1414 = vmatprep.subr.mxu0 0.0
  %1415 = vmatpush1.msra.mxu0 0.0
  %1416 = vmatprep.mubr.f32.mxu0 0.0
  %1417 = vmatmul.mubr.f32.gmra.mrb[0].mxu0 %v1267
  %v1418 = vpop.f32.mrb[0].mxu0
  %v1419 = vadd.f32 %v1263, %v1418
  %v1420 = vpop.f32.mrb[0].mxu0
  %v1421 = vadd.f32 %v1265, %v1420
  %1422 = vdwg.mxu0
  %v1424 = vsel %vm265, %v548, 0
  %v1427 = vsel %vm270, %v747, 0
  %v1430 = vsel %vm270, %v748, 0
  %v1433 = vsel %vm270, %v749, 0
  %v1436 = vsel %vm270, %v750, 0
  %1438 = vmatprep.subr.mxu0 %v1430
  %1439 = vmatpush1.msra.mxu0 %v1427
  %1440 = vmatprep.subr.mxu0 0.0
  %1441 = vmatpush1.msra.mxu0 0.0
  %1442 = vmatprep.subr.mxu0 0.0
  %1443 = vmatpush1.msra.mxu0 0.0
  %1444 = vmatprep.subr.mxu0 0.0
  %1445 = vmatpush1.msra.mxu0 0.0
  %1446 = vmatprep.subr.mxu0 0.0
  %1447 = vmatpush1.msra.mxu0 0.0
  %1448 = vmatprep.subr.mxu0 0.0
  %1449 = vmatpush1.msra.mxu0 0.0
  %1450 = vmatprep.subr.mxu0 0.0
  %1451 = vmatpush1.msra.mxu0 0.0
  %1452 = vmatprep.subr.mxu0 0.0
  %1453 = vmatpush1.msra.mxu0 0.0
  %1454 = vmatprep.subr.mxu0 0.0
  %1455 = vmatpush1.msra.mxu0 0.0
  %1456 = vmatprep.subr.mxu0 0.0
  %1457 = vmatpush1.msra.mxu0 0.0
  %1458 = vmatprep.subr.mxu0 0.0
  %1459 = vmatpush1.msra.mxu0 0.0
  %1460 = vmatprep.subr.mxu0 0.0
  %1461 = vmatpush1.msra.mxu0 0.0
  %1462 = vmatprep.subr.mxu0 0.0
  %1463 = vmatpush1.msra.mxu0 0.0
  %1464 = vmatprep.subr.mxu0 0.0
  %1465 = vmatpush1.msra.mxu0 0.0
  %1466 = vmatprep.subr.mxu0 0.0
  %1467 = vmatpush1.msra.mxu0 0.0
  %1468 = vmatprep.subr.mxu0 0.0
  %1469 = vmatpush1.msra.mxu0 0.0
  %1470 = vmatprep.subr.mxu0 0.0
  %1471 = vmatpush1.msra.mxu0 0.0
  %1472 = vmatprep.subr.mxu0 0.0
  %1473 = vmatpush1.msra.mxu0 0.0
  %1474 = vmatprep.subr.mxu0 0.0
  %1475 = vmatpush1.msra.mxu0 0.0
  %1476 = vmatprep.subr.mxu0 0.0
  %1477 = vmatpush1.msra.mxu0 0.0
  %1478 = vmatprep.subr.mxu0 0.0
  %1479 = vmatpush1.msra.mxu0 0.0
  %1480 = vmatprep.subr.mxu0 0.0
  %1481 = vmatpush1.msra.mxu0 0.0
  %1482 = vmatprep.subr.mxu0 0.0
  %1483 = vmatpush1.msra.mxu0 0.0
  %1484 = vmatprep.subr.mxu0 0.0
  %1485 = vmatpush1.msra.mxu0 0.0
  %1486 = vmatprep.subr.mxu0 0.0
  %1487 = vmatpush1.msra.mxu0 0.0
  %1488 = vmatprep.subr.mxu0 0.0
  %1489 = vmatpush1.msra.mxu0 0.0
  %1490 = vmatprep.subr.mxu0 0.0
  %1491 = vmatpush1.msra.mxu0 0.0
  %1492 = vmatprep.subr.mxu0 0.0
  %1493 = vmatpush1.msra.mxu0 0.0
  %1494 = vmatprep.subr.mxu0 0.0
  %1495 = vmatpush1.msra.mxu0 0.0
  %1496 = vmatprep.subr.mxu0 0.0
  %1497 = vmatpush1.msra.mxu0 0.0
  %1498 = vmatprep.subr.mxu0 0.0
  %1499 = vmatpush1.msra.mxu0 0.0
  %1500 = vmatprep.subr.mxu0 0.0
  %1501 = vmatpush1.msra.mxu0 0.0
  %1502 = vmatprep.mubr.f32.mxu0 0.0
  %1503 = vmatmul.mubr.f32.gmra.mrb[0].mxu0 %v1424
  %v1504 = vpop.f32.mrb[0].mxu0
  %v1505 = vadd.f32 0.0, %v1504
  %v1506 = vpop.f32.mrb[0].mxu0
  %v1507 = vadd.f32 0.0, %v1506
  %1508 = vdwg.mxu0
  %1509 = vmatprep.subr.mxu0 %v1436
  %1510 = vmatpush1.msra.mxu0 %v1433
  %1511 = vmatprep.subr.mxu0 0.0
  %1512 = vmatpush1.msra.mxu0 0.0
  %1513 = vmatprep.subr.mxu0 0.0
  %1514 = vmatpush1.msra.mxu0 0.0
  %1515 = vmatprep.subr.mxu0 0.0
  %1516 = vmatpush1.msra.mxu0 0.0
  %1517 = vmatprep.subr.mxu0 0.0
  %1518 = vmatpush1.msra.mxu0 0.0
  %1519 = vmatprep.subr.mxu0 0.0
  %1520 = vmatpush1.msra.mxu0 0.0
  %1521 = vmatprep.subr.mxu0 0.0
  %1522 = vmatpush1.msra.mxu0 0.0
  %1523 = vmatprep.subr.mxu0 0.0
  %1524 = vmatpush1.msra.mxu0 0.0
  %1525 = vmatprep.subr.mxu0 0.0
  %1526 = vmatpush1.msra.mxu0 0.0
  %1527 = vmatprep.subr.mxu0 0.0
  %1528 = vmatpush1.msra.mxu0 0.0
  %1529 = vmatprep.subr.mxu0 0.0
  %1530 = vmatpush1.msra.mxu0 0.0
  %1531 = vmatprep.subr.mxu0 0.0
  %1532 = vmatpush1.msra.mxu0 0.0
  %1533 = vmatprep.subr.mxu0 0.0
  %1534 = vmatpush1.msra.mxu0 0.0
  %1535 = vmatprep.subr.mxu0 0.0
  %1536 = vmatpush1.msra.mxu0 0.0
  %1537 = vmatprep.subr.mxu0 0.0
  %1538 = vmatpush1.msra.mxu0 0.0
  %1539 = vmatprep.subr.mxu0 0.0
  %1540 = vmatpush1.msra.mxu0 0.0
  %1541 = vmatprep.subr.mxu0 0.0
  %1542 = vmatpush1.msra.mxu0 0.0
  %1543 = vmatprep.subr.mxu0 0.0
  %1544 = vmatpush1.msra.mxu0 0.0
  %1545 = vmatprep.subr.mxu0 0.0
  %1546 = vmatpush1.msra.mxu0 0.0
  %1547 = vmatprep.subr.mxu0 0.0
  %1548 = vmatpush1.msra.mxu0 0.0
  %1549 = vmatprep.subr.mxu0 0.0
  %1550 = vmatpush1.msra.mxu0 0.0
  %1551 = vmatprep.subr.mxu0 0.0
  %1552 = vmatpush1.msra.mxu0 0.0
  %1553 = vmatprep.subr.mxu0 0.0
  %1554 = vmatpush1.msra.mxu0 0.0
  %1555 = vmatprep.subr.mxu0 0.0
  %1556 = vmatpush1.msra.mxu0 0.0
  %1557 = vmatprep.subr.mxu0 0.0
  %1558 = vmatpush1.msra.mxu0 0.0
  %1559 = vmatprep.subr.mxu0 0.0
  %1560 = vmatpush1.msra.mxu0 0.0
  %1561 = vmatprep.subr.mxu0 0.0
  %1562 = vmatpush1.msra.mxu0 0.0
  %1563 = vmatprep.subr.mxu0 0.0
  %1564 = vmatpush1.msra.mxu0 0.0
  %1565 = vmatprep.subr.mxu0 0.0
  %1566 = vmatpush1.msra.mxu0 0.0
  %1567 = vmatprep.subr.mxu0 0.0
  %1568 = vmatpush1.msra.mxu0 0.0
  %1569 = vmatprep.subr.mxu0 0.0
  %1570 = vmatpush1.msra.mxu0 0.0
  %1571 = vmatprep.subr.mxu0 0.0
  %1572 = vmatpush1.msra.mxu0 0.0
  %1573 = vmatprep.mubr.f32.mxu0 0.0
  %1574 = vmatmul.mubr.f32.gmra.mrb[0].mxu0 %v1424
  %v1575 = vpop.f32.mrb[0].mxu0
  %v1576 = vadd.f32 0.0, %v1575
  %v1577 = vpop.f32.mrb[0].mxu0
  %v1578 = vadd.f32 0.0, %v1577
  %1579 = vdwg.mxu0
  %v1580 = vsel %vm98, %v1505, 0.0
  %v1581 = vsel %vm98, %v1507, 0.0
  %v1582 = vadd.f32 %v1580, %v1581
  %v1583 = vsel %vm98, %v1576, 0.0
  %v1584 = vadd.f32 %v1582, %v1583
  %v1585 = vsel %vm98, %v1578, 0.0
  %v1586 = vadd.f32 %v1584, %v1585
  %1587 = vadd.xlane.f32.xlu0 %v1586
  %v1588 = vpop.xlane.xlu0 %1587
  %v1589 = vmul.f32 %v1588, %v443
  %v1590 = vsub.f32 %v1505, %v1589
  %v1591 = vsub.f32 %v1507, %v1589
  %v1592 = vsub.f32 %v1576, %v1589
  %v1593 = vsub.f32 %v1578, %v1589
  %v1594 = vmul.f32 %v1590, %v1590
  %v1595 = vmul.f32 %v1591, %v1591
  %v1596 = vmul.f32 %v1592, %v1592
  %v1597 = vmul.f32 %v1593, %v1593
  %v1598 = vsel %vm98, %v1594, 0.0
  %v1599 = vsel %vm98, %v1595, 0.0
  %v1600 = vadd.f32 %v1598, %v1599
  %v1601 = vsel %vm98, %v1596, 0.0
  %v1602 = vadd.f32 %v1600, %v1601
  %v1603 = vsel %vm98, %v1597, 0.0
  %v1604 = vadd.f32 %v1602, %v1603
  %1605 = vadd.xlane.f32.xlu0 %v1604
  %v1606 = vpop.xlane.xlu0 %1605
  %v1607 = vmul.f32 %v1606, %v443
  %v1608 = vadd.f32 %v1607, 1e-05
  %v1609 = vrsqrt.pop %v1608
  %v1610 = vmul.f32 %v1590, %v1609
  %v1611 = vmul.f32 %v1591, %v1609
  %v1612 = vmul.f32 %v1592, %v1609
  %v1613 = vmul.f32 %v1593, %v1609
  %1615 = vset.pattern.permute.xlu0 0
  %1616 = vperm.xlu0 %1615, %v549
  %v1617 = vpop.permute.xlu0 %1616
  %v1619 = vlaneseq
  %v1620 = vshrl.u32 %v1619, 7
  %v1621 = vsub.s32 0, %v1620
  %v1622 = vrot.slane %v1617, %v1621
  %v1623 = vmul.f32 %v1610, %v1622
  %v1624 = vmul.f32 %v1611, %v1622
  %v1625 = vmul.f32 %v1612, %v1622
  %v1626 = vmul.f32 %v1613, %v1622
  %1627 = vset.pattern.permute.xlu0 1
  %1628 = vperm.xlu0 %1627, %v549
  %v1629 = vpop.permute.xlu0 %1628
  %v1631 = vlaneseq
  %v1632 = vshrl.u32 %v1631, 7
  %v1633 = vsub.s32 0, %v1632
  %v1634 = vrot.slane %v1629, %v1633
  %v1635 = vadd.f32 %v1623, %v1634
  %v1636 = vadd.f32 %v1624, %v1634
  %v1637 = vadd.f32 %v1625, %v1634
  %v1638 = vadd.f32 %v1626, %v1634
  %v1639 = vmax.f32 %v1635, 0.0
  %v1640 = vmax.f32 %v1636, 0.0
  %v1641 = vmax.f32 %v1637, 0.0
  %v1642 = vmax.f32 %v1638, 0.0
  %v1647 = vcombine.low %v1348, %v1350
  %v1648 = vcombine.low %v1419, %v1421
  %1651 = vst [vmem:[%s13] sm:$0xff] %v1647
  %1652 = vst [vmem:[%s13 + $0x8] sm:$0xff] %v1648
  %v1657 = vcombine.low %v1639, %v1640
  %v1658 = vcombine.low %v1641, %v1642
  %v1660 = vunpack.c.l.s4 1966171168
  %v1661 = vunpack.c.0.s8 %v1660
  %v1662 = vlaneseq
  %v1663 = vshrl.u32 %v1662, 7
  %v1664 = vsub.s32 %v1661, %v1663
  %v1665 = vrot.slane %v1657, %v1664
  %v1667 = vunpack.c.l.s4 1966171168
  %v1668 = vunpack.c.0.s8 %v1667
  %v1669 = vlaneseq
  %v1670 = vshrl.u32 %v1669, 7
  %v1671 = vsub.s32 %v1668, %v1670
  %v1672 = vrot.slane %v1658, %v1671
  %v1673 = vcombine.low %v1665, %v1672
  %v1675 = vunpack.c.l.s4 1966171168
  %v1676 = vunpack.c.0.s8 %v1675
  %v1677 = vlaneseq
  %v1678 = vshrl.u32 %v1677, 7
  %v1679 = vsub.s32 %v1676, %v1678
  %v1680 = vrot.slane %v1673, %v1679
  %v1682 = vlaneseq
  %vm1683 = vcmp.ge.s32.totalorder %v1682, 0
  %vm1684 = vcmp.lt.s32.totalorder %v1682, 512
  %vm1685 = vmand %vm1683, %vm1684
  %1686 = vst.msk [vmem:[%s14] sm:$0xf] %vm1685, %v1680
  // Predicated region
  $region50: #{fused_lffc_resnet_block.7} parent=0 // pred_check
    _
  $region51: #{fused_lffc_resnet_block.7} parent=0 // pred_check_branch
    %1688 = sbr.rel (0) target = $region53
  $region52: #{fused_lffc_resnet_block.7} parent=0 // pred_region
    _
  $region53: #{fused_lffc_resnet_block.7} parent=0 // pred_fallthru
    _
  // Predicated region
  $region54: #{fused_lffc_resnet_block.7} parent=0 // pred_check
    _
  $region55: #{fused_lffc_resnet_block.7} parent=0 // pred_check_branch
    %1690 = sbr.rel (0) target = $region57
  $region56: #{fused_lffc_resnet_block.7} parent=0 // pred_region
    _
  $region57: #{fused_lffc_resnet_block.7} parent=0 // pred_fallthru
    _
  // Predicated region
  $region58: #{fused_lffc_resnet_block.7} parent=0 // pred_check
    _
  $region59: #{fused_lffc_resnet_block.7} parent=0 // pred_check_branch
    %1692 = sbr.rel (0) target = $region61
  $region60: #{fused_lffc_resnet_block.7} parent=0 // pred_region
    _
  $region61: #{fused_lffc_resnet_block.7} parent=0 // pred_fallthru
    _
  // Predicated region
  $region62: #{fused_lffc_resnet_block.7} parent=0 // pred_check
    _
  $region63: #{fused_lffc_resnet_block.7} parent=0 // pred_check_branch
    %1694 = sbr.rel (0) target = $region65
  $region64: #{fused_lffc_resnet_block.7} parent=0 // pred_region
    _
  $region65: #{fused_lffc_resnet_block.7} parent=0 // pred_fallthru
    _
  // Predicated region
  $region66: #{fused_lffc_resnet_block.7} parent=0 // pred_check
    _
  $region67: #{fused_lffc_resnet_block.7} parent=0 // pred_check_branch
    %1696 = sbr.rel (0) target = $region69
  $region68: #{fused_lffc_resnet_block.7} parent=0 // pred_region
    _
  $region69: #{fused_lffc_resnet_block.7} parent=0 // pred_fallthru
    _
  // Predicated region
  $region70: #{fused_lffc_resnet_block.7} parent=0 // pred_check
    _
  $region71: #{fused_lffc_resnet_block.7} parent=0 // pred_check_branch
    %1698 = sbr.rel (0) target = $region73
  $region72: #{fused_lffc_resnet_block.7} parent=0 // pred_region
    _
  $region73: #{fused_lffc_resnet_block.7} parent=0 // pred_fallthru
    _

</llo_original>
